<compile_context>
chip_gen: v6e
topology: v6e:2x2x1
jax: 0.10.0
libtpu: 0.0.40
codegen_flags: <defaults>
</compile_context>

<pallas_src>
import functools

import jax
import jax.numpy as jnp
import numpy as np
from jax.experimental import pallas as pl
from jax.experimental.pallas import tpu as pltpu

VOCAB_SIZE = 3004
HIDDEN = 256                                   # global hidden_size (.view(-1,1,H))
VPAD = ((VOCAB_SIZE + 127) // 128) * 128       # 3072, lane-dense vocab
HEAD_CHUNK = 512                               # vocab chunk for online lse/argmax


# ----------------------------------------------------------------------------
# Fused kernel: input proj -> unrolled LSTM -> Linear -> LogSoftmax -> argmax
# ----------------------------------------------------------------------------
def make_decoder_kernel(B, T, H):
    N = B * T

    def kernel(x_ref, h0_ref, c0_ref, wih_ref, whh_ref, bl_ref,
               wout_hbm, bout_ref,
               res_ref, idx_ref, hN_ref, cN_ref,
               out_s, w_vmem, w_sem):
        # ---- start W_out prefetch (bf16, ~1.5 MB) immediately; hide it behind
        #      the LSTM recurrence, wait only right before the head matmul.
        wcp = pltpu.make_async_copy(wout_hbm, w_vmem, w_sem.at[0])
        wcp.start()

        # ---- hoisted LSTM input projection: one matmul over all B*T rows
        gx = jnp.dot(x_ref[...], wih_ref[...],
                     preferred_element_type=jnp.float32) + bl_ref[...]     # (N, 4H)

        # ---- LSTM recurrence, fully unrolled (static T); h/c live in vregs
        h = h0_ref[...]                                                    # (B, H)
        c = c0_ref[...]                                                    # (B, H)
        for t in range(T):
            # gates_x rows b*T + t (batch-major), assembled as (B, 4H)
            gx_t = jnp.concatenate(
                [gx[b * T + t:b * T + t + 1, :] for b in range(B)], axis=0)
            gates = gx_t + jnp.dot(h, whh_ref[...],
                                   preferred_element_type=jnp.float32)     # (B, 4H)
            i_g = jax.nn.sigmoid(gates[:, 0 * H:1 * H])
            f_g = jax.nn.sigmoid(gates[:, 1 * H:2 * H])
            g_g = jnp.tanh(gates[:, 2 * H:3 * H])
            o_g = jax.nn.sigmoid(gates[:, 3 * H:4 * H])
            c = f_g * c + i_g * g_g
            h = o_g * jnp.tanh(c)
            # write h rows straight into the batch-major head input (row b*T+t)
            for b in range(B):
                out_s[pl.ds(b * T + t, 1), :] = h[b:b + 1, :]
        hN_ref[...] = h
        cN_ref[...] = c

        # ---- head: Linear (bf16 W_out, padded vocab) -> LogSoftmax -> argmax
        wcp.wait()                                                         # W_out ready
        xh = out_s[...].astype(jnp.bfloat16)                               # (N, H)
        logits = (jnp.dot(xh, w_vmem[...],
                          preferred_element_type=jnp.float32)
                  + bout_ref[...])                                         # (N, Vp) f32

        # padded lanes carry bias -1e30 (zero weight cols) -> never win the max
        # and underflow to 0 in the logsumexp.
        m = jnp.max(logits, axis=-1, keepdims=True)                        # (N, 1)

        # chunked second pass over the vocab axis keeps live vregs low
        s = jnp.zeros((N, 1), jnp.float32)
        idx = jnp.full((N, 1), VPAD, jnp.int32)
        for v0 in range(0, VPAD, HEAD_CHUNK):
            blk = logits[:, v0:v0 + HEAD_CHUNK]
            s = s + jnp.sum(jnp.exp(blk - m), axis=-1, keepdims=True)
            pos = jax.lax.broadcasted_iota(jnp.int32, blk.shape, 1) + v0
            cand = jnp.where(blk == m, pos, VPAD)
            idx = jnp.minimum(idx, jnp.min(cand, axis=-1, keepdims=True))
        lse = m + jnp.log(s)

        res_ref[...] = logits - lse                                        # lane-dense
        idx_ref[...] = idx                                                 # (N, 1) int32

    return kernel


def decoder_pallas(x2d, h0, c0, wih, whh, b_lstm, w_out_pad, b_out_pad, *, B, T):
    """x2d: (B*T, I) batch-major. Returns (logprobs (N,Vp), idx (N,1), h_n, c_n)."""
    N, I = x2d.shape
    H = h0.shape[-1]
    G = 4 * H
    Vp = w_out_pad.shape[-1]
    kernel = make_decoder_kernel(B, T, H)
    return pl.pallas_call(
        kernel,
        out_shape=(jax.ShapeDtypeStruct((N, Vp), jnp.float32),
                   jax.ShapeDtypeStruct((N, 1), jnp.int32),
                   jax.ShapeDtypeStruct((B, H), jnp.float32),
                   jax.ShapeDtypeStruct((B, H), jnp.float32)),
        grid=(1,),
        in_specs=[pl.BlockSpec((N, I), lambda i: (0, 0)),
                  pl.BlockSpec((B, H), lambda i: (0, 0)),
                  pl.BlockSpec((B, H), lambda i: (0, 0)),
                  pl.BlockSpec((I, G), lambda i: (0, 0)),
                  pl.BlockSpec((H, G), lambda i: (0, 0)),
                  pl.BlockSpec((1, G), lambda i: (0, 0)),
                  pl.BlockSpec(memory_space=pl.ANY),        # W_out: manual DMA
                  pl.BlockSpec((1, Vp), lambda i: (0, 0))],
        out_specs=(pl.BlockSpec((N, Vp), lambda i: (0, 0)),
                   pl.BlockSpec((N, 1), lambda i: (0, 0)),
                   pl.BlockSpec((B, H), lambda i: (0, 0)),
                   pl.BlockSpec((B, H), lambda i: (0, 0))),
        scratch_shapes=[pltpu.VMEM((N, H), jnp.float32),         # batch-major LSTM out
                        pltpu.VMEM((H, Vp), jnp.bfloat16),       # prefetched W_out
                        pltpu.SemaphoreType.DMA((1,))],
        compiler_params=pltpu.CompilerParams(
            dimension_semantics=("arbitrary",)),
    )(x2d, h0, c0, wih, whh, b_lstm, w_out_pad, b_out_pad)


# ----------------------------------------------------------------------------
# One-time parameter preparation (vocab padding hoisted out of the forward)
# ----------------------------------------------------------------------------
def prepare_params(raw):
    p = dict(raw)
    p["w_out_pad"] = jnp.pad(raw["w_out"].astype(jnp.bfloat16),
                             ((0, 0), (0, VPAD - VOCAB_SIZE)))
    p["b_out_pad"] = jnp.concatenate(
        [raw["b_out"],
         jnp.full((VPAD - VOCAB_SIZE,), -1e30, jnp.float32)]).reshape(1, VPAD)
    return p


# ----------------------------------------------------------------------------
# Decoder.forward glue
# ----------------------------------------------------------------------------
@functools.partial(jax.jit, static_argnames=("layer",))
def decoder_forward(params, data, hidden, layer=1):
    """data: (B, T, input_size); hidden = (h0, c0) each (1, B, HIDDEN)."""
    B, T, I = data.shape
    h, c = hidden
    h, c = h[0], c[0]                                     # (B, H)

    result = embed = None
    for _ in range(layer):
        x2d = data.reshape(B * T, I)                      # batch-major flatten (free)
        res_pad, idx, h, c = decoder_pallas(
            x2d, h, c, params["wih"], params["whh"], params["b_lstm"],
            params["w_out_pad"], params["b_out_pad"], B=B, T=T)
        result = res_pad[:, :VOCAB_SIZE]
        # tiny data-dependent embedding row gather kept in the wrapper
        embed = jnp.take(params["emb"], idx[:, 0], axis=0).reshape(-1, 1, HIDDEN)

    return result, embed, (h[None], c[None])


# ----------------------------------------------------------------------------
# Pure-JAX reference (same precision choices: f32 LSTM, bf16 W_out matmul)
# ----------------------------------------------------------------------------
def reference_forward(params, data, hidden, layer=1):
    H = HIDDEN
    h, c = hidden
    h, c = h[0], c[0]
    result = embed = None
    for _ in range(layer):
        def step(carry, x_t):
            hh, cc = carry
            gates = x_t @ params["wih"] + hh @ params["whh"] + params["b_lstm"][0]
            i_g = jax.nn.sigmoid(gates[:, :H])
            f_g = jax.nn.sigmoid(gates[:, H:2 * H])
            g_g = jnp.tanh(gates[:, 2 * H:3 * H])
            o_g = jax.nn.sigmoid(gates[:, 3 * H:])
            cc2 = f_g * cc + i_g * g_g
            hh2 = o_g * jnp.tanh(cc2)
            return (hh2, cc2), hh2

        (h, c), out_tm = jax.lax.scan(step, (h, c),
                                      jnp.transpose(data, (1, 0, 2)))
        out = jnp.transpose(out_tm, (1, 0, 2)).reshape(-1, H)
        logits = jnp.dot(out.astype(jnp.bfloat16), params["w_out"],
                         preferred_element_type=jnp.float32) + params["b_out"]
        result = jax.nn.log_softmax(logits, axis=-1)
        idx = jnp.argmax(logits, axis=-1)
        embed = params["emb"][idx].reshape(-1, 1, H)
    return result, embed, (h[None], c[None])


if __name__ == "__main__":
    B, T, INPUT = 2, 4, 32
    H, V = HIDDEN, VOCAB_SIZE

    key = jax.random.PRNGKey(0)
    ks = jax.random.split(key, 8)
    scale = 1.0 / np.sqrt(H)

    params = {
        # LSTM weights stored transposed: x @ wih + h @ whh + b (gate order i,f,g,o)
        "wih": jax.random.uniform(ks[0], (INPUT, 4 * H), jnp.float32, -scale, scale),
        "whh": jax.random.uniform(ks[1], (H, 4 * H), jnp.float32, -scale, scale),
        "b_lstm": (jax.random.uniform(ks[2], (4 * H,), jnp.float32, -scale, scale)
                   + jax.random.uniform(ks[3], (4 * H,), jnp.float32, -scale, scale)
                   ).reshape(1, 4 * H),       # b_ih + b_hh, combined
        # output projection stored in bfloat16 (halves the dominant weight DMA)
        "w_out": jax.random.uniform(ks[4], (H, V), jnp.float32,
                                    -scale, scale).astype(jnp.bfloat16),
        "b_out": jax.random.uniform(ks[5], (V,), jnp.float32, -scale, scale),
        "emb": jax.random.normal(ks[6], (V, H), jnp.float32),
    }
    params = prepare_params(params)           # one-time vocab padding (hoisted)

    data = jax.random.normal(ks[7], (B, T, INPUT), jnp.float32)
    hidden0 = (jnp.zeros((1, B, H), jnp.float32),
               jnp.zeros((1, B, H), jnp.float32))   # Decoder.init_hidden

    result, embed, (h_n, c_n) = decoder_forward(params, data, hidden0)
    jax.block_until_ready((result, embed, h_n, c_n))

    # correctness check vs. pure-JAX reference
    r_ref, e_ref, (h_ref, c_ref) = reference_forward(params, data, hidden0)
    np.testing.assert_allclose(np.asarray(result), np.asarray(r_ref),
                               rtol=2e-3, atol=2e-3)
    np.testing.assert_allclose(np.asarray(embed), np.asarray(e_ref),
                               rtol=2e-3, atol=2e-3)
    np.testing.assert_allclose(np.asarray(h_n), np.asarray(h_ref),
                               rtol=2e-3, atol=2e-3)
    np.testing.assert_allclose(np.asarray(c_n), np.asarray(c_ref),
                               rtol=2e-3, atol=2e-3)

    assert result.shape == (B * T, V)
    assert embed.shape == (B * T, 1, H)
    assert h_n.shape == (1, B, H) and c_n.shape == (1, B, H)

    print("KERNEL_OK")
</pallas_src>

<mosaic_0001>
module attributes {stable_mosaic.version = 11 : i64} {
  func.func @kernel(%arg0: i32, %arg1: memref<8x32xf32, #tpu.memory_space<vmem>>, %arg2: memref<2x256xf32, #tpu.memory_space<vmem>>, %arg3: memref<2x256xf32, #tpu.memory_space<vmem>>, %arg4: memref<32x1024xf32, #tpu.memory_space<vmem>>, %arg5: memref<256x1024xf32, #tpu.memory_space<vmem>>, %arg6: memref<1x1024xf32, #tpu.memory_space<vmem>>, %arg7: memref<256x3072xbf16, #tpu.memory_space<any>>, %arg8: memref<1x3072xf32, #tpu.memory_space<vmem>>, %arg9: memref<8x3072xf32, #tpu.memory_space<vmem>>, %arg10: memref<8x1xi32, #tpu.memory_space<vmem>>, %arg11: memref<2x256xf32, #tpu.memory_space<vmem>>, %arg12: memref<2x256xf32, #tpu.memory_space<vmem>>, %arg13: memref<8x256xf32, #tpu.memory_space<vmem>>, %arg14: memref<256x3072xbf16, #tpu.memory_space<vmem>>, %arg15: memref<1x!tpu.dma_semaphore, #tpu.memory_space<semaphore_mem>>) attributes {dimension_semantics = [#tpu.dimension_semantics<arbitrary>], iteration_bounds = array<i64: 1>, scalar_prefetch = 0 : i64, scratch_operands = 3 : i64, tpu.core_type = #tpu.core_type<tc>, window_params = [{pipeline_mode = #tpu.pipeline_mode<synchronous>, transform_indices = @transform_0, window_bounds = array<i64: 8, 32>}, {pipeline_mode = #tpu.pipeline_mode<synchronous>, transform_indices = @transform_1, window_bounds = array<i64: 2, 256>}, {pipeline_mode = #tpu.pipeline_mode<synchronous>, transform_indices = @transform_2, window_bounds = array<i64: 2, 256>}, {pipeline_mode = #tpu.pipeline_mode<synchronous>, transform_indices = @transform_3, window_bounds = array<i64: 32, 1024>}, {pipeline_mode = #tpu.pipeline_mode<synchronous>, transform_indices = @transform_4, window_bounds = array<i64: 256, 1024>}, {pipeline_mode = #tpu.pipeline_mode<synchronous>, transform_indices = @transform_5, window_bounds = array<i64: 1, 1024>}, {}, {pipeline_mode = #tpu.pipeline_mode<synchronous>, transform_indices = @transform_7, window_bounds = array<i64: 1, 3072>}, {pipeline_mode = #tpu.pipeline_mode<synchronous>, transform_indices = @transform_8, window_bounds = array<i64: 8, 3072>}, {pipeline_mode = #tpu.pipeline_mode<synchronous>, transform_indices = @transform_9, window_bounds = array<i64: 8, 1>}, {pipeline_mode = #tpu.pipeline_mode<synchronous>, transform_indices = @transform_10, window_bounds = array<i64: 2, 256>}, {pipeline_mode = #tpu.pipeline_mode<synchronous>, transform_indices = @transform_11, window_bounds = array<i64: 2, 256>}]} {
    %c0_i32 = arith.constant 0 : i32
    %0 = tpu.memref_slice %arg15[%c0_i32] : memref<1x!tpu.dma_semaphore, #tpu.memory_space<semaphore_mem>> -> memref<1x!tpu.dma_semaphore, #tpu.memory_space<semaphore_mem>>
    %1 = tpu.memref_squeeze %0 : memref<1x!tpu.dma_semaphore, #tpu.memory_space<semaphore_mem>> -> memref<!tpu.dma_semaphore, #tpu.memory_space<semaphore_mem>>
    tpu.enqueue_dma source(%arg7 : memref<256x3072xbf16, #tpu.memory_space<any>>) target(%arg14 : memref<256x3072xbf16, #tpu.memory_space<vmem>>) target_semaphore(%1 : memref<!tpu.dma_semaphore, #tpu.memory_space<semaphore_mem>>)
    %c0 = arith.constant 0 : index
    %c0_0 = arith.constant 0 : index
    %2 = vector.load %arg1[%c0, %c0_0] : memref<8x32xf32, #tpu.memory_space<vmem>>, vector<8x32xf32>
    %c0_1 = arith.constant 0 : index
    %c0_2 = arith.constant 0 : index
    %3 = vector.load %arg4[%c0_1, %c0_2] : memref<32x1024xf32, #tpu.memory_space<vmem>>, vector<32x1024xf32>
    %cst = arith.constant dense<0.000000e+00> : vector<8x1024xf32>
    %4 = tpu.matmul %2, %3, %cst {dimension_numbers = #tpu.dot_dimension_numbers<[1], [0], [0], [1], [0, 0, 1, 1], [], []>} : vector<8x32xf32>, vector<32x1024xf32>, vector<8x1024xf32> -> vector<8x1024xf32>
    %c0_3 = arith.constant 0 : index
    %c0_4 = arith.constant 0 : index
    %5 = vector.load %arg6[%c0_3, %c0_4] : memref<1x1024xf32, #tpu.memory_space<vmem>>, vector<1x1024xf32>
    %6 = vector.broadcast %5 : vector<1x1024xf32> to vector<8x1024xf32>
    %7 = arith.addf %4, %6 : vector<8x1024xf32>
    %c0_5 = arith.constant 0 : index
    %c0_6 = arith.constant 0 : index
    %8 = vector.load %arg2[%c0_5, %c0_6] : memref<2x256xf32, #tpu.memory_space<vmem>>, vector<2x256xf32>
    %c0_7 = arith.constant 0 : index
    %c0_8 = arith.constant 0 : index
    %9 = vector.load %arg3[%c0_7, %c0_8] : memref<2x256xf32, #tpu.memory_space<vmem>>, vector<2x256xf32>
    %10 = vector.extract_strided_slice %7 {offsets = [0, 0], sizes = [1, 1024], strides = [1, 1]} : vector<8x1024xf32> to vector<1x1024xf32>
    %11 = vector.extract_strided_slice %7 {offsets = [4, 0], sizes = [1, 1024], strides = [1, 1]} : vector<8x1024xf32> to vector<1x1024xf32>
    %12 = tpu.concatenate %10, %11 in 0 : vector<1x1024xf32>, vector<1x1024xf32> -> vector<2x1024xf32>
    %c0_9 = arith.constant 0 : index
    %c0_10 = arith.constant 0 : index
    %13 = vector.load %arg5[%c0_9, %c0_10] : memref<256x1024xf32, #tpu.memory_space<vmem>>, vector<256x1024xf32>
    %cst_11 = arith.constant dense<0.000000e+00> : vector<2x1024xf32>
    %14 = tpu.matmul %8, %13, %cst_11 {dimension_numbers = #tpu.dot_dimension_numbers<[1], [0], [0], [1], [0, 0, 1, 1], [], []>} : vector<2x256xf32>, vector<256x1024xf32>, vector<2x1024xf32> -> vector<2x1024xf32>
    %15 = arith.addf %12, %14 : vector<2x1024xf32>
    %16 = vector.extract_strided_slice %15 {offsets = [0, 0], sizes = [2, 256], strides = [1, 1]} : vector<2x1024xf32> to vector<2x256xf32>
    %17 = arith.negf %16 : vector<2x256xf32>
    %18 = math.exp %17 : vector<2x256xf32>
    %cst_12 = arith.constant 1.000000e+00 : f32
    %19 = vector.broadcast %cst_12 : f32 to vector<2x256xf32>
    %20 = arith.addf %19, %18 : vector<2x256xf32>
    %21 = arith.divf %19, %20 : vector<2x256xf32>
    %22 = vector.extract_strided_slice %15 {offsets = [0, 256], sizes = [2, 256], strides = [1, 1]} : vector<2x1024xf32> to vector<2x256xf32>
    %23 = arith.negf %22 : vector<2x256xf32>
    %24 = math.exp %23 : vector<2x256xf32>
    %cst_13 = arith.constant 1.000000e+00 : f32
    %25 = vector.broadcast %cst_13 : f32 to vector<2x256xf32>
    %26 = arith.addf %25, %24 : vector<2x256xf32>
    %27 = arith.divf %25, %26 : vector<2x256xf32>
    %28 = vector.extract_strided_slice %15 {offsets = [0, 512], sizes = [2, 256], strides = [1, 1]} : vector<2x1024xf32> to vector<2x256xf32>
    %29 = math.tanh %28 : vector<2x256xf32>
    %30 = vector.extract_strided_slice %15 {offsets = [0, 768], sizes = [2, 256], strides = [1, 1]} : vector<2x1024xf32> to vector<2x256xf32>
    %31 = arith.negf %30 : vector<2x256xf32>
    %32 = math.exp %31 : vector<2x256xf32>
    %cst_14 = arith.constant 1.000000e+00 : f32
    %33 = vector.broadcast %cst_14 : f32 to vector<2x256xf32>
    %34 = arith.addf %33, %32 : vector<2x256xf32>
    %35 = arith.divf %33, %34 : vector<2x256xf32>
    %36 = arith.mulf %27, %9 : vector<2x256xf32>
    %37 = arith.mulf %21, %29 : vector<2x256xf32>
    %38 = arith.addf %36, %37 : vector<2x256xf32>
    %39 = math.tanh %38 : vector<2x256xf32>
    %40 = arith.mulf %35, %39 : vector<2x256xf32>
    %41 = vector.extract_strided_slice %40 {offsets = [0, 0], sizes = [1, 256], strides = [1, 1]} : vector<2x256xf32> to vector<1x256xf32>
    %c0_15 = arith.constant 0 : index
    %c0_16 = arith.constant 0 : index
    %42 = vector.load %arg13[%c0_15, %c0_16] : memref<8x256xf32, #tpu.memory_space<vmem>>, vector<1x256xf32>
    tpu.vector_store %arg13[%c0_15, %c0_16], %41 {strides = array<i32>} : memref<8x256xf32, #tpu.memory_space<vmem>>, vector<1x256xf32>,
    %43 = vector.extract_strided_slice %40 {offsets = [1, 0], sizes = [1, 256], strides = [1, 1]} : vector<2x256xf32> to vector<1x256xf32>
    %c4 = arith.constant 4 : index
    %c0_17 = arith.constant 0 : index
    %44 = vector.load %arg13[%c4, %c0_17] : memref<8x256xf32, #tpu.memory_space<vmem>>, vector<1x256xf32>
    tpu.vector_store %arg13[%c4, %c0_17], %43 {strides = array<i32>} : memref<8x256xf32, #tpu.memory_space<vmem>>, vector<1x256xf32>,
    %45 = vector.extract_strided_slice %7 {offsets = [1, 0], sizes = [1, 1024], strides = [1, 1]} : vector<8x1024xf32> to vector<1x1024xf32>
    %46 = vector.extract_strided_slice %7 {offsets = [5, 0], sizes = [1, 1024], strides = [1, 1]} : vector<8x1024xf32> to vector<1x1024xf32>
    %47 = tpu.concatenate %45, %46 in 0 : vector<1x1024xf32>, vector<1x1024xf32> -> vector<2x1024xf32>
    %c0_18 = arith.constant 0 : index
    %c0_19 = arith.constant 0 : index
    %48 = vector.load %arg5[%c0_18, %c0_19] : memref<256x1024xf32, #tpu.memory_space<vmem>>, vector<256x1024xf32>
    %cst_20 = arith.constant dense<0.000000e+00> : vector<2x1024xf32>
    %49 = tpu.matmul %40, %48, %cst_20 {dimension_numbers = #tpu.dot_dimension_numbers<[1], [0], [0], [1], [0, 0, 1, 1], [], []>} : vector<2x256xf32>, vector<256x1024xf32>, vector<2x1024xf32> -> vector<2x1024xf32>
    %50 = arith.addf %47, %49 : vector<2x1024xf32>
    %51 = vector.extract_strided_slice %50 {offsets = [0, 0], sizes = [2, 256], strides = [1, 1]} : vector<2x1024xf32> to vector<2x256xf32>
    %52 = arith.negf %51 : vector<2x256xf32>
    %53 = math.exp %52 : vector<2x256xf32>
    %cst_21 = arith.constant 1.000000e+00 : f32
    %54 = vector.broadcast %cst_21 : f32 to vector<2x256xf32>
    %55 = arith.addf %54, %53 : vector<2x256xf32>
    %56 = arith.divf %54, %55 : vector<2x256xf32>
    %57 = vector.extract_strided_slice %50 {offsets = [0, 256], sizes = [2, 256], strides = [1, 1]} : vector<2x1024xf32> to vector<2x256xf32>
    %58 = arith.negf %57 : vector<2x256xf32>
    %59 = math.exp %58 : vector<2x256xf32>
    %cst_22 = arith.constant 1.000000e+00 : f32
    %60 = vector.broadcast %cst_22 : f32 to vector<2x256xf32>
    %61 = arith.addf %60, %59 : vector<2x256xf32>
    %62 = arith.divf %60, %61 : vector<2x256xf32>
    %63 = vector.extract_strided_slice %50 {offsets = [0, 512], sizes = [2, 256], strides = [1, 1]} : vector<2x1024xf32> to vector<2x256xf32>
    %64 = math.tanh %63 : vector<2x256xf32>
    %65 = vector.extract_strided_slice %50 {offsets = [0, 768], sizes = [2, 256], strides = [1, 1]} : vector<2x1024xf32> to vector<2x256xf32>
    %66 = arith.negf %65 : vector<2x256xf32>
    %67 = math.exp %66 : vector<2x256xf32>
    %cst_23 = arith.constant 1.000000e+00 : f32
    %68 = vector.broadcast %cst_23 : f32 to vector<2x256xf32>
    %69 = arith.addf %68, %67 : vector<2x256xf32>
    %70 = arith.divf %68, %69 : vector<2x256xf32>
    %71 = arith.mulf %62, %38 : vector<2x256xf32>
    %72 = arith.mulf %56, %64 : vector<2x256xf32>
    %73 = arith.addf %71, %72 : vector<2x256xf32>
    %74 = math.tanh %73 : vector<2x256xf32>
    %75 = arith.mulf %70, %74 : vector<2x256xf32>
    %76 = vector.extract_strided_slice %75 {offsets = [0, 0], sizes = [1, 256], strides = [1, 1]} : vector<2x256xf32> to vector<1x256xf32>
    %c1 = arith.constant 1 : index
    %c0_24 = arith.constant 0 : index
    %77 = vector.load %arg13[%c1, %c0_24] : memref<8x256xf32, #tpu.memory_space<vmem>>, vector<1x256xf32>
    tpu.vector_store %arg13[%c1, %c0_24], %76 {strides = array<i32>} : memref<8x256xf32, #tpu.memory_space<vmem>>, vector<1x256xf32>,
    %78 = vector.extract_strided_slice %75 {offsets = [1, 0], sizes = [1, 256], strides = [1, 1]} : vector<2x256xf32> to vector<1x256xf32>
    %c5 = arith.constant 5 : index
    %c0_25 = arith.constant 0 : index
    %79 = vector.load %arg13[%c5, %c0_25] : memref<8x256xf32, #tpu.memory_space<vmem>>, vector<1x256xf32>
    tpu.vector_store %arg13[%c5, %c0_25], %78 {strides = array<i32>} : memref<8x256xf32, #tpu.memory_space<vmem>>, vector<1x256xf32>,
    %80 = vector.extract_strided_slice %7 {offsets = [2, 0], sizes = [1, 1024], strides = [1, 1]} : vector<8x1024xf32> to vector<1x1024xf32>
    %81 = vector.extract_strided_slice %7 {offsets = [6, 0], sizes = [1, 1024], strides = [1, 1]} : vector<8x1024xf32> to vector<1x1024xf32>
    %82 = tpu.concatenate %80, %81 in 0 : vector<1x1024xf32>, vector<1x1024xf32> -> vector<2x1024xf32>
    %c0_26 = arith.constant 0 : index
    %c0_27 = arith.constant 0 : index
    %83 = vector.load %arg5[%c0_26, %c0_27] : memref<256x1024xf32, #tpu.memory_space<vmem>>, vector<256x1024xf32>
    %cst_28 = arith.constant dense<0.000000e+00> : vector<2x1024xf32>
    %84 = tpu.matmul %75, %83, %cst_28 {dimension_numbers = #tpu.dot_dimension_numbers<[1], [0], [0], [1], [0, 0, 1, 1], [], []>} : vector<2x256xf32>, vector<256x1024xf32>, vector<2x1024xf32> -> vector<2x1024xf32>
    %85 = arith.addf %82, %84 : vector<2x1024xf32>
    %86 = vector.extract_strided_slice %85 {offsets = [0, 0], sizes = [2, 256], strides = [1, 1]} : vector<2x1024xf32> to vector<2x256xf32>
    %87 = arith.negf %86 : vector<2x256xf32>
    %88 = math.exp %87 : vector<2x256xf32>
    %cst_29 = arith.constant 1.000000e+00 : f32
    %89 = vector.broadcast %cst_29 : f32 to vector<2x256xf32>
    %90 = arith.addf %89, %88 : vector<2x256xf32>
    %91 = arith.divf %89, %90 : vector<2x256xf32>
    %92 = vector.extract_strided_slice %85 {offsets = [0, 256], sizes = [2, 256], strides = [1, 1]} : vector<2x1024xf32> to vector<2x256xf32>
    %93 = arith.negf %92 : vector<2x256xf32>
    %94 = math.exp %93 : vector<2x256xf32>
    %cst_30 = arith.constant 1.000000e+00 : f32
    %95 = vector.broadcast %cst_30 : f32 to vector<2x256xf32>
    %96 = arith.addf %95, %94 : vector<2x256xf32>
    %97 = arith.divf %95, %96 : vector<2x256xf32>
    %98 = vector.extract_strided_slice %85 {offsets = [0, 512], sizes = [2, 256], strides = [1, 1]} : vector<2x1024xf32> to vector<2x256xf32>
    %99 = math.tanh %98 : vector<2x256xf32>
    %100 = vector.extract_strided_slice %85 {offsets = [0, 768], sizes = [2, 256], strides = [1, 1]} : vector<2x1024xf32> to vector<2x256xf32>
    %101 = arith.negf %100 : vector<2x256xf32>
    %102 = math.exp %101 : vector<2x256xf32>
    %cst_31 = arith.constant 1.000000e+00 : f32
    %103 = vector.broadcast %cst_31 : f32 to vector<2x256xf32>
    %104 = arith.addf %103, %102 : vector<2x256xf32>
    %105 = arith.divf %103, %104 : vector<2x256xf32>
    %106 = arith.mulf %97, %73 : vector<2x256xf32>
    %107 = arith.mulf %91, %99 : vector<2x256xf32>
    %108 = arith.addf %106, %107 : vector<2x256xf32>
    %109 = math.tanh %108 : vector<2x256xf32>
    %110 = arith.mulf %105, %109 : vector<2x256xf32>
    %111 = vector.extract_strided_slice %110 {offsets = [0, 0], sizes = [1, 256], strides = [1, 1]} : vector<2x256xf32> to vector<1x256xf32>
    %c2 = arith.constant 2 : index
    %c0_32 = arith.constant 0 : index
    %112 = vector.load %arg13[%c2, %c0_32] : memref<8x256xf32, #tpu.memory_space<vmem>>, vector<1x256xf32>
    tpu.vector_store %arg13[%c2, %c0_32], %111 {strides = array<i32>} : memref<8x256xf32, #tpu.memory_space<vmem>>, vector<1x256xf32>,
    %113 = vector.extract_strided_slice %110 {offsets = [1, 0], sizes = [1, 256], strides = [1, 1]} : vector<2x256xf32> to vector<1x256xf32>
    %c6 = arith.constant 6 : index
    %c0_33 = arith.constant 0 : index
    %114 = vector.load %arg13[%c6, %c0_33] : memref<8x256xf32, #tpu.memory_space<vmem>>, vector<1x256xf32>
    tpu.vector_store %arg13[%c6, %c0_33], %113 {strides = array<i32>} : memref<8x256xf32, #tpu.memory_space<vmem>>, vector<1x256xf32>,
    %115 = vector.extract_strided_slice %7 {offsets = [3, 0], sizes = [1, 1024], strides = [1, 1]} : vector<8x1024xf32> to vector<1x1024xf32>
    %116 = vector.extract_strided_slice %7 {offsets = [7, 0], sizes = [1, 1024], strides = [1, 1]} : vector<8x1024xf32> to vector<1x1024xf32>
    %117 = tpu.concatenate %115, %116 in 0 : vector<1x1024xf32>, vector<1x1024xf32> -> vector<2x1024xf32>
    %c0_34 = arith.constant 0 : index
    %c0_35 = arith.constant 0 : index
    %118 = vector.load %arg5[%c0_34, %c0_35] : memref<256x1024xf32, #tpu.memory_space<vmem>>, vector<256x1024xf32>
    %cst_36 = arith.constant dense<0.000000e+00> : vector<2x1024xf32>
    %119 = tpu.matmul %110, %118, %cst_36 {dimension_numbers = #tpu.dot_dimension_numbers<[1], [0], [0], [1], [0, 0, 1, 1], [], []>} : vector<2x256xf32>, vector<256x1024xf32>, vector<2x1024xf32> -> vector<2x1024xf32>
    %120 = arith.addf %117, %119 : vector<2x1024xf32>
    %121 = vector.extract_strided_slice %120 {offsets = [0, 0], sizes = [2, 256], strides = [1, 1]} : vector<2x1024xf32> to vector<2x256xf32>
    %122 = arith.negf %121 : vector<2x256xf32>
    %123 = math.exp %122 : vector<2x256xf32>
    %cst_37 = arith.constant 1.000000e+00 : f32
    %124 = vector.broadcast %cst_37 : f32 to vector<2x256xf32>
    %125 = arith.addf %124, %123 : vector<2x256xf32>
    %126 = arith.divf %124, %125 : vector<2x256xf32>
    %127 = vector.extract_strided_slice %120 {offsets = [0, 256], sizes = [2, 256], strides = [1, 1]} : vector<2x1024xf32> to vector<2x256xf32>
    %128 = arith.negf %127 : vector<2x256xf32>
    %129 = math.exp %128 : vector<2x256xf32>
    %cst_38 = arith.constant 1.000000e+00 : f32
    %130 = vector.broadcast %cst_38 : f32 to vector<2x256xf32>
    %131 = arith.addf %130, %129 : vector<2x256xf32>
    %132 = arith.divf %130, %131 : vector<2x256xf32>
    %133 = vector.extract_strided_slice %120 {offsets = [0, 512], sizes = [2, 256], strides = [1, 1]} : vector<2x1024xf32> to vector<2x256xf32>
    %134 = math.tanh %133 : vector<2x256xf32>
    %135 = vector.extract_strided_slice %120 {offsets = [0, 768], sizes = [2, 256], strides = [1, 1]} : vector<2x1024xf32> to vector<2x256xf32>
    %136 = arith.negf %135 : vector<2x256xf32>
    %137 = math.exp %136 : vector<2x256xf32>
    %cst_39 = arith.constant 1.000000e+00 : f32
    %138 = vector.broadcast %cst_39 : f32 to vector<2x256xf32>
    %139 = arith.addf %138, %137 : vector<2x256xf32>
    %140 = arith.divf %138, %139 : vector<2x256xf32>
    %141 = arith.mulf %132, %108 : vector<2x256xf32>
    %142 = arith.mulf %126, %134 : vector<2x256xf32>
    %143 = arith.addf %141, %142 : vector<2x256xf32>
    %144 = math.tanh %143 : vector<2x256xf32>
    %145 = arith.mulf %140, %144 : vector<2x256xf32>
    %146 = vector.extract_strided_slice %145 {offsets = [0, 0], sizes = [1, 256], strides = [1, 1]} : vector<2x256xf32> to vector<1x256xf32>
    %c3 = arith.constant 3 : index
    %c0_40 = arith.constant 0 : index
    %147 = vector.load %arg13[%c3, %c0_40] : memref<8x256xf32, #tpu.memory_space<vmem>>, vector<1x256xf32>
    tpu.vector_store %arg13[%c3, %c0_40], %146 {strides = array<i32>} : memref<8x256xf32, #tpu.memory_space<vmem>>, vector<1x256xf32>,
    %148 = vector.extract_strided_slice %145 {offsets = [1, 0], sizes = [1, 256], strides = [1, 1]} : vector<2x256xf32> to vector<1x256xf32>
    %c7 = arith.constant 7 : index
    %c0_41 = arith.constant 0 : index
    %149 = vector.load %arg13[%c7, %c0_41] : memref<8x256xf32, #tpu.memory_space<vmem>>, vector<1x256xf32>
    tpu.vector_store %arg13[%c7, %c0_41], %148 {strides = array<i32>} : memref<8x256xf32, #tpu.memory_space<vmem>>, vector<1x256xf32>,
    %c0_42 = arith.constant 0 : index
    %c0_43 = arith.constant 0 : index
    %150 = vector.load %arg11[%c0_42, %c0_43] : memref<2x256xf32, #tpu.memory_space<vmem>>, vector<2x256xf32>
    tpu.vector_store %arg11[%c0_42, %c0_43], %145 {strides = array<i32>} : memref<2x256xf32, #tpu.memory_space<vmem>>, vector<2x256xf32>,
    %c0_44 = arith.constant 0 : index
    %c0_45 = arith.constant 0 : index
    %151 = vector.load %arg12[%c0_44, %c0_45] : memref<2x256xf32, #tpu.memory_space<vmem>>, vector<2x256xf32>
    tpu.vector_store %arg12[%c0_44, %c0_45], %143 {strides = array<i32>} : memref<2x256xf32, #tpu.memory_space<vmem>>, vector<2x256xf32>,
    %c0_i32_46 = arith.constant 0 : i32
    %152 = tpu.memref_slice %arg15[%c0_i32_46] : memref<1x!tpu.dma_semaphore, #tpu.memory_space<semaphore_mem>> -> memref<1x!tpu.dma_semaphore, #tpu.memory_space<semaphore_mem>>
    %153 = tpu.memref_squeeze %152 : memref<1x!tpu.dma_semaphore, #tpu.memory_space<semaphore_mem>> -> memref<!tpu.dma_semaphore, #tpu.memory_space<semaphore_mem>>
    tpu.wait_dma2 semaphore(%153 : memref<!tpu.dma_semaphore, #tpu.memory_space<semaphore_mem>>) src(%arg7 : memref<256x3072xbf16, #tpu.memory_space<any>>) dst(%arg14 : memref<256x3072xbf16, #tpu.memory_space<vmem>>)
    %c0_47 = arith.constant 0 : index
    %c0_48 = arith.constant 0 : index
    %154 = vector.load %arg13[%c0_47, %c0_48] : memref<8x256xf32, #tpu.memory_space<vmem>>, vector<8x256xf32>
    %155 = arith.truncf %154 : vector<8x256xf32> to vector<8x256xbf16>
    %c0_49 = arith.constant 0 : index
    %c0_50 = arith.constant 0 : index
    %156 = vector.load %arg14[%c0_49, %c0_50] : memref<256x3072xbf16, #tpu.memory_space<vmem>>, vector<256x3072xbf16>
    %cst_51 = arith.constant dense<0.000000e+00> : vector<8x3072xf32>
    %157 = tpu.matmul %155, %156, %cst_51 {dimension_numbers = #tpu.dot_dimension_numbers<[1], [0], [0], [1], [0, 0, 1, 1], [], []>} : vector<8x256xbf16>, vector<256x3072xbf16>, vector<8x3072xf32> -> vector<8x3072xf32>
    %c0_52 = arith.constant 0 : index
    %c0_53 = arith.constant 0 : index
    %158 = vector.load %arg8[%c0_52, %c0_53] : memref<1x3072xf32, #tpu.memory_space<vmem>>, vector<1x3072xf32>
    %159 = vector.broadcast %158 : vector<1x3072xf32> to vector<8x3072xf32>
    %160 = arith.addf %157, %159 : vector<8x3072xf32>
    %cst_54 = arith.constant dense<0xFF800000> : vector<8xf32>
    %161 = vector.multi_reduction <maximumf>, %160, %cst_54 [1] : vector<8x3072xf32> to vector<8xf32>
    %162 = vector.shape_cast %161 : vector<8xf32> to vector<8x1xf32>
    %cst_55 = arith.constant 0.000000e+00 : f32
    %163 = vector.broadcast %cst_55 : f32 to vector<8x1xf32>
    %c3072_i32 = arith.constant 3072 : i32
    %164 = vector.broadcast %c3072_i32 : i32 to vector<8x1xi32>
    %165 = vector.extract_strided_slice %160 {offsets = [0, 0], sizes = [8, 512], strides = [1, 1]} : vector<8x3072xf32> to vector<8x512xf32>
    %166 = vector.broadcast %162 : vector<8x1xf32> to vector<8x512xf32>
    %167 = arith.subf %165, %166 : vector<8x512xf32>
    %168 = math.exp %167 : vector<8x512xf32>
    %cst_56 = arith.constant dense<0.000000e+00> : vector<8xf32>
    %169 = vector.multi_reduction <add>, %168, %cst_56 [1] : vector<8x512xf32> to vector<8xf32>
    %170 = vector.shape_cast %169 : vector<8xf32> to vector<8x1xf32>
    %171 = arith.addf %163, %170 : vector<8x1xf32>
    %172 = tpu.iota {dimensions = array<i32: 1>} : vector<8x512xi32>
    %c0_i32_57 = arith.constant 0 : i32
    %173 = vector.broadcast %c0_i32_57 : i32 to vector<8x512xi32>
    %174 = arith.addi %172, %173 : vector<8x512xi32>
    %175 = vector.broadcast %162 : vector<8x1xf32> to vector<8x512xf32>
    %176 = arith.cmpf oeq, %165, %175 : vector<8x512xf32>
    %c3072_i32_58 = arith.constant 3072 : i32
    %177 = vector.broadcast %c3072_i32_58 : i32 to vector<8x512xi32>
    %178 = arith.select %176, %174, %177 : vector<8x512xi1>, vector<8x512xi32>
    %cst_59 = arith.constant dense<2147483647> : vector<8xi32>
    %179 = vector.multi_reduction <minsi>, %178, %cst_59 [1] : vector<8x512xi32> to vector<8xi32>
    %180 = vector.shape_cast %179 : vector<8xi32> to vector<8x1xi32>
    %181 = arith.minsi %164, %180 : vector<8x1xi32>
    %182 = vector.extract_strided_slice %160 {offsets = [0, 512], sizes = [8, 512], strides = [1, 1]} : vector<8x3072xf32> to vector<8x512xf32>
    %183 = vector.broadcast %162 : vector<8x1xf32> to vector<8x512xf32>
    %184 = arith.subf %182, %183 : vector<8x512xf32>
    %185 = math.exp %184 : vector<8x512xf32>
    %cst_60 = arith.constant dense<0.000000e+00> : vector<8xf32>
    %186 = vector.multi_reduction <add>, %185, %cst_60 [1] : vector<8x512xf32> to vector<8xf32>
    %187 = vector.shape_cast %186 : vector<8xf32> to vector<8x1xf32>
    %188 = arith.addf %171, %187 : vector<8x1xf32>
    %189 = tpu.iota {dimensions = array<i32: 1>} : vector<8x512xi32>
    %c512_i32 = arith.constant 512 : i32
    %190 = vector.broadcast %c512_i32 : i32 to vector<8x512xi32>
    %191 = arith.addi %189, %190 : vector<8x512xi32>
    %192 = vector.broadcast %162 : vector<8x1xf32> to vector<8x512xf32>
    %193 = arith.cmpf oeq, %182, %192 : vector<8x512xf32>
    %c3072_i32_61 = arith.constant 3072 : i32
    %194 = vector.broadcast %c3072_i32_61 : i32 to vector<8x512xi32>
    %195 = arith.select %193, %191, %194 : vector<8x512xi1>, vector<8x512xi32>
    %cst_62 = arith.constant dense<2147483647> : vector<8xi32>
    %196 = vector.multi_reduction <minsi>, %195, %cst_62 [1] : vector<8x512xi32> to vector<8xi32>
    %197 = vector.shape_cast %196 : vector<8xi32> to vector<8x1xi32>
    %198 = arith.minsi %181, %197 : vector<8x1xi32>
    %199 = vector.extract_strided_slice %160 {offsets = [0, 1024], sizes = [8, 512], strides = [1, 1]} : vector<8x3072xf32> to vector<8x512xf32>
    %200 = vector.broadcast %162 : vector<8x1xf32> to vector<8x512xf32>
    %201 = arith.subf %199, %200 : vector<8x512xf32>
    %202 = math.exp %201 : vector<8x512xf32>
    %cst_63 = arith.constant dense<0.000000e+00> : vector<8xf32>
    %203 = vector.multi_reduction <add>, %202, %cst_63 [1] : vector<8x512xf32> to vector<8xf32>
    %204 = vector.shape_cast %203 : vector<8xf32> to vector<8x1xf32>
    %205 = arith.addf %188, %204 : vector<8x1xf32>
    %206 = tpu.iota {dimensions = array<i32: 1>} : vector<8x512xi32>
    %c1024_i32 = arith.constant 1024 : i32
    %207 = vector.broadcast %c1024_i32 : i32 to vector<8x512xi32>
    %208 = arith.addi %206, %207 : vector<8x512xi32>
    %209 = vector.broadcast %162 : vector<8x1xf32> to vector<8x512xf32>
    %210 = arith.cmpf oeq, %199, %209 : vector<8x512xf32>
    %c3072_i32_64 = arith.constant 3072 : i32
    %211 = vector.broadcast %c3072_i32_64 : i32 to vector<8x512xi32>
    %212 = arith.select %210, %208, %211 : vector<8x512xi1>, vector<8x512xi32>
    %cst_65 = arith.constant dense<2147483647> : vector<8xi32>
    %213 = vector.multi_reduction <minsi>, %212, %cst_65 [1] : vector<8x512xi32> to vector<8xi32>
    %214 = vector.shape_cast %213 : vector<8xi32> to vector<8x1xi32>
    %215 = arith.minsi %198, %214 : vector<8x1xi32>
    %216 = vector.extract_strided_slice %160 {offsets = [0, 1536], sizes = [8, 512], strides = [1, 1]} : vector<8x3072xf32> to vector<8x512xf32>
    %217 = vector.broadcast %162 : vector<8x1xf32> to vector<8x512xf32>
    %218 = arith.subf %216, %217 : vector<8x512xf32>
    %219 = math.exp %218 : vector<8x512xf32>
    %cst_66 = arith.constant dense<0.000000e+00> : vector<8xf32>
    %220 = vector.multi_reduction <add>, %219, %cst_66 [1] : vector<8x512xf32> to vector<8xf32>
    %221 = vector.shape_cast %220 : vector<8xf32> to vector<8x1xf32>
    %222 = arith.addf %205, %221 : vector<8x1xf32>
    %223 = tpu.iota {dimensions = array<i32: 1>} : vector<8x512xi32>
    %c1536_i32 = arith.constant 1536 : i32
    %224 = vector.broadcast %c1536_i32 : i32 to vector<8x512xi32>
    %225 = arith.addi %223, %224 : vector<8x512xi32>
    %226 = vector.broadcast %162 : vector<8x1xf32> to vector<8x512xf32>
    %227 = arith.cmpf oeq, %216, %226 : vector<8x512xf32>
    %c3072_i32_67 = arith.constant 3072 : i32
    %228 = vector.broadcast %c3072_i32_67 : i32 to vector<8x512xi32>
    %229 = arith.select %227, %225, %228 : vector<8x512xi1>, vector<8x512xi32>
    %cst_68 = arith.constant dense<2147483647> : vector<8xi32>
    %230 = vector.multi_reduction <minsi>, %229, %cst_68 [1] : vector<8x512xi32> to vector<8xi32>
    %231 = vector.shape_cast %230 : vector<8xi32> to vector<8x1xi32>
    %232 = arith.minsi %215, %231 : vector<8x1xi32>
    %233 = vector.extract_strided_slice %160 {offsets = [0, 2048], sizes = [8, 512], strides = [1, 1]} : vector<8x3072xf32> to vector<8x512xf32>
    %234 = vector.broadcast %162 : vector<8x1xf32> to vector<8x512xf32>
    %235 = arith.subf %233, %234 : vector<8x512xf32>
    %236 = math.exp %235 : vector<8x512xf32>
    %cst_69 = arith.constant dense<0.000000e+00> : vector<8xf32>
    %237 = vector.multi_reduction <add>, %236, %cst_69 [1] : vector<8x512xf32> to vector<8xf32>
    %238 = vector.shape_cast %237 : vector<8xf32> to vector<8x1xf32>
    %239 = arith.addf %222, %238 : vector<8x1xf32>
    %240 = tpu.iota {dimensions = array<i32: 1>} : vector<8x512xi32>
    %c2048_i32 = arith.constant 2048 : i32
    %241 = vector.broadcast %c2048_i32 : i32 to vector<8x512xi32>
    %242 = arith.addi %240, %241 : vector<8x512xi32>
    %243 = vector.broadcast %162 : vector<8x1xf32> to vector<8x512xf32>
    %244 = arith.cmpf oeq, %233, %243 : vector<8x512xf32>
    %c3072_i32_70 = arith.constant 3072 : i32
    %245 = vector.broadcast %c3072_i32_70 : i32 to vector<8x512xi32>
    %246 = arith.select %244, %242, %245 : vector<8x512xi1>, vector<8x512xi32>
    %cst_71 = arith.constant dense<2147483647> : vector<8xi32>
    %247 = vector.multi_reduction <minsi>, %246, %cst_71 [1] : vector<8x512xi32> to vector<8xi32>
    %248 = vector.shape_cast %247 : vector<8xi32> to vector<8x1xi32>
    %249 = arith.minsi %232, %248 : vector<8x1xi32>
    %250 = vector.extract_strided_slice %160 {offsets = [0, 2560], sizes = [8, 512], strides = [1, 1]} : vector<8x3072xf32> to vector<8x512xf32>
    %251 = vector.broadcast %162 : vector<8x1xf32> to vector<8x512xf32>
    %252 = arith.subf %250, %251 : vector<8x512xf32>
    %253 = math.exp %252 : vector<8x512xf32>
    %cst_72 = arith.constant dense<0.000000e+00> : vector<8xf32>
    %254 = vector.multi_reduction <add>, %253, %cst_72 [1] : vector<8x512xf32> to vector<8xf32>
    %255 = vector.shape_cast %254 : vector<8xf32> to vector<8x1xf32>
    %256 = arith.addf %239, %255 : vector<8x1xf32>
    %257 = tpu.iota {dimensions = array<i32: 1>} : vector<8x512xi32>
    %c2560_i32 = arith.constant 2560 : i32
    %258 = vector.broadcast %c2560_i32 : i32 to vector<8x512xi32>
    %259 = arith.addi %257, %258 : vector<8x512xi32>
    %260 = vector.broadcast %162 : vector<8x1xf32> to vector<8x512xf32>
    %261 = arith.cmpf oeq, %250, %260 : vector<8x512xf32>
    %c3072_i32_73 = arith.constant 3072 : i32
    %262 = vector.broadcast %c3072_i32_73 : i32 to vector<8x512xi32>
    %263 = arith.select %261, %259, %262 : vector<8x512xi1>, vector<8x512xi32>
    %cst_74 = arith.constant dense<2147483647> : vector<8xi32>
    %264 = vector.multi_reduction <minsi>, %263, %cst_74 [1] : vector<8x512xi32> to vector<8xi32>
    %265 = vector.shape_cast %264 : vector<8xi32> to vector<8x1xi32>
    %266 = arith.minsi %249, %265 : vector<8x1xi32>
    %267 = math.log %256 : vector<8x1xf32>
    %268 = arith.addf %162, %267 : vector<8x1xf32>
    %269 = vector.broadcast %268 : vector<8x1xf32> to vector<8x3072xf32>
    %270 = arith.subf %160, %269 : vector<8x3072xf32>
    %c0_75 = arith.constant 0 : index
    %c0_76 = arith.constant 0 : index
    %271 = vector.load %arg9[%c0_75, %c0_76] : memref<8x3072xf32, #tpu.memory_space<vmem>>, vector<8x3072xf32>
    tpu.vector_store %arg9[%c0_75, %c0_76], %270 {strides = array<i32>} : memref<8x3072xf32, #tpu.memory_space<vmem>>, vector<8x3072xf32>,
    %c0_77 = arith.constant 0 : index
    %c0_78 = arith.constant 0 : index
    %272 = vector.load %arg10[%c0_77, %c0_78] : memref<8x1xi32, #tpu.memory_space<vmem>>, vector<8x1xi32>
    tpu.vector_store %arg10[%c0_77, %c0_78], %266 {strides = array<i32>} : memref<8x1xi32, #tpu.memory_space<vmem>>, vector<8x1xi32>,
    return
  }
  func.func @transform_0(%arg0: i32) -> (i32, i32) {
    %c0_i32 = arith.constant 0 : i32
    %c0_i32_0 = arith.constant 0 : i32
    %c0_i32_1 = arith.constant 0 : i32
    return %c0_i32, %c0_i32_0 : i32, i32
  }
  func.func @transform_1(%arg0: i32) -> (i32, i32) {
    %c0_i32 = arith.constant 0 : i32
    %c0_i32_0 = arith.constant 0 : i32
    %c0_i32_1 = arith.constant 0 : i32
    return %c0_i32, %c0_i32_0 : i32, i32
  }
  func.func @transform_2(%arg0: i32) -> (i32, i32) {
    %c0_i32 = arith.constant 0 : i32
    %c0_i32_0 = arith.constant 0 : i32
    %c0_i32_1 = arith.constant 0 : i32
    return %c0_i32, %c0_i32_0 : i32, i32
  }
  func.func @transform_3(%arg0: i32) -> (i32, i32) {
    %c0_i32 = arith.constant 0 : i32
    %c0_i32_0 = arith.constant 0 : i32
    %c0_i32_1 = arith.constant 0 : i32
    return %c0_i32, %c0_i32_0 : i32, i32
  }
  func.func @transform_4(%arg0: i32) -> (i32, i32) {
    %c0_i32 = arith.constant 0 : i32
    %c0_i32_0 = arith.constant 0 : i32
    %c0_i32_1 = arith.constant 0 : i32
    return %c0_i32, %c0_i32_0 : i32, i32
  }
  func.func @transform_5(%arg0: i32) -> (i32, i32) {
    %c0_i32 = arith.constant 0 : i32
    %c0_i32_0 = arith.constant 0 : i32
    %c0_i32_1 = arith.constant 0 : i32
    return %c0_i32, %c0_i32_0 : i32, i32
  }
  func.func @transform_7(%arg0: i32) -> (i32, i32) {
    %c0_i32 = arith.constant 0 : i32
    %c0_i32_0 = arith.constant 0 : i32
    %c0_i32_1 = arith.constant 0 : i32
    return %c0_i32, %c0_i32_0 : i32, i32
  }
  func.func @transform_8(%arg0: i32) -> (i32, i32) {
    %c0_i32 = arith.constant 0 : i32
    %c0_i32_0 = arith.constant 0 : i32
    %c0_i32_1 = arith.constant 0 : i32
    return %c0_i32, %c0_i32_0 : i32, i32
  }
  func.func @transform_9(%arg0: i32) -> (i32, i32) {
    %c0_i32 = arith.constant 0 : i32
    %c0_i32_0 = arith.constant 0 : i32
    %c0_i32_1 = arith.constant 0 : i32
    return %c0_i32, %c0_i32_0 : i32, i32
  }
  func.func @transform_10(%arg0: i32) -> (i32, i32) {
    %c0_i32 = arith.constant 0 : i32
    %c0_i32_0 = arith.constant 0 : i32
    %c0_i32_1 = arith.constant 0 : i32
    return %c0_i32, %c0_i32_0 : i32, i32
  }
  func.func @transform_11(%arg0: i32) -> (i32, i32) {
    %c0_i32 = arith.constant 0 : i32
    %c0_i32_0 = arith.constant 0 : i32
    %c0_i32_1 = arith.constant 0 : i32
    return %c0_i32, %c0_i32_0 : i32, i32
  }
}

</mosaic_0001>

<llo_original>
// kernel: decoder_forward.1
$region0: #{decoder_forward.1}
  #allocation0 [shape = 'u32[]', space=smem, size = 0x4, offset = 0x4, fixed_abs, tag = 'smem constant byte address 0x4 - core index']
  #allocation1 [shape = 'u32[144,128]{1,0:T(1,128)}', space=vmem, size = 0x12000, scoped, tag = 'internal scratch']
  #allocation2 [shape = 'f32[8,256]{1,0:T(8,128)}', space=vmem, size = 0x2000, scoped, tag = 'scratch operand']
  #allocation3 [shape = 'bf16[256,3072]{1,0:T(8,128)(2,1)}', space=vmem, size = 0x180000, scoped, tag = 'scratch operand']
  #allocation4 [shape = 's32[1]{0}', space=sflag, size = 0x4, scoped, tag = 'scratch operand']
  #allocation21 [shape = 's32[]', space=sflag, size = 0x4, offset = 0, fixed_abs, tag = 'sflag constant byte address 0x0 - dummy sync flag']
  #allocation22 [shape = 's32[]', space=sflag, size = 0x4, offset = 0, fixed_abs, tag = 'sflag constant byte address 0x0 - dummy sync flag']
  #allocation23 [shape = 'u32[]', space=smem, size = 0x4, offset = 0x44, fixed_abs, tag = 'smem constant byte address 0x44 - assertion arg 0']
  #allocation24 [shape = 'u32[]', space=smem, size = 0x4, offset = 0x48, fixed_abs, tag = 'smem constant byte address 0x48 - assertion arg 1']
  %s0 = inlined_call_operand.hbm [shape: f32[8,32], index: 0, kind: input, shape index: {}]
  %s1 = inlined_call_operand.hbm [shape: f32[2,256], index: 1, kind: input, shape index: {}]
  %s2 = inlined_call_operand.hbm [shape: f32[2,256], index: 2, kind: input, shape index: {}]
  %s3 = inlined_call_operand.hbm [shape: f32[32,1024], index: 3, kind: input, shape index: {}]
  %s4 = inlined_call_operand.hbm [shape: f32[256,1024], index: 4, kind: input, shape index: {}]
  %s5 = inlined_call_operand.hbm [shape: f32[1,1024], index: 5, kind: input, shape index: {}]
  %s6 = inlined_call_operand.hbm [shape: bf16[256,3072], index: 6, kind: input, shape index: {}]
  %s7 = inlined_call_operand.hbm [shape: f32[1,3072], index: 7, kind: input, shape index: {}]
  %s8 = inlined_call_operand.hbm [shape: f32[8,3072], index: 8, kind: output, shape index: {0}]
  %s9 = inlined_call_operand.vmem [shape: s32[8,1], index: 9, kind: output, shape index: {1}]
  %s10 = inlined_call_operand.hbm [shape: f32[2,256], index: 10, kind: output, shape index: {2}]
  %s11 = inlined_call_operand.hbm [shape: f32[2,256], index: 11, kind: output, shape index: {3}]
  %12 = xla_tuple %s8, %s9, %s10, %s11
  %s13 = sld [smem:[#allocation0]]
  $region94: #{decoder_forward.1} parent=0
    _
  %s15 = ssub.s32 1, %s13
  %s16 = scalar_select 0, %s15, %s13
  $region1: #{decoder_forward.1} parent=0
    #allocation5 [shape = 'u8[4096]{0}', space=vmem, size = 0x1000, scoped, tag = 'input window, operand 0, single buffered']
    #allocation6 [shape = 's32[1]{0}', space=sflag, size = 0x4, scoped, tag = 'scoped memory for decoder_forward.1']
    #allocation7 [shape = 's32[1]{0}', space=sflag, size = 0x4, scoped, tag = 'scoped memory for decoder_forward.1']
    #allocation8 [shape = 'u8[2048]{0}', space=vmem, size = 0x800, scoped, tag = 'input window, operand 1, single buffered']
    #allocation9 [shape = 's32[1]{0}', space=sflag, size = 0x4, scoped, tag = 'scoped memory for decoder_forward.1']
    #allocation10 [shape = 'u8[2048]{0}', space=vmem, size = 0x800, scoped, tag = 'input window, operand 2, single buffered']
    #allocation11 [shape = 'u8[131072]{0}', space=vmem, size = 0x20000, scoped, tag = 'input window, operand 3, single buffered']
    #allocation12 [shape = 's32[1]{0}', space=sflag, size = 0x4, scoped, tag = 'scoped memory for decoder_forward.1']
    #allocation13 [shape = 'u8[1048576]{0}', space=vmem, size = 0x100000, scoped, tag = 'input window, operand 4, single buffered']
    #allocation14 [shape = 'u8[4096]{0}', space=vmem, size = 0x1000, scoped, tag = 'input window, operand 5, single buffered']
    #allocation15 [shape = 's32[1]{0}', space=sflag, size = 0x4, scoped, tag = 'scoped memory for decoder_forward.1']
    #allocation16 [shape = 'u8[12288]{0}', space=vmem, size = 0x3000, scoped, tag = 'input window, operand 7, single buffered']
    #allocation17 [shape = 'u8[98304]{0}', space=vmem, size = 0x18000, scoped, tag = 'output window, operand 0, single buffered']
    #allocation18 [shape = 'u8[2048]{0}', space=vmem, size = 0x800, scoped, tag = 'output window, operand 2, single buffered']
    #allocation19 [shape = 's32[1]{0}', space=sflag, size = 0x4, scoped, tag = 'scoped memory for decoder_forward.1']
    #allocation20 [shape = 'u8[2048]{0}', space=vmem, size = 0x800, scoped, tag = 'output window, operand 3, single buffered']
    %17 = vsyncpa [#allocation6], 0
    %18 = vsyncpa [#allocation9], 0
    %19 = vsyncpa [#allocation12], 0
    %20 = vsyncpa [#allocation15], 0
    %21 = vsyncpa [#allocation7], 0
    %22 = vsyncpa [#allocation19], 0
    // Predicated region
    $region2: #{decoder_forward.1} parent=1 // pred_check
      _
    $region3: #{decoder_forward.1} parent=1 // pred_check_branch
      %24 = sbr.rel (0) target = $region5
    $region4: #{decoder_forward.1} parent=1 // pred_region
      %s26 = ssub.s32 128, 128
      %27 = vsyncadd [#allocation6], %s26
      %s29 = sshll.u32 [#allocation5], 4
      %s30 = int_to_ptr.vmem [resolvable:$true] %s29
      %32 = dma.hbm_to_vmem [thread:$0]  %s0, 128, %s30, [#allocation6]
    $region5: #{decoder_forward.1} parent=1 // pred_fallthru
      _
    // Predicated region
    $region6: #{decoder_forward.1} parent=1 // pred_check
      _
    $region7: #{decoder_forward.1} parent=1 // pred_check_branch
      %34 = sbr.rel (0) target = $region9
    $region8: #{decoder_forward.1} parent=1 // pred_region
      %s36 = ssub.s32 64, 64
      %37 = vsyncadd [#allocation9], %s36
      %s39 = sshll.u32 [#allocation8], 4
      %s40 = int_to_ptr.vmem [resolvable:$true] %s39
      %42 = dma.hbm_to_vmem [thread:$0]  %s1, 64, %s40, [#allocation9]
    $region9: #{decoder_forward.1} parent=1 // pred_fallthru
      _
    // Predicated region
    $region10: #{decoder_forward.1} parent=1 // pred_check
      _
    $region11: #{decoder_forward.1} parent=1 // pred_check_branch
      %44 = sbr.rel (0) target = $region13
    $region12: #{decoder_forward.1} parent=1 // pred_region
      %s46 = ssub.s32 64, 64
      %47 = vsyncadd [#allocation9], %s46
      %s49 = sshll.u32 [#allocation10], 4
      %s50 = int_to_ptr.vmem [resolvable:$true] %s49
      %52 = dma.hbm_to_vmem [thread:$0]  %s2, 64, %s50, [#allocation9]
    $region13: #{decoder_forward.1} parent=1 // pred_fallthru
      _
    // Predicated region
    $region14: #{decoder_forward.1} parent=1 // pred_check
      _
    $region15: #{decoder_forward.1} parent=1 // pred_check_branch
      %54 = sbr.rel (0) target = $region17
    $region16: #{decoder_forward.1} parent=1 // pred_region
      %s56 = ssub.s32 4096, 4096
      %57 = vsyncadd [#allocation12], %s56
      %s58 = sshll.u32 [#allocation11], 4
      %s59 = int_to_ptr.vmem [resolvable:$true] %s58
      %64 = dma.hbm_to_vmem [thread:$0]  %s3, 4096, %s59, [#allocation12], 1024, 1024, 64
    $region17: #{decoder_forward.1} parent=1 // pred_fallthru
      _
    // Predicated region
    $region18: #{decoder_forward.1} parent=1 // pred_check
      _
    $region19: #{decoder_forward.1} parent=1 // pred_check_branch
      %66 = sbr.rel (0) target = $region21
    $region20: #{decoder_forward.1} parent=1 // pred_region
      %s68 = ssub.s32 32768, 32768
      %69 = vsyncadd [#allocation12], %s68
      %s70 = sshll.u32 [#allocation13], 4
      %s71 = int_to_ptr.vmem [resolvable:$true] %s70
      %76 = dma.hbm_to_vmem [thread:$0]  %s4, 32768, %s71, [#allocation12], 1024, 1024, 64
    $region21: #{decoder_forward.1} parent=1 // pred_fallthru
      _
    // Predicated region
    $region22: #{decoder_forward.1} parent=1 // pred_check
      _
    $region23: #{decoder_forward.1} parent=1 // pred_check_branch
      %78 = sbr.rel (0) target = $region25
    $region24: #{decoder_forward.1} parent=1 // pred_region
      %s80 = ssub.s32 128, 128
      %81 = vsyncadd [#allocation15], %s80
      %s83 = sshll.u32 [#allocation14], 4
      %s84 = int_to_ptr.vmem [resolvable:$true] %s83
      %86 = dma.hbm_to_vmem [thread:$0]  %s5, 128, %s84, [#allocation15]
    $region25: #{decoder_forward.1} parent=1 // pred_fallthru
      _
    // Predicated region
    $region26: #{decoder_forward.1} parent=1 // pred_check
      _
    $region27: #{decoder_forward.1} parent=1 // pred_check_branch
      %88 = sbr.rel (0) target = $region29
    $region28: #{decoder_forward.1} parent=1 // pred_region
      %s90 = ssub.s32 384, 384
      %91 = vsyncadd [#allocation15], %s90
      %s93 = sshll.u32 [#allocation16], 4
      %s94 = int_to_ptr.vmem [resolvable:$true] %s93
      %96 = dma.hbm_to_vmem [thread:$0]  %s7, 384, %s94, [#allocation15]
    $region29: #{decoder_forward.1} parent=1 // pred_fallthru
      _
    // Predicated region
    $region30: #{decoder_forward.1} parent=1 // pred_check
      _
    $region31: #{decoder_forward.1} parent=1 // pred_check_branch
      %98 = sbr.rel (0) target = $region33
    $region32: #{decoder_forward.1} parent=1 // pred_region
      %99 = dma.done [#allocation6], 128
    $region33: #{decoder_forward.1} parent=1 // pred_fallthru
      _
    // Predicated region
    $region34: #{decoder_forward.1} parent=1 // pred_check
      _
    $region35: #{decoder_forward.1} parent=1 // pred_check_branch
      %101 = sbr.rel (0) target = $region37
    $region36: #{decoder_forward.1} parent=1 // pred_region
      %102 = dma.done [#allocation9], 64
    $region37: #{decoder_forward.1} parent=1 // pred_fallthru
      _
    // Predicated region
    $region38: #{decoder_forward.1} parent=1 // pred_check
      _
    $region39: #{decoder_forward.1} parent=1 // pred_check_branch
      %104 = sbr.rel (0) target = $region41
    $region40: #{decoder_forward.1} parent=1 // pred_region
      %105 = dma.done [#allocation9], 64
    $region41: #{decoder_forward.1} parent=1 // pred_fallthru
      _
    // Predicated region
    $region42: #{decoder_forward.1} parent=1 // pred_check
      _
    $region43: #{decoder_forward.1} parent=1 // pred_check_branch
      %107 = sbr.rel (0) target = $region45
    $region44: #{decoder_forward.1} parent=1 // pred_region
      %108 = dma.done [#allocation12], 4096
    $region45: #{decoder_forward.1} parent=1 // pred_fallthru
      _
    // Predicated region
    $region46: #{decoder_forward.1} parent=1 // pred_check
      _
    $region47: #{decoder_forward.1} parent=1 // pred_check_branch
      %110 = sbr.rel (0) target = $region49
    $region48: #{decoder_forward.1} parent=1 // pred_region
      %111 = dma.done [#allocation12], 32768
    $region49: #{decoder_forward.1} parent=1 // pred_fallthru
      _
    // Predicated region
    $region50: #{decoder_forward.1} parent=1 // pred_check
      _
    $region51: #{decoder_forward.1} parent=1 // pred_check_branch
      %113 = sbr.rel (0) target = $region53
    $region52: #{decoder_forward.1} parent=1 // pred_region
      %114 = dma.done [#allocation15], 128
    $region53: #{decoder_forward.1} parent=1 // pred_fallthru
      _
    // Predicated region
    $region54: #{decoder_forward.1} parent=1 // pred_check
      _
    $region55: #{decoder_forward.1} parent=1 // pred_check_branch
      %116 = sbr.rel (0) target = $region57
    $region56: #{decoder_forward.1} parent=1 // pred_region
      %117 = dma.done [#allocation15], 384
    $region57: #{decoder_forward.1} parent=1 // pred_fallthru
      _
    // Predicated region
    $region58: #{decoder_forward.1} parent=1 // pred_check
      _
    $region59: #{decoder_forward.1} parent=1 // pred_check_branch
      %119 = sbr.rel target = $region61
    $region60: #{decoder_forward.1} parent=1 // pred_region
      %120 = sst [smem:[#allocation23]] [#allocation22]
      %121 = sst [smem:[#allocation24]] [#allocation21]
    $region61: #{decoder_forward.1} parent=1 // pred_fallthru
      _
    %123 = shalt.err (0)
    %s125 = sshll.u32 [#allocation3], 4
    %s126 = int_to_ptr.vmem [resolvable:$true] %s125
    %128 = dma.hbm_to_vmem [thread:$0]  %s6, 49152, %s126, [#allocation4]
    %v129 = vld [vmem:[#allocation5] sm:$0xff]
    %v130 = vld [vmem:[#allocation11] sm:$0xff]
    %v131 = vld [vmem:[#allocation11 + $0x8] sm:$0xff]
    %v132 = vld [vmem:[#allocation11 + $0x10] sm:$0xff]
    %v133 = vld [vmem:[#allocation11 + $0x18] sm:$0xff]
    %v134 = vld [vmem:[#allocation11 + $0x20] sm:$0xff]
    %v135 = vld [vmem:[#allocation11 + $0x28] sm:$0xff]
    %v136 = vld [vmem:[#allocation11 + $0x30] sm:$0xff]
    %v137 = vld [vmem:[#allocation11 + $0x38] sm:$0xff]
    %v138 = vld [vmem:[#allocation11 + $0x40] sm:$0xff]
    %v139 = vld [vmem:[#allocation11 + $0x48] sm:$0xff]
    %v140 = vld [vmem:[#allocation11 + $0x50] sm:$0xff]
    %v141 = vld [vmem:[#allocation11 + $0x58] sm:$0xff]
    %v142 = vld [vmem:[#allocation11 + $0x60] sm:$0xff]
    %v143 = vld [vmem:[#allocation11 + $0x68] sm:$0xff]
    %v144 = vld [vmem:[#allocation11 + $0x70] sm:$0xff]
    %v145 = vld [vmem:[#allocation11 + $0x78] sm:$0xff]
    %v146 = vld [vmem:[#allocation11 + $0x80] sm:$0xff]
    %v147 = vld [vmem:[#allocation11 + $0x88] sm:$0xff]
    %v148 = vld [vmem:[#allocation11 + $0x90] sm:$0xff]
    %v149 = vld [vmem:[#allocation11 + $0x98] sm:$0xff]
    %v150 = vld [vmem:[#allocation11 + $0xa0] sm:$0xff]
    %v151 = vld [vmem:[#allocation11 + $0xa8] sm:$0xff]
    %v152 = vld [vmem:[#allocation11 + $0xb0] sm:$0xff]
    %v153 = vld [vmem:[#allocation11 + $0xb8] sm:$0xff]
    %v154 = vld [vmem:[#allocation11 + $0xc0] sm:$0xff]
    %v155 = vld [vmem:[#allocation11 + $0xc8] sm:$0xff]
    %v156 = vld [vmem:[#allocation11 + $0xd0] sm:$0xff]
    %v157 = vld [vmem:[#allocation11 + $0xd8] sm:$0xff]
    %v158 = vld [vmem:[#allocation11 + $0xe0] sm:$0xff]
    %v159 = vld [vmem:[#allocation11 + $0xe8] sm:$0xff]
    %v160 = vld [vmem:[#allocation11 + $0xf0] sm:$0xff]
    %v161 = vld [vmem:[#allocation11 + $0xf8] sm:$0xff]
    %v162 = vld [vmem:[#allocation14] sm:$0xff]
    %v164 = vlaneseq
    %v165 = vshrl.u32 %v164, 7
    %v166 = vsub.s32 0, %v165
    %v167 = vrot.slane %v162, %v166
    %v168 = vlaneseq
    %v169 = vshrl.u32 %v168, 7
    %v170 = vsub.s32 1, %v169
    %v171 = vrot.slane %v162, %v170
    %v172 = vlaneseq
    %v173 = vshrl.u32 %v172, 7
    %v174 = vsub.s32 2, %v173
    %v175 = vrot.slane %v162, %v174
    %v176 = vlaneseq
    %v177 = vshrl.u32 %v176, 7
    %v178 = vsub.s32 3, %v177
    %v179 = vrot.slane %v162, %v178
    %v180 = vlaneseq
    %v181 = vshrl.u32 %v180, 7
    %v182 = vsub.s32 4, %v181
    %v183 = vrot.slane %v162, %v182
    %v184 = vlaneseq
    %v185 = vshrl.u32 %v184, 7
    %v186 = vsub.s32 5, %v185
    %v187 = vrot.slane %v162, %v186
    %v188 = vlaneseq
    %v189 = vshrl.u32 %v188, 7
    %v190 = vsub.s32 6, %v189
    %v191 = vrot.slane %v162, %v190
    %v192 = vlaneseq
    %v193 = vshrl.u32 %v192, 7
    %v194 = vsub.s32 7, %v193
    %v195 = vrot.slane %v162, %v194
    %vm204 = vcmask 261120
    %v206 = vsel %vm204, %v129, 0
    %208 = vmatprep.subr.mxu0 0.0
    %209 = vmatpush1.msra.mxu0 0.0
    %210 = vmatprep.subr.mxu0 0.0
    %211 = vmatpush1.msra.mxu0 0.0
    %212 = vmatprep.subr.mxu0 0.0
    %213 = vmatpush1.msra.mxu0 0.0
    %214 = vmatprep.subr.mxu0 0.0
    %215 = vmatpush1.msra.mxu0 0.0
    %216 = vmatprep.subr.mxu0 0.0
    %217 = vmatpush1.msra.mxu0 0.0
    %218 = vmatprep.subr.mxu0 0.0
    %219 = vmatpush1.msra.mxu0 0.0
    %220 = vmatprep.subr.mxu0 0.0
    %221 = vmatpush1.msra.mxu0 0.0
    %222 = vmatprep.subr.mxu0 0.0
    %223 = vmatpush1.msra.mxu0 0.0
    %224 = vmatprep.subr.mxu0 0.0
    %225 = vmatpush1.msra.mxu0 0.0
    %226 = vmatprep.subr.mxu0 0.0
    %227 = vmatpush1.msra.mxu0 0.0
    %228 = vmatprep.subr.mxu0 0.0
    %229 = vmatpush1.msra.mxu0 0.0
    %230 = vmatprep.subr.mxu0 0.0
    %231 = vmatpush1.msra.mxu0 0.0
    %232 = vmatprep.subr.mxu0 %v155
    %233 = vmatpush1.msra.mxu0 %v154
    %234 = vmatprep.subr.mxu0 %v147
    %235 = vmatpush1.msra.mxu0 %v146
    %236 = vmatprep.subr.mxu0 %v139
    %237 = vmatpush1.msra.mxu0 %v138
    %238 = vmatprep.subr.mxu0 %v131
    %239 = vmatpush1.msra.mxu0 %v130
    %240 = vmatprep.subr.mxu0 0.0
    %241 = vmatpush2.msra.mxu0 0.0
    %242 = vmatprep.subr.mxu0 0.0
    %243 = vmatpush2.msra.mxu0 0.0
    %244 = vmatprep.subr.mxu0 0.0
    %245 = vmatpush2.msra.mxu0 0.0
    %246 = vmatprep.subr.mxu0 0.0
    %247 = vmatpush2.msra.mxu0 0.0
    %248 = vmatprep.subr.mxu0 0.0
    %249 = vmatpush2.msra.mxu0 0.0
    %250 = vmatprep.subr.mxu0 0.0
    %251 = vmatpush2.msra.mxu0 0.0
    %252 = vmatprep.subr.mxu0 0.0
    %253 = vmatpush2.msra.mxu0 0.0
    %254 = vmatprep.subr.mxu0 0.0
    %255 = vmatpush2.msra.mxu0 0.0
    %256 = vmatprep.subr.mxu0 0.0
    %257 = vmatpush2.msra.mxu0 0.0
    %258 = vmatprep.subr.mxu0 0.0
    %259 = vmatpush2.msra.mxu0 0.0
    %260 = vmatprep.subr.mxu0 0.0
    %261 = vmatpush2.msra.mxu0 0.0
    %262 = vmatprep.subr.mxu0 0.0
    %263 = vmatpush2.msra.mxu0 0.0
    %264 = vmatprep.subr.mxu0 0.0
    %265 = vmatpush2.msra.mxu0 0.0
    %266 = vmatprep.subr.mxu0 0.0
    %267 = vmatpush2.msra.mxu0 0.0
    %268 = vmatprep.subr.mxu0 0.0
    %269 = vmatpush2.msra.mxu0 0.0
    %270 = vmatprep.subr.mxu0 0.0
    %271 = vmatpush2.msra.mxu0 0.0
    %272 = vmatprep.mubr.f32.mxu0 0.0
    %273 = vmatmul.mubr.f32.gmra.mxu0 %v206
    %v274 = vpop.f32.mrf.mxu0
    %v275 = vadd.f32 %v167, %v274
    %v276 = vpop.f32.mrf.mxu0
    %v277 = vadd.f32 %v171, %v276
    %278 = vdwg.mxu0
    %279 = vmatprep.subr.mxu0 0.0
    %280 = vmatpush1.msra.mxu0 0.0
    %281 = vmatprep.subr.mxu0 0.0
    %282 = vmatpush1.msra.mxu0 0.0
    %283 = vmatprep.subr.mxu0 0.0
    %284 = vmatpush1.msra.mxu0 0.0
    %285 = vmatprep.subr.mxu0 0.0
    %286 = vmatpush1.msra.mxu0 0.0
    %287 = vmatprep.subr.mxu0 0.0
    %288 = vmatpush1.msra.mxu0 0.0
    %289 = vmatprep.subr.mxu0 0.0
    %290 = vmatpush1.msra.mxu0 0.0
    %291 = vmatprep.subr.mxu0 0.0
    %292 = vmatpush1.msra.mxu0 0.0
    %293 = vmatprep.subr.mxu0 0.0
    %294 = vmatpush1.msra.mxu0 0.0
    %295 = vmatprep.subr.mxu0 0.0
    %296 = vmatpush1.msra.mxu0 0.0
    %297 = vmatprep.subr.mxu0 0.0
    %298 = vmatpush1.msra.mxu0 0.0
    %299 = vmatprep.subr.mxu0 0.0
    %300 = vmatpush1.msra.mxu0 0.0
    %301 = vmatprep.subr.mxu0 0.0
    %302 = vmatpush1.msra.mxu0 0.0
    %303 = vmatprep.subr.mxu0 %v157
    %304 = vmatpush1.msra.mxu0 %v156
    %305 = vmatprep.subr.mxu0 %v149
    %306 = vmatpush1.msra.mxu0 %v148
    %307 = vmatprep.subr.mxu0 %v141
    %308 = vmatpush1.msra.mxu0 %v140
    %309 = vmatprep.subr.mxu0 %v133
    %310 = vmatpush1.msra.mxu0 %v132
    %311 = vmatprep.subr.mxu0 0.0
    %312 = vmatpush2.msra.mxu0 0.0
    %313 = vmatprep.subr.mxu0 0.0
    %314 = vmatpush2.msra.mxu0 0.0
    %315 = vmatprep.subr.mxu0 0.0
    %316 = vmatpush2.msra.mxu0 0.0
    %317 = vmatprep.subr.mxu0 0.0
    %318 = vmatpush2.msra.mxu0 0.0
    %319 = vmatprep.subr.mxu0 0.0
    %320 = vmatpush2.msra.mxu0 0.0
    %321 = vmatprep.subr.mxu0 0.0
    %322 = vmatpush2.msra.mxu0 0.0
    %323 = vmatprep.subr.mxu0 0.0
    %324 = vmatpush2.msra.mxu0 0.0
    %325 = vmatprep.subr.mxu0 0.0
    %326 = vmatpush2.msra.mxu0 0.0
    %327 = vmatprep.subr.mxu0 0.0
    %328 = vmatpush2.msra.mxu0 0.0
    %329 = vmatprep.subr.mxu0 0.0
    %330 = vmatpush2.msra.mxu0 0.0
    %331 = vmatprep.subr.mxu0 0.0
    %332 = vmatpush2.msra.mxu0 0.0
    %333 = vmatprep.subr.mxu0 0.0
    %334 = vmatpush2.msra.mxu0 0.0
    %335 = vmatprep.subr.mxu0 0.0
    %336 = vmatpush2.msra.mxu0 0.0
    %337 = vmatprep.subr.mxu0 0.0
    %338 = vmatpush2.msra.mxu0 0.0
    %339 = vmatprep.subr.mxu0 0.0
    %340 = vmatpush2.msra.mxu0 0.0
    %341 = vmatprep.subr.mxu0 0.0
    %342 = vmatpush2.msra.mxu0 0.0
    %343 = vmatprep.mubr.f32.mxu0 0.0
    %344 = vmatmul.mubr.f32.gmra.mxu0 %v206
    %v345 = vpop.f32.mrf.mxu0
    %v346 = vadd.f32 %v175, %v345
    %v347 = vpop.f32.mrf.mxu0
    %v348 = vadd.f32 %v179, %v347
    %349 = vdwg.mxu0
    %350 = vmatprep.subr.mxu0 0.0
    %351 = vmatpush1.msra.mxu0 0.0
    %352 = vmatprep.subr.mxu0 0.0
    %353 = vmatpush1.msra.mxu0 0.0
    %354 = vmatprep.subr.mxu0 0.0
    %355 = vmatpush1.msra.mxu0 0.0
    %356 = vmatprep.subr.mxu0 0.0
    %357 = vmatpush1.msra.mxu0 0.0
    %358 = vmatprep.subr.mxu0 0.0
    %359 = vmatpush1.msra.mxu0 0.0
    %360 = vmatprep.subr.mxu0 0.0
    %361 = vmatpush1.msra.mxu0 0.0
    %362 = vmatprep.subr.mxu0 0.0
    %363 = vmatpush1.msra.mxu0 0.0
    %364 = vmatprep.subr.mxu0 0.0
    %365 = vmatpush1.msra.mxu0 0.0
    %366 = vmatprep.subr.mxu0 0.0
    %367 = vmatpush1.msra.mxu0 0.0
    %368 = vmatprep.subr.mxu0 0.0
    %369 = vmatpush1.msra.mxu0 0.0
    %370 = vmatprep.subr.mxu0 0.0
    %371 = vmatpush1.msra.mxu0 0.0
    %372 = vmatprep.subr.mxu0 0.0
    %373 = vmatpush1.msra.mxu0 0.0
    %374 = vmatprep.subr.mxu0 %v159
    %375 = vmatpush1.msra.mxu0 %v158
    %376 = vmatprep.subr.mxu0 %v151
    %377 = vmatpush1.msra.mxu0 %v150
    %378 = vmatprep.subr.mxu0 %v143
    %379 = vmatpush1.msra.mxu0 %v142
    %380 = vmatprep.subr.mxu0 %v135
    %381 = vmatpush1.msra.mxu0 %v134
    %382 = vmatprep.subr.mxu0 0.0
    %383 = vmatpush2.msra.mxu0 0.0
    %384 = vmatprep.subr.mxu0 0.0
    %385 = vmatpush2.msra.mxu0 0.0
    %386 = vmatprep.subr.mxu0 0.0
    %387 = vmatpush2.msra.mxu0 0.0
    %388 = vmatprep.subr.mxu0 0.0
    %389 = vmatpush2.msra.mxu0 0.0
    %390 = vmatprep.subr.mxu0 0.0
    %391 = vmatpush2.msra.mxu0 0.0
    %392 = vmatprep.subr.mxu0 0.0
    %393 = vmatpush2.msra.mxu0 0.0
    %394 = vmatprep.subr.mxu0 0.0
    %395 = vmatpush2.msra.mxu0 0.0
    %396 = vmatprep.subr.mxu0 0.0
    %397 = vmatpush2.msra.mxu0 0.0
    %398 = vmatprep.subr.mxu0 0.0
    %399 = vmatpush2.msra.mxu0 0.0
    %400 = vmatprep.subr.mxu0 0.0
    %401 = vmatpush2.msra.mxu0 0.0
    %402 = vmatprep.subr.mxu0 0.0
    %403 = vmatpush2.msra.mxu0 0.0
    %404 = vmatprep.subr.mxu0 0.0
    %405 = vmatpush2.msra.mxu0 0.0
    %406 = vmatprep.subr.mxu0 0.0
    %407 = vmatpush2.msra.mxu0 0.0
    %408 = vmatprep.subr.mxu0 0.0
    %409 = vmatpush2.msra.mxu0 0.0
    %410 = vmatprep.subr.mxu0 0.0
    %411 = vmatpush2.msra.mxu0 0.0
    %412 = vmatprep.subr.mxu0 0.0
    %413 = vmatpush2.msra.mxu0 0.0
    %414 = vmatprep.mubr.f32.mxu0 0.0
    %415 = vmatmul.mubr.f32.gmra.mxu0 %v206
    %v416 = vpop.f32.mrf.mxu0
    %v417 = vadd.f32 %v183, %v416
    %v418 = vpop.f32.mrf.mxu0
    %v419 = vadd.f32 %v187, %v418
    %420 = vdwg.mxu0
    %421 = vmatprep.subr.mxu0 0.0
    %422 = vmatpush1.msra.mxu0 0.0
    %423 = vmatprep.subr.mxu0 0.0
    %424 = vmatpush1.msra.mxu0 0.0
    %425 = vmatprep.subr.mxu0 0.0
    %426 = vmatpush1.msra.mxu0 0.0
    %427 = vmatprep.subr.mxu0 0.0
    %428 = vmatpush1.msra.mxu0 0.0
    %429 = vmatprep.subr.mxu0 0.0
    %430 = vmatpush1.msra.mxu0 0.0
    %431 = vmatprep.subr.mxu0 0.0
    %432 = vmatpush1.msra.mxu0 0.0
    %433 = vmatprep.subr.mxu0 0.0
    %434 = vmatpush1.msra.mxu0 0.0
    %435 = vmatprep.subr.mxu0 0.0
    %436 = vmatpush1.msra.mxu0 0.0
    %437 = vmatprep.subr.mxu0 0.0
    %438 = vmatpush1.msra.mxu0 0.0
    %439 = vmatprep.subr.mxu0 0.0
    %440 = vmatpush1.msra.mxu0 0.0
    %441 = vmatprep.subr.mxu0 0.0
    %442 = vmatpush1.msra.mxu0 0.0
    %443 = vmatprep.subr.mxu0 0.0
    %444 = vmatpush1.msra.mxu0 0.0
    %445 = vmatprep.subr.mxu0 %v161
    %446 = vmatpush1.msra.mxu0 %v160
    %447 = vmatprep.subr.mxu0 %v153
    %448 = vmatpush1.msra.mxu0 %v152
    %449 = vmatprep.subr.mxu0 %v145
    %450 = vmatpush1.msra.mxu0 %v144
    %451 = vmatprep.subr.mxu0 %v137
    %452 = vmatpush1.msra.mxu0 %v136
    %453 = vmatprep.subr.mxu0 0.0
    %454 = vmatpush2.msra.mxu0 0.0
    %455 = vmatprep.subr.mxu0 0.0
    %456 = vmatpush2.msra.mxu0 0.0
    %457 = vmatprep.subr.mxu0 0.0
    %458 = vmatpush2.msra.mxu0 0.0
    %459 = vmatprep.subr.mxu0 0.0
    %460 = vmatpush2.msra.mxu0 0.0
    %461 = vmatprep.subr.mxu0 0.0
    %462 = vmatpush2.msra.mxu0 0.0
    %463 = vmatprep.subr.mxu0 0.0
    %464 = vmatpush2.msra.mxu0 0.0
    %465 = vmatprep.subr.mxu0 0.0
    %466 = vmatpush2.msra.mxu0 0.0
    %467 = vmatprep.subr.mxu0 0.0
    %468 = vmatpush2.msra.mxu0 0.0
    %469 = vmatprep.subr.mxu0 0.0
    %470 = vmatpush2.msra.mxu0 0.0
    %471 = vmatprep.subr.mxu0 0.0
    %472 = vmatpush2.msra.mxu0 0.0
    %473 = vmatprep.subr.mxu0 0.0
    %474 = vmatpush2.msra.mxu0 0.0
    %475 = vmatprep.subr.mxu0 0.0
    %476 = vmatpush2.msra.mxu0 0.0
    %477 = vmatprep.subr.mxu0 0.0
    %478 = vmatpush2.msra.mxu0 0.0
    %479 = vmatprep.subr.mxu0 0.0
    %480 = vmatpush2.msra.mxu0 0.0
    %481 = vmatprep.subr.mxu0 0.0
    %482 = vmatpush2.msra.mxu0 0.0
    %483 = vmatprep.subr.mxu0 0.0
    %484 = vmatpush2.msra.mxu0 0.0
    %485 = vmatprep.mubr.f32.mxu0 0.0
    %486 = vmatmul.mubr.f32.gmra.mxu0 %v206
    %v487 = vpop.f32.mrf.mxu0
    %v488 = vadd.f32 %v191, %v487
    %v489 = vpop.f32.mrf.mxu0
    %v490 = vadd.f32 %v195, %v489
    %491 = vdwg.mxu0
    %v492 = vld [vmem:[#allocation8] sm:$0xf]
    %v493 = vld [vmem:[#allocation10] sm:$0xf]
    %v502 = vrot.slane %v275, 3
    %v503 = vrot.slane %v277, 3
    %v504 = vrot.slane %v346, 3
    %v505 = vrot.slane %v348, 3
    %v506 = vrot.slane %v417, 3
    %v507 = vrot.slane %v419, 3
    %v508 = vrot.slane %v488, 3
    %v509 = vrot.slane %v490, 3
    %vm518 = vcmask 1040384
    %v519 = vsel %vm518, %v275, %v502
    %v520 = vsel %vm518, %v277, %v503
    %v521 = vsel %vm518, %v346, %v504
    %v522 = vsel %vm518, %v348, %v505
    %v523 = vsel %vm518, %v417, %v506
    %v524 = vsel %vm518, %v419, %v507
    %v525 = vsel %vm518, %v488, %v508
    %v526 = vsel %vm518, %v490, %v509
    %v527 = vld [vmem:[#allocation13] sm:$0xff]
    %v528 = vld [vmem:[#allocation13 + $0x8] sm:$0xff]
    %v529 = vld [vmem:[#allocation13 + $0x10] sm:$0xff]
    %v530 = vld [vmem:[#allocation13 + $0x18] sm:$0xff]
    %v531 = vld [vmem:[#allocation13 + $0x20] sm:$0xff]
    %v532 = vld [vmem:[#allocation13 + $0x28] sm:$0xff]
    %v533 = vld [vmem:[#allocation13 + $0x30] sm:$0xff]
    %v534 = vld [vmem:[#allocation13 + $0x38] sm:$0xff]
    %v535 = vld [vmem:[#allocation13 + $0x40] sm:$0xff]
    %v536 = vld [vmem:[#allocation13 + $0x48] sm:$0xff]
    %v537 = vld [vmem:[#allocation13 + $0x50] sm:$0xff]
    %v538 = vld [vmem:[#allocation13 + $0x58] sm:$0xff]
    %v539 = vld [vmem:[#allocation13 + $0x60] sm:$0xff]
    %v540 = vld [vmem:[#allocation13 + $0x68] sm:$0xff]
    %v541 = vld [vmem:[#allocation13 + $0x70] sm:$0xff]
    %v542 = vld [vmem:[#allocation13 + $0x78] sm:$0xff]
    %v543 = vld [vmem:[#allocation13 + $0x80] sm:$0xff]
    %v544 = vld [vmem:[#allocation13 + $0x88] sm:$0xff]
    %v545 = vld [vmem:[#allocation13 + $0x90] sm:$0xff]
    %v546 = vld [vmem:[#allocation13 + $0x98] sm:$0xff]
    %v547 = vld [vmem:[#allocation13 + $0xa0] sm:$0xff]
    %v548 = vld [vmem:[#allocation13 + $0xa8] sm:$0xff]
    %v549 = vld [vmem:[#allocation13 + $0xb0] sm:$0xff]
    %v550 = vld [vmem:[#allocation13 + $0xb8] sm:$0xff]
    %v551 = vld [vmem:[#allocation13 + $0xc0] sm:$0xff]
    %v552 = vld [vmem:[#allocation13 + $0xc8] sm:$0xff]
    %v553 = vld [vmem:[#allocation13 + $0xd0] sm:$0xff]
    %v554 = vld [vmem:[#allocation13 + $0xd8] sm:$0xff]
    %v555 = vld [vmem:[#allocation13 + $0xe0] sm:$0xff]
    %v556 = vld [vmem:[#allocation13 + $0xe8] sm:$0xff]
    %v557 = vld [vmem:[#allocation13 + $0xf0] sm:$0xff]
    %v558 = vld [vmem:[#allocation13 + $0xf8] sm:$0xff]
    %v559 = vld [vmem:[#allocation13 + $0x100] sm:$0xff]
    %v560 = vld [vmem:[#allocation13 + $0x108] sm:$0xff]
    %v561 = vld [vmem:[#allocation13 + $0x110] sm:$0xff]
    %v562 = vld [vmem:[#allocation13 + $0x118] sm:$0xff]
    %v563 = vld [vmem:[#allocation13 + $0x120] sm:$0xff]
    %v564 = vld [vmem:[#allocation13 + $0x128] sm:$0xff]
    %v565 = vld [vmem:[#allocation13 + $0x130] sm:$0xff]
    %v566 = vld [vmem:[#allocation13 + $0x138] sm:$0xff]
    %v567 = vld [vmem:[#allocation13 + $0x140] sm:$0xff]
    %v568 = vld [vmem:[#allocation13 + $0x148] sm:$0xff]
    %v569 = vld [vmem:[#allocation13 + $0x150] sm:$0xff]
    %v570 = vld [vmem:[#allocation13 + $0x158] sm:$0xff]
    %v571 = vld [vmem:[#allocation13 + $0x160] sm:$0xff]
    %v572 = vld [vmem:[#allocation13 + $0x168] sm:$0xff]
    %v573 = vld [vmem:[#allocation13 + $0x170] sm:$0xff]
    %v574 = vld [vmem:[#allocation13 + $0x178] sm:$0xff]
    %v575 = vld [vmem:[#allocation13 + $0x180] sm:$0xff]
    %v576 = vld [vmem:[#allocation13 + $0x188] sm:$0xff]
    %v577 = vld [vmem:[#allocation13 + $0x190] sm:$0xff]
    %v578 = vld [vmem:[#allocation13 + $0x198] sm:$0xff]
    %v579 = vld [vmem:[#allocation13 + $0x1a0] sm:$0xff]
    %v580 = vld [vmem:[#allocation13 + $0x1a8] sm:$0xff]
    %v581 = vld [vmem:[#allocation13 + $0x1b0] sm:$0xff]
    %v582 = vld [vmem:[#allocation13 + $0x1b8] sm:$0xff]
    %v583 = vld [vmem:[#allocation13 + $0x1c0] sm:$0xff]
    %v584 = vld [vmem:[#allocation13 + $0x1c8] sm:$0xff]
    %v585 = vld [vmem:[#allocation13 + $0x1d0] sm:$0xff]
    %v586 = vld [vmem:[#allocation13 + $0x1d8] sm:$0xff]
    %v587 = vld [vmem:[#allocation13 + $0x1e0] sm:$0xff]
    %v588 = vld [vmem:[#allocation13 + $0x1e8] sm:$0xff]
    %v589 = vld [vmem:[#allocation13 + $0x1f0] sm:$0xff]
    %v590 = vld [vmem:[#allocation13 + $0x1f8] sm:$0xff]
    %v591 = vld [vmem:[#allocation13 + $0x200] sm:$0xff]
    %v592 = vld [vmem:[#allocation13 + $0x208] sm:$0xff]
    %v593 = vld [vmem:[#allocation13 + $0x210] sm:$0xff]
    %v594 = vld [vmem:[#allocation13 + $0x218] sm:$0xff]
    %v595 = vld [vmem:[#allocation13 + $0x220] sm:$0xff]
    %v596 = vld [vmem:[#allocation13 + $0x228] sm:$0xff]
    %v597 = vld [vmem:[#allocation13 + $0x230] sm:$0xff]
    %v598 = vld [vmem:[#allocation13 + $0x238] sm:$0xff]
    %v599 = vld [vmem:[#allocation13 + $0x240] sm:$0xff]
    %v600 = vld [vmem:[#allocation13 + $0x248] sm:$0xff]
    %v601 = vld [vmem:[#allocation13 + $0x250] sm:$0xff]
    %v602 = vld [vmem:[#allocation13 + $0x258] sm:$0xff]
    %v603 = vld [vmem:[#allocation13 + $0x260] sm:$0xff]
    %v604 = vld [vmem:[#allocation13 + $0x268] sm:$0xff]
    %v605 = vld [vmem:[#allocation13 + $0x270] sm:$0xff]
    %v606 = vld [vmem:[#allocation13 + $0x278] sm:$0xff]
    %v607 = vld [vmem:[#allocation13 + $0x280] sm:$0xff]
    %v608 = vld [vmem:[#allocation13 + $0x288] sm:$0xff]
    %v609 = vld [vmem:[#allocation13 + $0x290] sm:$0xff]
    %v610 = vld [vmem:[#allocation13 + $0x298] sm:$0xff]
    %v611 = vld [vmem:[#allocation13 + $0x2a0] sm:$0xff]
    %v612 = vld [vmem:[#allocation13 + $0x2a8] sm:$0xff]
    %v613 = vld [vmem:[#allocation13 + $0x2b0] sm:$0xff]
    %v614 = vld [vmem:[#allocation13 + $0x2b8] sm:$0xff]
    %v615 = vld [vmem:[#allocation13 + $0x2c0] sm:$0xff]
    %v616 = vld [vmem:[#allocation13 + $0x2c8] sm:$0xff]
    %v617 = vld [vmem:[#allocation13 + $0x2d0] sm:$0xff]
    %v618 = vld [vmem:[#allocation13 + $0x2d8] sm:$0xff]
    %v619 = vld [vmem:[#allocation13 + $0x2e0] sm:$0xff]
    %v620 = vld [vmem:[#allocation13 + $0x2e8] sm:$0xff]
    %v621 = vld [vmem:[#allocation13 + $0x2f0] sm:$0xff]
    %v622 = vld [vmem:[#allocation13 + $0x2f8] sm:$0xff]
    %v623 = vld [vmem:[#allocation13 + $0x300] sm:$0xff]
    %v624 = vld [vmem:[#allocation13 + $0x308] sm:$0xff]
    %v625 = vld [vmem:[#allocation13 + $0x310] sm:$0xff]
    %v626 = vld [vmem:[#allocation13 + $0x318] sm:$0xff]
    %v627 = vld [vmem:[#allocation13 + $0x320] sm:$0xff]
    %v628 = vld [vmem:[#allocation13 + $0x328] sm:$0xff]
    %v629 = vld [vmem:[#allocation13 + $0x330] sm:$0xff]
    %v630 = vld [vmem:[#allocation13 + $0x338] sm:$0xff]
    %v631 = vld [vmem:[#allocation13 + $0x340] sm:$0xff]
    %v632 = vld [vmem:[#allocation13 + $0x348] sm:$0xff]
    %v633 = vld [vmem:[#allocation13 + $0x350] sm:$0xff]
    %v634 = vld [vmem:[#allocation13 + $0x358] sm:$0xff]
    %v635 = vld [vmem:[#allocation13 + $0x360] sm:$0xff]
    %v636 = vld [vmem:[#allocation13 + $0x368] sm:$0xff]
    %v637 = vld [vmem:[#allocation13 + $0x370] sm:$0xff]
    %v638 = vld [vmem:[#allocation13 + $0x378] sm:$0xff]
    %v639 = vld [vmem:[#allocation13 + $0x380] sm:$0xff]
    %v640 = vld [vmem:[#allocation13 + $0x388] sm:$0xff]
    %v641 = vld [vmem:[#allocation13 + $0x390] sm:$0xff]
    %v642 = vld [vmem:[#allocation13 + $0x398] sm:$0xff]
    %v643 = vld [vmem:[#allocation13 + $0x3a0] sm:$0xff]
    %v644 = vld [vmem:[#allocation13 + $0x3a8] sm:$0xff]
    %v645 = vld [vmem:[#allocation13 + $0x3b0] sm:$0xff]
    %v646 = vld [vmem:[#allocation13 + $0x3b8] sm:$0xff]
    %v647 = vld [vmem:[#allocation13 + $0x3c0] sm:$0xff]
    %v648 = vld [vmem:[#allocation13 + $0x3c8] sm:$0xff]
    %v649 = vld [vmem:[#allocation13 + $0x3d0] sm:$0xff]
    %v650 = vld [vmem:[#allocation13 + $0x3d8] sm:$0xff]
    %v651 = vld [vmem:[#allocation13 + $0x3e0] sm:$0xff]
    %v652 = vld [vmem:[#allocation13 + $0x3e8] sm:$0xff]
    %v653 = vld [vmem:[#allocation13 + $0x3f0] sm:$0xff]
    %v654 = vld [vmem:[#allocation13 + $0x3f8] sm:$0xff]
    %v655 = vld [vmem:[#allocation13 + $0x400] sm:$0xff]
    %v656 = vld [vmem:[#allocation13 + $0x408] sm:$0xff]
    %v657 = vld [vmem:[#allocation13 + $0x410] sm:$0xff]
    %v658 = vld [vmem:[#allocation13 + $0x418] sm:$0xff]
    %v659 = vld [vmem:[#allocation13 + $0x420] sm:$0xff]
    %v660 = vld [vmem:[#allocation13 + $0x428] sm:$0xff]
    %v661 = vld [vmem:[#allocation13 + $0x430] sm:$0xff]
    %v662 = vld [vmem:[#allocation13 + $0x438] sm:$0xff]
    %v663 = vld [vmem:[#allocation13 + $0x440] sm:$0xff]
    %v664 = vld [vmem:[#allocation13 + $0x448] sm:$0xff]
    %v665 = vld [vmem:[#allocation13 + $0x450] sm:$0xff]
    %v666 = vld [vmem:[#allocation13 + $0x458] sm:$0xff]
    %v667 = vld [vmem:[#allocation13 + $0x460] sm:$0xff]
    %v668 = vld [vmem:[#allocation13 + $0x468] sm:$0xff]
    %v669 = vld [vmem:[#allocation13 + $0x470] sm:$0xff]
    %v670 = vld [vmem:[#allocation13 + $0x478] sm:$0xff]
    %v671 = vld [vmem:[#allocation13 + $0x480] sm:$0xff]
    %v672 = vld [vmem:[#allocation13 + $0x488] sm:$0xff]
    %v673 = vld [vmem:[#allocation13 + $0x490] sm:$0xff]
    %v674 = vld [vmem:[#allocation13 + $0x498] sm:$0xff]
    %v675 = vld [vmem:[#allocation13 + $0x4a0] sm:$0xff]
    %v676 = vld [vmem:[#allocation13 + $0x4a8] sm:$0xff]
    %v677 = vld [vmem:[#allocation13 + $0x4b0] sm:$0xff]
    %v678 = vld [vmem:[#allocation13 + $0x4b8] sm:$0xff]
    %v679 = vld [vmem:[#allocation13 + $0x4c0] sm:$0xff]
    %v680 = vld [vmem:[#allocation13 + $0x4c8] sm:$0xff]
    %v681 = vld [vmem:[#allocation13 + $0x4d0] sm:$0xff]
    %v682 = vld [vmem:[#allocation13 + $0x4d8] sm:$0xff]
    %v683 = vld [vmem:[#allocation13 + $0x4e0] sm:$0xff]
    %v684 = vld [vmem:[#allocation13 + $0x4e8] sm:$0xff]
    %v685 = vld [vmem:[#allocation13 + $0x4f0] sm:$0xff]
    %v686 = vld [vmem:[#allocation13 + $0x4f8] sm:$0xff]
    %v687 = vld [vmem:[#allocation13 + $0x500] sm:$0xff]
    %v688 = vld [vmem:[#allocation13 + $0x508] sm:$0xff]
    %v689 = vld [vmem:[#allocation13 + $0x510] sm:$0xff]
    %v690 = vld [vmem:[#allocation13 + $0x518] sm:$0xff]
    %v691 = vld [vmem:[#allocation13 + $0x520] sm:$0xff]
    %v692 = vld [vmem:[#allocation13 + $0x528] sm:$0xff]
    %v693 = vld [vmem:[#allocation13 + $0x530] sm:$0xff]
    %v694 = vld [vmem:[#allocation13 + $0x538] sm:$0xff]
    %v695 = vld [vmem:[#allocation13 + $0x540] sm:$0xff]
    %v696 = vld [vmem:[#allocation13 + $0x548] sm:$0xff]
    %v697 = vld [vmem:[#allocation13 + $0x550] sm:$0xff]
    %v698 = vld [vmem:[#allocation13 + $0x558] sm:$0xff]
    %v699 = vld [vmem:[#allocation13 + $0x560] sm:$0xff]
    %v700 = vld [vmem:[#allocation13 + $0x568] sm:$0xff]
    %v701 = vld [vmem:[#allocation13 + $0x570] sm:$0xff]
    %v702 = vld [vmem:[#allocation13 + $0x578] sm:$0xff]
    %v703 = vld [vmem:[#allocation13 + $0x580] sm:$0xff]
    %v704 = vld [vmem:[#allocation13 + $0x588] sm:$0xff]
    %v705 = vld [vmem:[#allocation13 + $0x590] sm:$0xff]
    %v706 = vld [vmem:[#allocation13 + $0x598] sm:$0xff]
    %v707 = vld [vmem:[#allocation13 + $0x5a0] sm:$0xff]
    %v708 = vld [vmem:[#allocation13 + $0x5a8] sm:$0xff]
    %v709 = vld [vmem:[#allocation13 + $0x5b0] sm:$0xff]
    %v710 = vld [vmem:[#allocation13 + $0x5b8] sm:$0xff]
    %v711 = vld [vmem:[#allocation13 + $0x5c0] sm:$0xff]
    %v712 = vld [vmem:[#allocation13 + $0x5c8] sm:$0xff]
    %v713 = vld [vmem:[#allocation13 + $0x5d0] sm:$0xff]
    %v714 = vld [vmem:[#allocation13 + $0x5d8] sm:$0xff]
    %v715 = vld [vmem:[#allocation13 + $0x5e0] sm:$0xff]
    %v716 = vld [vmem:[#allocation13 + $0x5e8] sm:$0xff]
    %v717 = vld [vmem:[#allocation13 + $0x5f0] sm:$0xff]
    %v718 = vld [vmem:[#allocation13 + $0x5f8] sm:$0xff]
    %v719 = vld [vmem:[#allocation13 + $0x600] sm:$0xff]
    %v720 = vld [vmem:[#allocation13 + $0x608] sm:$0xff]
    %v721 = vld [vmem:[#allocation13 + $0x610] sm:$0xff]
    %v722 = vld [vmem:[#allocation13 + $0x618] sm:$0xff]
    %v723 = vld [vmem:[#allocation13 + $0x620] sm:$0xff]
    %v724 = vld [vmem:[#allocation13 + $0x628] sm:$0xff]
    %v725 = vld [vmem:[#allocation13 + $0x630] sm:$0xff]
    %v726 = vld [vmem:[#allocation13 + $0x638] sm:$0xff]
    %v727 = vld [vmem:[#allocation13 + $0x640] sm:$0xff]
    %v728 = vld [vmem:[#allocation13 + $0x648] sm:$0xff]
    %v729 = vld [vmem:[#allocation13 + $0x650] sm:$0xff]
    %v730 = vld [vmem:[#allocation13 + $0x658] sm:$0xff]
    %v731 = vld [vmem:[#allocation13 + $0x660] sm:$0xff]
    %v732 = vld [vmem:[#allocation13 + $0x668] sm:$0xff]
    %v733 = vld [vmem:[#allocation13 + $0x670] sm:$0xff]
    %v734 = vld [vmem:[#allocation13 + $0x678] sm:$0xff]
    %v735 = vld [vmem:[#allocation13 + $0x680] sm:$0xff]
    %v736 = vld [vmem:[#allocation13 + $0x688] sm:$0xff]
    %v737 = vld [vmem:[#allocation13 + $0x690] sm:$0xff]
    %v738 = vld [vmem:[#allocation13 + $0x698] sm:$0xff]
    %v739 = vld [vmem:[#allocation13 + $0x6a0] sm:$0xff]
    %v740 = vld [vmem:[#allocation13 + $0x6a8] sm:$0xff]
    %v741 = vld [vmem:[#allocation13 + $0x6b0] sm:$0xff]
    %v742 = vld [vmem:[#allocation13 + $0x6b8] sm:$0xff]
    %v743 = vld [vmem:[#allocation13 + $0x6c0] sm:$0xff]
    %v744 = vld [vmem:[#allocation13 + $0x6c8] sm:$0xff]
    %v745 = vld [vmem:[#allocation13 + $0x6d0] sm:$0xff]
    %v746 = vld [vmem:[#allocation13 + $0x6d8] sm:$0xff]
    %v747 = vld [vmem:[#allocation13 + $0x6e0] sm:$0xff]
    %v748 = vld [vmem:[#allocation13 + $0x6e8] sm:$0xff]
    %v749 = vld [vmem:[#allocation13 + $0x6f0] sm:$0xff]
    %v750 = vld [vmem:[#allocation13 + $0x6f8] sm:$0xff]
    %v751 = vld [vmem:[#allocation13 + $0x700] sm:$0xff]
    %v752 = vld [vmem:[#allocation13 + $0x708] sm:$0xff]
    %v753 = vld [vmem:[#allocation13 + $0x710] sm:$0xff]
    %v754 = vld [vmem:[#allocation13 + $0x718] sm:$0xff]
    %v755 = vld [vmem:[#allocation13 + $0x720] sm:$0xff]
    %v756 = vld [vmem:[#allocation13 + $0x728] sm:$0xff]
    %v757 = vld [vmem:[#allocation13 + $0x730] sm:$0xff]
    %v758 = vld [vmem:[#allocation13 + $0x738] sm:$0xff]
    %v759 = vld [vmem:[#allocation13 + $0x740] sm:$0xff]
    %v760 = vld [vmem:[#allocation13 + $0x748] sm:$0xff]
    %v761 = vld [vmem:[#allocation13 + $0x750] sm:$0xff]
    %v762 = vld [vmem:[#allocation13 + $0x758] sm:$0xff]
    %v763 = vld [vmem:[#allocation13 + $0x760] sm:$0xff]
    %v764 = vld [vmem:[#allocation13 + $0x768] sm:$0xff]
    %v765 = vld [vmem:[#allocation13 + $0x770] sm:$0xff]
    %v766 = vld [vmem:[#allocation13 + $0x778] sm:$0xff]
    %v767 = vld [vmem:[#allocation13 + $0x780] sm:$0xff]
    %v768 = vld [vmem:[#allocation13 + $0x788] sm:$0xff]
    %v769 = vld [vmem:[#allocation13 + $0x790] sm:$0xff]
    %v770 = vld [vmem:[#allocation13 + $0x798] sm:$0xff]
    %v771 = vld [vmem:[#allocation13 + $0x7a0] sm:$0xff]
    %v772 = vld [vmem:[#allocation13 + $0x7a8] sm:$0xff]
    %v773 = vld [vmem:[#allocation13 + $0x7b0] sm:$0xff]
    %v774 = vld [vmem:[#allocation13 + $0x7b8] sm:$0xff]
    %v775 = vld [vmem:[#allocation13 + $0x7c0] sm:$0xff]
    %v776 = vld [vmem:[#allocation13 + $0x7c8] sm:$0xff]
    %v777 = vld [vmem:[#allocation13 + $0x7d0] sm:$0xff]
    %v778 = vld [vmem:[#allocation13 + $0x7d8] sm:$0xff]
    %v779 = vld [vmem:[#allocation13 + $0x7e0] sm:$0xff]
    %v780 = vld [vmem:[#allocation13 + $0x7e8] sm:$0xff]
    %v781 = vld [vmem:[#allocation13 + $0x7f0] sm:$0xff]
    %v782 = vld [vmem:[#allocation13 + $0x7f8] sm:$0xff]
    %v785 = vunpack.c.l.s4 1983009808
    %v786 = vunpack.c.0.s8 %v785
    %v787 = vlaneseq
    %v788 = vshrl.u32 %v787, 7
    %v789 = vsub.s32 %v786, %v788
    %v790 = vrot.slane %v492, %v789
    %v791 = vcombine.high %v790, %v790
    %794 = vmatprep.subr.mxu0 %v648
    %795 = vmatpush1.msra.mxu0 %v647
    %796 = vmatprep.subr.mxu0 %v640
    %797 = vmatpush1.msra.mxu0 %v639
    %798 = vmatprep.subr.mxu0 %v632
    %799 = vmatpush1.msra.mxu0 %v631
    %800 = vmatprep.subr.mxu0 %v624
    %801 = vmatpush1.msra.mxu0 %v623
    %802 = vmatprep.subr.mxu0 %v616
    %803 = vmatpush1.msra.mxu0 %v615
    %804 = vmatprep.subr.mxu0 %v608
    %805 = vmatpush1.msra.mxu0 %v607
    %806 = vmatprep.subr.mxu0 %v600
    %807 = vmatpush1.msra.mxu0 %v599
    %808 = vmatprep.subr.mxu0 %v592
    %809 = vmatpush1.msra.mxu0 %v591
    %810 = vmatprep.subr.mxu0 %v584
    %811 = vmatpush1.msra.mxu0 %v583
    %812 = vmatprep.subr.mxu0 %v576
    %813 = vmatpush1.msra.mxu0 %v575
    %814 = vmatprep.subr.mxu0 %v568
    %815 = vmatpush1.msra.mxu0 %v567
    %816 = vmatprep.subr.mxu0 %v560
    %817 = vmatpush1.msra.mxu0 %v559
    %818 = vmatprep.subr.mxu0 %v552
    %819 = vmatpush1.msra.mxu0 %v551
    %820 = vmatprep.subr.mxu0 %v544
    %821 = vmatpush1.msra.mxu0 %v543
    %822 = vmatprep.subr.mxu0 %v536
    %823 = vmatpush1.msra.mxu0 %v535
    %824 = vmatprep.subr.mxu0 %v528
    %825 = vmatpush1.msra.mxu0 %v527
    %826 = vmatprep.subr.mxu0 %v776
    %827 = vmatpush2.msra.mxu0 %v775
    %828 = vmatprep.subr.mxu0 %v768
    %829 = vmatpush2.msra.mxu0 %v767
    %830 = vmatprep.subr.mxu0 %v760
    %831 = vmatpush2.msra.mxu0 %v759
    %832 = vmatprep.subr.mxu0 %v752
    %833 = vmatpush2.msra.mxu0 %v751
    %834 = vmatprep.subr.mxu0 %v744
    %835 = vmatpush2.msra.mxu0 %v743
    %836 = vmatprep.subr.mxu0 %v736
    %837 = vmatpush2.msra.mxu0 %v735
    %838 = vmatprep.subr.mxu0 %v728
    %839 = vmatpush2.msra.mxu0 %v727
    %840 = vmatprep.subr.mxu0 %v720
    %841 = vmatpush2.msra.mxu0 %v719
    %842 = vmatprep.subr.mxu0 %v712
    %843 = vmatpush2.msra.mxu0 %v711
    %844 = vmatprep.subr.mxu0 %v704
    %845 = vmatpush2.msra.mxu0 %v703
    %846 = vmatprep.subr.mxu0 %v696
    %847 = vmatpush2.msra.mxu0 %v695
    %848 = vmatprep.subr.mxu0 %v688
    %849 = vmatpush2.msra.mxu0 %v687
    %850 = vmatprep.subr.mxu0 %v680
    %851 = vmatpush2.msra.mxu0 %v679
    %852 = vmatprep.subr.mxu0 %v672
    %853 = vmatpush2.msra.mxu0 %v671
    %854 = vmatprep.subr.mxu0 %v664
    %855 = vmatpush2.msra.mxu0 %v663
    %856 = vmatprep.subr.mxu0 %v656
    %857 = vmatpush2.msra.mxu0 %v655
    %858 = vmatprep.mubr.f32.mxu0 %v791
    %859 = vmatmul.mubr.f32.gmra.mxu0 %v790
    %v860 = vpop.f32.mrf.mxu0
    %v861 = vadd.f32 0.0, %v860
    %v862 = vpop.f32.mrf.mxu0
    %v863 = vadd.f32 0.0, %v862
    %864 = vdwg.mxu0
    %865 = vmatprep.subr.mxu0 %v650
    %866 = vmatpush1.msra.mxu0 %v649
    %867 = vmatprep.subr.mxu0 %v642
    %868 = vmatpush1.msra.mxu0 %v641
    %869 = vmatprep.subr.mxu0 %v634
    %870 = vmatpush1.msra.mxu0 %v633
    %871 = vmatprep.subr.mxu0 %v626
    %872 = vmatpush1.msra.mxu0 %v625
    %873 = vmatprep.subr.mxu0 %v618
    %874 = vmatpush1.msra.mxu0 %v617
    %875 = vmatprep.subr.mxu0 %v610
    %876 = vmatpush1.msra.mxu0 %v609
    %877 = vmatprep.subr.mxu0 %v602
    %878 = vmatpush1.msra.mxu0 %v601
    %879 = vmatprep.subr.mxu0 %v594
    %880 = vmatpush1.msra.mxu0 %v593
    %881 = vmatprep.subr.mxu0 %v586
    %882 = vmatpush1.msra.mxu0 %v585
    %883 = vmatprep.subr.mxu0 %v578
    %884 = vmatpush1.msra.mxu0 %v577
    %885 = vmatprep.subr.mxu0 %v570
    %886 = vmatpush1.msra.mxu0 %v569
    %887 = vmatprep.subr.mxu0 %v562
    %888 = vmatpush1.msra.mxu0 %v561
    %889 = vmatprep.subr.mxu0 %v554
    %890 = vmatpush1.msra.mxu0 %v553
    %891 = vmatprep.subr.mxu0 %v546
    %892 = vmatpush1.msra.mxu0 %v545
    %893 = vmatprep.subr.mxu0 %v538
    %894 = vmatpush1.msra.mxu0 %v537
    %895 = vmatprep.subr.mxu0 %v530
    %896 = vmatpush1.msra.mxu0 %v529
    %897 = vmatprep.subr.mxu0 %v778
    %898 = vmatpush2.msra.mxu0 %v777
    %899 = vmatprep.subr.mxu0 %v770
    %900 = vmatpush2.msra.mxu0 %v769
    %901 = vmatprep.subr.mxu0 %v762
    %902 = vmatpush2.msra.mxu0 %v761
    %903 = vmatprep.subr.mxu0 %v754
    %904 = vmatpush2.msra.mxu0 %v753
    %905 = vmatprep.subr.mxu0 %v746
    %906 = vmatpush2.msra.mxu0 %v745
    %907 = vmatprep.subr.mxu0 %v738
    %908 = vmatpush2.msra.mxu0 %v737
    %909 = vmatprep.subr.mxu0 %v730
    %910 = vmatpush2.msra.mxu0 %v729
    %911 = vmatprep.subr.mxu0 %v722
    %912 = vmatpush2.msra.mxu0 %v721
    %913 = vmatprep.subr.mxu0 %v714
    %914 = vmatpush2.msra.mxu0 %v713
    %915 = vmatprep.subr.mxu0 %v706
    %916 = vmatpush2.msra.mxu0 %v705
    %917 = vmatprep.subr.mxu0 %v698
    %918 = vmatpush2.msra.mxu0 %v697
    %919 = vmatprep.subr.mxu0 %v690
    %920 = vmatpush2.msra.mxu0 %v689
    %921 = vmatprep.subr.mxu0 %v682
    %922 = vmatpush2.msra.mxu0 %v681
    %923 = vmatprep.subr.mxu0 %v674
    %924 = vmatpush2.msra.mxu0 %v673
    %925 = vmatprep.subr.mxu0 %v666
    %926 = vmatpush2.msra.mxu0 %v665
    %927 = vmatprep.subr.mxu0 %v658
    %928 = vmatpush2.msra.mxu0 %v657
    %929 = vmatprep.mubr.f32.mxu0 %v791
    %930 = vmatmul.mubr.f32.gmra.mxu0 %v790
    %v931 = vpop.f32.mrf.mxu0
    %v932 = vadd.f32 0.0, %v931
    %v933 = vpop.f32.mrf.mxu0
    %v934 = vadd.f32 0.0, %v933
    %935 = vdwg.mxu0
    %936 = vmatprep.subr.mxu0 %v652
    %937 = vmatpush1.msra.mxu0 %v651
    %938 = vmatprep.subr.mxu0 %v644
    %939 = vmatpush1.msra.mxu0 %v643
    %940 = vmatprep.subr.mxu0 %v636
    %941 = vmatpush1.msra.mxu0 %v635
    %942 = vmatprep.subr.mxu0 %v628
    %943 = vmatpush1.msra.mxu0 %v627
    %944 = vmatprep.subr.mxu0 %v620
    %945 = vmatpush1.msra.mxu0 %v619
    %946 = vmatprep.subr.mxu0 %v612
    %947 = vmatpush1.msra.mxu0 %v611
    %948 = vmatprep.subr.mxu0 %v604
    %949 = vmatpush1.msra.mxu0 %v603
    %950 = vmatprep.subr.mxu0 %v596
    %951 = vmatpush1.msra.mxu0 %v595
    %952 = vmatprep.subr.mxu0 %v588
    %953 = vmatpush1.msra.mxu0 %v587
    %954 = vmatprep.subr.mxu0 %v580
    %955 = vmatpush1.msra.mxu0 %v579
    %956 = vmatprep.subr.mxu0 %v572
    %957 = vmatpush1.msra.mxu0 %v571
    %958 = vmatprep.subr.mxu0 %v564
    %959 = vmatpush1.msra.mxu0 %v563
    %960 = vmatprep.subr.mxu0 %v556
    %961 = vmatpush1.msra.mxu0 %v555
    %962 = vmatprep.subr.mxu0 %v548
    %963 = vmatpush1.msra.mxu0 %v547
    %964 = vmatprep.subr.mxu0 %v540
    %965 = vmatpush1.msra.mxu0 %v539
    %966 = vmatprep.subr.mxu0 %v532
    %967 = vmatpush1.msra.mxu0 %v531
    %968 = vmatprep.subr.mxu0 %v780
    %969 = vmatpush2.msra.mxu0 %v779
    %970 = vmatprep.subr.mxu0 %v772
    %971 = vmatpush2.msra.mxu0 %v771
    %972 = vmatprep.subr.mxu0 %v764
    %973 = vmatpush2.msra.mxu0 %v763
    %974 = vmatprep.subr.mxu0 %v756
    %975 = vmatpush2.msra.mxu0 %v755
    %976 = vmatprep.subr.mxu0 %v748
    %977 = vmatpush2.msra.mxu0 %v747
    %978 = vmatprep.subr.mxu0 %v740
    %979 = vmatpush2.msra.mxu0 %v739
    %980 = vmatprep.subr.mxu0 %v732
    %981 = vmatpush2.msra.mxu0 %v731
    %982 = vmatprep.subr.mxu0 %v724
    %983 = vmatpush2.msra.mxu0 %v723
    %984 = vmatprep.subr.mxu0 %v716
    %985 = vmatpush2.msra.mxu0 %v715
    %986 = vmatprep.subr.mxu0 %v708
    %987 = vmatpush2.msra.mxu0 %v707
    %988 = vmatprep.subr.mxu0 %v700
    %989 = vmatpush2.msra.mxu0 %v699
    %990 = vmatprep.subr.mxu0 %v692
    %991 = vmatpush2.msra.mxu0 %v691
    %992 = vmatprep.subr.mxu0 %v684
    %993 = vmatpush2.msra.mxu0 %v683
    %994 = vmatprep.subr.mxu0 %v676
    %995 = vmatpush2.msra.mxu0 %v675
    %996 = vmatprep.subr.mxu0 %v668
    %997 = vmatpush2.msra.mxu0 %v667
    %998 = vmatprep.subr.mxu0 %v660
    %999 = vmatpush2.msra.mxu0 %v659
    %1000 = vmatprep.mubr.f32.mxu0 %v791
    %1001 = vmatmul.mubr.f32.gmra.mxu0 %v790
    %v1002 = vpop.f32.mrf.mxu0
    %v1003 = vadd.f32 0.0, %v1002
    %v1004 = vpop.f32.mrf.mxu0
    %v1005 = vadd.f32 0.0, %v1004
    %1006 = vdwg.mxu0
    %1007 = vmatprep.subr.mxu0 %v654
    %1008 = vmatpush1.msra.mxu0 %v653
    %1009 = vmatprep.subr.mxu0 %v646
    %1010 = vmatpush1.msra.mxu0 %v645
    %1011 = vmatprep.subr.mxu0 %v638
    %1012 = vmatpush1.msra.mxu0 %v637
    %1013 = vmatprep.subr.mxu0 %v630
    %1014 = vmatpush1.msra.mxu0 %v629
    %1015 = vmatprep.subr.mxu0 %v622
    %1016 = vmatpush1.msra.mxu0 %v621
    %1017 = vmatprep.subr.mxu0 %v614
    %1018 = vmatpush1.msra.mxu0 %v613
    %1019 = vmatprep.subr.mxu0 %v606
    %1020 = vmatpush1.msra.mxu0 %v605
    %1021 = vmatprep.subr.mxu0 %v598
    %1022 = vmatpush1.msra.mxu0 %v597
    %1023 = vmatprep.subr.mxu0 %v590
    %1024 = vmatpush1.msra.mxu0 %v589
    %1025 = vmatprep.subr.mxu0 %v582
    %1026 = vmatpush1.msra.mxu0 %v581
    %1027 = vmatprep.subr.mxu0 %v574
    %1028 = vmatpush1.msra.mxu0 %v573
    %1029 = vmatprep.subr.mxu0 %v566
    %1030 = vmatpush1.msra.mxu0 %v565
    %1031 = vmatprep.subr.mxu0 %v558
    %1032 = vmatpush1.msra.mxu0 %v557
    %1033 = vmatprep.subr.mxu0 %v550
    %1034 = vmatpush1.msra.mxu0 %v549
    %1035 = vmatprep.subr.mxu0 %v542
    %1036 = vmatpush1.msra.mxu0 %v541
    %1037 = vmatprep.subr.mxu0 %v534
    %1038 = vmatpush1.msra.mxu0 %v533
    %1039 = vmatprep.subr.mxu0 %v782
    %1040 = vmatpush2.msra.mxu0 %v781
    %1041 = vmatprep.subr.mxu0 %v774
    %1042 = vmatpush2.msra.mxu0 %v773
    %1043 = vmatprep.subr.mxu0 %v766
    %1044 = vmatpush2.msra.mxu0 %v765
    %1045 = vmatprep.subr.mxu0 %v758
    %1046 = vmatpush2.msra.mxu0 %v757
    %1047 = vmatprep.subr.mxu0 %v750
    %1048 = vmatpush2.msra.mxu0 %v749
    %1049 = vmatprep.subr.mxu0 %v742
    %1050 = vmatpush2.msra.mxu0 %v741
    %1051 = vmatprep.subr.mxu0 %v734
    %1052 = vmatpush2.msra.mxu0 %v733
    %1053 = vmatprep.subr.mxu0 %v726
    %1054 = vmatpush2.msra.mxu0 %v725
    %1055 = vmatprep.subr.mxu0 %v718
    %1056 = vmatpush2.msra.mxu0 %v717
    %1057 = vmatprep.subr.mxu0 %v710
    %1058 = vmatpush2.msra.mxu0 %v709
    %1059 = vmatprep.subr.mxu0 %v702
    %1060 = vmatpush2.msra.mxu0 %v701
    %1061 = vmatprep.subr.mxu0 %v694
    %1062 = vmatpush2.msra.mxu0 %v693
    %1063 = vmatprep.subr.mxu0 %v686
    %1064 = vmatpush2.msra.mxu0 %v685
    %1065 = vmatprep.subr.mxu0 %v678
    %1066 = vmatpush2.msra.mxu0 %v677
    %1067 = vmatprep.subr.mxu0 %v670
    %1068 = vmatpush2.msra.mxu0 %v669
    %1069 = vmatprep.subr.mxu0 %v662
    %1070 = vmatpush2.msra.mxu0 %v661
    %1071 = vmatprep.mubr.f32.mxu0 %v791
    %1072 = vmatmul.mubr.f32.gmra.mxu0 %v790
    %v1073 = vpop.f32.mrf.mxu0
    %v1074 = vadd.f32 0.0, %v1073
    %v1075 = vpop.f32.mrf.mxu0
    %v1076 = vadd.f32 0.0, %v1075
    %1077 = vdwg.mxu0
    %v1078 = vadd.f32 %v519, %v861
    %v1079 = vadd.f32 %v520, %v863
    %v1080 = vadd.f32 %v521, %v932
    %v1081 = vadd.f32 %v522, %v934
    %v1082 = vadd.f32 %v523, %v1003
    %v1083 = vadd.f32 %v524, %v1005
    %v1084 = vadd.f32 %v525, %v1074
    %v1085 = vadd.f32 %v526, %v1076
    %v1086 = vxor.u32 %v1078, 2147483648
    %v1087 = vxor.u32 %v1079, 2147483648
    %v1088 = vmul.f32 %v1086, 1.442695
    %v1089 = vpow.pop %v1088
    %v1090 = vmul.f32 %v1087, 1.442695
    %v1091 = vpow.pop %v1090
    %v1092 = vadd.f32 %v1089, 1.0
    %v1093 = vadd.f32 %v1091, 1.0
    %v1094 = vrcp.pop %v1092
    %v1095 = vmul.f32 1.0, %v1094
    %v1096 = vrcp.pop %v1093
    %v1097 = vmul.f32 1.0, %v1096
    %v1098 = vxor.u32 %v1080, 2147483648
    %v1099 = vxor.u32 %v1081, 2147483648
    %v1100 = vmul.f32 %v1098, 1.442695
    %v1101 = vpow.pop %v1100
    %v1102 = vmul.f32 %v1099, 1.442695
    %v1103 = vpow.pop %v1102
    %v1104 = vadd.f32 %v1101, 1.0
    %v1105 = vadd.f32 %v1103, 1.0
    %v1106 = vrcp.pop %v1104
    %v1107 = vmul.f32 1.0, %v1106
    %v1108 = vrcp.pop %v1105
    %v1109 = vmul.f32 1.0, %v1108
    %v1110 = vtanh.pop %v1082
    %v1111 = vtanh.pop %v1083
    %v1112 = vxor.u32 %v1084, 2147483648
    %v1113 = vxor.u32 %v1085, 2147483648
    %v1114 = vmul.f32 %v1112, 1.442695
    %v1115 = vpow.pop %v1114
    %v1116 = vmul.f32 %v1113, 1.442695
    %v1117 = vpow.pop %v1116
    %v1118 = vadd.f32 %v1115, 1.0
    %v1119 = vadd.f32 %v1117, 1.0
    %v1120 = vrcp.pop %v1118
    %v1121 = vmul.f32 1.0, %v1120
    %v1122 = vrcp.pop %v1119
    %v1123 = vmul.f32 1.0, %v1122
    %v1126 = vunpack.c.l.s4 1983009808
    %v1127 = vunpack.c.0.s8 %v1126
    %v1128 = vlaneseq
    %v1129 = vshrl.u32 %v1128, 7
    %v1130 = vsub.s32 %v1127, %v1129
    %v1131 = vrot.slane %v493, %v1130
    %v1132 = vcombine.high %v1131, %v1131
    %v1135 = vmul.f32 %v1107, %v1131
    %v1136 = vmul.f32 %v1109, %v1132
    %v1137 = vmul.f32 %v1095, %v1110
    %v1138 = vmul.f32 %v1097, %v1111
    %v1139 = vadd.f32 %v1135, %v1137
    %v1140 = vadd.f32 %v1136, %v1138
    %v1141 = vtanh.pop %v1139
    %v1142 = vtanh.pop %v1140
    %v1143 = vmul.f32 %v1121, %v1141
    %v1144 = vmul.f32 %v1123, %v1142
    %v1147 = vcombine.low %v1143, %v1144
    %v1149 = vunpack.c.l.s4 1966171168
    %v1150 = vunpack.c.0.s8 %v1149
    %v1151 = vlaneseq
    %v1152 = vshrl.u32 %v1151, 7
    %v1153 = vsub.s32 %v1150, %v1152
    %v1154 = vrot.slane %v1147, %v1153
    %v1156 = vunpack.c.l.s4 1966171168
    %v1157 = vunpack.c.0.s8 %v1156
    %v1158 = vlaneseq
    %v1159 = vshrl.u32 %v1158, 7
    %v1160 = vsub.s32 %v1157, %v1159
    %v1161 = vrot.slane %v1154, %v1160
    %v1163 = vlaneseq
    %vm1164 = vcmp.ge.s32.totalorder %v1163, 0
    %vm1165 = vcmp.lt.s32.totalorder %v1163, 256
    %vm1166 = vmand %vm1164, %vm1165
    %1167 = vst.msk [vmem:[#allocation2] ss:$8 sm:$0x3] %vm1166, %v1161
    %1168 = vst.msk [vmem:[#allocation2] ss:$8 sm:$0x0] %vm1166, %v1161
    %v1169 = vcombine.high %v1154, %v1154
    %v1171 = vunpack.c.l.s4 1966171168
    %v1172 = vunpack.c.0.s8 %v1171
    %v1173 = vlaneseq
    %v1174 = vshrl.u32 %v1173, 7
    %v1175 = vsub.s32 %v1172, %v1174
    %v1176 = vrot.slane %v1169, %v1175
    %s1178 = scalar_lea.vmem [#allocation2], 4
    %1179 = vst.msk [vmem:[%s1178] ss:$8 sm:$0x3] %vm1166, %v1176
    %1180 = vst.msk [vmem:[%s1178] ss:$8 sm:$0x0] %vm1166, %v1176
    %v1181 = vrot.slane %v275, 1
    %v1182 = vrot.slane %v277, 1
    %v1183 = vrot.slane %v346, 1
    %v1184 = vrot.slane %v348, 1
    %v1185 = vrot.slane %v417, 1
    %v1186 = vrot.slane %v419, 1
    %v1187 = vrot.slane %v488, 1
    %v1188 = vrot.slane %v490, 1
    %v1197 = vrot.slane %v275, 4
    %v1198 = vrot.slane %v277, 4
    %v1199 = vrot.slane %v346, 4
    %v1200 = vrot.slane %v348, 4
    %v1201 = vrot.slane %v417, 4
    %v1202 = vrot.slane %v419, 4
    %v1203 = vrot.slane %v488, 4
    %v1204 = vrot.slane %v490, 4
    %v1213 = vsel %vm518, %v1181, %v1197
    %v1214 = vsel %vm518, %v1182, %v1198
    %v1215 = vsel %vm518, %v1183, %v1199
    %v1216 = vsel %vm518, %v1184, %v1200
    %v1217 = vsel %vm518, %v1185, %v1201
    %v1218 = vsel %vm518, %v1186, %v1202
    %v1219 = vsel %vm518, %v1187, %v1203
    %v1220 = vsel %vm518, %v1188, %v1204
    %v1221 = vld [vmem:[#allocation13] sm:$0xff]
    %v1222 = vld [vmem:[#allocation13 + $0x8] sm:$0xff]
    %v1223 = vld [vmem:[#allocation13 + $0x10] sm:$0xff]
    %v1224 = vld [vmem:[#allocation13 + $0x18] sm:$0xff]
    %v1225 = vld [vmem:[#allocation13 + $0x20] sm:$0xff]
    %v1226 = vld [vmem:[#allocation13 + $0x28] sm:$0xff]
    %v1227 = vld [vmem:[#allocation13 + $0x30] sm:$0xff]
    %v1228 = vld [vmem:[#allocation13 + $0x38] sm:$0xff]
    %v1229 = vld [vmem:[#allocation13 + $0x40] sm:$0xff]
    %v1230 = vld [vmem:[#allocation13 + $0x48] sm:$0xff]
    %v1231 = vld [vmem:[#allocation13 + $0x50] sm:$0xff]
    %v1232 = vld [vmem:[#allocation13 + $0x58] sm:$0xff]
    %v1233 = vld [vmem:[#allocation13 + $0x60] sm:$0xff]
    %v1234 = vld [vmem:[#allocation13 + $0x68] sm:$0xff]
    %v1235 = vld [vmem:[#allocation13 + $0x70] sm:$0xff]
    %v1236 = vld [vmem:[#allocation13 + $0x78] sm:$0xff]
    %v1237 = vld [vmem:[#allocation13 + $0x80] sm:$0xff]
    %v1238 = vld [vmem:[#allocation13 + $0x88] sm:$0xff]
    %v1239 = vld [vmem:[#allocation13 + $0x90] sm:$0xff]
    %v1240 = vld [vmem:[#allocation13 + $0x98] sm:$0xff]
    %v1241 = vld [vmem:[#allocation13 + $0xa0] sm:$0xff]
    %v1242 = vld [vmem:[#allocation13 + $0xa8] sm:$0xff]
    %v1243 = vld [vmem:[#allocation13 + $0xb0] sm:$0xff]
    %v1244 = vld [vmem:[#allocation13 + $0xb8] sm:$0xff]
    %v1245 = vld [vmem:[#allocation13 + $0xc0] sm:$0xff]
    %v1246 = vld [vmem:[#allocation13 + $0xc8] sm:$0xff]
    %v1247 = vld [vmem:[#allocation13 + $0xd0] sm:$0xff]
    %v1248 = vld [vmem:[#allocation13 + $0xd8] sm:$0xff]
    %v1249 = vld [vmem:[#allocation13 + $0xe0] sm:$0xff]
    %v1250 = vld [vmem:[#allocation13 + $0xe8] sm:$0xff]
    %v1251 = vld [vmem:[#allocation13 + $0xf0] sm:$0xff]
    %v1252 = vld [vmem:[#allocation13 + $0xf8] sm:$0xff]
    %v1253 = vld [vmem:[#allocation13 + $0x100] sm:$0xff]
    %v1254 = vld [vmem:[#allocation13 + $0x108] sm:$0xff]
    %v1255 = vld [vmem:[#allocation13 + $0x110] sm:$0xff]
    %v1256 = vld [vmem:[#allocation13 + $0x118] sm:$0xff]
    %v1257 = vld [vmem:[#allocation13 + $0x120] sm:$0xff]
    %v1258 = vld [vmem:[#allocation13 + $0x128] sm:$0xff]
    %v1259 = vld [vmem:[#allocation13 + $0x130] sm:$0xff]
    %v1260 = vld [vmem:[#allocation13 + $0x138] sm:$0xff]
    %v1261 = vld [vmem:[#allocation13 + $0x140] sm:$0xff]
    %v1262 = vld [vmem:[#allocation13 + $0x148] sm:$0xff]
    %v1263 = vld [vmem:[#allocation13 + $0x150] sm:$0xff]
    %v1264 = vld [vmem:[#allocation13 + $0x158] sm:$0xff]
    %v1265 = vld [vmem:[#allocation13 + $0x160] sm:$0xff]
    %v1266 = vld [vmem:[#allocation13 + $0x168] sm:$0xff]
    %v1267 = vld [vmem:[#allocation13 + $0x170] sm:$0xff]
    %v1268 = vld [vmem:[#allocation13 + $0x178] sm:$0xff]
    %v1269 = vld [vmem:[#allocation13 + $0x180] sm:$0xff]
    %v1270 = vld [vmem:[#allocation13 + $0x188] sm:$0xff]
    %v1271 = vld [vmem:[#allocation13 + $0x190] sm:$0xff]
    %v1272 = vld [vmem:[#allocation13 + $0x198] sm:$0xff]
    %v1273 = vld [vmem:[#allocation13 + $0x1a0] sm:$0xff]
    %v1274 = vld [vmem:[#allocation13 + $0x1a8] sm:$0xff]
    %v1275 = vld [vmem:[#allocation13 + $0x1b0] sm:$0xff]
    %v1276 = vld [vmem:[#allocation13 + $0x1b8] sm:$0xff]
    %v1277 = vld [vmem:[#allocation13 + $0x1c0] sm:$0xff]
    %v1278 = vld [vmem:[#allocation13 + $0x1c8] sm:$0xff]
    %v1279 = vld [vmem:[#allocation13 + $0x1d0] sm:$0xff]
    %v1280 = vld [vmem:[#allocation13 + $0x1d8] sm:$0xff]
    %v1281 = vld [vmem:[#allocation13 + $0x1e0] sm:$0xff]
    %v1282 = vld [vmem:[#allocation13 + $0x1e8] sm:$0xff]
    %v1283 = vld [vmem:[#allocation13 + $0x1f0] sm:$0xff]
    %v1284 = vld [vmem:[#allocation13 + $0x1f8] sm:$0xff]
    %v1285 = vld [vmem:[#allocation13 + $0x200] sm:$0xff]
    %v1286 = vld [vmem:[#allocation13 + $0x208] sm:$0xff]
    %v1287 = vld [vmem:[#allocation13 + $0x210] sm:$0xff]
    %v1288 = vld [vmem:[#allocation13 + $0x218] sm:$0xff]
    %v1289 = vld [vmem:[#allocation13 + $0x220] sm:$0xff]
    %v1290 = vld [vmem:[#allocation13 + $0x228] sm:$0xff]
    %v1291 = vld [vmem:[#allocation13 + $0x230] sm:$0xff]
    %v1292 = vld [vmem:[#allocation13 + $0x238] sm:$0xff]
    %v1293 = vld [vmem:[#allocation13 + $0x240] sm:$0xff]
    %v1294 = vld [vmem:[#allocation13 + $0x248] sm:$0xff]
    %v1295 = vld [vmem:[#allocation13 + $0x250] sm:$0xff]
    %v1296 = vld [vmem:[#allocation13 + $0x258] sm:$0xff]
    %v1297 = vld [vmem:[#allocation13 + $0x260] sm:$0xff]
    %v1298 = vld [vmem:[#allocation13 + $0x268] sm:$0xff]
    %v1299 = vld [vmem:[#allocation13 + $0x270] sm:$0xff]
    %v1300 = vld [vmem:[#allocation13 + $0x278] sm:$0xff]
    %v1301 = vld [vmem:[#allocation13 + $0x280] sm:$0xff]
    %v1302 = vld [vmem:[#allocation13 + $0x288] sm:$0xff]
    %v1303 = vld [vmem:[#allocation13 + $0x290] sm:$0xff]
    %v1304 = vld [vmem:[#allocation13 + $0x298] sm:$0xff]
    %v1305 = vld [vmem:[#allocation13 + $0x2a0] sm:$0xff]
    %v1306 = vld [vmem:[#allocation13 + $0x2a8] sm:$0xff]
    %v1307 = vld [vmem:[#allocation13 + $0x2b0] sm:$0xff]
    %v1308 = vld [vmem:[#allocation13 + $0x2b8] sm:$0xff]
    %v1309 = vld [vmem:[#allocation13 + $0x2c0] sm:$0xff]
    %v1310 = vld [vmem:[#allocation13 + $0x2c8] sm:$0xff]
    %v1311 = vld [vmem:[#allocation13 + $0x2d0] sm:$0xff]
    %v1312 = vld [vmem:[#allocation13 + $0x2d8] sm:$0xff]
    %v1313 = vld [vmem:[#allocation13 + $0x2e0] sm:$0xff]
    %v1314 = vld [vmem:[#allocation13 + $0x2e8] sm:$0xff]
    %v1315 = vld [vmem:[#allocation13 + $0x2f0] sm:$0xff]
    %v1316 = vld [vmem:[#allocation13 + $0x2f8] sm:$0xff]
    %v1317 = vld [vmem:[#allocation13 + $0x300] sm:$0xff]
    %v1318 = vld [vmem:[#allocation13 + $0x308] sm:$0xff]
    %v1319 = vld [vmem:[#allocation13 + $0x310] sm:$0xff]
    %v1320 = vld [vmem:[#allocation13 + $0x318] sm:$0xff]
    %v1321 = vld [vmem:[#allocation13 + $0x320] sm:$0xff]
    %v1322 = vld [vmem:[#allocation13 + $0x328] sm:$0xff]
    %v1323 = vld [vmem:[#allocation13 + $0x330] sm:$0xff]
    %v1324 = vld [vmem:[#allocation13 + $0x338] sm:$0xff]
    %v1325 = vld [vmem:[#allocation13 + $0x340] sm:$0xff]
    %v1326 = vld [vmem:[#allocation13 + $0x348] sm:$0xff]
    %v1327 = vld [vmem:[#allocation13 + $0x350] sm:$0xff]
    %v1328 = vld [vmem:[#allocation13 + $0x358] sm:$0xff]
    %v1329 = vld [vmem:[#allocation13 + $0x360] sm:$0xff]
    %v1330 = vld [vmem:[#allocation13 + $0x368] sm:$0xff]
    %v1331 = vld [vmem:[#allocation13 + $0x370] sm:$0xff]
    %v1332 = vld [vmem:[#allocation13 + $0x378] sm:$0xff]
    %v1333 = vld [vmem:[#allocation13 + $0x380] sm:$0xff]
    %v1334 = vld [vmem:[#allocation13 + $0x388] sm:$0xff]
    %v1335 = vld [vmem:[#allocation13 + $0x390] sm:$0xff]
    %v1336 = vld [vmem:[#allocation13 + $0x398] sm:$0xff]
    %v1337 = vld [vmem:[#allocation13 + $0x3a0] sm:$0xff]
    %v1338 = vld [vmem:[#allocation13 + $0x3a8] sm:$0xff]
    %v1339 = vld [vmem:[#allocation13 + $0x3b0] sm:$0xff]
    %v1340 = vld [vmem:[#allocation13 + $0x3b8] sm:$0xff]
    %v1341 = vld [vmem:[#allocation13 + $0x3c0] sm:$0xff]
    %v1342 = vld [vmem:[#allocation13 + $0x3c8] sm:$0xff]
    %v1343 = vld [vmem:[#allocation13 + $0x3d0] sm:$0xff]
    %v1344 = vld [vmem:[#allocation13 + $0x3d8] sm:$0xff]
    %v1345 = vld [vmem:[#allocation13 + $0x3e0] sm:$0xff]
    %v1346 = vld [vmem:[#allocation13 + $0x3e8] sm:$0xff]
    %v1347 = vld [vmem:[#allocation13 + $0x3f0] sm:$0xff]
    %v1348 = vld [vmem:[#allocation13 + $0x3f8] sm:$0xff]
    %v1349 = vld [vmem:[#allocation13 + $0x400] sm:$0xff]
    %v1350 = vld [vmem:[#allocation13 + $0x408] sm:$0xff]
    %v1351 = vld [vmem:[#allocation13 + $0x410] sm:$0xff]
    %v1352 = vld [vmem:[#allocation13 + $0x418] sm:$0xff]
    %v1353 = vld [vmem:[#allocation13 + $0x420] sm:$0xff]
    %v1354 = vld [vmem:[#allocation13 + $0x428] sm:$0xff]
    %v1355 = vld [vmem:[#allocation13 + $0x430] sm:$0xff]
    %v1356 = vld [vmem:[#allocation13 + $0x438] sm:$0xff]
    %v1357 = vld [vmem:[#allocation13 + $0x440] sm:$0xff]
    %v1358 = vld [vmem:[#allocation13 + $0x448] sm:$0xff]
    %v1359 = vld [vmem:[#allocation13 + $0x450] sm:$0xff]
    %v1360 = vld [vmem:[#allocation13 + $0x458] sm:$0xff]
    %v1361 = vld [vmem:[#allocation13 + $0x460] sm:$0xff]
    %v1362 = vld [vmem:[#allocation13 + $0x468] sm:$0xff]
    %v1363 = vld [vmem:[#allocation13 + $0x470] sm:$0xff]
    %v1364 = vld [vmem:[#allocation13 + $0x478] sm:$0xff]
    %v1365 = vld [vmem:[#allocation13 + $0x480] sm:$0xff]
    %v1366 = vld [vmem:[#allocation13 + $0x488] sm:$0xff]
    %v1367 = vld [vmem:[#allocation13 + $0x490] sm:$0xff]
    %v1368 = vld [vmem:[#allocation13 + $0x498] sm:$0xff]
    %v1369 = vld [vmem:[#allocation13 + $0x4a0] sm:$0xff]
    %v1370 = vld [vmem:[#allocation13 + $0x4a8] sm:$0xff]
    %v1371 = vld [vmem:[#allocation13 + $0x4b0] sm:$0xff]
    %v1372 = vld [vmem:[#allocation13 + $0x4b8] sm:$0xff]
    %v1373 = vld [vmem:[#allocation13 + $0x4c0] sm:$0xff]
    %v1374 = vld [vmem:[#allocation13 + $0x4c8] sm:$0xff]
    %v1375 = vld [vmem:[#allocation13 + $0x4d0] sm:$0xff]
    %v1376 = vld [vmem:[#allocation13 + $0x4d8] sm:$0xff]
    %v1377 = vld [vmem:[#allocation13 + $0x4e0] sm:$0xff]
    %v1378 = vld [vmem:[#allocation13 + $0x4e8] sm:$0xff]
    %v1379 = vld [vmem:[#allocation13 + $0x4f0] sm:$0xff]
    %v1380 = vld [vmem:[#allocation13 + $0x4f8] sm:$0xff]
    %v1381 = vld [vmem:[#allocation13 + $0x500] sm:$0xff]
    %v1382 = vld [vmem:[#allocation13 + $0x508] sm:$0xff]
    %v1383 = vld [vmem:[#allocation13 + $0x510] sm:$0xff]
    %v1384 = vld [vmem:[#allocation13 + $0x518] sm:$0xff]
    %v1385 = vld [vmem:[#allocation13 + $0x520] sm:$0xff]
    %v1386 = vld [vmem:[#allocation13 + $0x528] sm:$0xff]
    %v1387 = vld [vmem:[#allocation13 + $0x530] sm:$0xff]
    %v1388 = vld [vmem:[#allocation13 + $0x538] sm:$0xff]
    %v1389 = vld [vmem:[#allocation13 + $0x540] sm:$0xff]
    %v1390 = vld [vmem:[#allocation13 + $0x548] sm:$0xff]
    %v1391 = vld [vmem:[#allocation13 + $0x550] sm:$0xff]
    %v1392 = vld [vmem:[#allocation13 + $0x558] sm:$0xff]
    %v1393 = vld [vmem:[#allocation13 + $0x560] sm:$0xff]
    %v1394 = vld [vmem:[#allocation13 + $0x568] sm:$0xff]
    %v1395 = vld [vmem:[#allocation13 + $0x570] sm:$0xff]
    %v1396 = vld [vmem:[#allocation13 + $0x578] sm:$0xff]
    %v1397 = vld [vmem:[#allocation13 + $0x580] sm:$0xff]
    %v1398 = vld [vmem:[#allocation13 + $0x588] sm:$0xff]
    %v1399 = vld [vmem:[#allocation13 + $0x590] sm:$0xff]
    %v1400 = vld [vmem:[#allocation13 + $0x598] sm:$0xff]
    %v1401 = vld [vmem:[#allocation13 + $0x5a0] sm:$0xff]
    %v1402 = vld [vmem:[#allocation13 + $0x5a8] sm:$0xff]
    %v1403 = vld [vmem:[#allocation13 + $0x5b0] sm:$0xff]
    %v1404 = vld [vmem:[#allocation13 + $0x5b8] sm:$0xff]
    %v1405 = vld [vmem:[#allocation13 + $0x5c0] sm:$0xff]
    %v1406 = vld [vmem:[#allocation13 + $0x5c8] sm:$0xff]
    %v1407 = vld [vmem:[#allocation13 + $0x5d0] sm:$0xff]
    %v1408 = vld [vmem:[#allocation13 + $0x5d8] sm:$0xff]
    %v1409 = vld [vmem:[#allocation13 + $0x5e0] sm:$0xff]
    %v1410 = vld [vmem:[#allocation13 + $0x5e8] sm:$0xff]
    %v1411 = vld [vmem:[#allocation13 + $0x5f0] sm:$0xff]
    %v1412 = vld [vmem:[#allocation13 + $0x5f8] sm:$0xff]
    %v1413 = vld [vmem:[#allocation13 + $0x600] sm:$0xff]
    %v1414 = vld [vmem:[#allocation13 + $0x608] sm:$0xff]
    %v1415 = vld [vmem:[#allocation13 + $0x610] sm:$0xff]
    %v1416 = vld [vmem:[#allocation13 + $0x618] sm:$0xff]
    %v1417 = vld [vmem:[#allocation13 + $0x620] sm:$0xff]
    %v1418 = vld [vmem:[#allocation13 + $0x628] sm:$0xff]
    %v1419 = vld [vmem:[#allocation13 + $0x630] sm:$0xff]
    %v1420 = vld [vmem:[#allocation13 + $0x638] sm:$0xff]
    %v1421 = vld [vmem:[#allocation13 + $0x640] sm:$0xff]
    %v1422 = vld [vmem:[#allocation13 + $0x648] sm:$0xff]
    %v1423 = vld [vmem:[#allocation13 + $0x650] sm:$0xff]
    %v1424 = vld [vmem:[#allocation13 + $0x658] sm:$0xff]
    %v1425 = vld [vmem:[#allocation13 + $0x660] sm:$0xff]
    %v1426 = vld [vmem:[#allocation13 + $0x668] sm:$0xff]
    %v1427 = vld [vmem:[#allocation13 + $0x670] sm:$0xff]
    %v1428 = vld [vmem:[#allocation13 + $0x678] sm:$0xff]
    %v1429 = vld [vmem:[#allocation13 + $0x680] sm:$0xff]
    %v1430 = vld [vmem:[#allocation13 + $0x688] sm:$0xff]
    %v1431 = vld [vmem:[#allocation13 + $0x690] sm:$0xff]
    %v1432 = vld [vmem:[#allocation13 + $0x698] sm:$0xff]
    %v1433 = vld [vmem:[#allocation13 + $0x6a0] sm:$0xff]
    %v1434 = vld [vmem:[#allocation13 + $0x6a8] sm:$0xff]
    %v1435 = vld [vmem:[#allocation13 + $0x6b0] sm:$0xff]
    %v1436 = vld [vmem:[#allocation13 + $0x6b8] sm:$0xff]
    %v1437 = vld [vmem:[#allocation13 + $0x6c0] sm:$0xff]
    %v1438 = vld [vmem:[#allocation13 + $0x6c8] sm:$0xff]
    %v1439 = vld [vmem:[#allocation13 + $0x6d0] sm:$0xff]
    %v1440 = vld [vmem:[#allocation13 + $0x6d8] sm:$0xff]
    %v1441 = vld [vmem:[#allocation13 + $0x6e0] sm:$0xff]
    %v1442 = vld [vmem:[#allocation13 + $0x6e8] sm:$0xff]
    %v1443 = vld [vmem:[#allocation13 + $0x6f0] sm:$0xff]
    %v1444 = vld [vmem:[#allocation13 + $0x6f8] sm:$0xff]
    %v1445 = vld [vmem:[#allocation13 + $0x700] sm:$0xff]
    %v1446 = vld [vmem:[#allocation13 + $0x708] sm:$0xff]
    %v1447 = vld [vmem:[#allocation13 + $0x710] sm:$0xff]
    %v1448 = vld [vmem:[#allocation13 + $0x718] sm:$0xff]
    %v1449 = vld [vmem:[#allocation13 + $0x720] sm:$0xff]
    %v1450 = vld [vmem:[#allocation13 + $0x728] sm:$0xff]
    %v1451 = vld [vmem:[#allocation13 + $0x730] sm:$0xff]
    %v1452 = vld [vmem:[#allocation13 + $0x738] sm:$0xff]
    %v1453 = vld [vmem:[#allocation13 + $0x740] sm:$0xff]
    %v1454 = vld [vmem:[#allocation13 + $0x748] sm:$0xff]
    %v1455 = vld [vmem:[#allocation13 + $0x750] sm:$0xff]
    %v1456 = vld [vmem:[#allocation13 + $0x758] sm:$0xff]
    %v1457 = vld [vmem:[#allocation13 + $0x760] sm:$0xff]
    %v1458 = vld [vmem:[#allocation13 + $0x768] sm:$0xff]
    %v1459 = vld [vmem:[#allocation13 + $0x770] sm:$0xff]
    %v1460 = vld [vmem:[#allocation13 + $0x778] sm:$0xff]
    %v1461 = vld [vmem:[#allocation13 + $0x780] sm:$0xff]
    %v1462 = vld [vmem:[#allocation13 + $0x788] sm:$0xff]
    %v1463 = vld [vmem:[#allocation13 + $0x790] sm:$0xff]
    %v1464 = vld [vmem:[#allocation13 + $0x798] sm:$0xff]
    %v1465 = vld [vmem:[#allocation13 + $0x7a0] sm:$0xff]
    %v1466 = vld [vmem:[#allocation13 + $0x7a8] sm:$0xff]
    %v1467 = vld [vmem:[#allocation13 + $0x7b0] sm:$0xff]
    %v1468 = vld [vmem:[#allocation13 + $0x7b8] sm:$0xff]
    %v1469 = vld [vmem:[#allocation13 + $0x7c0] sm:$0xff]
    %v1470 = vld [vmem:[#allocation13 + $0x7c8] sm:$0xff]
    %v1471 = vld [vmem:[#allocation13 + $0x7d0] sm:$0xff]
    %v1472 = vld [vmem:[#allocation13 + $0x7d8] sm:$0xff]
    %v1473 = vld [vmem:[#allocation13 + $0x7e0] sm:$0xff]
    %v1474 = vld [vmem:[#allocation13 + $0x7e8] sm:$0xff]
    %v1475 = vld [vmem:[#allocation13 + $0x7f0] sm:$0xff]
    %v1476 = vld [vmem:[#allocation13 + $0x7f8] sm:$0xff]
    %1477 = vmatprep.subr.mxu0 %v1342
    %1478 = vmatpush1.msra.mxu0 %v1341
    %1479 = vmatprep.subr.mxu0 %v1334
    %1480 = vmatpush1.msra.mxu0 %v1333
    %1481 = vmatprep.subr.mxu0 %v1326
    %1482 = vmatpush1.msra.mxu0 %v1325
    %1483 = vmatprep.subr.mxu0 %v1318
    %1484 = vmatpush1.msra.mxu0 %v1317
    %1485 = vmatprep.subr.mxu0 %v1310
    %1486 = vmatpush1.msra.mxu0 %v1309
    %1487 = vmatprep.subr.mxu0 %v1302
    %1488 = vmatpush1.msra.mxu0 %v1301
    %1489 = vmatprep.subr.mxu0 %v1294
    %1490 = vmatpush1.msra.mxu0 %v1293
    %1491 = vmatprep.subr.mxu0 %v1286
    %1492 = vmatpush1.msra.mxu0 %v1285
    %1493 = vmatprep.subr.mxu0 %v1278
    %1494 = vmatpush1.msra.mxu0 %v1277
    %1495 = vmatprep.subr.mxu0 %v1270
    %1496 = vmatpush1.msra.mxu0 %v1269
    %1497 = vmatprep.subr.mxu0 %v1262
    %1498 = vmatpush1.msra.mxu0 %v1261
    %1499 = vmatprep.subr.mxu0 %v1254
    %1500 = vmatpush1.msra.mxu0 %v1253
    %1501 = vmatprep.subr.mxu0 %v1246
    %1502 = vmatpush1.msra.mxu0 %v1245
    %1503 = vmatprep.subr.mxu0 %v1238
    %1504 = vmatpush1.msra.mxu0 %v1237
    %1505 = vmatprep.subr.mxu0 %v1230
    %1506 = vmatpush1.msra.mxu0 %v1229
    %1507 = vmatprep.subr.mxu0 %v1222
    %1508 = vmatpush1.msra.mxu0 %v1221
    %1509 = vmatprep.subr.mxu0 %v1470
    %1510 = vmatpush2.msra.mxu0 %v1469
    %1511 = vmatprep.subr.mxu0 %v1462
    %1512 = vmatpush2.msra.mxu0 %v1461
    %1513 = vmatprep.subr.mxu0 %v1454
    %1514 = vmatpush2.msra.mxu0 %v1453
    %1515 = vmatprep.subr.mxu0 %v1446
    %1516 = vmatpush2.msra.mxu0 %v1445
    %1517 = vmatprep.subr.mxu0 %v1438
    %1518 = vmatpush2.msra.mxu0 %v1437
    %1519 = vmatprep.subr.mxu0 %v1430
    %1520 = vmatpush2.msra.mxu0 %v1429
    %1521 = vmatprep.subr.mxu0 %v1422
    %1522 = vmatpush2.msra.mxu0 %v1421
    %1523 = vmatprep.subr.mxu0 %v1414
    %1524 = vmatpush2.msra.mxu0 %v1413
    %1525 = vmatprep.subr.mxu0 %v1406
    %1526 = vmatpush2.msra.mxu0 %v1405
    %1527 = vmatprep.subr.mxu0 %v1398
    %1528 = vmatpush2.msra.mxu0 %v1397
    %1529 = vmatprep.subr.mxu0 %v1390
    %1530 = vmatpush2.msra.mxu0 %v1389
    %1531 = vmatprep.subr.mxu0 %v1382
    %1532 = vmatpush2.msra.mxu0 %v1381
    %1533 = vmatprep.subr.mxu0 %v1374
    %1534 = vmatpush2.msra.mxu0 %v1373
    %1535 = vmatprep.subr.mxu0 %v1366
    %1536 = vmatpush2.msra.mxu0 %v1365
    %1537 = vmatprep.subr.mxu0 %v1358
    %1538 = vmatpush2.msra.mxu0 %v1357
    %1539 = vmatprep.subr.mxu0 %v1350
    %1540 = vmatpush2.msra.mxu0 %v1349
    %1541 = vmatprep.mubr.f32.mxu0 %v1144
    %1542 = vmatmul.mubr.f32.gmra.mxu0 %v1143
    %v1543 = vpop.f32.mrf.mxu0
    %v1544 = vadd.f32 0.0, %v1543
    %v1545 = vpop.f32.mrf.mxu0
    %v1546 = vadd.f32 0.0, %v1545
    %1547 = vdwg.mxu0
    %1548 = vmatprep.subr.mxu0 %v1344
    %1549 = vmatpush1.msra.mxu0 %v1343
    %1550 = vmatprep.subr.mxu0 %v1336
    %1551 = vmatpush1.msra.mxu0 %v1335
    %1552 = vmatprep.subr.mxu0 %v1328
    %1553 = vmatpush1.msra.mxu0 %v1327
    %1554 = vmatprep.subr.mxu0 %v1320
    %1555 = vmatpush1.msra.mxu0 %v1319
    %1556 = vmatprep.subr.mxu0 %v1312
    %1557 = vmatpush1.msra.mxu0 %v1311
    %1558 = vmatprep.subr.mxu0 %v1304
    %1559 = vmatpush1.msra.mxu0 %v1303
    %1560 = vmatprep.subr.mxu0 %v1296
    %1561 = vmatpush1.msra.mxu0 %v1295
    %1562 = vmatprep.subr.mxu0 %v1288
    %1563 = vmatpush1.msra.mxu0 %v1287
    %1564 = vmatprep.subr.mxu0 %v1280
    %1565 = vmatpush1.msra.mxu0 %v1279
    %1566 = vmatprep.subr.mxu0 %v1272
    %1567 = vmatpush1.msra.mxu0 %v1271
    %1568 = vmatprep.subr.mxu0 %v1264
    %1569 = vmatpush1.msra.mxu0 %v1263
    %1570 = vmatprep.subr.mxu0 %v1256
    %1571 = vmatpush1.msra.mxu0 %v1255
    %1572 = vmatprep.subr.mxu0 %v1248
    %1573 = vmatpush1.msra.mxu0 %v1247
    %1574 = vmatprep.subr.mxu0 %v1240
    %1575 = vmatpush1.msra.mxu0 %v1239
    %1576 = vmatprep.subr.mxu0 %v1232
    %1577 = vmatpush1.msra.mxu0 %v1231
    %1578 = vmatprep.subr.mxu0 %v1224
    %1579 = vmatpush1.msra.mxu0 %v1223
    %1580 = vmatprep.subr.mxu0 %v1472
    %1581 = vmatpush2.msra.mxu0 %v1471
    %1582 = vmatprep.subr.mxu0 %v1464
    %1583 = vmatpush2.msra.mxu0 %v1463
    %1584 = vmatprep.subr.mxu0 %v1456
    %1585 = vmatpush2.msra.mxu0 %v1455
    %1586 = vmatprep.subr.mxu0 %v1448
    %1587 = vmatpush2.msra.mxu0 %v1447
    %1588 = vmatprep.subr.mxu0 %v1440
    %1589 = vmatpush2.msra.mxu0 %v1439
    %1590 = vmatprep.subr.mxu0 %v1432
    %1591 = vmatpush2.msra.mxu0 %v1431
    %1592 = vmatprep.subr.mxu0 %v1424
    %1593 = vmatpush2.msra.mxu0 %v1423
    %1594 = vmatprep.subr.mxu0 %v1416
    %1595 = vmatpush2.msra.mxu0 %v1415
    %1596 = vmatprep.subr.mxu0 %v1408
    %1597 = vmatpush2.msra.mxu0 %v1407
    %1598 = vmatprep.subr.mxu0 %v1400
    %1599 = vmatpush2.msra.mxu0 %v1399
    %1600 = vmatprep.subr.mxu0 %v1392
    %1601 = vmatpush2.msra.mxu0 %v1391
    %1602 = vmatprep.subr.mxu0 %v1384
    %1603 = vmatpush2.msra.mxu0 %v1383
    %1604 = vmatprep.subr.mxu0 %v1376
    %1605 = vmatpush2.msra.mxu0 %v1375
    %1606 = vmatprep.subr.mxu0 %v1368
    %1607 = vmatpush2.msra.mxu0 %v1367
    %1608 = vmatprep.subr.mxu0 %v1360
    %1609 = vmatpush2.msra.mxu0 %v1359
    %1610 = vmatprep.subr.mxu0 %v1352
    %1611 = vmatpush2.msra.mxu0 %v1351
    %1612 = vmatprep.mubr.f32.mxu0 %v1144
    %1613 = vmatmul.mubr.f32.gmra.mxu0 %v1143
    %v1614 = vpop.f32.mrf.mxu0
    %v1615 = vadd.f32 0.0, %v1614
    %v1616 = vpop.f32.mrf.mxu0
    %v1617 = vadd.f32 0.0, %v1616
    %1618 = vdwg.mxu0
    %1619 = vmatprep.subr.mxu0 %v1346
    %1620 = vmatpush1.msra.mxu0 %v1345
    %1621 = vmatprep.subr.mxu0 %v1338
    %1622 = vmatpush1.msra.mxu0 %v1337
    %1623 = vmatprep.subr.mxu0 %v1330
    %1624 = vmatpush1.msra.mxu0 %v1329
    %1625 = vmatprep.subr.mxu0 %v1322
    %1626 = vmatpush1.msra.mxu0 %v1321
    %1627 = vmatprep.subr.mxu0 %v1314
    %1628 = vmatpush1.msra.mxu0 %v1313
    %1629 = vmatprep.subr.mxu0 %v1306
    %1630 = vmatpush1.msra.mxu0 %v1305
    %1631 = vmatprep.subr.mxu0 %v1298
    %1632 = vmatpush1.msra.mxu0 %v1297
    %1633 = vmatprep.subr.mxu0 %v1290
    %1634 = vmatpush1.msra.mxu0 %v1289
    %1635 = vmatprep.subr.mxu0 %v1282
    %1636 = vmatpush1.msra.mxu0 %v1281
    %1637 = vmatprep.subr.mxu0 %v1274
    %1638 = vmatpush1.msra.mxu0 %v1273
    %1639 = vmatprep.subr.mxu0 %v1266
    %1640 = vmatpush1.msra.mxu0 %v1265
    %1641 = vmatprep.subr.mxu0 %v1258
    %1642 = vmatpush1.msra.mxu0 %v1257
    %1643 = vmatprep.subr.mxu0 %v1250
    %1644 = vmatpush1.msra.mxu0 %v1249
    %1645 = vmatprep.subr.mxu0 %v1242
    %1646 = vmatpush1.msra.mxu0 %v1241
    %1647 = vmatprep.subr.mxu0 %v1234
    %1648 = vmatpush1.msra.mxu0 %v1233
    %1649 = vmatprep.subr.mxu0 %v1226
    %1650 = vmatpush1.msra.mxu0 %v1225
    %1651 = vmatprep.subr.mxu0 %v1474
    %1652 = vmatpush2.msra.mxu0 %v1473
    %1653 = vmatprep.subr.mxu0 %v1466
    %1654 = vmatpush2.msra.mxu0 %v1465
    %1655 = vmatprep.subr.mxu0 %v1458
    %1656 = vmatpush2.msra.mxu0 %v1457
    %1657 = vmatprep.subr.mxu0 %v1450
    %1658 = vmatpush2.msra.mxu0 %v1449
    %1659 = vmatprep.subr.mxu0 %v1442
    %1660 = vmatpush2.msra.mxu0 %v1441
    %1661 = vmatprep.subr.mxu0 %v1434
    %1662 = vmatpush2.msra.mxu0 %v1433
    %1663 = vmatprep.subr.mxu0 %v1426
    %1664 = vmatpush2.msra.mxu0 %v1425
    %1665 = vmatprep.subr.mxu0 %v1418
    %1666 = vmatpush2.msra.mxu0 %v1417
    %1667 = vmatprep.subr.mxu0 %v1410
    %1668 = vmatpush2.msra.mxu0 %v1409
    %1669 = vmatprep.subr.mxu0 %v1402
    %1670 = vmatpush2.msra.mxu0 %v1401
    %1671 = vmatprep.subr.mxu0 %v1394
    %1672 = vmatpush2.msra.mxu0 %v1393
    %1673 = vmatprep.subr.mxu0 %v1386
    %1674 = vmatpush2.msra.mxu0 %v1385
    %1675 = vmatprep.subr.mxu0 %v1378
    %1676 = vmatpush2.msra.mxu0 %v1377
    %1677 = vmatprep.subr.mxu0 %v1370
    %1678 = vmatpush2.msra.mxu0 %v1369
    %1679 = vmatprep.subr.mxu0 %v1362
    %1680 = vmatpush2.msra.mxu0 %v1361
    %1681 = vmatprep.subr.mxu0 %v1354
    %1682 = vmatpush2.msra.mxu0 %v1353
    %1683 = vmatprep.mubr.f32.mxu0 %v1144
    %1684 = vmatmul.mubr.f32.gmra.mxu0 %v1143
    %v1685 = vpop.f32.mrf.mxu0
    %v1686 = vadd.f32 0.0, %v1685
    %v1687 = vpop.f32.mrf.mxu0
    %v1688 = vadd.f32 0.0, %v1687
    %1689 = vdwg.mxu0
    %1690 = vmatprep.subr.mxu0 %v1348
    %1691 = vmatpush1.msra.mxu0 %v1347
    %1692 = vmatprep.subr.mxu0 %v1340
    %1693 = vmatpush1.msra.mxu0 %v1339
    %1694 = vmatprep.subr.mxu0 %v1332
    %1695 = vmatpush1.msra.mxu0 %v1331
    %1696 = vmatprep.subr.mxu0 %v1324
    %1697 = vmatpush1.msra.mxu0 %v1323
    %1698 = vmatprep.subr.mxu0 %v1316
    %1699 = vmatpush1.msra.mxu0 %v1315
    %1700 = vmatprep.subr.mxu0 %v1308
    %1701 = vmatpush1.msra.mxu0 %v1307
    %1702 = vmatprep.subr.mxu0 %v1300
    %1703 = vmatpush1.msra.mxu0 %v1299
    %1704 = vmatprep.subr.mxu0 %v1292
    %1705 = vmatpush1.msra.mxu0 %v1291
    %1706 = vmatprep.subr.mxu0 %v1284
    %1707 = vmatpush1.msra.mxu0 %v1283
    %1708 = vmatprep.subr.mxu0 %v1276
    %1709 = vmatpush1.msra.mxu0 %v1275
    %1710 = vmatprep.subr.mxu0 %v1268
    %1711 = vmatpush1.msra.mxu0 %v1267
    %1712 = vmatprep.subr.mxu0 %v1260
    %1713 = vmatpush1.msra.mxu0 %v1259
    %1714 = vmatprep.subr.mxu0 %v1252
    %1715 = vmatpush1.msra.mxu0 %v1251
    %1716 = vmatprep.subr.mxu0 %v1244
    %1717 = vmatpush1.msra.mxu0 %v1243
    %1718 = vmatprep.subr.mxu0 %v1236
    %1719 = vmatpush1.msra.mxu0 %v1235
    %1720 = vmatprep.subr.mxu0 %v1228
    %1721 = vmatpush1.msra.mxu0 %v1227
    %1722 = vmatprep.subr.mxu0 %v1476
    %1723 = vmatpush2.msra.mxu0 %v1475
    %1724 = vmatprep.subr.mxu0 %v1468
    %1725 = vmatpush2.msra.mxu0 %v1467
    %1726 = vmatprep.subr.mxu0 %v1460
    %1727 = vmatpush2.msra.mxu0 %v1459
    %1728 = vmatprep.subr.mxu0 %v1452
    %1729 = vmatpush2.msra.mxu0 %v1451
    %1730 = vmatprep.subr.mxu0 %v1444
    %1731 = vmatpush2.msra.mxu0 %v1443
    %1732 = vmatprep.subr.mxu0 %v1436
    %1733 = vmatpush2.msra.mxu0 %v1435
    %1734 = vmatprep.subr.mxu0 %v1428
    %1735 = vmatpush2.msra.mxu0 %v1427
    %1736 = vmatprep.subr.mxu0 %v1420
    %1737 = vmatpush2.msra.mxu0 %v1419
    %1738 = vmatprep.subr.mxu0 %v1412
    %1739 = vmatpush2.msra.mxu0 %v1411
    %1740 = vmatprep.subr.mxu0 %v1404
    %1741 = vmatpush2.msra.mxu0 %v1403
    %1742 = vmatprep.subr.mxu0 %v1396
    %1743 = vmatpush2.msra.mxu0 %v1395
    %1744 = vmatprep.subr.mxu0 %v1388
    %1745 = vmatpush2.msra.mxu0 %v1387
    %1746 = vmatprep.subr.mxu0 %v1380
    %1747 = vmatpush2.msra.mxu0 %v1379
    %1748 = vmatprep.subr.mxu0 %v1372
    %1749 = vmatpush2.msra.mxu0 %v1371
    %1750 = vmatprep.subr.mxu0 %v1364
    %1751 = vmatpush2.msra.mxu0 %v1363
    %1752 = vmatprep.subr.mxu0 %v1356
    %1753 = vmatpush2.msra.mxu0 %v1355
    %1754 = vmatprep.mubr.f32.mxu0 %v1144
    %1755 = vmatmul.mubr.f32.gmra.mxu0 %v1143
    %v1756 = vpop.f32.mrf.mxu0
    %v1757 = vadd.f32 0.0, %v1756
    %v1758 = vpop.f32.mrf.mxu0
    %v1759 = vadd.f32 0.0, %v1758
    %1760 = vdwg.mxu0
    %v1761 = vadd.f32 %v1213, %v1544
    %v1762 = vadd.f32 %v1214, %v1546
    %v1763 = vadd.f32 %v1215, %v1615
    %v1764 = vadd.f32 %v1216, %v1617
    %v1765 = vadd.f32 %v1217, %v1686
    %v1766 = vadd.f32 %v1218, %v1688
    %v1767 = vadd.f32 %v1219, %v1757
    %v1768 = vadd.f32 %v1220, %v1759
    %v1769 = vxor.u32 %v1761, 2147483648
    %v1770 = vxor.u32 %v1762, 2147483648
    %v1771 = vmul.f32 %v1769, 1.442695
    %v1772 = vpow.pop %v1771
    %v1773 = vmul.f32 %v1770, 1.442695
    %v1774 = vpow.pop %v1773
    %v1775 = vadd.f32 %v1772, 1.0
    %v1776 = vadd.f32 %v1774, 1.0
    %v1777 = vrcp.pop %v1775
    %v1778 = vmul.f32 1.0, %v1777
    %v1779 = vrcp.pop %v1776
    %v1780 = vmul.f32 1.0, %v1779
    %v1781 = vxor.u32 %v1763, 2147483648
    %v1782 = vxor.u32 %v1764, 2147483648
    %v1783 = vmul.f32 %v1781, 1.442695
    %v1784 = vpow.pop %v1783
    %v1785 = vmul.f32 %v1782, 1.442695
    %v1786 = vpow.pop %v1785
    %v1787 = vadd.f32 %v1784, 1.0
    %v1788 = vadd.f32 %v1786, 1.0
    %v1789 = vrcp.pop %v1787
    %v1790 = vmul.f32 1.0, %v1789
    %v1791 = vrcp.pop %v1788
    %v1792 = vmul.f32 1.0, %v1791
    %v1793 = vtanh.pop %v1765
    %v1794 = vtanh.pop %v1766
    %v1795 = vxor.u32 %v1767, 2147483648
    %v1796 = vxor.u32 %v1768, 2147483648
    %v1797 = vmul.f32 %v1795, 1.442695
    %v1798 = vpow.pop %v1797
    %v1799 = vmul.f32 %v1796, 1.442695
    %v1800 = vpow.pop %v1799
    %v1801 = vadd.f32 %v1798, 1.0
    %v1802 = vadd.f32 %v1800, 1.0
    %v1803 = vrcp.pop %v1801
    %v1804 = vmul.f32 1.0, %v1803
    %v1805 = vrcp.pop %v1802
    %v1806 = vmul.f32 1.0, %v1805
    %v1807 = vmul.f32 %v1790, %v1139
    %v1808 = vmul.f32 %v1792, %v1140
    %v1809 = vmul.f32 %v1778, %v1793
    %v1810 = vmul.f32 %v1780, %v1794
    %v1811 = vadd.f32 %v1807, %v1809
    %v1812 = vadd.f32 %v1808, %v1810
    %v1813 = vtanh.pop %v1811
    %v1814 = vtanh.pop %v1812
    %v1815 = vmul.f32 %v1804, %v1813
    %v1816 = vmul.f32 %v1806, %v1814
    %v1819 = vcombine.low %v1815, %v1816
    %v1821 = vunpack.c.l.s4 1966171168
    %v1822 = vunpack.c.0.s8 %v1821
    %v1823 = vlaneseq
    %v1824 = vshrl.u32 %v1823, 7
    %v1825 = vsub.s32 %v1822, %v1824
    %v1826 = vrot.slane %v1819, %v1825
    %v1828 = vunpack.c.l.s4 1966171168
    %v1829 = vunpack.c.0.s8 %v1828
    %v1830 = vlaneseq
    %v1831 = vshrl.u32 %v1830, 7
    %v1832 = vsub.s32 %v1829, %v1831
    %v1833 = vrot.slane %v1826, %v1832
    %s1835 = scalar_lea.vmem [#allocation2], 1
    %1836 = vst.msk [vmem:[%s1835] ss:$8 sm:$0x3] %vm1166, %v1833
    %1837 = vst.msk [vmem:[%s1835] ss:$8 sm:$0x0] %vm1166, %v1833
    %v1838 = vcombine.high %v1826, %v1826
    %v1840 = vunpack.c.l.s4 1966171168
    %v1841 = vunpack.c.0.s8 %v1840
    %v1842 = vlaneseq
    %v1843 = vshrl.u32 %v1842, 7
    %v1844 = vsub.s32 %v1841, %v1843
    %v1845 = vrot.slane %v1838, %v1844
    %s1847 = scalar_lea.vmem [#allocation2], 5
    %1848 = vst.msk [vmem:[%s1847] ss:$8 sm:$0x3] %vm1166, %v1845
    %1849 = vst.msk [vmem:[%s1847] ss:$8 sm:$0x0] %vm1166, %v1845
    %v1850 = vrot.slane %v275, 2
    %v1851 = vrot.slane %v277, 2
    %v1852 = vrot.slane %v346, 2
    %v1853 = vrot.slane %v348, 2
    %v1854 = vrot.slane %v417, 2
    %v1855 = vrot.slane %v419, 2
    %v1856 = vrot.slane %v488, 2
    %v1857 = vrot.slane %v490, 2
    %v1866 = vrot.slane %v275, 5
    %v1867 = vrot.slane %v277, 5
    %v1868 = vrot.slane %v346, 5
    %v1869 = vrot.slane %v348, 5
    %v1870 = vrot.slane %v417, 5
    %v1871 = vrot.slane %v419, 5
    %v1872 = vrot.slane %v488, 5
    %v1873 = vrot.slane %v490, 5
    %v1882 = vsel %vm518, %v1850, %v1866
    %v1883 = vsel %vm518, %v1851, %v1867
    %v1884 = vsel %vm518, %v1852, %v1868
    %v1885 = vsel %vm518, %v1853, %v1869
    %v1886 = vsel %vm518, %v1854, %v1870
    %v1887 = vsel %vm518, %v1855, %v1871
    %v1888 = vsel %vm518, %v1856, %v1872
    %v1889 = vsel %vm518, %v1857, %v1873
    %v1890 = vld [vmem:[#allocation13] sm:$0xff]
    %v1891 = vld [vmem:[#allocation13 + $0x8] sm:$0xff]
    %v1892 = vld [vmem:[#allocation13 + $0x10] sm:$0xff]
    %v1893 = vld [vmem:[#allocation13 + $0x18] sm:$0xff]
    %v1894 = vld [vmem:[#allocation13 + $0x20] sm:$0xff]
    %v1895 = vld [vmem:[#allocation13 + $0x28] sm:$0xff]
    %v1896 = vld [vmem:[#allocation13 + $0x30] sm:$0xff]
    %v1897 = vld [vmem:[#allocation13 + $0x38] sm:$0xff]
    %v1898 = vld [vmem:[#allocation13 + $0x40] sm:$0xff]
    %v1899 = vld [vmem:[#allocation13 + $0x48] sm:$0xff]
    %v1900 = vld [vmem:[#allocation13 + $0x50] sm:$0xff]
    %v1901 = vld [vmem:[#allocation13 + $0x58] sm:$0xff]
    %v1902 = vld [vmem:[#allocation13 + $0x60] sm:$0xff]
    %v1903 = vld [vmem:[#allocation13 + $0x68] sm:$0xff]
    %v1904 = vld [vmem:[#allocation13 + $0x70] sm:$0xff]
    %v1905 = vld [vmem:[#allocation13 + $0x78] sm:$0xff]
    %v1906 = vld [vmem:[#allocation13 + $0x80] sm:$0xff]
    %v1907 = vld [vmem:[#allocation13 + $0x88] sm:$0xff]
    %v1908 = vld [vmem:[#allocation13 + $0x90] sm:$0xff]
    %v1909 = vld [vmem:[#allocation13 + $0x98] sm:$0xff]
    %v1910 = vld [vmem:[#allocation13 + $0xa0] sm:$0xff]
    %v1911 = vld [vmem:[#allocation13 + $0xa8] sm:$0xff]
    %v1912 = vld [vmem:[#allocation13 + $0xb0] sm:$0xff]
    %v1913 = vld [vmem:[#allocation13 + $0xb8] sm:$0xff]
    %v1914 = vld [vmem:[#allocation13 + $0xc0] sm:$0xff]
    %v1915 = vld [vmem:[#allocation13 + $0xc8] sm:$0xff]
    %v1916 = vld [vmem:[#allocation13 + $0xd0] sm:$0xff]
    %v1917 = vld [vmem:[#allocation13 + $0xd8] sm:$0xff]
    %v1918 = vld [vmem:[#allocation13 + $0xe0] sm:$0xff]
    %v1919 = vld [vmem:[#allocation13 + $0xe8] sm:$0xff]
    %v1920 = vld [vmem:[#allocation13 + $0xf0] sm:$0xff]
    %v1921 = vld [vmem:[#allocation13 + $0xf8] sm:$0xff]
    %v1922 = vld [vmem:[#allocation13 + $0x100] sm:$0xff]
    %v1923 = vld [vmem:[#allocation13 + $0x108] sm:$0xff]
    %v1924 = vld [vmem:[#allocation13 + $0x110] sm:$0xff]
    %v1925 = vld [vmem:[#allocation13 + $0x118] sm:$0xff]
    %v1926 = vld [vmem:[#allocation13 + $0x120] sm:$0xff]
    %v1927 = vld [vmem:[#allocation13 + $0x128] sm:$0xff]
    %v1928 = vld [vmem:[#allocation13 + $0x130] sm:$0xff]
    %v1929 = vld [vmem:[#allocation13 + $0x138] sm:$0xff]
    %v1930 = vld [vmem:[#allocation13 + $0x140] sm:$0xff]
    %v1931 = vld [vmem:[#allocation13 + $0x148] sm:$0xff]
    %v1932 = vld [vmem:[#allocation13 + $0x150] sm:$0xff]
    %v1933 = vld [vmem:[#allocation13 + $0x158] sm:$0xff]
    %v1934 = vld [vmem:[#allocation13 + $0x160] sm:$0xff]
    %v1935 = vld [vmem:[#allocation13 + $0x168] sm:$0xff]
    %v1936 = vld [vmem:[#allocation13 + $0x170] sm:$0xff]
    %v1937 = vld [vmem:[#allocation13 + $0x178] sm:$0xff]
    %v1938 = vld [vmem:[#allocation13 + $0x180] sm:$0xff]
    %v1939 = vld [vmem:[#allocation13 + $0x188] sm:$0xff]
    %v1940 = vld [vmem:[#allocation13 + $0x190] sm:$0xff]
    %v1941 = vld [vmem:[#allocation13 + $0x198] sm:$0xff]
    %v1942 = vld [vmem:[#allocation13 + $0x1a0] sm:$0xff]
    %v1943 = vld [vmem:[#allocation13 + $0x1a8] sm:$0xff]
    %v1944 = vld [vmem:[#allocation13 + $0x1b0] sm:$0xff]
    %v1945 = vld [vmem:[#allocation13 + $0x1b8] sm:$0xff]
    %v1946 = vld [vmem:[#allocation13 + $0x1c0] sm:$0xff]
    %v1947 = vld [vmem:[#allocation13 + $0x1c8] sm:$0xff]
    %v1948 = vld [vmem:[#allocation13 + $0x1d0] sm:$0xff]
    %v1949 = vld [vmem:[#allocation13 + $0x1d8] sm:$0xff]
    %v1950 = vld [vmem:[#allocation13 + $0x1e0] sm:$0xff]
    %v1951 = vld [vmem:[#allocation13 + $0x1e8] sm:$0xff]
    %v1952 = vld [vmem:[#allocation13 + $0x1f0] sm:$0xff]
    %v1953 = vld [vmem:[#allocation13 + $0x1f8] sm:$0xff]
    %v1954 = vld [vmem:[#allocation13 + $0x200] sm:$0xff]
    %v1955 = vld [vmem:[#allocation13 + $0x208] sm:$0xff]
    %v1956 = vld [vmem:[#allocation13 + $0x210] sm:$0xff]
    %v1957 = vld [vmem:[#allocation13 + $0x218] sm:$0xff]
    %v1958 = vld [vmem:[#allocation13 + $0x220] sm:$0xff]
    %v1959 = vld [vmem:[#allocation13 + $0x228] sm:$0xff]
    %v1960 = vld [vmem:[#allocation13 + $0x230] sm:$0xff]
    %v1961 = vld [vmem:[#allocation13 + $0x238] sm:$0xff]
    %v1962 = vld [vmem:[#allocation13 + $0x240] sm:$0xff]
    %v1963 = vld [vmem:[#allocation13 + $0x248] sm:$0xff]
    %v1964 = vld [vmem:[#allocation13 + $0x250] sm:$0xff]
    %v1965 = vld [vmem:[#allocation13 + $0x258] sm:$0xff]
    %v1966 = vld [vmem:[#allocation13 + $0x260] sm:$0xff]
    %v1967 = vld [vmem:[#allocation13 + $0x268] sm:$0xff]
    %v1968 = vld [vmem:[#allocation13 + $0x270] sm:$0xff]
    %v1969 = vld [vmem:[#allocation13 + $0x278] sm:$0xff]
    %v1970 = vld [vmem:[#allocation13 + $0x280] sm:$0xff]
    %v1971 = vld [vmem:[#allocation13 + $0x288] sm:$0xff]
    %v1972 = vld [vmem:[#allocation13 + $0x290] sm:$0xff]
    %v1973 = vld [vmem:[#allocation13 + $0x298] sm:$0xff]
    %v1974 = vld [vmem:[#allocation13 + $0x2a0] sm:$0xff]
    %v1975 = vld [vmem:[#allocation13 + $0x2a8] sm:$0xff]
    %v1976 = vld [vmem:[#allocation13 + $0x2b0] sm:$0xff]
    %v1977 = vld [vmem:[#allocation13 + $0x2b8] sm:$0xff]
    %v1978 = vld [vmem:[#allocation13 + $0x2c0] sm:$0xff]
    %v1979 = vld [vmem:[#allocation13 + $0x2c8] sm:$0xff]
    %v1980 = vld [vmem:[#allocation13 + $0x2d0] sm:$0xff]
    %v1981 = vld [vmem:[#allocation13 + $0x2d8] sm:$0xff]
    %v1982 = vld [vmem:[#allocation13 + $0x2e0] sm:$0xff]
    %v1983 = vld [vmem:[#allocation13 + $0x2e8] sm:$0xff]
    %v1984 = vld [vmem:[#allocation13 + $0x2f0] sm:$0xff]
    %v1985 = vld [vmem:[#allocation13 + $0x2f8] sm:$0xff]
    %v1986 = vld [vmem:[#allocation13 + $0x300] sm:$0xff]
    %v1987 = vld [vmem:[#allocation13 + $0x308] sm:$0xff]
    %v1988 = vld [vmem:[#allocation13 + $0x310] sm:$0xff]
    %v1989 = vld [vmem:[#allocation13 + $0x318] sm:$0xff]
    %v1990 = vld [vmem:[#allocation13 + $0x320] sm:$0xff]
    %v1991 = vld [vmem:[#allocation13 + $0x328] sm:$0xff]
    %v1992 = vld [vmem:[#allocation13 + $0x330] sm:$0xff]
    %v1993 = vld [vmem:[#allocation13 + $0x338] sm:$0xff]
    %v1994 = vld [vmem:[#allocation13 + $0x340] sm:$0xff]
    %v1995 = vld [vmem:[#allocation13 + $0x348] sm:$0xff]
    %v1996 = vld [vmem:[#allocation13 + $0x350] sm:$0xff]
    %v1997 = vld [vmem:[#allocation13 + $0x358] sm:$0xff]
    %v1998 = vld [vmem:[#allocation13 + $0x360] sm:$0xff]
    %v1999 = vld [vmem:[#allocation13 + $0x368] sm:$0xff]
    %v2000 = vld [vmem:[#allocation13 + $0x370] sm:$0xff]
    %v2001 = vld [vmem:[#allocation13 + $0x378] sm:$0xff]
    %v2002 = vld [vmem:[#allocation13 + $0x380] sm:$0xff]
    %v2003 = vld [vmem:[#allocation13 + $0x388] sm:$0xff]
    %v2004 = vld [vmem:[#allocation13 + $0x390] sm:$0xff]
    %v2005 = vld [vmem:[#allocation13 + $0x398] sm:$0xff]
    %v2006 = vld [vmem:[#allocation13 + $0x3a0] sm:$0xff]
    %v2007 = vld [vmem:[#allocation13 + $0x3a8] sm:$0xff]
    %v2008 = vld [vmem:[#allocation13 + $0x3b0] sm:$0xff]
    %v2009 = vld [vmem:[#allocation13 + $0x3b8] sm:$0xff]
    %v2010 = vld [vmem:[#allocation13 + $0x3c0] sm:$0xff]
    %v2011 = vld [vmem:[#allocation13 + $0x3c8] sm:$0xff]
    %v2012 = vld [vmem:[#allocation13 + $0x3d0] sm:$0xff]
    %v2013 = vld [vmem:[#allocation13 + $0x3d8] sm:$0xff]
    %v2014 = vld [vmem:[#allocation13 + $0x3e0] sm:$0xff]
    %v2015 = vld [vmem:[#allocation13 + $0x3e8] sm:$0xff]
    %v2016 = vld [vmem:[#allocation13 + $0x3f0] sm:$0xff]
    %v2017 = vld [vmem:[#allocation13 + $0x3f8] sm:$0xff]
    %v2018 = vld [vmem:[#allocation13 + $0x400] sm:$0xff]
    %v2019 = vld [vmem:[#allocation13 + $0x408] sm:$0xff]
    %v2020 = vld [vmem:[#allocation13 + $0x410] sm:$0xff]
    %v2021 = vld [vmem:[#allocation13 + $0x418] sm:$0xff]
    %v2022 = vld [vmem:[#allocation13 + $0x420] sm:$0xff]
    %v2023 = vld [vmem:[#allocation13 + $0x428] sm:$0xff]
    %v2024 = vld [vmem:[#allocation13 + $0x430] sm:$0xff]
    %v2025 = vld [vmem:[#allocation13 + $0x438] sm:$0xff]
    %v2026 = vld [vmem:[#allocation13 + $0x440] sm:$0xff]
    %v2027 = vld [vmem:[#allocation13 + $0x448] sm:$0xff]
    %v2028 = vld [vmem:[#allocation13 + $0x450] sm:$0xff]
    %v2029 = vld [vmem:[#allocation13 + $0x458] sm:$0xff]
    %v2030 = vld [vmem:[#allocation13 + $0x460] sm:$0xff]
    %v2031 = vld [vmem:[#allocation13 + $0x468] sm:$0xff]
    %v2032 = vld [vmem:[#allocation13 + $0x470] sm:$0xff]
    %v2033 = vld [vmem:[#allocation13 + $0x478] sm:$0xff]
    %v2034 = vld [vmem:[#allocation13 + $0x480] sm:$0xff]
    %v2035 = vld [vmem:[#allocation13 + $0x488] sm:$0xff]
    %v2036 = vld [vmem:[#allocation13 + $0x490] sm:$0xff]
    %v2037 = vld [vmem:[#allocation13 + $0x498] sm:$0xff]
    %v2038 = vld [vmem:[#allocation13 + $0x4a0] sm:$0xff]
    %v2039 = vld [vmem:[#allocation13 + $0x4a8] sm:$0xff]
    %v2040 = vld [vmem:[#allocation13 + $0x4b0] sm:$0xff]
    %v2041 = vld [vmem:[#allocation13 + $0x4b8] sm:$0xff]
    %v2042 = vld [vmem:[#allocation13 + $0x4c0] sm:$0xff]
    %v2043 = vld [vmem:[#allocation13 + $0x4c8] sm:$0xff]
    %v2044 = vld [vmem:[#allocation13 + $0x4d0] sm:$0xff]
    %v2045 = vld [vmem:[#allocation13 + $0x4d8] sm:$0xff]
    %v2046 = vld [vmem:[#allocation13 + $0x4e0] sm:$0xff]
    %v2047 = vld [vmem:[#allocation13 + $0x4e8] sm:$0xff]
    %v2048 = vld [vmem:[#allocation13 + $0x4f0] sm:$0xff]
    %v2049 = vld [vmem:[#allocation13 + $0x4f8] sm:$0xff]
    %v2050 = vld [vmem:[#allocation13 + $0x500] sm:$0xff]
    %v2051 = vld [vmem:[#allocation13 + $0x508] sm:$0xff]
    %v2052 = vld [vmem:[#allocation13 + $0x510] sm:$0xff]
    %v2053 = vld [vmem:[#allocation13 + $0x518] sm:$0xff]
    %v2054 = vld [vmem:[#allocation13 + $0x520] sm:$0xff]
    %v2055 = vld [vmem:[#allocation13 + $0x528] sm:$0xff]
    %v2056 = vld [vmem:[#allocation13 + $0x530] sm:$0xff]
    %v2057 = vld [vmem:[#allocation13 + $0x538] sm:$0xff]
    %v2058 = vld [vmem:[#allocation13 + $0x540] sm:$0xff]
    %v2059 = vld [vmem:[#allocation13 + $0x548] sm:$0xff]
    %v2060 = vld [vmem:[#allocation13 + $0x550] sm:$0xff]
    %v2061 = vld [vmem:[#allocation13 + $0x558] sm:$0xff]
    %v2062 = vld [vmem:[#allocation13 + $0x560] sm:$0xff]
    %v2063 = vld [vmem:[#allocation13 + $0x568] sm:$0xff]
    %v2064 = vld [vmem:[#allocation13 + $0x570] sm:$0xff]
    %v2065 = vld [vmem:[#allocation13 + $0x578] sm:$0xff]
    %v2066 = vld [vmem:[#allocation13 + $0x580] sm:$0xff]
    %v2067 = vld [vmem:[#allocation13 + $0x588] sm:$0xff]
    %v2068 = vld [vmem:[#allocation13 + $0x590] sm:$0xff]
    %v2069 = vld [vmem:[#allocation13 + $0x598] sm:$0xff]
    %v2070 = vld [vmem:[#allocation13 + $0x5a0] sm:$0xff]
    %v2071 = vld [vmem:[#allocation13 + $0x5a8] sm:$0xff]
    %v2072 = vld [vmem:[#allocation13 + $0x5b0] sm:$0xff]
    %v2073 = vld [vmem:[#allocation13 + $0x5b8] sm:$0xff]
    %v2074 = vld [vmem:[#allocation13 + $0x5c0] sm:$0xff]
    %v2075 = vld [vmem:[#allocation13 + $0x5c8] sm:$0xff]
    %v2076 = vld [vmem:[#allocation13 + $0x5d0] sm:$0xff]
    %v2077 = vld [vmem:[#allocation13 + $0x5d8] sm:$0xff]
    %v2078 = vld [vmem:[#allocation13 + $0x5e0] sm:$0xff]
    %v2079 = vld [vmem:[#allocation13 + $0x5e8] sm:$0xff]
    %v2080 = vld [vmem:[#allocation13 + $0x5f0] sm:$0xff]
    %v2081 = vld [vmem:[#allocation13 + $0x5f8] sm:$0xff]
    %v2082 = vld [vmem:[#allocation13 + $0x600] sm:$0xff]
    %v2083 = vld [vmem:[#allocation13 + $0x608] sm:$0xff]
    %v2084 = vld [vmem:[#allocation13 + $0x610] sm:$0xff]
    %v2085 = vld [vmem:[#allocation13 + $0x618] sm:$0xff]
    %v2086 = vld [vmem:[#allocation13 + $0x620] sm:$0xff]
    %v2087 = vld [vmem:[#allocation13 + $0x628] sm:$0xff]
    %v2088 = vld [vmem:[#allocation13 + $0x630] sm:$0xff]
    %v2089 = vld [vmem:[#allocation13 + $0x638] sm:$0xff]
    %v2090 = vld [vmem:[#allocation13 + $0x640] sm:$0xff]
    %v2091 = vld [vmem:[#allocation13 + $0x648] sm:$0xff]
    %v2092 = vld [vmem:[#allocation13 + $0x650] sm:$0xff]
    %v2093 = vld [vmem:[#allocation13 + $0x658] sm:$0xff]
    %v2094 = vld [vmem:[#allocation13 + $0x660] sm:$0xff]
    %v2095 = vld [vmem:[#allocation13 + $0x668] sm:$0xff]
    %v2096 = vld [vmem:[#allocation13 + $0x670] sm:$0xff]
    %v2097 = vld [vmem:[#allocation13 + $0x678] sm:$0xff]
    %v2098 = vld [vmem:[#allocation13 + $0x680] sm:$0xff]
    %v2099 = vld [vmem:[#allocation13 + $0x688] sm:$0xff]
    %v2100 = vld [vmem:[#allocation13 + $0x690] sm:$0xff]
    %v2101 = vld [vmem:[#allocation13 + $0x698] sm:$0xff]
    %v2102 = vld [vmem:[#allocation13 + $0x6a0] sm:$0xff]
    %v2103 = vld [vmem:[#allocation13 + $0x6a8] sm:$0xff]
    %v2104 = vld [vmem:[#allocation13 + $0x6b0] sm:$0xff]
    %v2105 = vld [vmem:[#allocation13 + $0x6b8] sm:$0xff]
    %v2106 = vld [vmem:[#allocation13 + $0x6c0] sm:$0xff]
    %v2107 = vld [vmem:[#allocation13 + $0x6c8] sm:$0xff]
    %v2108 = vld [vmem:[#allocation13 + $0x6d0] sm:$0xff]
    %v2109 = vld [vmem:[#allocation13 + $0x6d8] sm:$0xff]
    %v2110 = vld [vmem:[#allocation13 + $0x6e0] sm:$0xff]
    %v2111 = vld [vmem:[#allocation13 + $0x6e8] sm:$0xff]
    %v2112 = vld [vmem:[#allocation13 + $0x6f0] sm:$0xff]
    %v2113 = vld [vmem:[#allocation13 + $0x6f8] sm:$0xff]
    %v2114 = vld [vmem:[#allocation13 + $0x700] sm:$0xff]
    %v2115 = vld [vmem:[#allocation13 + $0x708] sm:$0xff]
    %v2116 = vld [vmem:[#allocation13 + $0x710] sm:$0xff]
    %v2117 = vld [vmem:[#allocation13 + $0x718] sm:$0xff]
    %v2118 = vld [vmem:[#allocation13 + $0x720] sm:$0xff]
    %v2119 = vld [vmem:[#allocation13 + $0x728] sm:$0xff]
    %v2120 = vld [vmem:[#allocation13 + $0x730] sm:$0xff]
    %v2121 = vld [vmem:[#allocation13 + $0x738] sm:$0xff]
    %v2122 = vld [vmem:[#allocation13 + $0x740] sm:$0xff]
    %v2123 = vld [vmem:[#allocation13 + $0x748] sm:$0xff]
    %v2124 = vld [vmem:[#allocation13 + $0x750] sm:$0xff]
    %v2125 = vld [vmem:[#allocation13 + $0x758] sm:$0xff]
    %v2126 = vld [vmem:[#allocation13 + $0x760] sm:$0xff]
    %v2127 = vld [vmem:[#allocation13 + $0x768] sm:$0xff]
    %v2128 = vld [vmem:[#allocation13 + $0x770] sm:$0xff]
    %v2129 = vld [vmem:[#allocation13 + $0x778] sm:$0xff]
    %v2130 = vld [vmem:[#allocation13 + $0x780] sm:$0xff]
    %v2131 = vld [vmem:[#allocation13 + $0x788] sm:$0xff]
    %v2132 = vld [vmem:[#allocation13 + $0x790] sm:$0xff]
    %v2133 = vld [vmem:[#allocation13 + $0x798] sm:$0xff]
    %v2134 = vld [vmem:[#allocation13 + $0x7a0] sm:$0xff]
    %v2135 = vld [vmem:[#allocation13 + $0x7a8] sm:$0xff]
    %v2136 = vld [vmem:[#allocation13 + $0x7b0] sm:$0xff]
    %v2137 = vld [vmem:[#allocation13 + $0x7b8] sm:$0xff]
    %v2138 = vld [vmem:[#allocation13 + $0x7c0] sm:$0xff]
    %v2139 = vld [vmem:[#allocation13 + $0x7c8] sm:$0xff]
    %v2140 = vld [vmem:[#allocation13 + $0x7d0] sm:$0xff]
    %v2141 = vld [vmem:[#allocation13 + $0x7d8] sm:$0xff]
    %v2142 = vld [vmem:[#allocation13 + $0x7e0] sm:$0xff]
    %v2143 = vld [vmem:[#allocation13 + $0x7e8] sm:$0xff]
    %v2144 = vld [vmem:[#allocation13 + $0x7f0] sm:$0xff]
    %v2145 = vld [vmem:[#allocation13 + $0x7f8] sm:$0xff]
    %2146 = vmatprep.subr.mxu0 %v2011
    %2147 = vmatpush1.msra.mxu0 %v2010
    %2148 = vmatprep.subr.mxu0 %v2003
    %2149 = vmatpush1.msra.mxu0 %v2002
    %2150 = vmatprep.subr.mxu0 %v1995
    %2151 = vmatpush1.msra.mxu0 %v1994
    %2152 = vmatprep.subr.mxu0 %v1987
    %2153 = vmatpush1.msra.mxu0 %v1986
    %2154 = vmatprep.subr.mxu0 %v1979
    %2155 = vmatpush1.msra.mxu0 %v1978
    %2156 = vmatprep.subr.mxu0 %v1971
    %2157 = vmatpush1.msra.mxu0 %v1970
    %2158 = vmatprep.subr.mxu0 %v1963
    %2159 = vmatpush1.msra.mxu0 %v1962
    %2160 = vmatprep.subr.mxu0 %v1955
    %2161 = vmatpush1.msra.mxu0 %v1954
    %2162 = vmatprep.subr.mxu0 %v1947
    %2163 = vmatpush1.msra.mxu0 %v1946
    %2164 = vmatprep.subr.mxu0 %v1939
    %2165 = vmatpush1.msra.mxu0 %v1938
    %2166 = vmatprep.subr.mxu0 %v1931
    %2167 = vmatpush1.msra.mxu0 %v1930
    %2168 = vmatprep.subr.mxu0 %v1923
    %2169 = vmatpush1.msra.mxu0 %v1922
    %2170 = vmatprep.subr.mxu0 %v1915
    %2171 = vmatpush1.msra.mxu0 %v1914
    %2172 = vmatprep.subr.mxu0 %v1907
    %2173 = vmatpush1.msra.mxu0 %v1906
    %2174 = vmatprep.subr.mxu0 %v1899
    %2175 = vmatpush1.msra.mxu0 %v1898
    %2176 = vmatprep.subr.mxu0 %v1891
    %2177 = vmatpush1.msra.mxu0 %v1890
    %2178 = vmatprep.subr.mxu0 %v2139
    %2179 = vmatpush2.msra.mxu0 %v2138
    %2180 = vmatprep.subr.mxu0 %v2131
    %2181 = vmatpush2.msra.mxu0 %v2130
    %2182 = vmatprep.subr.mxu0 %v2123
    %2183 = vmatpush2.msra.mxu0 %v2122
    %2184 = vmatprep.subr.mxu0 %v2115
    %2185 = vmatpush2.msra.mxu0 %v2114
    %2186 = vmatprep.subr.mxu0 %v2107
    %2187 = vmatpush2.msra.mxu0 %v2106
    %2188 = vmatprep.subr.mxu0 %v2099
    %2189 = vmatpush2.msra.mxu0 %v2098
    %2190 = vmatprep.subr.mxu0 %v2091
    %2191 = vmatpush2.msra.mxu0 %v2090
    %2192 = vmatprep.subr.mxu0 %v2083
    %2193 = vmatpush2.msra.mxu0 %v2082
    %2194 = vmatprep.subr.mxu0 %v2075
    %2195 = vmatpush2.msra.mxu0 %v2074
    %2196 = vmatprep.subr.mxu0 %v2067
    %2197 = vmatpush2.msra.mxu0 %v2066
    %2198 = vmatprep.subr.mxu0 %v2059
    %2199 = vmatpush2.msra.mxu0 %v2058
    %2200 = vmatprep.subr.mxu0 %v2051
    %2201 = vmatpush2.msra.mxu0 %v2050
    %2202 = vmatprep.subr.mxu0 %v2043
    %2203 = vmatpush2.msra.mxu0 %v2042
    %2204 = vmatprep.subr.mxu0 %v2035
    %2205 = vmatpush2.msra.mxu0 %v2034
    %2206 = vmatprep.subr.mxu0 %v2027
    %2207 = vmatpush2.msra.mxu0 %v2026
    %2208 = vmatprep.subr.mxu0 %v2019
    %2209 = vmatpush2.msra.mxu0 %v2018
    %2210 = vmatprep.mubr.f32.mxu0 %v1816
    %2211 = vmatmul.mubr.f32.gmra.mxu0 %v1815
    %v2212 = vpop.f32.mrf.mxu0
    %v2213 = vadd.f32 0.0, %v2212
    %v2214 = vpop.f32.mrf.mxu0
    %v2215 = vadd.f32 0.0, %v2214
    %2216 = vdwg.mxu0
    %2217 = vmatprep.subr.mxu0 %v2013
    %2218 = vmatpush1.msra.mxu0 %v2012
    %2219 = vmatprep.subr.mxu0 %v2005
    %2220 = vmatpush1.msra.mxu0 %v2004
    %2221 = vmatprep.subr.mxu0 %v1997
    %2222 = vmatpush1.msra.mxu0 %v1996
    %2223 = vmatprep.subr.mxu0 %v1989
    %2224 = vmatpush1.msra.mxu0 %v1988
    %2225 = vmatprep.subr.mxu0 %v1981
    %2226 = vmatpush1.msra.mxu0 %v1980
    %2227 = vmatprep.subr.mxu0 %v1973
    %2228 = vmatpush1.msra.mxu0 %v1972
    %2229 = vmatprep.subr.mxu0 %v1965
    %2230 = vmatpush1.msra.mxu0 %v1964
    %2231 = vmatprep.subr.mxu0 %v1957
    %2232 = vmatpush1.msra.mxu0 %v1956
    %2233 = vmatprep.subr.mxu0 %v1949
    %2234 = vmatpush1.msra.mxu0 %v1948
    %2235 = vmatprep.subr.mxu0 %v1941
    %2236 = vmatpush1.msra.mxu0 %v1940
    %2237 = vmatprep.subr.mxu0 %v1933
    %2238 = vmatpush1.msra.mxu0 %v1932
    %2239 = vmatprep.subr.mxu0 %v1925
    %2240 = vmatpush1.msra.mxu0 %v1924
    %2241 = vmatprep.subr.mxu0 %v1917
    %2242 = vmatpush1.msra.mxu0 %v1916
    %2243 = vmatprep.subr.mxu0 %v1909
    %2244 = vmatpush1.msra.mxu0 %v1908
    %2245 = vmatprep.subr.mxu0 %v1901
    %2246 = vmatpush1.msra.mxu0 %v1900
    %2247 = vmatprep.subr.mxu0 %v1893
    %2248 = vmatpush1.msra.mxu0 %v1892
    %2249 = vmatprep.subr.mxu0 %v2141
    %2250 = vmatpush2.msra.mxu0 %v2140
    %2251 = vmatprep.subr.mxu0 %v2133
    %2252 = vmatpush2.msra.mxu0 %v2132
    %2253 = vmatprep.subr.mxu0 %v2125
    %2254 = vmatpush2.msra.mxu0 %v2124
    %2255 = vmatprep.subr.mxu0 %v2117
    %2256 = vmatpush2.msra.mxu0 %v2116
    %2257 = vmatprep.subr.mxu0 %v2109
    %2258 = vmatpush2.msra.mxu0 %v2108
    %2259 = vmatprep.subr.mxu0 %v2101
    %2260 = vmatpush2.msra.mxu0 %v2100
    %2261 = vmatprep.subr.mxu0 %v2093
    %2262 = vmatpush2.msra.mxu0 %v2092
    %2263 = vmatprep.subr.mxu0 %v2085
    %2264 = vmatpush2.msra.mxu0 %v2084
    %2265 = vmatprep.subr.mxu0 %v2077
    %2266 = vmatpush2.msra.mxu0 %v2076
    %2267 = vmatprep.subr.mxu0 %v2069
    %2268 = vmatpush2.msra.mxu0 %v2068
    %2269 = vmatprep.subr.mxu0 %v2061
    %2270 = vmatpush2.msra.mxu0 %v2060
    %2271 = vmatprep.subr.mxu0 %v2053
    %2272 = vmatpush2.msra.mxu0 %v2052
    %2273 = vmatprep.subr.mxu0 %v2045
    %2274 = vmatpush2.msra.mxu0 %v2044
    %2275 = vmatprep.subr.mxu0 %v2037
    %2276 = vmatpush2.msra.mxu0 %v2036
    %2277 = vmatprep.subr.mxu0 %v2029
    %2278 = vmatpush2.msra.mxu0 %v2028
    %2279 = vmatprep.subr.mxu0 %v2021
    %2280 = vmatpush2.msra.mxu0 %v2020
    %2281 = vmatprep.mubr.f32.mxu0 %v1816
    %2282 = vmatmul.mubr.f32.gmra.mxu0 %v1815
    %v2283 = vpop.f32.mrf.mxu0
    %v2284 = vadd.f32 0.0, %v2283
    %v2285 = vpop.f32.mrf.mxu0
    %v2286 = vadd.f32 0.0, %v2285
    %2287 = vdwg.mxu0
    %2288 = vmatprep.subr.mxu0 %v2015
    %2289 = vmatpush1.msra.mxu0 %v2014
    %2290 = vmatprep.subr.mxu0 %v2007
    %2291 = vmatpush1.msra.mxu0 %v2006
    %2292 = vmatprep.subr.mxu0 %v1999
    %2293 = vmatpush1.msra.mxu0 %v1998
    %2294 = vmatprep.subr.mxu0 %v1991
    %2295 = vmatpush1.msra.mxu0 %v1990
    %2296 = vmatprep.subr.mxu0 %v1983
    %2297 = vmatpush1.msra.mxu0 %v1982
    %2298 = vmatprep.subr.mxu0 %v1975
    %2299 = vmatpush1.msra.mxu0 %v1974
    %2300 = vmatprep.subr.mxu0 %v1967
    %2301 = vmatpush1.msra.mxu0 %v1966
    %2302 = vmatprep.subr.mxu0 %v1959
    %2303 = vmatpush1.msra.mxu0 %v1958
    %2304 = vmatprep.subr.mxu0 %v1951
    %2305 = vmatpush1.msra.mxu0 %v1950
    %2306 = vmatprep.subr.mxu0 %v1943
    %2307 = vmatpush1.msra.mxu0 %v1942
    %2308 = vmatprep.subr.mxu0 %v1935
    %2309 = vmatpush1.msra.mxu0 %v1934
    %2310 = vmatprep.subr.mxu0 %v1927
    %2311 = vmatpush1.msra.mxu0 %v1926
    %2312 = vmatprep.subr.mxu0 %v1919
    %2313 = vmatpush1.msra.mxu0 %v1918
    %2314 = vmatprep.subr.mxu0 %v1911
    %2315 = vmatpush1.msra.mxu0 %v1910
    %2316 = vmatprep.subr.mxu0 %v1903
    %2317 = vmatpush1.msra.mxu0 %v1902
    %2318 = vmatprep.subr.mxu0 %v1895
    %2319 = vmatpush1.msra.mxu0 %v1894
    %2320 = vmatprep.subr.mxu0 %v2143
    %2321 = vmatpush2.msra.mxu0 %v2142
    %2322 = vmatprep.subr.mxu0 %v2135
    %2323 = vmatpush2.msra.mxu0 %v2134
    %2324 = vmatprep.subr.mxu0 %v2127
    %2325 = vmatpush2.msra.mxu0 %v2126
    %2326 = vmatprep.subr.mxu0 %v2119
    %2327 = vmatpush2.msra.mxu0 %v2118
    %2328 = vmatprep.subr.mxu0 %v2111
    %2329 = vmatpush2.msra.mxu0 %v2110
    %2330 = vmatprep.subr.mxu0 %v2103
    %2331 = vmatpush2.msra.mxu0 %v2102
    %2332 = vmatprep.subr.mxu0 %v2095
    %2333 = vmatpush2.msra.mxu0 %v2094
    %2334 = vmatprep.subr.mxu0 %v2087
    %2335 = vmatpush2.msra.mxu0 %v2086
    %2336 = vmatprep.subr.mxu0 %v2079
    %2337 = vmatpush2.msra.mxu0 %v2078
    %2338 = vmatprep.subr.mxu0 %v2071
    %2339 = vmatpush2.msra.mxu0 %v2070
    %2340 = vmatprep.subr.mxu0 %v2063
    %2341 = vmatpush2.msra.mxu0 %v2062
    %2342 = vmatprep.subr.mxu0 %v2055
    %2343 = vmatpush2.msra.mxu0 %v2054
    %2344 = vmatprep.subr.mxu0 %v2047
    %2345 = vmatpush2.msra.mxu0 %v2046
    %2346 = vmatprep.subr.mxu0 %v2039
    %2347 = vmatpush2.msra.mxu0 %v2038
    %2348 = vmatprep.subr.mxu0 %v2031
    %2349 = vmatpush2.msra.mxu0 %v2030
    %2350 = vmatprep.subr.mxu0 %v2023
    %2351 = vmatpush2.msra.mxu0 %v2022
    %2352 = vmatprep.mubr.f32.mxu0 %v1816
    %2353 = vmatmul.mubr.f32.gmra.mxu0 %v1815
    %v2354 = vpop.f32.mrf.mxu0
    %v2355 = vadd.f32 0.0, %v2354
    %v2356 = vpop.f32.mrf.mxu0
    %v2357 = vadd.f32 0.0, %v2356
    %2358 = vdwg.mxu0
    %2359 = vmatprep.subr.mxu0 %v2017
    %2360 = vmatpush1.msra.mxu0 %v2016
    %2361 = vmatprep.subr.mxu0 %v2009
    %2362 = vmatpush1.msra.mxu0 %v2008
    %2363 = vmatprep.subr.mxu0 %v2001
    %2364 = vmatpush1.msra.mxu0 %v2000
    %2365 = vmatprep.subr.mxu0 %v1993
    %2366 = vmatpush1.msra.mxu0 %v1992
    %2367 = vmatprep.subr.mxu0 %v1985
    %2368 = vmatpush1.msra.mxu0 %v1984
    %2369 = vmatprep.subr.mxu0 %v1977
    %2370 = vmatpush1.msra.mxu0 %v1976
    %2371 = vmatprep.subr.mxu0 %v1969
    %2372 = vmatpush1.msra.mxu0 %v1968
    %2373 = vmatprep.subr.mxu0 %v1961
    %2374 = vmatpush1.msra.mxu0 %v1960
    %2375 = vmatprep.subr.mxu0 %v1953
    %2376 = vmatpush1.msra.mxu0 %v1952
    %2377 = vmatprep.subr.mxu0 %v1945
    %2378 = vmatpush1.msra.mxu0 %v1944
    %2379 = vmatprep.subr.mxu0 %v1937
    %2380 = vmatpush1.msra.mxu0 %v1936
    %2381 = vmatprep.subr.mxu0 %v1929
    %2382 = vmatpush1.msra.mxu0 %v1928
    %2383 = vmatprep.subr.mxu0 %v1921
    %2384 = vmatpush1.msra.mxu0 %v1920
    %2385 = vmatprep.subr.mxu0 %v1913
    %2386 = vmatpush1.msra.mxu0 %v1912
    %2387 = vmatprep.subr.mxu0 %v1905
    %2388 = vmatpush1.msra.mxu0 %v1904
    %2389 = vmatprep.subr.mxu0 %v1897
    %2390 = vmatpush1.msra.mxu0 %v1896
    %2391 = vmatprep.subr.mxu0 %v2145
    %2392 = vmatpush2.msra.mxu0 %v2144
    %2393 = vmatprep.subr.mxu0 %v2137
    %2394 = vmatpush2.msra.mxu0 %v2136
    %2395 = vmatprep.subr.mxu0 %v2129
    %2396 = vmatpush2.msra.mxu0 %v2128
    %2397 = vmatprep.subr.mxu0 %v2121
    %2398 = vmatpush2.msra.mxu0 %v2120
    %2399 = vmatprep.subr.mxu0 %v2113
    %2400 = vmatpush2.msra.mxu0 %v2112
    %2401 = vmatprep.subr.mxu0 %v2105
    %2402 = vmatpush2.msra.mxu0 %v2104
    %2403 = vmatprep.subr.mxu0 %v2097
    %2404 = vmatpush2.msra.mxu0 %v2096
    %2405 = vmatprep.subr.mxu0 %v2089
    %2406 = vmatpush2.msra.mxu0 %v2088
    %2407 = vmatprep.subr.mxu0 %v2081
    %2408 = vmatpush2.msra.mxu0 %v2080
    %2409 = vmatprep.subr.mxu0 %v2073
    %2410 = vmatpush2.msra.mxu0 %v2072
    %2411 = vmatprep.subr.mxu0 %v2065
    %2412 = vmatpush2.msra.mxu0 %v2064
    %2413 = vmatprep.subr.mxu0 %v2057
    %2414 = vmatpush2.msra.mxu0 %v2056
    %2415 = vmatprep.subr.mxu0 %v2049
    %2416 = vmatpush2.msra.mxu0 %v2048
    %2417 = vmatprep.subr.mxu0 %v2041
    %2418 = vmatpush2.msra.mxu0 %v2040
    %2419 = vmatprep.subr.mxu0 %v2033
    %2420 = vmatpush2.msra.mxu0 %v2032
    %2421 = vmatprep.subr.mxu0 %v2025
    %2422 = vmatpush2.msra.mxu0 %v2024
    %2423 = vmatprep.mubr.f32.mxu0 %v1816
    %2424 = vmatmul.mubr.f32.gmra.mxu0 %v1815
    %v2425 = vpop.f32.mrf.mxu0
    %v2426 = vadd.f32 0.0, %v2425
    %v2427 = vpop.f32.mrf.mxu0
    %v2428 = vadd.f32 0.0, %v2427
    %2429 = vdwg.mxu0
    %v2430 = vadd.f32 %v1882, %v2213
    %v2431 = vadd.f32 %v1883, %v2215
    %v2432 = vadd.f32 %v1884, %v2284
    %v2433 = vadd.f32 %v1885, %v2286
    %v2434 = vadd.f32 %v1886, %v2355
    %v2435 = vadd.f32 %v1887, %v2357
    %v2436 = vadd.f32 %v1888, %v2426
    %v2437 = vadd.f32 %v1889, %v2428
    %v2438 = vxor.u32 %v2430, 2147483648
    %v2439 = vxor.u32 %v2431, 2147483648
    %v2440 = vmul.f32 %v2438, 1.442695
    %v2441 = vpow.pop %v2440
    %v2442 = vmul.f32 %v2439, 1.442695
    %v2443 = vpow.pop %v2442
    %v2444 = vadd.f32 %v2441, 1.0
    %v2445 = vadd.f32 %v2443, 1.0
    %v2446 = vrcp.pop %v2444
    %v2447 = vmul.f32 1.0, %v2446
    %v2448 = vrcp.pop %v2445
    %v2449 = vmul.f32 1.0, %v2448
    %v2450 = vxor.u32 %v2432, 2147483648
    %v2451 = vxor.u32 %v2433, 2147483648
    %v2452 = vmul.f32 %v2450, 1.442695
    %v2453 = vpow.pop %v2452
    %v2454 = vmul.f32 %v2451, 1.442695
    %v2455 = vpow.pop %v2454
    %v2456 = vadd.f32 %v2453, 1.0
    %v2457 = vadd.f32 %v2455, 1.0
    %v2458 = vrcp.pop %v2456
    %v2459 = vmul.f32 1.0, %v2458
    %v2460 = vrcp.pop %v2457
    %v2461 = vmul.f32 1.0, %v2460
    %v2462 = vtanh.pop %v2434
    %v2463 = vtanh.pop %v2435
    %v2464 = vxor.u32 %v2436, 2147483648
    %v2465 = vxor.u32 %v2437, 2147483648
    %v2466 = vmul.f32 %v2464, 1.442695
    %v2467 = vpow.pop %v2466
    %v2468 = vmul.f32 %v2465, 1.442695
    %v2469 = vpow.pop %v2468
    %v2470 = vadd.f32 %v2467, 1.0
    %v2471 = vadd.f32 %v2469, 1.0
    %v2472 = vrcp.pop %v2470
    %v2473 = vmul.f32 1.0, %v2472
    %v2474 = vrcp.pop %v2471
    %v2475 = vmul.f32 1.0, %v2474
    %v2476 = vmul.f32 %v2459, %v1811
    %v2477 = vmul.f32 %v2461, %v1812
    %v2478 = vmul.f32 %v2447, %v2462
    %v2479 = vmul.f32 %v2449, %v2463
    %v2480 = vadd.f32 %v2476, %v2478
    %v2481 = vadd.f32 %v2477, %v2479
    %v2482 = vtanh.pop %v2480
    %v2483 = vtanh.pop %v2481
    %v2484 = vmul.f32 %v2473, %v2482
    %v2485 = vmul.f32 %v2475, %v2483
    %v2488 = vcombine.low %v2484, %v2485
    %v2490 = vunpack.c.l.s4 1966171168
    %v2491 = vunpack.c.0.s8 %v2490
    %v2492 = vlaneseq
    %v2493 = vshrl.u32 %v2492, 7
    %v2494 = vsub.s32 %v2491, %v2493
    %v2495 = vrot.slane %v2488, %v2494
    %v2497 = vunpack.c.l.s4 1966171168
    %v2498 = vunpack.c.0.s8 %v2497
    %v2499 = vlaneseq
    %v2500 = vshrl.u32 %v2499, 7
    %v2501 = vsub.s32 %v2498, %v2500
    %v2502 = vrot.slane %v2495, %v2501
    %s2504 = scalar_lea.vmem [#allocation2], 2
    %2505 = vst.msk [vmem:[%s2504] ss:$8 sm:$0x3] %vm1166, %v2502
    %2506 = vst.msk [vmem:[%s2504] ss:$8 sm:$0x0] %vm1166, %v2502
    %v2507 = vcombine.high %v2495, %v2495
    %v2509 = vunpack.c.l.s4 1966171168
    %v2510 = vunpack.c.0.s8 %v2509
    %v2511 = vlaneseq
    %v2512 = vshrl.u32 %v2511, 7
    %v2513 = vsub.s32 %v2510, %v2512
    %v2514 = vrot.slane %v2507, %v2513
    %s2516 = scalar_lea.vmem [#allocation2], 6
    %2517 = vst.msk [vmem:[%s2516] ss:$8 sm:$0x3] %vm1166, %v2514
    %2518 = vst.msk [vmem:[%s2516] ss:$8 sm:$0x0] %vm1166, %v2514
    %v2519 = vrot.slane %v275, 6
    %v2520 = vrot.slane %v277, 6
    %v2521 = vrot.slane %v346, 6
    %v2522 = vrot.slane %v348, 6
    %v2523 = vrot.slane %v417, 6
    %v2524 = vrot.slane %v419, 6
    %v2525 = vrot.slane %v488, 6
    %v2526 = vrot.slane %v490, 6
    %v2535 = vsel %vm518, %v502, %v2519
    %v2536 = vsel %vm518, %v503, %v2520
    %v2537 = vsel %vm518, %v504, %v2521
    %v2538 = vsel %vm518, %v505, %v2522
    %v2539 = vsel %vm518, %v506, %v2523
    %v2540 = vsel %vm518, %v507, %v2524
    %v2541 = vsel %vm518, %v508, %v2525
    %v2542 = vsel %vm518, %v509, %v2526
    %v2543 = vld [vmem:[#allocation13] sm:$0xff]
    %v2544 = vld [vmem:[#allocation13 + $0x8] sm:$0xff]
    %v2545 = vld [vmem:[#allocation13 + $0x10] sm:$0xff]
    %v2546 = vld [vmem:[#allocation13 + $0x18] sm:$0xff]
    %v2547 = vld [vmem:[#allocation13 + $0x20] sm:$0xff]
    %v2548 = vld [vmem:[#allocation13 + $0x28] sm:$0xff]
    %v2549 = vld [vmem:[#allocation13 + $0x30] sm:$0xff]
    %v2550 = vld [vmem:[#allocation13 + $0x38] sm:$0xff]
    %v2551 = vld [vmem:[#allocation13 + $0x40] sm:$0xff]
    %v2552 = vld [vmem:[#allocation13 + $0x48] sm:$0xff]
    %v2553 = vld [vmem:[#allocation13 + $0x50] sm:$0xff]
    %v2554 = vld [vmem:[#allocation13 + $0x58] sm:$0xff]
    %v2555 = vld [vmem:[#allocation13 + $0x60] sm:$0xff]
    %v2556 = vld [vmem:[#allocation13 + $0x68] sm:$0xff]
    %v2557 = vld [vmem:[#allocation13 + $0x70] sm:$0xff]
    %v2558 = vld [vmem:[#allocation13 + $0x78] sm:$0xff]
    %v2559 = vld [vmem:[#allocation13 + $0x80] sm:$0xff]
    %v2560 = vld [vmem:[#allocation13 + $0x88] sm:$0xff]
    %v2561 = vld [vmem:[#allocation13 + $0x90] sm:$0xff]
    %v2562 = vld [vmem:[#allocation13 + $0x98] sm:$0xff]
    %v2563 = vld [vmem:[#allocation13 + $0xa0] sm:$0xff]
    %v2564 = vld [vmem:[#allocation13 + $0xa8] sm:$0xff]
    %v2565 = vld [vmem:[#allocation13 + $0xb0] sm:$0xff]
    %v2566 = vld [vmem:[#allocation13 + $0xb8] sm:$0xff]
    %v2567 = vld [vmem:[#allocation13 + $0xc0] sm:$0xff]
    %v2568 = vld [vmem:[#allocation13 + $0xc8] sm:$0xff]
    %v2569 = vld [vmem:[#allocation13 + $0xd0] sm:$0xff]
    %v2570 = vld [vmem:[#allocation13 + $0xd8] sm:$0xff]
    %v2571 = vld [vmem:[#allocation13 + $0xe0] sm:$0xff]
    %v2572 = vld [vmem:[#allocation13 + $0xe8] sm:$0xff]
    %v2573 = vld [vmem:[#allocation13 + $0xf0] sm:$0xff]
    %v2574 = vld [vmem:[#allocation13 + $0xf8] sm:$0xff]
    %v2575 = vld [vmem:[#allocation13 + $0x100] sm:$0xff]
    %v2576 = vld [vmem:[#allocation13 + $0x108] sm:$0xff]
    %v2577 = vld [vmem:[#allocation13 + $0x110] sm:$0xff]
    %v2578 = vld [vmem:[#allocation13 + $0x118] sm:$0xff]
    %v2579 = vld [vmem:[#allocation13 + $0x120] sm:$0xff]
    %v2580 = vld [vmem:[#allocation13 + $0x128] sm:$0xff]
    %v2581 = vld [vmem:[#allocation13 + $0x130] sm:$0xff]
    %v2582 = vld [vmem:[#allocation13 + $0x138] sm:$0xff]
    %v2583 = vld [vmem:[#allocation13 + $0x140] sm:$0xff]
    %v2584 = vld [vmem:[#allocation13 + $0x148] sm:$0xff]
    %v2585 = vld [vmem:[#allocation13 + $0x150] sm:$0xff]
    %v2586 = vld [vmem:[#allocation13 + $0x158] sm:$0xff]
    %v2587 = vld [vmem:[#allocation13 + $0x160] sm:$0xff]
    %v2588 = vld [vmem:[#allocation13 + $0x168] sm:$0xff]
    %v2589 = vld [vmem:[#allocation13 + $0x170] sm:$0xff]
    %v2590 = vld [vmem:[#allocation13 + $0x178] sm:$0xff]
    %v2591 = vld [vmem:[#allocation13 + $0x180] sm:$0xff]
    %v2592 = vld [vmem:[#allocation13 + $0x188] sm:$0xff]
    %v2593 = vld [vmem:[#allocation13 + $0x190] sm:$0xff]
    %v2594 = vld [vmem:[#allocation13 + $0x198] sm:$0xff]
    %v2595 = vld [vmem:[#allocation13 + $0x1a0] sm:$0xff]
    %v2596 = vld [vmem:[#allocation13 + $0x1a8] sm:$0xff]
    %v2597 = vld [vmem:[#allocation13 + $0x1b0] sm:$0xff]
    %v2598 = vld [vmem:[#allocation13 + $0x1b8] sm:$0xff]
    %v2599 = vld [vmem:[#allocation13 + $0x1c0] sm:$0xff]
    %v2600 = vld [vmem:[#allocation13 + $0x1c8] sm:$0xff]
    %v2601 = vld [vmem:[#allocation13 + $0x1d0] sm:$0xff]
    %v2602 = vld [vmem:[#allocation13 + $0x1d8] sm:$0xff]
    %v2603 = vld [vmem:[#allocation13 + $0x1e0] sm:$0xff]
    %v2604 = vld [vmem:[#allocation13 + $0x1e8] sm:$0xff]
    %v2605 = vld [vmem:[#allocation13 + $0x1f0] sm:$0xff]
    %v2606 = vld [vmem:[#allocation13 + $0x1f8] sm:$0xff]
    %v2607 = vld [vmem:[#allocation13 + $0x200] sm:$0xff]
    %v2608 = vld [vmem:[#allocation13 + $0x208] sm:$0xff]
    %v2609 = vld [vmem:[#allocation13 + $0x210] sm:$0xff]
    %v2610 = vld [vmem:[#allocation13 + $0x218] sm:$0xff]
    %v2611 = vld [vmem:[#allocation13 + $0x220] sm:$0xff]
    %v2612 = vld [vmem:[#allocation13 + $0x228] sm:$0xff]
    %v2613 = vld [vmem:[#allocation13 + $0x230] sm:$0xff]
    %v2614 = vld [vmem:[#allocation13 + $0x238] sm:$0xff]
    %v2615 = vld [vmem:[#allocation13 + $0x240] sm:$0xff]
    %v2616 = vld [vmem:[#allocation13 + $0x248] sm:$0xff]
    %v2617 = vld [vmem:[#allocation13 + $0x250] sm:$0xff]
    %v2618 = vld [vmem:[#allocation13 + $0x258] sm:$0xff]
    %v2619 = vld [vmem:[#allocation13 + $0x260] sm:$0xff]
    %v2620 = vld [vmem:[#allocation13 + $0x268] sm:$0xff]
    %v2621 = vld [vmem:[#allocation13 + $0x270] sm:$0xff]
    %v2622 = vld [vmem:[#allocation13 + $0x278] sm:$0xff]
    %v2623 = vld [vmem:[#allocation13 + $0x280] sm:$0xff]
    %v2624 = vld [vmem:[#allocation13 + $0x288] sm:$0xff]
    %v2625 = vld [vmem:[#allocation13 + $0x290] sm:$0xff]
    %v2626 = vld [vmem:[#allocation13 + $0x298] sm:$0xff]
    %v2627 = vld [vmem:[#allocation13 + $0x2a0] sm:$0xff]
    %v2628 = vld [vmem:[#allocation13 + $0x2a8] sm:$0xff]
    %v2629 = vld [vmem:[#allocation13 + $0x2b0] sm:$0xff]
    %v2630 = vld [vmem:[#allocation13 + $0x2b8] sm:$0xff]
    %v2631 = vld [vmem:[#allocation13 + $0x2c0] sm:$0xff]
    %v2632 = vld [vmem:[#allocation13 + $0x2c8] sm:$0xff]
    %v2633 = vld [vmem:[#allocation13 + $0x2d0] sm:$0xff]
    %v2634 = vld [vmem:[#allocation13 + $0x2d8] sm:$0xff]
    %v2635 = vld [vmem:[#allocation13 + $0x2e0] sm:$0xff]
    %v2636 = vld [vmem:[#allocation13 + $0x2e8] sm:$0xff]
    %v2637 = vld [vmem:[#allocation13 + $0x2f0] sm:$0xff]
    %v2638 = vld [vmem:[#allocation13 + $0x2f8] sm:$0xff]
    %v2639 = vld [vmem:[#allocation13 + $0x300] sm:$0xff]
    %v2640 = vld [vmem:[#allocation13 + $0x308] sm:$0xff]
    %v2641 = vld [vmem:[#allocation13 + $0x310] sm:$0xff]
    %v2642 = vld [vmem:[#allocation13 + $0x318] sm:$0xff]
    %v2643 = vld [vmem:[#allocation13 + $0x320] sm:$0xff]
    %v2644 = vld [vmem:[#allocation13 + $0x328] sm:$0xff]
    %v2645 = vld [vmem:[#allocation13 + $0x330] sm:$0xff]
    %v2646 = vld [vmem:[#allocation13 + $0x338] sm:$0xff]
    %v2647 = vld [vmem:[#allocation13 + $0x340] sm:$0xff]
    %v2648 = vld [vmem:[#allocation13 + $0x348] sm:$0xff]
    %v2649 = vld [vmem:[#allocation13 + $0x350] sm:$0xff]
    %v2650 = vld [vmem:[#allocation13 + $0x358] sm:$0xff]
    %v2651 = vld [vmem:[#allocation13 + $0x360] sm:$0xff]
    %v2652 = vld [vmem:[#allocation13 + $0x368] sm:$0xff]
    %v2653 = vld [vmem:[#allocation13 + $0x370] sm:$0xff]
    %v2654 = vld [vmem:[#allocation13 + $0x378] sm:$0xff]
    %v2655 = vld [vmem:[#allocation13 + $0x380] sm:$0xff]
    %v2656 = vld [vmem:[#allocation13 + $0x388] sm:$0xff]
    %v2657 = vld [vmem:[#allocation13 + $0x390] sm:$0xff]
    %v2658 = vld [vmem:[#allocation13 + $0x398] sm:$0xff]
    %v2659 = vld [vmem:[#allocation13 + $0x3a0] sm:$0xff]
    %v2660 = vld [vmem:[#allocation13 + $0x3a8] sm:$0xff]
    %v2661 = vld [vmem:[#allocation13 + $0x3b0] sm:$0xff]
    %v2662 = vld [vmem:[#allocation13 + $0x3b8] sm:$0xff]
    %v2663 = vld [vmem:[#allocation13 + $0x3c0] sm:$0xff]
    %v2664 = vld [vmem:[#allocation13 + $0x3c8] sm:$0xff]
    %v2665 = vld [vmem:[#allocation13 + $0x3d0] sm:$0xff]
    %v2666 = vld [vmem:[#allocation13 + $0x3d8] sm:$0xff]
    %v2667 = vld [vmem:[#allocation13 + $0x3e0] sm:$0xff]
    %v2668 = vld [vmem:[#allocation13 + $0x3e8] sm:$0xff]
    %v2669 = vld [vmem:[#allocation13 + $0x3f0] sm:$0xff]
    %v2670 = vld [vmem:[#allocation13 + $0x3f8] sm:$0xff]
    %v2671 = vld [vmem:[#allocation13 + $0x400] sm:$0xff]
    %v2672 = vld [vmem:[#allocation13 + $0x408] sm:$0xff]
    %v2673 = vld [vmem:[#allocation13 + $0x410] sm:$0xff]
    %v2674 = vld [vmem:[#allocation13 + $0x418] sm:$0xff]
    %v2675 = vld [vmem:[#allocation13 + $0x420] sm:$0xff]
    %v2676 = vld [vmem:[#allocation13 + $0x428] sm:$0xff]
    %v2677 = vld [vmem:[#allocation13 + $0x430] sm:$0xff]
    %v2678 = vld [vmem:[#allocation13 + $0x438] sm:$0xff]
    %v2679 = vld [vmem:[#allocation13 + $0x440] sm:$0xff]
    %v2680 = vld [vmem:[#allocation13 + $0x448] sm:$0xff]
    %v2681 = vld [vmem:[#allocation13 + $0x450] sm:$0xff]
    %v2682 = vld [vmem:[#allocation13 + $0x458] sm:$0xff]
    %v2683 = vld [vmem:[#allocation13 + $0x460] sm:$0xff]
    %v2684 = vld [vmem:[#allocation13 + $0x468] sm:$0xff]
    %v2685 = vld [vmem:[#allocation13 + $0x470] sm:$0xff]
    %v2686 = vld [vmem:[#allocation13 + $0x478] sm:$0xff]
    %v2687 = vld [vmem:[#allocation13 + $0x480] sm:$0xff]
    %v2688 = vld [vmem:[#allocation13 + $0x488] sm:$0xff]
    %v2689 = vld [vmem:[#allocation13 + $0x490] sm:$0xff]
    %v2690 = vld [vmem:[#allocation13 + $0x498] sm:$0xff]
    %v2691 = vld [vmem:[#allocation13 + $0x4a0] sm:$0xff]
    %v2692 = vld [vmem:[#allocation13 + $0x4a8] sm:$0xff]
    %v2693 = vld [vmem:[#allocation13 + $0x4b0] sm:$0xff]
    %v2694 = vld [vmem:[#allocation13 + $0x4b8] sm:$0xff]
    %v2695 = vld [vmem:[#allocation13 + $0x4c0] sm:$0xff]
    %v2696 = vld [vmem:[#allocation13 + $0x4c8] sm:$0xff]
    %v2697 = vld [vmem:[#allocation13 + $0x4d0] sm:$0xff]
    %v2698 = vld [vmem:[#allocation13 + $0x4d8] sm:$0xff]
    %v2699 = vld [vmem:[#allocation13 + $0x4e0] sm:$0xff]
    %v2700 = vld [vmem:[#allocation13 + $0x4e8] sm:$0xff]
    %v2701 = vld [vmem:[#allocation13 + $0x4f0] sm:$0xff]
    %v2702 = vld [vmem:[#allocation13 + $0x4f8] sm:$0xff]
    %v2703 = vld [vmem:[#allocation13 + $0x500] sm:$0xff]
    %v2704 = vld [vmem:[#allocation13 + $0x508] sm:$0xff]
    %v2705 = vld [vmem:[#allocation13 + $0x510] sm:$0xff]
    %v2706 = vld [vmem:[#allocation13 + $0x518] sm:$0xff]
    %v2707 = vld [vmem:[#allocation13 + $0x520] sm:$0xff]
    %v2708 = vld [vmem:[#allocation13 + $0x528] sm:$0xff]
    %v2709 = vld [vmem:[#allocation13 + $0x530] sm:$0xff]
    %v2710 = vld [vmem:[#allocation13 + $0x538] sm:$0xff]
    %v2711 = vld [vmem:[#allocation13 + $0x540] sm:$0xff]
    %v2712 = vld [vmem:[#allocation13 + $0x548] sm:$0xff]
    %v2713 = vld [vmem:[#allocation13 + $0x550] sm:$0xff]
    %v2714 = vld [vmem:[#allocation13 + $0x558] sm:$0xff]
    %v2715 = vld [vmem:[#allocation13 + $0x560] sm:$0xff]
    %v2716 = vld [vmem:[#allocation13 + $0x568] sm:$0xff]
    %v2717 = vld [vmem:[#allocation13 + $0x570] sm:$0xff]
    %v2718 = vld [vmem:[#allocation13 + $0x578] sm:$0xff]
    %v2719 = vld [vmem:[#allocation13 + $0x580] sm:$0xff]
    %v2720 = vld [vmem:[#allocation13 + $0x588] sm:$0xff]
    %v2721 = vld [vmem:[#allocation13 + $0x590] sm:$0xff]
    %v2722 = vld [vmem:[#allocation13 + $0x598] sm:$0xff]
    %v2723 = vld [vmem:[#allocation13 + $0x5a0] sm:$0xff]
    %v2724 = vld [vmem:[#allocation13 + $0x5a8] sm:$0xff]
    %v2725 = vld [vmem:[#allocation13 + $0x5b0] sm:$0xff]
    %v2726 = vld [vmem:[#allocation13 + $0x5b8] sm:$0xff]
    %v2727 = vld [vmem:[#allocation13 + $0x5c0] sm:$0xff]
    %v2728 = vld [vmem:[#allocation13 + $0x5c8] sm:$0xff]
    %v2729 = vld [vmem:[#allocation13 + $0x5d0] sm:$0xff]
    %v2730 = vld [vmem:[#allocation13 + $0x5d8] sm:$0xff]
    %v2731 = vld [vmem:[#allocation13 + $0x5e0] sm:$0xff]
    %v2732 = vld [vmem:[#allocation13 + $0x5e8] sm:$0xff]
    %v2733 = vld [vmem:[#allocation13 + $0x5f0] sm:$0xff]
    %v2734 = vld [vmem:[#allocation13 + $0x5f8] sm:$0xff]
    %v2735 = vld [vmem:[#allocation13 + $0x600] sm:$0xff]
    %v2736 = vld [vmem:[#allocation13 + $0x608] sm:$0xff]
    %v2737 = vld [vmem:[#allocation13 + $0x610] sm:$0xff]
    %v2738 = vld [vmem:[#allocation13 + $0x618] sm:$0xff]
    %v2739 = vld [vmem:[#allocation13 + $0x620] sm:$0xff]
    %v2740 = vld [vmem:[#allocation13 + $0x628] sm:$0xff]
    %v2741 = vld [vmem:[#allocation13 + $0x630] sm:$0xff]
    %v2742 = vld [vmem:[#allocation13 + $0x638] sm:$0xff]
    %v2743 = vld [vmem:[#allocation13 + $0x640] sm:$0xff]
    %v2744 = vld [vmem:[#allocation13 + $0x648] sm:$0xff]
    %v2745 = vld [vmem:[#allocation13 + $0x650] sm:$0xff]
    %v2746 = vld [vmem:[#allocation13 + $0x658] sm:$0xff]
    %v2747 = vld [vmem:[#allocation13 + $0x660] sm:$0xff]
    %v2748 = vld [vmem:[#allocation13 + $0x668] sm:$0xff]
    %v2749 = vld [vmem:[#allocation13 + $0x670] sm:$0xff]
    %v2750 = vld [vmem:[#allocation13 + $0x678] sm:$0xff]
    %v2751 = vld [vmem:[#allocation13 + $0x680] sm:$0xff]
    %v2752 = vld [vmem:[#allocation13 + $0x688] sm:$0xff]
    %v2753 = vld [vmem:[#allocation13 + $0x690] sm:$0xff]
    %v2754 = vld [vmem:[#allocation13 + $0x698] sm:$0xff]
    %v2755 = vld [vmem:[#allocation13 + $0x6a0] sm:$0xff]
    %v2756 = vld [vmem:[#allocation13 + $0x6a8] sm:$0xff]
    %v2757 = vld [vmem:[#allocation13 + $0x6b0] sm:$0xff]
    %v2758 = vld [vmem:[#allocation13 + $0x6b8] sm:$0xff]
    %v2759 = vld [vmem:[#allocation13 + $0x6c0] sm:$0xff]
    %v2760 = vld [vmem:[#allocation13 + $0x6c8] sm:$0xff]
    %v2761 = vld [vmem:[#allocation13 + $0x6d0] sm:$0xff]
    %v2762 = vld [vmem:[#allocation13 + $0x6d8] sm:$0xff]
    %v2763 = vld [vmem:[#allocation13 + $0x6e0] sm:$0xff]
    %v2764 = vld [vmem:[#allocation13 + $0x6e8] sm:$0xff]
    %v2765 = vld [vmem:[#allocation13 + $0x6f0] sm:$0xff]
    %v2766 = vld [vmem:[#allocation13 + $0x6f8] sm:$0xff]
    %v2767 = vld [vmem:[#allocation13 + $0x700] sm:$0xff]
    %v2768 = vld [vmem:[#allocation13 + $0x708] sm:$0xff]
    %v2769 = vld [vmem:[#allocation13 + $0x710] sm:$0xff]
    %v2770 = vld [vmem:[#allocation13 + $0x718] sm:$0xff]
    %v2771 = vld [vmem:[#allocation13 + $0x720] sm:$0xff]
    %v2772 = vld [vmem:[#allocation13 + $0x728] sm:$0xff]
    %v2773 = vld [vmem:[#allocation13 + $0x730] sm:$0xff]
    %v2774 = vld [vmem:[#allocation13 + $0x738] sm:$0xff]
    %v2775 = vld [vmem:[#allocation13 + $0x740] sm:$0xff]
    %v2776 = vld [vmem:[#allocation13 + $0x748] sm:$0xff]
    %v2777 = vld [vmem:[#allocation13 + $0x750] sm:$0xff]
    %v2778 = vld [vmem:[#allocation13 + $0x758] sm:$0xff]
    %v2779 = vld [vmem:[#allocation13 + $0x760] sm:$0xff]
    %v2780 = vld [vmem:[#allocation13 + $0x768] sm:$0xff]
    %v2781 = vld [vmem:[#allocation13 + $0x770] sm:$0xff]
    %v2782 = vld [vmem:[#allocation13 + $0x778] sm:$0xff]
    %v2783 = vld [vmem:[#allocation13 + $0x780] sm:$0xff]
    %v2784 = vld [vmem:[#allocation13 + $0x788] sm:$0xff]
    %v2785 = vld [vmem:[#allocation13 + $0x790] sm:$0xff]
    %v2786 = vld [vmem:[#allocation13 + $0x798] sm:$0xff]
    %v2787 = vld [vmem:[#allocation13 + $0x7a0] sm:$0xff]
    %v2788 = vld [vmem:[#allocation13 + $0x7a8] sm:$0xff]
    %v2789 = vld [vmem:[#allocation13 + $0x7b0] sm:$0xff]
    %v2790 = vld [vmem:[#allocation13 + $0x7b8] sm:$0xff]
    %v2791 = vld [vmem:[#allocation13 + $0x7c0] sm:$0xff]
    %v2792 = vld [vmem:[#allocation13 + $0x7c8] sm:$0xff]
    %v2793 = vld [vmem:[#allocation13 + $0x7d0] sm:$0xff]
    %v2794 = vld [vmem:[#allocation13 + $0x7d8] sm:$0xff]
    %v2795 = vld [vmem:[#allocation13 + $0x7e0] sm:$0xff]
    %v2796 = vld [vmem:[#allocation13 + $0x7e8] sm:$0xff]
    %v2797 = vld [vmem:[#allocation13 + $0x7f0] sm:$0xff]
    %v2798 = vld [vmem:[#allocation13 + $0x7f8] sm:$0xff]
    %2799 = vmatprep.subr.mxu0 %v2664
    %2800 = vmatpush1.msra.mxu0 %v2663
    %2801 = vmatprep.subr.mxu0 %v2656
    %2802 = vmatpush1.msra.mxu0 %v2655
    %2803 = vmatprep.subr.mxu0 %v2648
    %2804 = vmatpush1.msra.mxu0 %v2647
    %2805 = vmatprep.subr.mxu0 %v2640
    %2806 = vmatpush1.msra.mxu0 %v2639
    %2807 = vmatprep.subr.mxu0 %v2632
    %2808 = vmatpush1.msra.mxu0 %v2631
    %2809 = vmatprep.subr.mxu0 %v2624
    %2810 = vmatpush1.msra.mxu0 %v2623
    %2811 = vmatprep.subr.mxu0 %v2616
    %2812 = vmatpush1.msra.mxu0 %v2615
    %2813 = vmatprep.subr.mxu0 %v2608
    %2814 = vmatpush1.msra.mxu0 %v2607
    %2815 = vmatprep.subr.mxu0 %v2600
    %2816 = vmatpush1.msra.mxu0 %v2599
    %2817 = vmatprep.subr.mxu0 %v2592
    %2818 = vmatpush1.msra.mxu0 %v2591
    %2819 = vmatprep.subr.mxu0 %v2584
    %2820 = vmatpush1.msra.mxu0 %v2583
    %2821 = vmatprep.subr.mxu0 %v2576
    %2822 = vmatpush1.msra.mxu0 %v2575
    %2823 = vmatprep.subr.mxu0 %v2568
    %2824 = vmatpush1.msra.mxu0 %v2567
    %2825 = vmatprep.subr.mxu0 %v2560
    %2826 = vmatpush1.msra.mxu0 %v2559
    %2827 = vmatprep.subr.mxu0 %v2552
    %2828 = vmatpush1.msra.mxu0 %v2551
    %2829 = vmatprep.subr.mxu0 %v2544
    %2830 = vmatpush1.msra.mxu0 %v2543
    %2831 = vmatprep.subr.mxu0 %v2792
    %2832 = vmatpush2.msra.mxu0 %v2791
    %2833 = vmatprep.subr.mxu0 %v2784
    %2834 = vmatpush2.msra.mxu0 %v2783
    %2835 = vmatprep.subr.mxu0 %v2776
    %2836 = vmatpush2.msra.mxu0 %v2775
    %2837 = vmatprep.subr.mxu0 %v2768
    %2838 = vmatpush2.msra.mxu0 %v2767
    %2839 = vmatprep.subr.mxu0 %v2760
    %2840 = vmatpush2.msra.mxu0 %v2759
    %2841 = vmatprep.subr.mxu0 %v2752
    %2842 = vmatpush2.msra.mxu0 %v2751
    %2843 = vmatprep.subr.mxu0 %v2744
    %2844 = vmatpush2.msra.mxu0 %v2743
    %2845 = vmatprep.subr.mxu0 %v2736
    %2846 = vmatpush2.msra.mxu0 %v2735
    %2847 = vmatprep.subr.mxu0 %v2728
    %2848 = vmatpush2.msra.mxu0 %v2727
    %2849 = vmatprep.subr.mxu0 %v2720
    %2850 = vmatpush2.msra.mxu0 %v2719
    %2851 = vmatprep.subr.mxu0 %v2712
    %2852 = vmatpush2.msra.mxu0 %v2711
    %2853 = vmatprep.subr.mxu0 %v2704
    %2854 = vmatpush2.msra.mxu0 %v2703
    %2855 = vmatprep.subr.mxu0 %v2696
    %2856 = vmatpush2.msra.mxu0 %v2695
    %2857 = vmatprep.subr.mxu0 %v2688
    %2858 = vmatpush2.msra.mxu0 %v2687
    %2859 = vmatprep.subr.mxu0 %v2680
    %2860 = vmatpush2.msra.mxu0 %v2679
    %2861 = vmatprep.subr.mxu0 %v2672
    %2862 = vmatpush2.msra.mxu0 %v2671
    %2863 = vmatprep.mubr.f32.mxu0 %v2485
    %2864 = vmatmul.mubr.f32.gmra.mxu0 %v2484
    %v2865 = vpop.f32.mrf.mxu0
    %v2866 = vadd.f32 0.0, %v2865
    %v2867 = vpop.f32.mrf.mxu0
    %v2868 = vadd.f32 0.0, %v2867
    %2869 = vdwg.mxu0
    %2870 = vmatprep.subr.mxu0 %v2666
    %2871 = vmatpush1.msra.mxu0 %v2665
    %2872 = vmatprep.subr.mxu0 %v2658
    %2873 = vmatpush1.msra.mxu0 %v2657
    %2874 = vmatprep.subr.mxu0 %v2650
    %2875 = vmatpush1.msra.mxu0 %v2649
    %2876 = vmatprep.subr.mxu0 %v2642
    %2877 = vmatpush1.msra.mxu0 %v2641
    %2878 = vmatprep.subr.mxu0 %v2634
    %2879 = vmatpush1.msra.mxu0 %v2633
    %2880 = vmatprep.subr.mxu0 %v2626
    %2881 = vmatpush1.msra.mxu0 %v2625
    %2882 = vmatprep.subr.mxu0 %v2618
    %2883 = vmatpush1.msra.mxu0 %v2617
    %2884 = vmatprep.subr.mxu0 %v2610
    %2885 = vmatpush1.msra.mxu0 %v2609
    %2886 = vmatprep.subr.mxu0 %v2602
    %2887 = vmatpush1.msra.mxu0 %v2601
    %2888 = vmatprep.subr.mxu0 %v2594
    %2889 = vmatpush1.msra.mxu0 %v2593
    %2890 = vmatprep.subr.mxu0 %v2586
    %2891 = vmatpush1.msra.mxu0 %v2585
    %2892 = vmatprep.subr.mxu0 %v2578
    %2893 = vmatpush1.msra.mxu0 %v2577
    %2894 = vmatprep.subr.mxu0 %v2570
    %2895 = vmatpush1.msra.mxu0 %v2569
    %2896 = vmatprep.subr.mxu0 %v2562
    %2897 = vmatpush1.msra.mxu0 %v2561
    %2898 = vmatprep.subr.mxu0 %v2554
    %2899 = vmatpush1.msra.mxu0 %v2553
    %2900 = vmatprep.subr.mxu0 %v2546
    %2901 = vmatpush1.msra.mxu0 %v2545
    %2902 = vmatprep.subr.mxu0 %v2794
    %2903 = vmatpush2.msra.mxu0 %v2793
    %2904 = vmatprep.subr.mxu0 %v2786
    %2905 = vmatpush2.msra.mxu0 %v2785
    %2906 = vmatprep.subr.mxu0 %v2778
    %2907 = vmatpush2.msra.mxu0 %v2777
    %2908 = vmatprep.subr.mxu0 %v2770
    %2909 = vmatpush2.msra.mxu0 %v2769
    %2910 = vmatprep.subr.mxu0 %v2762
    %2911 = vmatpush2.msra.mxu0 %v2761
    %2912 = vmatprep.subr.mxu0 %v2754
    %2913 = vmatpush2.msra.mxu0 %v2753
    %2914 = vmatprep.subr.mxu0 %v2746
    %2915 = vmatpush2.msra.mxu0 %v2745
    %2916 = vmatprep.subr.mxu0 %v2738
    %2917 = vmatpush2.msra.mxu0 %v2737
    %2918 = vmatprep.subr.mxu0 %v2730
    %2919 = vmatpush2.msra.mxu0 %v2729
    %2920 = vmatprep.subr.mxu0 %v2722
    %2921 = vmatpush2.msra.mxu0 %v2721
    %2922 = vmatprep.subr.mxu0 %v2714
    %2923 = vmatpush2.msra.mxu0 %v2713
    %2924 = vmatprep.subr.mxu0 %v2706
    %2925 = vmatpush2.msra.mxu0 %v2705
    %2926 = vmatprep.subr.mxu0 %v2698
    %2927 = vmatpush2.msra.mxu0 %v2697
    %2928 = vmatprep.subr.mxu0 %v2690
    %2929 = vmatpush2.msra.mxu0 %v2689
    %2930 = vmatprep.subr.mxu0 %v2682
    %2931 = vmatpush2.msra.mxu0 %v2681
    %2932 = vmatprep.subr.mxu0 %v2674
    %2933 = vmatpush2.msra.mxu0 %v2673
    %2934 = vmatprep.mubr.f32.mxu0 %v2485
    %2935 = vmatmul.mubr.f32.gmra.mxu0 %v2484
    %v2936 = vpop.f32.mrf.mxu0
    %v2937 = vadd.f32 0.0, %v2936
    %v2938 = vpop.f32.mrf.mxu0
    %v2939 = vadd.f32 0.0, %v2938
    %2940 = vdwg.mxu0
    %2941 = vmatprep.subr.mxu0 %v2668
    %2942 = vmatpush1.msra.mxu0 %v2667
    %2943 = vmatprep.subr.mxu0 %v2660
    %2944 = vmatpush1.msra.mxu0 %v2659
    %2945 = vmatprep.subr.mxu0 %v2652
    %2946 = vmatpush1.msra.mxu0 %v2651
    %2947 = vmatprep.subr.mxu0 %v2644
    %2948 = vmatpush1.msra.mxu0 %v2643
    %2949 = vmatprep.subr.mxu0 %v2636
    %2950 = vmatpush1.msra.mxu0 %v2635
    %2951 = vmatprep.subr.mxu0 %v2628
    %2952 = vmatpush1.msra.mxu0 %v2627
    %2953 = vmatprep.subr.mxu0 %v2620
    %2954 = vmatpush1.msra.mxu0 %v2619
    %2955 = vmatprep.subr.mxu0 %v2612
    %2956 = vmatpush1.msra.mxu0 %v2611
    %2957 = vmatprep.subr.mxu0 %v2604
    %2958 = vmatpush1.msra.mxu0 %v2603
    %2959 = vmatprep.subr.mxu0 %v2596
    %2960 = vmatpush1.msra.mxu0 %v2595
    %2961 = vmatprep.subr.mxu0 %v2588
    %2962 = vmatpush1.msra.mxu0 %v2587
    %2963 = vmatprep.subr.mxu0 %v2580
    %2964 = vmatpush1.msra.mxu0 %v2579
    %2965 = vmatprep.subr.mxu0 %v2572
    %2966 = vmatpush1.msra.mxu0 %v2571
    %2967 = vmatprep.subr.mxu0 %v2564
    %2968 = vmatpush1.msra.mxu0 %v2563
    %2969 = vmatprep.subr.mxu0 %v2556
    %2970 = vmatpush1.msra.mxu0 %v2555
    %2971 = vmatprep.subr.mxu0 %v2548
    %2972 = vmatpush1.msra.mxu0 %v2547
    %2973 = vmatprep.subr.mxu0 %v2796
    %2974 = vmatpush2.msra.mxu0 %v2795
    %2975 = vmatprep.subr.mxu0 %v2788
    %2976 = vmatpush2.msra.mxu0 %v2787
    %2977 = vmatprep.subr.mxu0 %v2780
    %2978 = vmatpush2.msra.mxu0 %v2779
    %2979 = vmatprep.subr.mxu0 %v2772
    %2980 = vmatpush2.msra.mxu0 %v2771
    %2981 = vmatprep.subr.mxu0 %v2764
    %2982 = vmatpush2.msra.mxu0 %v2763
    %2983 = vmatprep.subr.mxu0 %v2756
    %2984 = vmatpush2.msra.mxu0 %v2755
    %2985 = vmatprep.subr.mxu0 %v2748
    %2986 = vmatpush2.msra.mxu0 %v2747
    %2987 = vmatprep.subr.mxu0 %v2740
    %2988 = vmatpush2.msra.mxu0 %v2739
    %2989 = vmatprep.subr.mxu0 %v2732
    %2990 = vmatpush2.msra.mxu0 %v2731
    %2991 = vmatprep.subr.mxu0 %v2724
    %2992 = vmatpush2.msra.mxu0 %v2723
    %2993 = vmatprep.subr.mxu0 %v2716
    %2994 = vmatpush2.msra.mxu0 %v2715
    %2995 = vmatprep.subr.mxu0 %v2708
    %2996 = vmatpush2.msra.mxu0 %v2707
    %2997 = vmatprep.subr.mxu0 %v2700
    %2998 = vmatpush2.msra.mxu0 %v2699
    %2999 = vmatprep.subr.mxu0 %v2692
    %3000 = vmatpush2.msra.mxu0 %v2691
    %3001 = vmatprep.subr.mxu0 %v2684
    %3002 = vmatpush2.msra.mxu0 %v2683
    %3003 = vmatprep.subr.mxu0 %v2676
    %3004 = vmatpush2.msra.mxu0 %v2675
    %3005 = vmatprep.mubr.f32.mxu0 %v2485
    %3006 = vmatmul.mubr.f32.gmra.mxu0 %v2484
    %v3007 = vpop.f32.mrf.mxu0
    %v3008 = vadd.f32 0.0, %v3007
    %v3009 = vpop.f32.mrf.mxu0
    %v3010 = vadd.f32 0.0, %v3009
    %3011 = vdwg.mxu0
    %3012 = vmatprep.subr.mxu0 %v2670
    %3013 = vmatpush1.msra.mxu0 %v2669
    %3014 = vmatprep.subr.mxu0 %v2662
    %3015 = vmatpush1.msra.mxu0 %v2661
    %3016 = vmatprep.subr.mxu0 %v2654
    %3017 = vmatpush1.msra.mxu0 %v2653
    %3018 = vmatprep.subr.mxu0 %v2646
    %3019 = vmatpush1.msra.mxu0 %v2645
    %3020 = vmatprep.subr.mxu0 %v2638
    %3021 = vmatpush1.msra.mxu0 %v2637
    %3022 = vmatprep.subr.mxu0 %v2630
    %3023 = vmatpush1.msra.mxu0 %v2629
    %3024 = vmatprep.subr.mxu0 %v2622
    %3025 = vmatpush1.msra.mxu0 %v2621
    %3026 = vmatprep.subr.mxu0 %v2614
    %3027 = vmatpush1.msra.mxu0 %v2613
    %3028 = vmatprep.subr.mxu0 %v2606
    %3029 = vmatpush1.msra.mxu0 %v2605
    %3030 = vmatprep.subr.mxu0 %v2598
    %3031 = vmatpush1.msra.mxu0 %v2597
    %3032 = vmatprep.subr.mxu0 %v2590
    %3033 = vmatpush1.msra.mxu0 %v2589
    %3034 = vmatprep.subr.mxu0 %v2582
    %3035 = vmatpush1.msra.mxu0 %v2581
    %3036 = vmatprep.subr.mxu0 %v2574
    %3037 = vmatpush1.msra.mxu0 %v2573
    %3038 = vmatprep.subr.mxu0 %v2566
    %3039 = vmatpush1.msra.mxu0 %v2565
    %3040 = vmatprep.subr.mxu0 %v2558
    %3041 = vmatpush1.msra.mxu0 %v2557
    %3042 = vmatprep.subr.mxu0 %v2550
    %3043 = vmatpush1.msra.mxu0 %v2549
    %3044 = vmatprep.subr.mxu0 %v2798
    %3045 = vmatpush2.msra.mxu0 %v2797
    %3046 = vmatprep.subr.mxu0 %v2790
    %3047 = vmatpush2.msra.mxu0 %v2789
    %3048 = vmatprep.subr.mxu0 %v2782
    %3049 = vmatpush2.msra.mxu0 %v2781
    %3050 = vmatprep.subr.mxu0 %v2774
    %3051 = vmatpush2.msra.mxu0 %v2773
    %3052 = vmatprep.subr.mxu0 %v2766
    %3053 = vmatpush2.msra.mxu0 %v2765
    %3054 = vmatprep.subr.mxu0 %v2758
    %3055 = vmatpush2.msra.mxu0 %v2757
    %3056 = vmatprep.subr.mxu0 %v2750
    %3057 = vmatpush2.msra.mxu0 %v2749
    %3058 = vmatprep.subr.mxu0 %v2742
    %3059 = vmatpush2.msra.mxu0 %v2741
    %3060 = vmatprep.subr.mxu0 %v2734
    %3061 = vmatpush2.msra.mxu0 %v2733
    %3062 = vmatprep.subr.mxu0 %v2726
    %3063 = vmatpush2.msra.mxu0 %v2725
    %3064 = vmatprep.subr.mxu0 %v2718
    %3065 = vmatpush2.msra.mxu0 %v2717
    %3066 = vmatprep.subr.mxu0 %v2710
    %3067 = vmatpush2.msra.mxu0 %v2709
    %3068 = vmatprep.subr.mxu0 %v2702
    %3069 = vmatpush2.msra.mxu0 %v2701
    %3070 = vmatprep.subr.mxu0 %v2694
    %3071 = vmatpush2.msra.mxu0 %v2693
    %3072 = vmatprep.subr.mxu0 %v2686
    %3073 = vmatpush2.msra.mxu0 %v2685
    %3074 = vmatprep.subr.mxu0 %v2678
    %3075 = vmatpush2.msra.mxu0 %v2677
    %3076 = vmatprep.mubr.f32.mxu0 %v2485
    %3077 = vmatmul.mubr.f32.gmra.mxu0 %v2484
    %v3078 = vpop.f32.mrf.mxu0
    %v3079 = vadd.f32 0.0, %v3078
    %v3080 = vpop.f32.mrf.mxu0
    %v3081 = vadd.f32 0.0, %v3080
    %3082 = vdwg.mxu0
    %v3083 = vadd.f32 %v2535, %v2866
    %v3084 = vadd.f32 %v2536, %v2868
    %v3085 = vadd.f32 %v2537, %v2937
    %v3086 = vadd.f32 %v2538, %v2939
    %v3087 = vadd.f32 %v2539, %v3008
    %v3088 = vadd.f32 %v2540, %v3010
    %v3089 = vadd.f32 %v2541, %v3079
    %v3090 = vadd.f32 %v2542, %v3081
    %v3091 = vxor.u32 %v3083, 2147483648
    %v3092 = vxor.u32 %v3084, 2147483648
    %v3093 = vmul.f32 %v3091, 1.442695
    %v3094 = vpow.pop %v3093
    %v3095 = vmul.f32 %v3092, 1.442695
    %v3096 = vpow.pop %v3095
    %v3097 = vadd.f32 %v3094, 1.0
    %v3098 = vadd.f32 %v3096, 1.0
    %v3099 = vrcp.pop %v3097
    %v3100 = vmul.f32 1.0, %v3099
    %v3101 = vrcp.pop %v3098
    %v3102 = vmul.f32 1.0, %v3101
    %v3103 = vxor.u32 %v3085, 2147483648
    %v3104 = vxor.u32 %v3086, 2147483648
    %v3105 = vmul.f32 %v3103, 1.442695
    %v3106 = vpow.pop %v3105
    %v3107 = vmul.f32 %v3104, 1.442695
    %v3108 = vpow.pop %v3107
    %v3109 = vadd.f32 %v3106, 1.0
    %v3110 = vadd.f32 %v3108, 1.0
    %v3111 = vrcp.pop %v3109
    %v3112 = vmul.f32 1.0, %v3111
    %v3113 = vrcp.pop %v3110
    %v3114 = vmul.f32 1.0, %v3113
    %v3115 = vtanh.pop %v3087
    %v3116 = vtanh.pop %v3088
    %v3117 = vxor.u32 %v3089, 2147483648
    %v3118 = vxor.u32 %v3090, 2147483648
    %v3119 = vmul.f32 %v3117, 1.442695
    %v3120 = vpow.pop %v3119
    %v3121 = vmul.f32 %v3118, 1.442695
    %v3122 = vpow.pop %v3121
    %v3123 = vadd.f32 %v3120, 1.0
    %v3124 = vadd.f32 %v3122, 1.0
    %v3125 = vrcp.pop %v3123
    %v3126 = vmul.f32 1.0, %v3125
    %v3127 = vrcp.pop %v3124
    %v3128 = vmul.f32 1.0, %v3127
    %v3129 = vmul.f32 %v3112, %v2480
    %v3130 = vmul.f32 %v3114, %v2481
    %v3131 = vmul.f32 %v3100, %v3115
    %v3132 = vmul.f32 %v3102, %v3116
    %v3133 = vadd.f32 %v3129, %v3131
    %v3134 = vadd.f32 %v3130, %v3132
    %v3135 = vtanh.pop %v3133
    %v3136 = vtanh.pop %v3134
    %v3137 = vmul.f32 %v3126, %v3135
    %v3138 = vmul.f32 %v3128, %v3136
    %v3141 = vcombine.low %v3137, %v3138
    %v3143 = vunpack.c.l.s4 1966171168
    %v3144 = vunpack.c.0.s8 %v3143
    %v3145 = vlaneseq
    %v3146 = vshrl.u32 %v3145, 7
    %v3147 = vsub.s32 %v3144, %v3146
    %v3148 = vrot.slane %v3141, %v3147
    %v3150 = vunpack.c.l.s4 1966171168
    %v3151 = vunpack.c.0.s8 %v3150
    %v3152 = vlaneseq
    %v3153 = vshrl.u32 %v3152, 7
    %v3154 = vsub.s32 %v3151, %v3153
    %v3155 = vrot.slane %v3148, %v3154
    %s3157 = scalar_lea.vmem [#allocation2], 3
    %3158 = vst.msk [vmem:[%s3157] ss:$8 sm:$0x3] %vm1166, %v3155
    %3159 = vst.msk [vmem:[%s3157] ss:$8 sm:$0x0] %vm1166, %v3155
    %v3160 = vcombine.high %v3148, %v3148
    %v3162 = vunpack.c.l.s4 1966171168
    %v3163 = vunpack.c.0.s8 %v3162
    %v3164 = vlaneseq
    %v3165 = vshrl.u32 %v3164, 7
    %v3166 = vsub.s32 %v3163, %v3165
    %v3167 = vrot.slane %v3160, %v3166
    %s3169 = scalar_lea.vmem [#allocation2], 7
    %3170 = vst.msk [vmem:[%s3169] ss:$8 sm:$0x3] %vm1166, %v3167
    %3171 = vst.msk [vmem:[%s3169] ss:$8 sm:$0x0] %vm1166, %v3167
    %v3173 = vunpack.c.l.s4 1983009808
    %v3174 = vunpack.c.0.s8 %v3173
    %v3175 = vlaneseq
    %v3176 = vshrl.u32 %v3175, 7
    %v3177 = vsub.s32 %v3174, %v3176
    %v3178 = vrot.slane %v3141, %v3177
    %3180 = vst [vmem:[#allocation18] sm:$0xf] %v3178
    %v3183 = vcombine.low %v3133, %v3134
    %v3185 = vunpack.c.l.s4 1983009808
    %v3186 = vunpack.c.0.s8 %v3185
    %v3187 = vlaneseq
    %v3188 = vshrl.u32 %v3187, 7
    %v3189 = vsub.s32 %v3186, %v3188
    %v3190 = vrot.slane %v3183, %v3189
    %3192 = vst [vmem:[#allocation20] sm:$0xf] %v3190
    %s3193 = smul.u32 4, 32
    %s3194 = smul.u32 %s3193, 24
    %s3195 = sshll.u32 %s3194, 4
    %3196 = dma.done [#allocation4], %s3195
    %v3197 = vld [vmem:[#allocation2] sm:$0xff]
    %v3198 = vld [vmem:[#allocation2 + $0x8] sm:$0xff]
    %v3199 = vpack.c.bf16 %v3197, %v3197
    %v3200 = vpack.c.bf16 %v3198, %v3198
    %v3201 = vld [vmem:[#allocation3] sm:$0xff]
    %v3202 = vld [vmem:[#allocation3 + $0x8] sm:$0xff]
    %v3203 = vld [vmem:[#allocation3 + $0x10] sm:$0xff]
    %v3204 = vld [vmem:[#allocation3 + $0x18] sm:$0xff]
    %v3205 = vld [vmem:[#allocation3 + $0x20] sm:$0xff]
    %v3206 = vld [vmem:[#allocation3 + $0x28] sm:$0xff]
    %v3207 = vld [vmem:[#allocation3 + $0x30] sm:$0xff]
    %v3208 = vld [vmem:[#allocation3 + $0x38] sm:$0xff]
    %v3209 = vld [vmem:[#allocation3 + $0x40] sm:$0xff]
    %v3210 = vld [vmem:[#allocation3 + $0x48] sm:$0xff]
    %v3211 = vld [vmem:[#allocation3 + $0x50] sm:$0xff]
    %v3212 = vld [vmem:[#allocation3 + $0x58] sm:$0xff]
    %v3213 = vld [vmem:[#allocation3 + $0x60] sm:$0xff]
    %v3214 = vld [vmem:[#allocation3 + $0x68] sm:$0xff]
    %v3215 = vld [vmem:[#allocation3 + $0x70] sm:$0xff]
    %v3216 = vld [vmem:[#allocation3 + $0x78] sm:$0xff]
    %v3217 = vld [vmem:[#allocation3 + $0x80] sm:$0xff]
    %v3218 = vld [vmem:[#allocation3 + $0x88] sm:$0xff]
    %v3219 = vld [vmem:[#allocation3 + $0x90] sm:$0xff]
    %v3220 = vld [vmem:[#allocation3 + $0x98] sm:$0xff]
    %v3221 = vld [vmem:[#allocation3 + $0xa0] sm:$0xff]
    %v3222 = vld [vmem:[#allocation3 + $0xa8] sm:$0xff]
    %v3223 = vld [vmem:[#allocation3 + $0xb0] sm:$0xff]
    %v3224 = vld [vmem:[#allocation3 + $0xb8] sm:$0xff]
    %v3225 = vld [vmem:[#allocation3 + $0xc0] sm:$0xff]
    %v3226 = vld [vmem:[#allocation3 + $0xc8] sm:$0xff]
    %v3227 = vld [vmem:[#allocation3 + $0xd0] sm:$0xff]
    %v3228 = vld [vmem:[#allocation3 + $0xd8] sm:$0xff]
    %v3229 = vld [vmem:[#allocation3 + $0xe0] sm:$0xff]
    %v3230 = vld [vmem:[#allocation3 + $0xe8] sm:$0xff]
    %v3231 = vld [vmem:[#allocation3 + $0xf0] sm:$0xff]
    %v3232 = vld [vmem:[#allocation3 + $0xf8] sm:$0xff]
    %v3233 = vld [vmem:[#allocation3 + $0x100] sm:$0xff]
    %v3234 = vld [vmem:[#allocation3 + $0x108] sm:$0xff]
    %v3235 = vld [vmem:[#allocation3 + $0x110] sm:$0xff]
    %v3236 = vld [vmem:[#allocation3 + $0x118] sm:$0xff]
    %v3237 = vld [vmem:[#allocation3 + $0x120] sm:$0xff]
    %v3238 = vld [vmem:[#allocation3 + $0x128] sm:$0xff]
    %v3239 = vld [vmem:[#allocation3 + $0x130] sm:$0xff]
    %v3240 = vld [vmem:[#allocation3 + $0x138] sm:$0xff]
    %v3241 = vld [vmem:[#allocation3 + $0x140] sm:$0xff]
    %v3242 = vld [vmem:[#allocation3 + $0x148] sm:$0xff]
    %v3243 = vld [vmem:[#allocation3 + $0x150] sm:$0xff]
    %v3244 = vld [vmem:[#allocation3 + $0x158] sm:$0xff]
    %v3245 = vld [vmem:[#allocation3 + $0x160] sm:$0xff]
    %v3246 = vld [vmem:[#allocation3 + $0x168] sm:$0xff]
    %v3247 = vld [vmem:[#allocation3 + $0x170] sm:$0xff]
    %v3248 = vld [vmem:[#allocation3 + $0x178] sm:$0xff]
    %v3249 = vld [vmem:[#allocation3 + $0x180] sm:$0xff]
    %v3250 = vld [vmem:[#allocation3 + $0x188] sm:$0xff]
    %v3251 = vld [vmem:[#allocation3 + $0x190] sm:$0xff]
    %v3252 = vld [vmem:[#allocation3 + $0x198] sm:$0xff]
    %v3253 = vld [vmem:[#allocation3 + $0x1a0] sm:$0xff]
    %v3254 = vld [vmem:[#allocation3 + $0x1a8] sm:$0xff]
    %v3255 = vld [vmem:[#allocation3 + $0x1b0] sm:$0xff]
    %v3256 = vld [vmem:[#allocation3 + $0x1b8] sm:$0xff]
    %v3257 = vld [vmem:[#allocation3 + $0x1c0] sm:$0xff]
    %v3258 = vld [vmem:[#allocation3 + $0x1c8] sm:$0xff]
    %v3259 = vld [vmem:[#allocation3 + $0x1d0] sm:$0xff]
    %v3260 = vld [vmem:[#allocation3 + $0x1d8] sm:$0xff]
    %v3261 = vld [vmem:[#allocation3 + $0x1e0] sm:$0xff]
    %v3262 = vld [vmem:[#allocation3 + $0x1e8] sm:$0xff]
    %v3263 = vld [vmem:[#allocation3 + $0x1f0] sm:$0xff]
    %v3264 = vld [vmem:[#allocation3 + $0x1f8] sm:$0xff]
    %v3265 = vld [vmem:[#allocation3 + $0x200] sm:$0xff]
    %v3266 = vld [vmem:[#allocation3 + $0x208] sm:$0xff]
    %v3267 = vld [vmem:[#allocation3 + $0x210] sm:$0xff]
    %v3268 = vld [vmem:[#allocation3 + $0x218] sm:$0xff]
    %v3269 = vld [vmem:[#allocation3 + $0x220] sm:$0xff]
    %v3270 = vld [vmem:[#allocation3 + $0x228] sm:$0xff]
    %v3271 = vld [vmem:[#allocation3 + $0x230] sm:$0xff]
    %v3272 = vld [vmem:[#allocation3 + $0x238] sm:$0xff]
    %v3273 = vld [vmem:[#allocation3 + $0x240] sm:$0xff]
    %v3274 = vld [vmem:[#allocation3 + $0x248] sm:$0xff]
    %v3275 = vld [vmem:[#allocation3 + $0x250] sm:$0xff]
    %v3276 = vld [vmem:[#allocation3 + $0x258] sm:$0xff]
    %v3277 = vld [vmem:[#allocation3 + $0x260] sm:$0xff]
    %v3278 = vld [vmem:[#allocation3 + $0x268] sm:$0xff]
    %v3279 = vld [vmem:[#allocation3 + $0x270] sm:$0xff]
    %v3280 = vld [vmem:[#allocation3 + $0x278] sm:$0xff]
    %v3281 = vld [vmem:[#allocation3 + $0x280] sm:$0xff]
    %v3282 = vld [vmem:[#allocation3 + $0x288] sm:$0xff]
    %v3283 = vld [vmem:[#allocation3 + $0x290] sm:$0xff]
    %v3284 = vld [vmem:[#allocation3 + $0x298] sm:$0xff]
    %v3285 = vld [vmem:[#allocation3 + $0x2a0] sm:$0xff]
    %v3286 = vld [vmem:[#allocation3 + $0x2a8] sm:$0xff]
    %v3287 = vld [vmem:[#allocation3 + $0x2b0] sm:$0xff]
    %v3288 = vld [vmem:[#allocation3 + $0x2b8] sm:$0xff]
    %v3289 = vld [vmem:[#allocation3 + $0x2c0] sm:$0xff]
    %v3290 = vld [vmem:[#allocation3 + $0x2c8] sm:$0xff]
    %v3291 = vld [vmem:[#allocation3 + $0x2d0] sm:$0xff]
    %v3292 = vld [vmem:[#allocation3 + $0x2d8] sm:$0xff]
    %v3293 = vld [vmem:[#allocation3 + $0x2e0] sm:$0xff]
    %v3294 = vld [vmem:[#allocation3 + $0x2e8] sm:$0xff]
    %v3295 = vld [vmem:[#allocation3 + $0x2f0] sm:$0xff]
    %v3296 = vld [vmem:[#allocation3 + $0x2f8] sm:$0xff]
    %v3297 = vld [vmem:[#allocation3 + $0x300] sm:$0xff]
    %v3298 = vld [vmem:[#allocation3 + $0x308] sm:$0xff]
    %v3299 = vld [vmem:[#allocation3 + $0x310] sm:$0xff]
    %v3300 = vld [vmem:[#allocation3 + $0x318] sm:$0xff]
    %v3301 = vld [vmem:[#allocation3 + $0x320] sm:$0xff]
    %v3302 = vld [vmem:[#allocation3 + $0x328] sm:$0xff]
    %v3303 = vld [vmem:[#allocation3 + $0x330] sm:$0xff]
    %v3304 = vld [vmem:[#allocation3 + $0x338] sm:$0xff]
    %v3305 = vld [vmem:[#allocation3 + $0x340] sm:$0xff]
    %v3306 = vld [vmem:[#allocation3 + $0x348] sm:$0xff]
    %v3307 = vld [vmem:[#allocation3 + $0x350] sm:$0xff]
    %v3308 = vld [vmem:[#allocation3 + $0x358] sm:$0xff]
    %v3309 = vld [vmem:[#allocation3 + $0x360] sm:$0xff]
    %v3310 = vld [vmem:[#allocation3 + $0x368] sm:$0xff]
    %v3311 = vld [vmem:[#allocation3 + $0x370] sm:$0xff]
    %v3312 = vld [vmem:[#allocation3 + $0x378] sm:$0xff]
    %v3313 = vld [vmem:[#allocation3 + $0x380] sm:$0xff]
    %v3314 = vld [vmem:[#allocation3 + $0x388] sm:$0xff]
    %v3315 = vld [vmem:[#allocation3 + $0x390] sm:$0xff]
    %v3316 = vld [vmem:[#allocation3 + $0x398] sm:$0xff]
    %v3317 = vld [vmem:[#allocation3 + $0x3a0] sm:$0xff]
    %v3318 = vld [vmem:[#allocation3 + $0x3a8] sm:$0xff]
    %v3319 = vld [vmem:[#allocation3 + $0x3b0] sm:$0xff]
    %v3320 = vld [vmem:[#allocation3 + $0x3b8] sm:$0xff]
    %v3321 = vld [vmem:[#allocation3 + $0x3c0] sm:$0xff]
    %v3322 = vld [vmem:[#allocation3 + $0x3c8] sm:$0xff]
    %v3323 = vld [vmem:[#allocation3 + $0x3d0] sm:$0xff]
    %v3324 = vld [vmem:[#allocation3 + $0x3d8] sm:$0xff]
    %v3325 = vld [vmem:[#allocation3 + $0x3e0] sm:$0xff]
    %v3326 = vld [vmem:[#allocation3 + $0x3e8] sm:$0xff]
    %v3327 = vld [vmem:[#allocation3 + $0x3f0] sm:$0xff]
    %v3328 = vld [vmem:[#allocation3 + $0x3f8] sm:$0xff]
    %v3329 = vld [vmem:[#allocation3 + $0x400] sm:$0xff]
    %v3330 = vld [vmem:[#allocation3 + $0x408] sm:$0xff]
    %v3331 = vld [vmem:[#allocation3 + $0x410] sm:$0xff]
    %v3332 = vld [vmem:[#allocation3 + $0x418] sm:$0xff]
    %v3333 = vld [vmem:[#allocation3 + $0x420] sm:$0xff]
    %v3334 = vld [vmem:[#allocation3 + $0x428] sm:$0xff]
    %v3335 = vld [vmem:[#allocation3 + $0x430] sm:$0xff]
    %v3336 = vld [vmem:[#allocation3 + $0x438] sm:$0xff]
    %v3337 = vld [vmem:[#allocation3 + $0x440] sm:$0xff]
    %v3338 = vld [vmem:[#allocation3 + $0x448] sm:$0xff]
    %v3339 = vld [vmem:[#allocation3 + $0x450] sm:$0xff]
    %v3340 = vld [vmem:[#allocation3 + $0x458] sm:$0xff]
    %v3341 = vld [vmem:[#allocation3 + $0x460] sm:$0xff]
    %v3342 = vld [vmem:[#allocation3 + $0x468] sm:$0xff]
    %v3343 = vld [vmem:[#allocation3 + $0x470] sm:$0xff]
    %v3344 = vld [vmem:[#allocation3 + $0x478] sm:$0xff]
    %v3345 = vld [vmem:[#allocation3 + $0x480] sm:$0xff]
    %v3346 = vld [vmem:[#allocation3 + $0x488] sm:$0xff]
    %v3347 = vld [vmem:[#allocation3 + $0x490] sm:$0xff]
    %v3348 = vld [vmem:[#allocation3 + $0x498] sm:$0xff]
    %v3349 = vld [vmem:[#allocation3 + $0x4a0] sm:$0xff]
    %v3350 = vld [vmem:[#allocation3 + $0x4a8] sm:$0xff]
    %v3351 = vld [vmem:[#allocation3 + $0x4b0] sm:$0xff]
    %v3352 = vld [vmem:[#allocation3 + $0x4b8] sm:$0xff]
    %v3353 = vld [vmem:[#allocation3 + $0x4c0] sm:$0xff]
    %v3354 = vld [vmem:[#allocation3 + $0x4c8] sm:$0xff]
    %v3355 = vld [vmem:[#allocation3 + $0x4d0] sm:$0xff]
    %v3356 = vld [vmem:[#allocation3 + $0x4d8] sm:$0xff]
    %v3357 = vld [vmem:[#allocation3 + $0x4e0] sm:$0xff]
    %v3358 = vld [vmem:[#allocation3 + $0x4e8] sm:$0xff]
    %v3359 = vld [vmem:[#allocation3 + $0x4f0] sm:$0xff]
    %v3360 = vld [vmem:[#allocation3 + $0x4f8] sm:$0xff]
    %v3361 = vld [vmem:[#allocation3 + $0x500] sm:$0xff]
    %v3362 = vld [vmem:[#allocation3 + $0x508] sm:$0xff]
    %v3363 = vld [vmem:[#allocation3 + $0x510] sm:$0xff]
    %v3364 = vld [vmem:[#allocation3 + $0x518] sm:$0xff]
    %v3365 = vld [vmem:[#allocation3 + $0x520] sm:$0xff]
    %v3366 = vld [vmem:[#allocation3 + $0x528] sm:$0xff]
    %v3367 = vld [vmem:[#allocation3 + $0x530] sm:$0xff]
    %v3368 = vld [vmem:[#allocation3 + $0x538] sm:$0xff]
    %v3369 = vld [vmem:[#allocation3 + $0x540] sm:$0xff]
    %v3370 = vld [vmem:[#allocation3 + $0x548] sm:$0xff]
    %v3371 = vld [vmem:[#allocation3 + $0x550] sm:$0xff]
    %v3372 = vld [vmem:[#allocation3 + $0x558] sm:$0xff]
    %v3373 = vld [vmem:[#allocation3 + $0x560] sm:$0xff]
    %v3374 = vld [vmem:[#allocation3 + $0x568] sm:$0xff]
    %v3375 = vld [vmem:[#allocation3 + $0x570] sm:$0xff]
    %v3376 = vld [vmem:[#allocation3 + $0x578] sm:$0xff]
    %v3377 = vld [vmem:[#allocation3 + $0x580] sm:$0xff]
    %v3378 = vld [vmem:[#allocation3 + $0x588] sm:$0xff]
    %v3379 = vld [vmem:[#allocation3 + $0x590] sm:$0xff]
    %v3380 = vld [vmem:[#allocation3 + $0x598] sm:$0xff]
    %v3381 = vld [vmem:[#allocation3 + $0x5a0] sm:$0xff]
    %v3382 = vld [vmem:[#allocation3 + $0x5a8] sm:$0xff]
    %v3383 = vld [vmem:[#allocation3 + $0x5b0] sm:$0xff]
    %v3384 = vld [vmem:[#allocation3 + $0x5b8] sm:$0xff]
    %v3385 = vld [vmem:[#allocation3 + $0x5c0] sm:$0xff]
    %v3386 = vld [vmem:[#allocation3 + $0x5c8] sm:$0xff]
    %v3387 = vld [vmem:[#allocation3 + $0x5d0] sm:$0xff]
    %v3388 = vld [vmem:[#allocation3 + $0x5d8] sm:$0xff]
    %v3389 = vld [vmem:[#allocation3 + $0x5e0] sm:$0xff]
    %v3390 = vld [vmem:[#allocation3 + $0x5e8] sm:$0xff]
    %v3391 = vld [vmem:[#allocation3 + $0x5f0] sm:$0xff]
    %v3392 = vld [vmem:[#allocation3 + $0x5f8] sm:$0xff]
    %v3393 = vld [vmem:[#allocation3 + $0x600] sm:$0xff]
    %v3394 = vld [vmem:[#allocation3 + $0x608] sm:$0xff]
    %v3395 = vld [vmem:[#allocation3 + $0x610] sm:$0xff]
    %v3396 = vld [vmem:[#allocation3 + $0x618] sm:$0xff]
    %v3397 = vld [vmem:[#allocation3 + $0x620] sm:$0xff]
    %v3398 = vld [vmem:[#allocation3 + $0x628] sm:$0xff]
    %v3399 = vld [vmem:[#allocation3 + $0x630] sm:$0xff]
    %v3400 = vld [vmem:[#allocation3 + $0x638] sm:$0xff]
    %v3401 = vld [vmem:[#allocation3 + $0x640] sm:$0xff]
    %v3402 = vld [vmem:[#allocation3 + $0x648] sm:$0xff]
    %v3403 = vld [vmem:[#allocation3 + $0x650] sm:$0xff]
    %v3404 = vld [vmem:[#allocation3 + $0x658] sm:$0xff]
    %v3405 = vld [vmem:[#allocation3 + $0x660] sm:$0xff]
    %v3406 = vld [vmem:[#allocation3 + $0x668] sm:$0xff]
    %v3407 = vld [vmem:[#allocation3 + $0x670] sm:$0xff]
    %v3408 = vld [vmem:[#allocation3 + $0x678] sm:$0xff]
    %v3409 = vld [vmem:[#allocation3 + $0x680] sm:$0xff]
    %v3410 = vld [vmem:[#allocation3 + $0x688] sm:$0xff]
    %v3411 = vld [vmem:[#allocation3 + $0x690] sm:$0xff]
    %v3412 = vld [vmem:[#allocation3 + $0x698] sm:$0xff]
    %v3413 = vld [vmem:[#allocation3 + $0x6a0] sm:$0xff]
    %v3414 = vld [vmem:[#allocation3 + $0x6a8] sm:$0xff]
    %v3415 = vld [vmem:[#allocation3 + $0x6b0] sm:$0xff]
    %v3416 = vld [vmem:[#allocation3 + $0x6b8] sm:$0xff]
    %v3417 = vld [vmem:[#allocation3 + $0x6c0] sm:$0xff]
    %v3418 = vld [vmem:[#allocation3 + $0x6c8] sm:$0xff]
    %v3419 = vld [vmem:[#allocation3 + $0x6d0] sm:$0xff]
    %v3420 = vld [vmem:[#allocation3 + $0x6d8] sm:$0xff]
    %v3421 = vld [vmem:[#allocation3 + $0x6e0] sm:$0xff]
    %v3422 = vld [vmem:[#allocation3 + $0x6e8] sm:$0xff]
    %v3423 = vld [vmem:[#allocation3 + $0x6f0] sm:$0xff]
    %v3424 = vld [vmem:[#allocation3 + $0x6f8] sm:$0xff]
    %v3425 = vld [vmem:[#allocation3 + $0x700] sm:$0xff]
    %v3426 = vld [vmem:[#allocation3 + $0x708] sm:$0xff]
    %v3427 = vld [vmem:[#allocation3 + $0x710] sm:$0xff]
    %v3428 = vld [vmem:[#allocation3 + $0x718] sm:$0xff]
    %v3429 = vld [vmem:[#allocation3 + $0x720] sm:$0xff]
    %v3430 = vld [vmem:[#allocation3 + $0x728] sm:$0xff]
    %v3431 = vld [vmem:[#allocation3 + $0x730] sm:$0xff]
    %v3432 = vld [vmem:[#allocation3 + $0x738] sm:$0xff]
    %v3433 = vld [vmem:[#allocation3 + $0x740] sm:$0xff]
    %v3434 = vld [vmem:[#allocation3 + $0x748] sm:$0xff]
    %v3435 = vld [vmem:[#allocation3 + $0x750] sm:$0xff]
    %v3436 = vld [vmem:[#allocation3 + $0x758] sm:$0xff]
    %v3437 = vld [vmem:[#allocation3 + $0x760] sm:$0xff]
    %v3438 = vld [vmem:[#allocation3 + $0x768] sm:$0xff]
    %v3439 = vld [vmem:[#allocation3 + $0x770] sm:$0xff]
    %v3440 = vld [vmem:[#allocation3 + $0x778] sm:$0xff]
    %v3441 = vld [vmem:[#allocation3 + $0x780] sm:$0xff]
    %v3442 = vld [vmem:[#allocation3 + $0x788] sm:$0xff]
    %v3443 = vld [vmem:[#allocation3 + $0x790] sm:$0xff]
    %v3444 = vld [vmem:[#allocation3 + $0x798] sm:$0xff]
    %v3445 = vld [vmem:[#allocation3 + $0x7a0] sm:$0xff]
    %v3446 = vld [vmem:[#allocation3 + $0x7a8] sm:$0xff]
    %v3447 = vld [vmem:[#allocation3 + $0x7b0] sm:$0xff]
    %v3448 = vld [vmem:[#allocation3 + $0x7b8] sm:$0xff]
    %v3449 = vld [vmem:[#allocation3 + $0x7c0] sm:$0xff]
    %v3450 = vld [vmem:[#allocation3 + $0x7c8] sm:$0xff]
    %v3451 = vld [vmem:[#allocation3 + $0x7d0] sm:$0xff]
    %v3452 = vld [vmem:[#allocation3 + $0x7d8] sm:$0xff]
    %v3453 = vld [vmem:[#allocation3 + $0x7e0] sm:$0xff]
    %v3454 = vld [vmem:[#allocation3 + $0x7e8] sm:$0xff]
    %v3455 = vld [vmem:[#allocation3 + $0x7f0] sm:$0xff]
    %v3456 = vld [vmem:[#allocation3 + $0x7f8] sm:$0xff]
    %v3457 = vld [vmem:[#allocation3 + $0x800] sm:$0xff]
    %v3458 = vld [vmem:[#allocation3 + $0x808] sm:$0xff]
    %v3459 = vld [vmem:[#allocation3 + $0x810] sm:$0xff]
    %v3460 = vld [vmem:[#allocation3 + $0x818] sm:$0xff]
    %v3461 = vld [vmem:[#allocation3 + $0x820] sm:$0xff]
    %v3462 = vld [vmem:[#allocation3 + $0x828] sm:$0xff]
    %v3463 = vld [vmem:[#allocation3 + $0x830] sm:$0xff]
    %v3464 = vld [vmem:[#allocation3 + $0x838] sm:$0xff]
    %v3465 = vld [vmem:[#allocation3 + $0x840] sm:$0xff]
    %v3466 = vld [vmem:[#allocation3 + $0x848] sm:$0xff]
    %v3467 = vld [vmem:[#allocation3 + $0x850] sm:$0xff]
    %v3468 = vld [vmem:[#allocation3 + $0x858] sm:$0xff]
    %v3469 = vld [vmem:[#allocation3 + $0x860] sm:$0xff]
    %v3470 = vld [vmem:[#allocation3 + $0x868] sm:$0xff]
    %v3471 = vld [vmem:[#allocation3 + $0x870] sm:$0xff]
    %v3472 = vld [vmem:[#allocation3 + $0x878] sm:$0xff]
    %v3473 = vld [vmem:[#allocation3 + $0x880] sm:$0xff]
    %v3474 = vld [vmem:[#allocation3 + $0x888] sm:$0xff]
    %v3475 = vld [vmem:[#allocation3 + $0x890] sm:$0xff]
    %v3476 = vld [vmem:[#allocation3 + $0x898] sm:$0xff]
    %v3477 = vld [vmem:[#allocation3 + $0x8a0] sm:$0xff]
    %v3478 = vld [vmem:[#allocation3 + $0x8a8] sm:$0xff]
    %v3479 = vld [vmem:[#allocation3 + $0x8b0] sm:$0xff]
    %v3480 = vld [vmem:[#allocation3 + $0x8b8] sm:$0xff]
    %v3481 = vld [vmem:[#allocation3 + $0x8c0] sm:$0xff]
    %v3482 = vld [vmem:[#allocation3 + $0x8c8] sm:$0xff]
    %v3483 = vld [vmem:[#allocation3 + $0x8d0] sm:$0xff]
    %v3484 = vld [vmem:[#allocation3 + $0x8d8] sm:$0xff]
    %v3485 = vld [vmem:[#allocation3 + $0x8e0] sm:$0xff]
    %v3486 = vld [vmem:[#allocation3 + $0x8e8] sm:$0xff]
    %v3487 = vld [vmem:[#allocation3 + $0x8f0] sm:$0xff]
    %v3488 = vld [vmem:[#allocation3 + $0x8f8] sm:$0xff]
    %v3489 = vld [vmem:[#allocation3 + $0x900] sm:$0xff]
    %v3490 = vld [vmem:[#allocation3 + $0x908] sm:$0xff]
    %v3491 = vld [vmem:[#allocation3 + $0x910] sm:$0xff]
    %v3492 = vld [vmem:[#allocation3 + $0x918] sm:$0xff]
    %v3493 = vld [vmem:[#allocation3 + $0x920] sm:$0xff]
    %v3494 = vld [vmem:[#allocation3 + $0x928] sm:$0xff]
    %v3495 = vld [vmem:[#allocation3 + $0x930] sm:$0xff]
    %v3496 = vld [vmem:[#allocation3 + $0x938] sm:$0xff]
    %v3497 = vld [vmem:[#allocation3 + $0x940] sm:$0xff]
    %v3498 = vld [vmem:[#allocation3 + $0x948] sm:$0xff]
    %v3499 = vld [vmem:[#allocation3 + $0x950] sm:$0xff]
    %v3500 = vld [vmem:[#allocation3 + $0x958] sm:$0xff]
    %v3501 = vld [vmem:[#allocation3 + $0x960] sm:$0xff]
    %v3502 = vld [vmem:[#allocation3 + $0x968] sm:$0xff]
    %v3503 = vld [vmem:[#allocation3 + $0x970] sm:$0xff]
    %v3504 = vld [vmem:[#allocation3 + $0x978] sm:$0xff]
    %v3505 = vld [vmem:[#allocation3 + $0x980] sm:$0xff]
    %v3506 = vld [vmem:[#allocation3 + $0x988] sm:$0xff]
    %v3507 = vld [vmem:[#allocation3 + $0x990] sm:$0xff]
    %v3508 = vld [vmem:[#allocation3 + $0x998] sm:$0xff]
    %v3509 = vld [vmem:[#allocation3 + $0x9a0] sm:$0xff]
    %v3510 = vld [vmem:[#allocation3 + $0x9a8] sm:$0xff]
    %v3511 = vld [vmem:[#allocation3 + $0x9b0] sm:$0xff]
    %v3512 = vld [vmem:[#allocation3 + $0x9b8] sm:$0xff]
    %v3513 = vld [vmem:[#allocation3 + $0x9c0] sm:$0xff]
    %v3514 = vld [vmem:[#allocation3 + $0x9c8] sm:$0xff]
    %v3515 = vld [vmem:[#allocation3 + $0x9d0] sm:$0xff]
    %v3516 = vld [vmem:[#allocation3 + $0x9d8] sm:$0xff]
    %v3517 = vld [vmem:[#allocation3 + $0x9e0] sm:$0xff]
    %v3518 = vld [vmem:[#allocation3 + $0x9e8] sm:$0xff]
    %v3519 = vld [vmem:[#allocation3 + $0x9f0] sm:$0xff]
    %v3520 = vld [vmem:[#allocation3 + $0x9f8] sm:$0xff]
    %v3521 = vld [vmem:[#allocation3 + $0xa00] sm:$0xff]
    %v3522 = vld [vmem:[#allocation3 + $0xa08] sm:$0xff]
    %v3523 = vld [vmem:[#allocation3 + $0xa10] sm:$0xff]
    %v3524 = vld [vmem:[#allocation3 + $0xa18] sm:$0xff]
    %v3525 = vld [vmem:[#allocation3 + $0xa20] sm:$0xff]
    %v3526 = vld [vmem:[#allocation3 + $0xa28] sm:$0xff]
    %v3527 = vld [vmem:[#allocation3 + $0xa30] sm:$0xff]
    %v3528 = vld [vmem:[#allocation3 + $0xa38] sm:$0xff]
    %v3529 = vld [vmem:[#allocation3 + $0xa40] sm:$0xff]
    %v3530 = vld [vmem:[#allocation3 + $0xa48] sm:$0xff]
    %v3531 = vld [vmem:[#allocation3 + $0xa50] sm:$0xff]
    %v3532 = vld [vmem:[#allocation3 + $0xa58] sm:$0xff]
    %v3533 = vld [vmem:[#allocation3 + $0xa60] sm:$0xff]
    %v3534 = vld [vmem:[#allocation3 + $0xa68] sm:$0xff]
    %v3535 = vld [vmem:[#allocation3 + $0xa70] sm:$0xff]
    %v3536 = vld [vmem:[#allocation3 + $0xa78] sm:$0xff]
    %v3537 = vld [vmem:[#allocation3 + $0xa80] sm:$0xff]
    %v3538 = vld [vmem:[#allocation3 + $0xa88] sm:$0xff]
    %v3539 = vld [vmem:[#allocation3 + $0xa90] sm:$0xff]
    %v3540 = vld [vmem:[#allocation3 + $0xa98] sm:$0xff]
    %v3541 = vld [vmem:[#allocation3 + $0xaa0] sm:$0xff]
    %v3542 = vld [vmem:[#allocation3 + $0xaa8] sm:$0xff]
    %v3543 = vld [vmem:[#allocation3 + $0xab0] sm:$0xff]
    %v3544 = vld [vmem:[#allocation3 + $0xab8] sm:$0xff]
    %v3545 = vld [vmem:[#allocation3 + $0xac0] sm:$0xff]
    %v3546 = vld [vmem:[#allocation3 + $0xac8] sm:$0xff]
    %v3547 = vld [vmem:[#allocation3 + $0xad0] sm:$0xff]
    %v3548 = vld [vmem:[#allocation3 + $0xad8] sm:$0xff]
    %v3549 = vld [vmem:[#allocation3 + $0xae0] sm:$0xff]
    %v3550 = vld [vmem:[#allocation3 + $0xae8] sm:$0xff]
    %v3551 = vld [vmem:[#allocation3 + $0xaf0] sm:$0xff]
    %v3552 = vld [vmem:[#allocation3 + $0xaf8] sm:$0xff]
    %v3553 = vld [vmem:[#allocation3 + $0xb00] sm:$0xff]
    %v3554 = vld [vmem:[#allocation3 + $0xb08] sm:$0xff]
    %v3555 = vld [vmem:[#allocation3 + $0xb10] sm:$0xff]
    %v3556 = vld [vmem:[#allocation3 + $0xb18] sm:$0xff]
    %v3557 = vld [vmem:[#allocation3 + $0xb20] sm:$0xff]
    %v3558 = vld [vmem:[#allocation3 + $0xb28] sm:$0xff]
    %v3559 = vld [vmem:[#allocation3 + $0xb30] sm:$0xff]
    %v3560 = vld [vmem:[#allocation3 + $0xb38] sm:$0xff]
    %v3561 = vld [vmem:[#allocation3 + $0xb40] sm:$0xff]
    %v3562 = vld [vmem:[#allocation3 + $0xb48] sm:$0xff]
    %v3563 = vld [vmem:[#allocation3 + $0xb50] sm:$0xff]
    %v3564 = vld [vmem:[#allocation3 + $0xb58] sm:$0xff]
    %v3565 = vld [vmem:[#allocation3 + $0xb60] sm:$0xff]
    %v3566 = vld [vmem:[#allocation3 + $0xb68] sm:$0xff]
    %v3567 = vld [vmem:[#allocation3 + $0xb70] sm:$0xff]
    %v3568 = vld [vmem:[#allocation3 + $0xb78] sm:$0xff]
    %v3569 = vld [vmem:[#allocation3 + $0xb80] sm:$0xff]
    %v3570 = vld [vmem:[#allocation3 + $0xb88] sm:$0xff]
    %v3571 = vld [vmem:[#allocation3 + $0xb90] sm:$0xff]
    %v3572 = vld [vmem:[#allocation3 + $0xb98] sm:$0xff]
    %v3573 = vld [vmem:[#allocation3 + $0xba0] sm:$0xff]
    %v3574 = vld [vmem:[#allocation3 + $0xba8] sm:$0xff]
    %v3575 = vld [vmem:[#allocation3 + $0xbb0] sm:$0xff]
    %v3576 = vld [vmem:[#allocation3 + $0xbb8] sm:$0xff]
    %v3577 = vld [vmem:[#allocation3 + $0xbc0] sm:$0xff]
    %v3578 = vld [vmem:[#allocation3 + $0xbc8] sm:$0xff]
    %v3579 = vld [vmem:[#allocation3 + $0xbd0] sm:$0xff]
    %v3580 = vld [vmem:[#allocation3 + $0xbd8] sm:$0xff]
    %v3581 = vld [vmem:[#allocation3 + $0xbe0] sm:$0xff]
    %v3582 = vld [vmem:[#allocation3 + $0xbe8] sm:$0xff]
    %v3583 = vld [vmem:[#allocation3 + $0xbf0] sm:$0xff]
    %v3584 = vld [vmem:[#allocation3 + $0xbf8] sm:$0xff]
    %v3585 = vld [vmem:[#allocation16] sm:$0xff]
    %v3586 = vld [vmem:[#allocation16 + $0x8] sm:$0xff]
    %v3587 = vld [vmem:[#allocation16 + $0x10] sm:$0xff]
    %v3591 = vlaneseq
    %v3592 = vshrl.u32 %v3591, 7
    %v3593 = vsub.s32 0, %v3592
    %v3594 = vrot.slane %v3585, %v3593
    %v3595 = vlaneseq
    %v3596 = vshrl.u32 %v3595, 7
    %v3597 = vsub.s32 1, %v3596
    %v3598 = vrot.slane %v3585, %v3597
    %v3599 = vlaneseq
    %v3600 = vshrl.u32 %v3599, 7
    %v3601 = vsub.s32 2, %v3600
    %v3602 = vrot.slane %v3585, %v3601
    %v3603 = vlaneseq
    %v3604 = vshrl.u32 %v3603, 7
    %v3605 = vsub.s32 3, %v3604
    %v3606 = vrot.slane %v3585, %v3605
    %v3607 = vlaneseq
    %v3608 = vshrl.u32 %v3607, 7
    %v3609 = vsub.s32 4, %v3608
    %v3610 = vrot.slane %v3585, %v3609
    %v3611 = vlaneseq
    %v3612 = vshrl.u32 %v3611, 7
    %v3613 = vsub.s32 5, %v3612
    %v3614 = vrot.slane %v3585, %v3613
    %v3615 = vlaneseq
    %v3616 = vshrl.u32 %v3615, 7
    %v3617 = vsub.s32 6, %v3616
    %v3618 = vrot.slane %v3585, %v3617
    %v3619 = vlaneseq
    %v3620 = vshrl.u32 %v3619, 7
    %v3621 = vsub.s32 7, %v3620
    %v3622 = vrot.slane %v3585, %v3621
    %v3623 = vlaneseq
    %v3624 = vshrl.u32 %v3623, 7
    %v3625 = vsub.s32 0, %v3624
    %v3626 = vrot.slane %v3586, %v3625
    %v3627 = vlaneseq
    %v3628 = vshrl.u32 %v3627, 7
    %v3629 = vsub.s32 1, %v3628
    %v3630 = vrot.slane %v3586, %v3629
    %v3631 = vlaneseq
    %v3632 = vshrl.u32 %v3631, 7
    %v3633 = vsub.s32 2, %v3632
    %v3634 = vrot.slane %v3586, %v3633
    %v3635 = vlaneseq
    %v3636 = vshrl.u32 %v3635, 7
    %v3637 = vsub.s32 3, %v3636
    %v3638 = vrot.slane %v3586, %v3637
    %v3639 = vlaneseq
    %v3640 = vshrl.u32 %v3639, 7
    %v3641 = vsub.s32 4, %v3640
    %v3642 = vrot.slane %v3586, %v3641
    %v3643 = vlaneseq
    %v3644 = vshrl.u32 %v3643, 7
    %v3645 = vsub.s32 5, %v3644
    %v3646 = vrot.slane %v3586, %v3645
    %v3647 = vlaneseq
    %v3648 = vshrl.u32 %v3647, 7
    %v3649 = vsub.s32 6, %v3648
    %v3650 = vrot.slane %v3586, %v3649
    %v3651 = vlaneseq
    %v3652 = vshrl.u32 %v3651, 7
    %v3653 = vsub.s32 7, %v3652
    %v3654 = vrot.slane %v3586, %v3653
    %v3655 = vlaneseq
    %v3656 = vshrl.u32 %v3655, 7
    %v3657 = vsub.s32 0, %v3656
    %v3658 = vrot.slane %v3587, %v3657
    %v3659 = vlaneseq
    %v3660 = vshrl.u32 %v3659, 7
    %v3661 = vsub.s32 1, %v3660
    %v3662 = vrot.slane %v3587, %v3661
    %v3663 = vlaneseq
    %v3664 = vshrl.u32 %v3663, 7
    %v3665 = vsub.s32 2, %v3664
    %v3666 = vrot.slane %v3587, %v3665
    %v3667 = vlaneseq
    %v3668 = vshrl.u32 %v3667, 7
    %v3669 = vsub.s32 3, %v3668
    %v3670 = vrot.slane %v3587, %v3669
    %v3671 = vlaneseq
    %v3672 = vshrl.u32 %v3671, 7
    %v3673 = vsub.s32 4, %v3672
    %v3674 = vrot.slane %v3587, %v3673
    %v3675 = vlaneseq
    %v3676 = vshrl.u32 %v3675, 7
    %v3677 = vsub.s32 5, %v3676
    %v3678 = vrot.slane %v3587, %v3677
    %v3679 = vlaneseq
    %v3680 = vshrl.u32 %v3679, 7
    %v3681 = vsub.s32 6, %v3680
    %v3682 = vrot.slane %v3587, %v3681
    %v3683 = vlaneseq
    %v3684 = vshrl.u32 %v3683, 7
    %v3685 = vsub.s32 7, %v3684
    %v3686 = vrot.slane %v3587, %v3685
    %v4095 = vunpack.c.l.b16 %v3201
    %v4096 = vunpack.c.h.b16 %v3201
    %v4097 = vunpack.c.l.b16 %v3202
    %v4098 = vunpack.c.h.b16 %v3202
    %v4099 = vunpack.c.l.b16 %v3203
    %v4100 = vunpack.c.h.b16 %v3203
    %v4101 = vunpack.c.l.b16 %v3204
    %v4102 = vunpack.c.h.b16 %v3204
    %v4103 = vunpack.c.l.b16 %v3205
    %v4104 = vunpack.c.h.b16 %v3205
    %v4105 = vunpack.c.l.b16 %v3206
    %v4106 = vunpack.c.h.b16 %v3206
    %v4107 = vunpack.c.l.b16 %v3207
    %v4108 = vunpack.c.h.b16 %v3207
    %v4109 = vunpack.c.l.b16 %v3208
    %v4110 = vunpack.c.h.b16 %v3208
    %v4111 = vunpack.c.l.b16 %v3209
    %v4112 = vunpack.c.h.b16 %v3209
    %v4113 = vunpack.c.l.b16 %v3210
    %v4114 = vunpack.c.h.b16 %v3210
    %v4115 = vunpack.c.l.b16 %v3211
    %v4116 = vunpack.c.h.b16 %v3211
    %v4117 = vunpack.c.l.b16 %v3212
    %v4118 = vunpack.c.h.b16 %v3212
    %v4119 = vunpack.c.l.b16 %v3213
    %v4120 = vunpack.c.h.b16 %v3213
    %v4121 = vunpack.c.l.b16 %v3214
    %v4122 = vunpack.c.h.b16 %v3214
    %v4123 = vunpack.c.l.b16 %v3215
    %v4124 = vunpack.c.h.b16 %v3215
    %v4125 = vunpack.c.l.b16 %v3216
    %v4126 = vunpack.c.h.b16 %v3216
    %v4127 = vunpack.c.l.b16 %v3217
    %v4128 = vunpack.c.h.b16 %v3217
    %v4129 = vunpack.c.l.b16 %v3218
    %v4130 = vunpack.c.h.b16 %v3218
    %v4131 = vunpack.c.l.b16 %v3219
    %v4132 = vunpack.c.h.b16 %v3219
    %v4133 = vunpack.c.l.b16 %v3220
    %v4134 = vunpack.c.h.b16 %v3220
    %v4135 = vunpack.c.l.b16 %v3221
    %v4136 = vunpack.c.h.b16 %v3221
    %v4137 = vunpack.c.l.b16 %v3222
    %v4138 = vunpack.c.h.b16 %v3222
    %v4139 = vunpack.c.l.b16 %v3223
    %v4140 = vunpack.c.h.b16 %v3223
    %v4141 = vunpack.c.l.b16 %v3224
    %v4142 = vunpack.c.h.b16 %v3224
    %v4143 = vunpack.c.l.b16 %v3225
    %v4144 = vunpack.c.h.b16 %v3225
    %v4145 = vunpack.c.l.b16 %v3226
    %v4146 = vunpack.c.h.b16 %v3226
    %v4147 = vunpack.c.l.b16 %v3227
    %v4148 = vunpack.c.h.b16 %v3227
    %v4149 = vunpack.c.l.b16 %v3228
    %v4150 = vunpack.c.h.b16 %v3228
    %v4151 = vunpack.c.l.b16 %v3229
    %v4152 = vunpack.c.h.b16 %v3229
    %v4153 = vunpack.c.l.b16 %v3230
    %v4154 = vunpack.c.h.b16 %v3230
    %v4155 = vunpack.c.l.b16 %v3231
    %v4156 = vunpack.c.h.b16 %v3231
    %v4157 = vunpack.c.l.b16 %v3232
    %v4158 = vunpack.c.h.b16 %v3232
    %v4159 = vunpack.c.l.b16 %v3233
    %v4160 = vunpack.c.h.b16 %v3233
    %v4161 = vunpack.c.l.b16 %v3234
    %v4162 = vunpack.c.h.b16 %v3234
    %v4163 = vunpack.c.l.b16 %v3235
    %v4164 = vunpack.c.h.b16 %v3235
    %v4165 = vunpack.c.l.b16 %v3236
    %v4166 = vunpack.c.h.b16 %v3236
    %v4167 = vunpack.c.l.b16 %v3237
    %v4168 = vunpack.c.h.b16 %v3237
    %v4169 = vunpack.c.l.b16 %v3238
    %v4170 = vunpack.c.h.b16 %v3238
    %v4171 = vunpack.c.l.b16 %v3239
    %v4172 = vunpack.c.h.b16 %v3239
    %v4173 = vunpack.c.l.b16 %v3240
    %v4174 = vunpack.c.h.b16 %v3240
    %v4175 = vunpack.c.l.b16 %v3241
    %v4176 = vunpack.c.h.b16 %v3241
    %v4177 = vunpack.c.l.b16 %v3242
    %v4178 = vunpack.c.h.b16 %v3242
    %v4179 = vunpack.c.l.b16 %v3243
    %v4180 = vunpack.c.h.b16 %v3243
    %v4181 = vunpack.c.l.b16 %v3244
    %v4182 = vunpack.c.h.b16 %v3244
    %v4183 = vunpack.c.l.b16 %v3245
    %v4184 = vunpack.c.h.b16 %v3245
    %v4185 = vunpack.c.l.b16 %v3246
    %v4186 = vunpack.c.h.b16 %v3246
    %v4187 = vunpack.c.l.b16 %v3247
    %v4188 = vunpack.c.h.b16 %v3247
    %v4189 = vunpack.c.l.b16 %v3248
    %v4190 = vunpack.c.h.b16 %v3248
    %v4191 = vunpack.c.l.b16 %v3249
    %v4192 = vunpack.c.h.b16 %v3249
    %v4193 = vunpack.c.l.b16 %v3250
    %v4194 = vunpack.c.h.b16 %v3250
    %v4195 = vunpack.c.l.b16 %v3251
    %v4196 = vunpack.c.h.b16 %v3251
    %v4197 = vunpack.c.l.b16 %v3252
    %v4198 = vunpack.c.h.b16 %v3252
    %v4199 = vunpack.c.l.b16 %v3253
    %v4200 = vunpack.c.h.b16 %v3253
    %v4201 = vunpack.c.l.b16 %v3254
    %v4202 = vunpack.c.h.b16 %v3254
    %v4203 = vunpack.c.l.b16 %v3255
    %v4204 = vunpack.c.h.b16 %v3255
    %v4205 = vunpack.c.l.b16 %v3256
    %v4206 = vunpack.c.h.b16 %v3256
    %v4207 = vunpack.c.l.b16 %v3257
    %v4208 = vunpack.c.h.b16 %v3257
    %v4209 = vunpack.c.l.b16 %v3258
    %v4210 = vunpack.c.h.b16 %v3258
    %v4211 = vunpack.c.l.b16 %v3259
    %v4212 = vunpack.c.h.b16 %v3259
    %v4213 = vunpack.c.l.b16 %v3260
    %v4214 = vunpack.c.h.b16 %v3260
    %v4215 = vunpack.c.l.b16 %v3261
    %v4216 = vunpack.c.h.b16 %v3261
    %v4217 = vunpack.c.l.b16 %v3262
    %v4218 = vunpack.c.h.b16 %v3262
    %v4219 = vunpack.c.l.b16 %v3263
    %v4220 = vunpack.c.h.b16 %v3263
    %v4221 = vunpack.c.l.b16 %v3264
    %v4222 = vunpack.c.h.b16 %v3264
    %v4223 = vunpack.c.l.b16 %v3265
    %v4224 = vunpack.c.h.b16 %v3265
    %v4225 = vunpack.c.l.b16 %v3266
    %v4226 = vunpack.c.h.b16 %v3266
    %v4227 = vunpack.c.l.b16 %v3267
    %v4228 = vunpack.c.h.b16 %v3267
    %v4229 = vunpack.c.l.b16 %v3268
    %v4230 = vunpack.c.h.b16 %v3268
    %v4231 = vunpack.c.l.b16 %v3269
    %v4232 = vunpack.c.h.b16 %v3269
    %v4233 = vunpack.c.l.b16 %v3270
    %v4234 = vunpack.c.h.b16 %v3270
    %v4235 = vunpack.c.l.b16 %v3271
    %v4236 = vunpack.c.h.b16 %v3271
    %v4237 = vunpack.c.l.b16 %v3272
    %v4238 = vunpack.c.h.b16 %v3272
    %v4239 = vunpack.c.l.b16 %v3273
    %v4240 = vunpack.c.h.b16 %v3273
    %v4241 = vunpack.c.l.b16 %v3274
    %v4242 = vunpack.c.h.b16 %v3274
    %v4243 = vunpack.c.l.b16 %v3275
    %v4244 = vunpack.c.h.b16 %v3275
    %v4245 = vunpack.c.l.b16 %v3276
    %v4246 = vunpack.c.h.b16 %v3276
    %v4247 = vunpack.c.l.b16 %v3277
    %v4248 = vunpack.c.h.b16 %v3277
    %v4249 = vunpack.c.l.b16 %v3278
    %v4250 = vunpack.c.h.b16 %v3278
    %v4251 = vunpack.c.l.b16 %v3279
    %v4252 = vunpack.c.h.b16 %v3279
    %v4253 = vunpack.c.l.b16 %v3280
    %v4254 = vunpack.c.h.b16 %v3280
    %v4255 = vunpack.c.l.b16 %v3281
    %v4256 = vunpack.c.h.b16 %v3281
    %v4257 = vunpack.c.l.b16 %v3282
    %v4258 = vunpack.c.h.b16 %v3282
    %v4259 = vunpack.c.l.b16 %v3283
    %v4260 = vunpack.c.h.b16 %v3283
    %v4261 = vunpack.c.l.b16 %v3284
    %v4262 = vunpack.c.h.b16 %v3284
    %v4263 = vunpack.c.l.b16 %v3285
    %v4264 = vunpack.c.h.b16 %v3285
    %v4265 = vunpack.c.l.b16 %v3286
    %v4266 = vunpack.c.h.b16 %v3286
    %v4267 = vunpack.c.l.b16 %v3287
    %v4268 = vunpack.c.h.b16 %v3287
    %v4269 = vunpack.c.l.b16 %v3288
    %v4270 = vunpack.c.h.b16 %v3288
    %v4271 = vunpack.c.l.b16 %v3289
    %v4272 = vunpack.c.h.b16 %v3289
    %v4273 = vunpack.c.l.b16 %v3290
    %v4274 = vunpack.c.h.b16 %v3290
    %v4275 = vunpack.c.l.b16 %v3291
    %v4276 = vunpack.c.h.b16 %v3291
    %v4277 = vunpack.c.l.b16 %v3292
    %v4278 = vunpack.c.h.b16 %v3292
    %v4279 = vunpack.c.l.b16 %v3293
    %v4280 = vunpack.c.h.b16 %v3293
    %v4281 = vunpack.c.l.b16 %v3294
    %v4282 = vunpack.c.h.b16 %v3294
    %v4283 = vunpack.c.l.b16 %v3295
    %v4284 = vunpack.c.h.b16 %v3295
    %v4285 = vunpack.c.l.b16 %v3296
    %v4286 = vunpack.c.h.b16 %v3296
    %v4287 = vunpack.c.l.b16 %v3297
    %v4288 = vunpack.c.h.b16 %v3297
    %v4289 = vunpack.c.l.b16 %v3298
    %v4290 = vunpack.c.h.b16 %v3298
    %v4291 = vunpack.c.l.b16 %v3299
    %v4292 = vunpack.c.h.b16 %v3299
    %v4293 = vunpack.c.l.b16 %v3300
    %v4294 = vunpack.c.h.b16 %v3300
    %v4295 = vunpack.c.l.b16 %v3301
    %v4296 = vunpack.c.h.b16 %v3301
    %v4297 = vunpack.c.l.b16 %v3302
    %v4298 = vunpack.c.h.b16 %v3302
    %v4299 = vunpack.c.l.b16 %v3303
    %v4300 = vunpack.c.h.b16 %v3303
    %v4301 = vunpack.c.l.b16 %v3304
    %v4302 = vunpack.c.h.b16 %v3304
    %v4303 = vunpack.c.l.b16 %v3305
    %v4304 = vunpack.c.h.b16 %v3305
    %v4305 = vunpack.c.l.b16 %v3306
    %v4306 = vunpack.c.h.b16 %v3306
    %v4307 = vunpack.c.l.b16 %v3307
    %v4308 = vunpack.c.h.b16 %v3307
    %v4309 = vunpack.c.l.b16 %v3308
    %v4310 = vunpack.c.h.b16 %v3308
    %v4311 = vunpack.c.l.b16 %v3309
    %v4312 = vunpack.c.h.b16 %v3309
    %v4313 = vunpack.c.l.b16 %v3310
    %v4314 = vunpack.c.h.b16 %v3310
    %v4315 = vunpack.c.l.b16 %v3311
    %v4316 = vunpack.c.h.b16 %v3311
    %v4317 = vunpack.c.l.b16 %v3312
    %v4318 = vunpack.c.h.b16 %v3312
    %v4319 = vunpack.c.l.b16 %v3313
    %v4320 = vunpack.c.h.b16 %v3313
    %v4321 = vunpack.c.l.b16 %v3314
    %v4322 = vunpack.c.h.b16 %v3314
    %v4323 = vunpack.c.l.b16 %v3315
    %v4324 = vunpack.c.h.b16 %v3315
    %v4325 = vunpack.c.l.b16 %v3316
    %v4326 = vunpack.c.h.b16 %v3316
    %v4327 = vunpack.c.l.b16 %v3317
    %v4328 = vunpack.c.h.b16 %v3317
    %v4329 = vunpack.c.l.b16 %v3318
    %v4330 = vunpack.c.h.b16 %v3318
    %v4331 = vunpack.c.l.b16 %v3319
    %v4332 = vunpack.c.h.b16 %v3319
    %v4333 = vunpack.c.l.b16 %v3320
    %v4334 = vunpack.c.h.b16 %v3320
    %v4335 = vunpack.c.l.b16 %v3321
    %v4336 = vunpack.c.h.b16 %v3321
    %v4337 = vunpack.c.l.b16 %v3322
    %v4338 = vunpack.c.h.b16 %v3322
    %v4339 = vunpack.c.l.b16 %v3323
    %v4340 = vunpack.c.h.b16 %v3323
    %v4341 = vunpack.c.l.b16 %v3324
    %v4342 = vunpack.c.h.b16 %v3324
    %v4343 = vunpack.c.l.b16 %v3325
    %v4344 = vunpack.c.h.b16 %v3325
    %v4345 = vunpack.c.l.b16 %v3326
    %v4346 = vunpack.c.h.b16 %v3326
    %v4347 = vunpack.c.l.b16 %v3327
    %v4348 = vunpack.c.h.b16 %v3327
    %v4349 = vunpack.c.l.b16 %v3328
    %v4350 = vunpack.c.h.b16 %v3328
    %v4351 = vunpack.c.l.b16 %v3329
    %v4352 = vunpack.c.h.b16 %v3329
    %v4353 = vunpack.c.l.b16 %v3330
    %v4354 = vunpack.c.h.b16 %v3330
    %v4355 = vunpack.c.l.b16 %v3331
    %v4356 = vunpack.c.h.b16 %v3331
    %v4357 = vunpack.c.l.b16 %v3332
    %v4358 = vunpack.c.h.b16 %v3332
    %v4359 = vunpack.c.l.b16 %v3333
    %v4360 = vunpack.c.h.b16 %v3333
    %v4361 = vunpack.c.l.b16 %v3334
    %v4362 = vunpack.c.h.b16 %v3334
    %v4363 = vunpack.c.l.b16 %v3335
    %v4364 = vunpack.c.h.b16 %v3335
    %v4365 = vunpack.c.l.b16 %v3336
    %v4366 = vunpack.c.h.b16 %v3336
    %v4367 = vunpack.c.l.b16 %v3337
    %v4368 = vunpack.c.h.b16 %v3337
    %v4369 = vunpack.c.l.b16 %v3338
    %v4370 = vunpack.c.h.b16 %v3338
    %v4371 = vunpack.c.l.b16 %v3339
    %v4372 = vunpack.c.h.b16 %v3339
    %v4373 = vunpack.c.l.b16 %v3340
    %v4374 = vunpack.c.h.b16 %v3340
    %v4375 = vunpack.c.l.b16 %v3341
    %v4376 = vunpack.c.h.b16 %v3341
    %v4377 = vunpack.c.l.b16 %v3342
    %v4378 = vunpack.c.h.b16 %v3342
    %v4379 = vunpack.c.l.b16 %v3343
    %v4380 = vunpack.c.h.b16 %v3343
    %v4381 = vunpack.c.l.b16 %v3344
    %v4382 = vunpack.c.h.b16 %v3344
    %v4383 = vunpack.c.l.b16 %v3345
    %v4384 = vunpack.c.h.b16 %v3345
    %v4385 = vunpack.c.l.b16 %v3346
    %v4386 = vunpack.c.h.b16 %v3346
    %v4387 = vunpack.c.l.b16 %v3347
    %v4388 = vunpack.c.h.b16 %v3347
    %v4389 = vunpack.c.l.b16 %v3348
    %v4390 = vunpack.c.h.b16 %v3348
    %v4391 = vunpack.c.l.b16 %v3349
    %v4392 = vunpack.c.h.b16 %v3349
    %v4393 = vunpack.c.l.b16 %v3350
    %v4394 = vunpack.c.h.b16 %v3350
    %v4395 = vunpack.c.l.b16 %v3351
    %v4396 = vunpack.c.h.b16 %v3351
    %v4397 = vunpack.c.l.b16 %v3352
    %v4398 = vunpack.c.h.b16 %v3352
    %v4399 = vunpack.c.l.b16 %v3353
    %v4400 = vunpack.c.h.b16 %v3353
    %v4401 = vunpack.c.l.b16 %v3354
    %v4402 = vunpack.c.h.b16 %v3354
    %v4403 = vunpack.c.l.b16 %v3355
    %v4404 = vunpack.c.h.b16 %v3355
    %v4405 = vunpack.c.l.b16 %v3356
    %v4406 = vunpack.c.h.b16 %v3356
    %v4407 = vunpack.c.l.b16 %v3357
    %v4408 = vunpack.c.h.b16 %v3357
    %v4409 = vunpack.c.l.b16 %v3358
    %v4410 = vunpack.c.h.b16 %v3358
    %v4411 = vunpack.c.l.b16 %v3359
    %v4412 = vunpack.c.h.b16 %v3359
    %v4413 = vunpack.c.l.b16 %v3360
    %v4414 = vunpack.c.h.b16 %v3360
    %v4415 = vunpack.c.l.b16 %v3361
    %v4416 = vunpack.c.h.b16 %v3361
    %v4417 = vunpack.c.l.b16 %v3362
    %v4418 = vunpack.c.h.b16 %v3362
    %v4419 = vunpack.c.l.b16 %v3363
    %v4420 = vunpack.c.h.b16 %v3363
    %v4421 = vunpack.c.l.b16 %v3364
    %v4422 = vunpack.c.h.b16 %v3364
    %v4423 = vunpack.c.l.b16 %v3365
    %v4424 = vunpack.c.h.b16 %v3365
    %v4425 = vunpack.c.l.b16 %v3366
    %v4426 = vunpack.c.h.b16 %v3366
    %v4427 = vunpack.c.l.b16 %v3367
    %v4428 = vunpack.c.h.b16 %v3367
    %v4429 = vunpack.c.l.b16 %v3368
    %v4430 = vunpack.c.h.b16 %v3368
    %v4431 = vunpack.c.l.b16 %v3369
    %v4432 = vunpack.c.h.b16 %v3369
    %v4433 = vunpack.c.l.b16 %v3370
    %v4434 = vunpack.c.h.b16 %v3370
    %v4435 = vunpack.c.l.b16 %v3371
    %v4436 = vunpack.c.h.b16 %v3371
    %v4437 = vunpack.c.l.b16 %v3372
    %v4438 = vunpack.c.h.b16 %v3372
    %v4439 = vunpack.c.l.b16 %v3373
    %v4440 = vunpack.c.h.b16 %v3373
    %v4441 = vunpack.c.l.b16 %v3374
    %v4442 = vunpack.c.h.b16 %v3374
    %v4443 = vunpack.c.l.b16 %v3375
    %v4444 = vunpack.c.h.b16 %v3375
    %v4445 = vunpack.c.l.b16 %v3376
    %v4446 = vunpack.c.h.b16 %v3376
    %v4447 = vunpack.c.l.b16 %v3377
    %v4448 = vunpack.c.h.b16 %v3377
    %v4449 = vunpack.c.l.b16 %v3378
    %v4450 = vunpack.c.h.b16 %v3378
    %v4451 = vunpack.c.l.b16 %v3379
    %v4452 = vunpack.c.h.b16 %v3379
    %v4453 = vunpack.c.l.b16 %v3380
    %v4454 = vunpack.c.h.b16 %v3380
    %v4455 = vunpack.c.l.b16 %v3381
    %v4456 = vunpack.c.h.b16 %v3381
    %v4457 = vunpack.c.l.b16 %v3382
    %v4458 = vunpack.c.h.b16 %v3382
    %v4459 = vunpack.c.l.b16 %v3383
    %v4460 = vunpack.c.h.b16 %v3383
    %v4461 = vunpack.c.l.b16 %v3384
    %v4462 = vunpack.c.h.b16 %v3384
    %v4463 = vunpack.c.l.b16 %v3385
    %v4464 = vunpack.c.h.b16 %v3385
    %v4465 = vunpack.c.l.b16 %v3386
    %v4466 = vunpack.c.h.b16 %v3386
    %v4467 = vunpack.c.l.b16 %v3387
    %v4468 = vunpack.c.h.b16 %v3387
    %v4469 = vunpack.c.l.b16 %v3388
    %v4470 = vunpack.c.h.b16 %v3388
    %v4471 = vunpack.c.l.b16 %v3389
    %v4472 = vunpack.c.h.b16 %v3389
    %v4473 = vunpack.c.l.b16 %v3390
    %v4474 = vunpack.c.h.b16 %v3390
    %v4475 = vunpack.c.l.b16 %v3391
    %v4476 = vunpack.c.h.b16 %v3391
    %v4477 = vunpack.c.l.b16 %v3392
    %v4478 = vunpack.c.h.b16 %v3392
    %v4479 = vunpack.c.l.b16 %v3393
    %v4480 = vunpack.c.h.b16 %v3393
    %v4481 = vunpack.c.l.b16 %v3394
    %v4482 = vunpack.c.h.b16 %v3394
    %v4483 = vunpack.c.l.b16 %v3395
    %v4484 = vunpack.c.h.b16 %v3395
    %v4485 = vunpack.c.l.b16 %v3396
    %v4486 = vunpack.c.h.b16 %v3396
    %v4487 = vunpack.c.l.b16 %v3397
    %v4488 = vunpack.c.h.b16 %v3397
    %v4489 = vunpack.c.l.b16 %v3398
    %v4490 = vunpack.c.h.b16 %v3398
    %v4491 = vunpack.c.l.b16 %v3399
    %v4492 = vunpack.c.h.b16 %v3399
    %v4493 = vunpack.c.l.b16 %v3400
    %v4494 = vunpack.c.h.b16 %v3400
    %v4495 = vunpack.c.l.b16 %v3401
    %v4496 = vunpack.c.h.b16 %v3401
    %v4497 = vunpack.c.l.b16 %v3402
    %v4498 = vunpack.c.h.b16 %v3402
    %v4499 = vunpack.c.l.b16 %v3403
    %v4500 = vunpack.c.h.b16 %v3403
    %v4501 = vunpack.c.l.b16 %v3404
    %v4502 = vunpack.c.h.b16 %v3404
    %v4503 = vunpack.c.l.b16 %v3405
    %v4504 = vunpack.c.h.b16 %v3405
    %v4505 = vunpack.c.l.b16 %v3406
    %v4506 = vunpack.c.h.b16 %v3406
    %v4507 = vunpack.c.l.b16 %v3407
    %v4508 = vunpack.c.h.b16 %v3407
    %v4509 = vunpack.c.l.b16 %v3408
    %v4510 = vunpack.c.h.b16 %v3408
    %v4511 = vunpack.c.l.b16 %v3409
    %v4512 = vunpack.c.h.b16 %v3409
    %v4513 = vunpack.c.l.b16 %v3410
    %v4514 = vunpack.c.h.b16 %v3410
    %v4515 = vunpack.c.l.b16 %v3411
    %v4516 = vunpack.c.h.b16 %v3411
    %v4517 = vunpack.c.l.b16 %v3412
    %v4518 = vunpack.c.h.b16 %v3412
    %v4519 = vunpack.c.l.b16 %v3413
    %v4520 = vunpack.c.h.b16 %v3413
    %v4521 = vunpack.c.l.b16 %v3414
    %v4522 = vunpack.c.h.b16 %v3414
    %v4523 = vunpack.c.l.b16 %v3415
    %v4524 = vunpack.c.h.b16 %v3415
    %v4525 = vunpack.c.l.b16 %v3416
    %v4526 = vunpack.c.h.b16 %v3416
    %v4527 = vunpack.c.l.b16 %v3417
    %v4528 = vunpack.c.h.b16 %v3417
    %v4529 = vunpack.c.l.b16 %v3418
    %v4530 = vunpack.c.h.b16 %v3418
    %v4531 = vunpack.c.l.b16 %v3419
    %v4532 = vunpack.c.h.b16 %v3419
    %v4533 = vunpack.c.l.b16 %v3420
    %v4534 = vunpack.c.h.b16 %v3420
    %v4535 = vunpack.c.l.b16 %v3421
    %v4536 = vunpack.c.h.b16 %v3421
    %v4537 = vunpack.c.l.b16 %v3422
    %v4538 = vunpack.c.h.b16 %v3422
    %v4539 = vunpack.c.l.b16 %v3423
    %v4540 = vunpack.c.h.b16 %v3423
    %v4541 = vunpack.c.l.b16 %v3424
    %v4542 = vunpack.c.h.b16 %v3424
    %v4543 = vunpack.c.l.b16 %v3425
    %v4544 = vunpack.c.h.b16 %v3425
    %v4545 = vunpack.c.l.b16 %v3426
    %v4546 = vunpack.c.h.b16 %v3426
    %v4547 = vunpack.c.l.b16 %v3427
    %v4548 = vunpack.c.h.b16 %v3427
    %v4549 = vunpack.c.l.b16 %v3428
    %v4550 = vunpack.c.h.b16 %v3428
    %v4551 = vunpack.c.l.b16 %v3429
    %v4552 = vunpack.c.h.b16 %v3429
    %v4553 = vunpack.c.l.b16 %v3430
    %v4554 = vunpack.c.h.b16 %v3430
    %v4555 = vunpack.c.l.b16 %v3431
    %v4556 = vunpack.c.h.b16 %v3431
    %v4557 = vunpack.c.l.b16 %v3432
    %v4558 = vunpack.c.h.b16 %v3432
    %v4559 = vunpack.c.l.b16 %v3433
    %v4560 = vunpack.c.h.b16 %v3433
    %v4561 = vunpack.c.l.b16 %v3434
    %v4562 = vunpack.c.h.b16 %v3434
    %v4563 = vunpack.c.l.b16 %v3435
    %v4564 = vunpack.c.h.b16 %v3435
    %v4565 = vunpack.c.l.b16 %v3436
    %v4566 = vunpack.c.h.b16 %v3436
    %v4567 = vunpack.c.l.b16 %v3437
    %v4568 = vunpack.c.h.b16 %v3437
    %v4569 = vunpack.c.l.b16 %v3438
    %v4570 = vunpack.c.h.b16 %v3438
    %v4571 = vunpack.c.l.b16 %v3439
    %v4572 = vunpack.c.h.b16 %v3439
    %v4573 = vunpack.c.l.b16 %v3440
    %v4574 = vunpack.c.h.b16 %v3440
    %v4575 = vunpack.c.l.b16 %v3441
    %v4576 = vunpack.c.h.b16 %v3441
    %v4577 = vunpack.c.l.b16 %v3442
    %v4578 = vunpack.c.h.b16 %v3442
    %v4579 = vunpack.c.l.b16 %v3443
    %v4580 = vunpack.c.h.b16 %v3443
    %v4581 = vunpack.c.l.b16 %v3444
    %v4582 = vunpack.c.h.b16 %v3444
    %v4583 = vunpack.c.l.b16 %v3445
    %v4584 = vunpack.c.h.b16 %v3445
    %v4585 = vunpack.c.l.b16 %v3446
    %v4586 = vunpack.c.h.b16 %v3446
    %v4587 = vunpack.c.l.b16 %v3447
    %v4588 = vunpack.c.h.b16 %v3447
    %v4589 = vunpack.c.l.b16 %v3448
    %v4590 = vunpack.c.h.b16 %v3448
    %v4591 = vunpack.c.l.b16 %v3449
    %v4592 = vunpack.c.h.b16 %v3449
    %v4593 = vunpack.c.l.b16 %v3450
    %v4594 = vunpack.c.h.b16 %v3450
    %v4595 = vunpack.c.l.b16 %v3451
    %v4596 = vunpack.c.h.b16 %v3451
    %v4597 = vunpack.c.l.b16 %v3452
    %v4598 = vunpack.c.h.b16 %v3452
    %v4599 = vunpack.c.l.b16 %v3453
    %v4600 = vunpack.c.h.b16 %v3453
    %v4601 = vunpack.c.l.b16 %v3454
    %v4602 = vunpack.c.h.b16 %v3454
    %v4603 = vunpack.c.l.b16 %v3455
    %v4604 = vunpack.c.h.b16 %v3455
    %v4605 = vunpack.c.l.b16 %v3456
    %v4606 = vunpack.c.h.b16 %v3456
    %v4607 = vunpack.c.l.b16 %v3457
    %v4608 = vunpack.c.h.b16 %v3457
    %v4609 = vunpack.c.l.b16 %v3458
    %v4610 = vunpack.c.h.b16 %v3458
    %v4611 = vunpack.c.l.b16 %v3459
    %v4612 = vunpack.c.h.b16 %v3459
    %v4613 = vunpack.c.l.b16 %v3460
    %v4614 = vunpack.c.h.b16 %v3460
    %v4615 = vunpack.c.l.b16 %v3461
    %v4616 = vunpack.c.h.b16 %v3461
    %v4617 = vunpack.c.l.b16 %v3462
    %v4618 = vunpack.c.h.b16 %v3462
    %v4619 = vunpack.c.l.b16 %v3463
    %v4620 = vunpack.c.h.b16 %v3463
    %v4621 = vunpack.c.l.b16 %v3464
    %v4622 = vunpack.c.h.b16 %v3464
    %v4623 = vunpack.c.l.b16 %v3465
    %v4624 = vunpack.c.h.b16 %v3465
    %v4625 = vunpack.c.l.b16 %v3466
    %v4626 = vunpack.c.h.b16 %v3466
    %v4627 = vunpack.c.l.b16 %v3467
    %v4628 = vunpack.c.h.b16 %v3467
    %v4629 = vunpack.c.l.b16 %v3468
    %v4630 = vunpack.c.h.b16 %v3468
    %v4631 = vunpack.c.l.b16 %v3469
    %v4632 = vunpack.c.h.b16 %v3469
    %v4633 = vunpack.c.l.b16 %v3470
    %v4634 = vunpack.c.h.b16 %v3470
    %v4635 = vunpack.c.l.b16 %v3471
    %v4636 = vunpack.c.h.b16 %v3471
    %v4637 = vunpack.c.l.b16 %v3472
    %v4638 = vunpack.c.h.b16 %v3472
    %v4639 = vunpack.c.l.b16 %v3473
    %v4640 = vunpack.c.h.b16 %v3473
    %v4641 = vunpack.c.l.b16 %v3474
    %v4642 = vunpack.c.h.b16 %v3474
    %v4643 = vunpack.c.l.b16 %v3475
    %v4644 = vunpack.c.h.b16 %v3475
    %v4645 = vunpack.c.l.b16 %v3476
    %v4646 = vunpack.c.h.b16 %v3476
    %v4647 = vunpack.c.l.b16 %v3477
    %v4648 = vunpack.c.h.b16 %v3477
    %v4649 = vunpack.c.l.b16 %v3478
    %v4650 = vunpack.c.h.b16 %v3478
    %v4651 = vunpack.c.l.b16 %v3479
    %v4652 = vunpack.c.h.b16 %v3479
    %v4653 = vunpack.c.l.b16 %v3480
    %v4654 = vunpack.c.h.b16 %v3480
    %v4655 = vunpack.c.l.b16 %v3481
    %v4656 = vunpack.c.h.b16 %v3481
    %v4657 = vunpack.c.l.b16 %v3482
    %v4658 = vunpack.c.h.b16 %v3482
    %v4659 = vunpack.c.l.b16 %v3483
    %v4660 = vunpack.c.h.b16 %v3483
    %v4661 = vunpack.c.l.b16 %v3484
    %v4662 = vunpack.c.h.b16 %v3484
    %v4663 = vunpack.c.l.b16 %v3485
    %v4664 = vunpack.c.h.b16 %v3485
    %v4665 = vunpack.c.l.b16 %v3486
    %v4666 = vunpack.c.h.b16 %v3486
    %v4667 = vunpack.c.l.b16 %v3487
    %v4668 = vunpack.c.h.b16 %v3487
    %v4669 = vunpack.c.l.b16 %v3488
    %v4670 = vunpack.c.h.b16 %v3488
    %v4671 = vunpack.c.l.b16 %v3489
    %v4672 = vunpack.c.h.b16 %v3489
    %v4673 = vunpack.c.l.b16 %v3490
    %v4674 = vunpack.c.h.b16 %v3490
    %v4675 = vunpack.c.l.b16 %v3491
    %v4676 = vunpack.c.h.b16 %v3491
    %v4677 = vunpack.c.l.b16 %v3492
    %v4678 = vunpack.c.h.b16 %v3492
    %v4679 = vunpack.c.l.b16 %v3493
    %v4680 = vunpack.c.h.b16 %v3493
    %v4681 = vunpack.c.l.b16 %v3494
    %v4682 = vunpack.c.h.b16 %v3494
    %v4683 = vunpack.c.l.b16 %v3495
    %v4684 = vunpack.c.h.b16 %v3495
    %v4685 = vunpack.c.l.b16 %v3496
    %v4686 = vunpack.c.h.b16 %v3496
    %v4687 = vunpack.c.l.b16 %v3497
    %v4688 = vunpack.c.h.b16 %v3497
    %v4689 = vunpack.c.l.b16 %v3498
    %v4690 = vunpack.c.h.b16 %v3498
    %v4691 = vunpack.c.l.b16 %v3499
    %v4692 = vunpack.c.h.b16 %v3499
    %v4693 = vunpack.c.l.b16 %v3500
    %v4694 = vunpack.c.h.b16 %v3500
    %v4695 = vunpack.c.l.b16 %v3501
    %v4696 = vunpack.c.h.b16 %v3501
    %v4697 = vunpack.c.l.b16 %v3502
    %v4698 = vunpack.c.h.b16 %v3502
    %v4699 = vunpack.c.l.b16 %v3503
    %v4700 = vunpack.c.h.b16 %v3503
    %v4701 = vunpack.c.l.b16 %v3504
    %v4702 = vunpack.c.h.b16 %v3504
    %v4703 = vunpack.c.l.b16 %v3505
    %v4704 = vunpack.c.h.b16 %v3505
    %v4705 = vunpack.c.l.b16 %v3506
    %v4706 = vunpack.c.h.b16 %v3506
    %v4707 = vunpack.c.l.b16 %v3507
    %v4708 = vunpack.c.h.b16 %v3507
    %v4709 = vunpack.c.l.b16 %v3508
    %v4710 = vunpack.c.h.b16 %v3508
    %v4711 = vunpack.c.l.b16 %v3509
    %v4712 = vunpack.c.h.b16 %v3509
    %v4713 = vunpack.c.l.b16 %v3510
    %v4714 = vunpack.c.h.b16 %v3510
    %v4715 = vunpack.c.l.b16 %v3511
    %v4716 = vunpack.c.h.b16 %v3511
    %v4717 = vunpack.c.l.b16 %v3512
    %v4718 = vunpack.c.h.b16 %v3512
    %v4719 = vunpack.c.l.b16 %v3513
    %v4720 = vunpack.c.h.b16 %v3513
    %v4721 = vunpack.c.l.b16 %v3514
    %v4722 = vunpack.c.h.b16 %v3514
    %v4723 = vunpack.c.l.b16 %v3515
    %v4724 = vunpack.c.h.b16 %v3515
    %v4725 = vunpack.c.l.b16 %v3516
    %v4726 = vunpack.c.h.b16 %v3516
    %v4727 = vunpack.c.l.b16 %v3517
    %v4728 = vunpack.c.h.b16 %v3517
    %v4729 = vunpack.c.l.b16 %v3518
    %v4730 = vunpack.c.h.b16 %v3518
    %v4731 = vunpack.c.l.b16 %v3519
    %v4732 = vunpack.c.h.b16 %v3519
    %v4733 = vunpack.c.l.b16 %v3520
    %v4734 = vunpack.c.h.b16 %v3520
    %v4735 = vunpack.c.l.b16 %v3521
    %v4736 = vunpack.c.h.b16 %v3521
    %v4737 = vunpack.c.l.b16 %v3522
    %v4738 = vunpack.c.h.b16 %v3522
    %v4739 = vunpack.c.l.b16 %v3523
    %v4740 = vunpack.c.h.b16 %v3523
    %v4741 = vunpack.c.l.b16 %v3524
    %v4742 = vunpack.c.h.b16 %v3524
    %v4743 = vunpack.c.l.b16 %v3525
    %v4744 = vunpack.c.h.b16 %v3525
    %v4745 = vunpack.c.l.b16 %v3526
    %v4746 = vunpack.c.h.b16 %v3526
    %v4747 = vunpack.c.l.b16 %v3527
    %v4748 = vunpack.c.h.b16 %v3527
    %v4749 = vunpack.c.l.b16 %v3528
    %v4750 = vunpack.c.h.b16 %v3528
    %v4751 = vunpack.c.l.b16 %v3529
    %v4752 = vunpack.c.h.b16 %v3529
    %v4753 = vunpack.c.l.b16 %v3530
    %v4754 = vunpack.c.h.b16 %v3530
    %v4755 = vunpack.c.l.b16 %v3531
    %v4756 = vunpack.c.h.b16 %v3531
    %v4757 = vunpack.c.l.b16 %v3532
    %v4758 = vunpack.c.h.b16 %v3532
    %v4759 = vunpack.c.l.b16 %v3533
    %v4760 = vunpack.c.h.b16 %v3533
    %v4761 = vunpack.c.l.b16 %v3534
    %v4762 = vunpack.c.h.b16 %v3534
    %v4763 = vunpack.c.l.b16 %v3535
    %v4764 = vunpack.c.h.b16 %v3535
    %v4765 = vunpack.c.l.b16 %v3536
    %v4766 = vunpack.c.h.b16 %v3536
    %v4767 = vunpack.c.l.b16 %v3537
    %v4768 = vunpack.c.h.b16 %v3537
    %v4769 = vunpack.c.l.b16 %v3538
    %v4770 = vunpack.c.h.b16 %v3538
    %v4771 = vunpack.c.l.b16 %v3539
    %v4772 = vunpack.c.h.b16 %v3539
    %v4773 = vunpack.c.l.b16 %v3540
    %v4774 = vunpack.c.h.b16 %v3540
    %v4775 = vunpack.c.l.b16 %v3541
    %v4776 = vunpack.c.h.b16 %v3541
    %v4777 = vunpack.c.l.b16 %v3542
    %v4778 = vunpack.c.h.b16 %v3542
    %v4779 = vunpack.c.l.b16 %v3543
    %v4780 = vunpack.c.h.b16 %v3543
    %v4781 = vunpack.c.l.b16 %v3544
    %v4782 = vunpack.c.h.b16 %v3544
    %v4783 = vunpack.c.l.b16 %v3545
    %v4784 = vunpack.c.h.b16 %v3545
    %v4785 = vunpack.c.l.b16 %v3546
    %v4786 = vunpack.c.h.b16 %v3546
    %v4787 = vunpack.c.l.b16 %v3547
    %v4788 = vunpack.c.h.b16 %v3547
    %v4789 = vunpack.c.l.b16 %v3548
    %v4790 = vunpack.c.h.b16 %v3548
    %v4791 = vunpack.c.l.b16 %v3549
    %v4792 = vunpack.c.h.b16 %v3549
    %v4793 = vunpack.c.l.b16 %v3550
    %v4794 = vunpack.c.h.b16 %v3550
    %v4795 = vunpack.c.l.b16 %v3551
    %v4796 = vunpack.c.h.b16 %v3551
    %v4797 = vunpack.c.l.b16 %v3552
    %v4798 = vunpack.c.h.b16 %v3552
    %v4799 = vunpack.c.l.b16 %v3553
    %v4800 = vunpack.c.h.b16 %v3553
    %v4801 = vunpack.c.l.b16 %v3554
    %v4802 = vunpack.c.h.b16 %v3554
    %v4803 = vunpack.c.l.b16 %v3555
    %v4804 = vunpack.c.h.b16 %v3555
    %v4805 = vunpack.c.l.b16 %v3556
    %v4806 = vunpack.c.h.b16 %v3556
    %v4807 = vunpack.c.l.b16 %v3557
    %v4808 = vunpack.c.h.b16 %v3557
    %v4809 = vunpack.c.l.b16 %v3558
    %v4810 = vunpack.c.h.b16 %v3558
    %v4811 = vunpack.c.l.b16 %v3559
    %v4812 = vunpack.c.h.b16 %v3559
    %v4813 = vunpack.c.l.b16 %v3560
    %v4814 = vunpack.c.h.b16 %v3560
    %v4815 = vunpack.c.l.b16 %v3561
    %v4816 = vunpack.c.h.b16 %v3561
    %v4817 = vunpack.c.l.b16 %v3562
    %v4818 = vunpack.c.h.b16 %v3562
    %v4819 = vunpack.c.l.b16 %v3563
    %v4820 = vunpack.c.h.b16 %v3563
    %v4821 = vunpack.c.l.b16 %v3564
    %v4822 = vunpack.c.h.b16 %v3564
    %v4823 = vunpack.c.l.b16 %v3565
    %v4824 = vunpack.c.h.b16 %v3565
    %v4825 = vunpack.c.l.b16 %v3566
    %v4826 = vunpack.c.h.b16 %v3566
    %v4827 = vunpack.c.l.b16 %v3567
    %v4828 = vunpack.c.h.b16 %v3567
    %v4829 = vunpack.c.l.b16 %v3568
    %v4830 = vunpack.c.h.b16 %v3568
    %v4831 = vunpack.c.l.b16 %v3569
    %v4832 = vunpack.c.h.b16 %v3569
    %v4833 = vunpack.c.l.b16 %v3570
    %v4834 = vunpack.c.h.b16 %v3570
    %v4835 = vunpack.c.l.b16 %v3571
    %v4836 = vunpack.c.h.b16 %v3571
    %v4837 = vunpack.c.l.b16 %v3572
    %v4838 = vunpack.c.h.b16 %v3572
    %v4839 = vunpack.c.l.b16 %v3573
    %v4840 = vunpack.c.h.b16 %v3573
    %v4841 = vunpack.c.l.b16 %v3574
    %v4842 = vunpack.c.h.b16 %v3574
    %v4843 = vunpack.c.l.b16 %v3575
    %v4844 = vunpack.c.h.b16 %v3575
    %v4845 = vunpack.c.l.b16 %v3576
    %v4846 = vunpack.c.h.b16 %v3576
    %v4847 = vunpack.c.l.b16 %v3577
    %v4848 = vunpack.c.h.b16 %v3577
    %v4849 = vunpack.c.l.b16 %v3578
    %v4850 = vunpack.c.h.b16 %v3578
    %v4851 = vunpack.c.l.b16 %v3579
    %v4852 = vunpack.c.h.b16 %v3579
    %v4853 = vunpack.c.l.b16 %v3580
    %v4854 = vunpack.c.h.b16 %v3580
    %v4855 = vunpack.c.l.b16 %v3581
    %v4856 = vunpack.c.h.b16 %v3581
    %v4857 = vunpack.c.l.b16 %v3582
    %v4858 = vunpack.c.h.b16 %v3582
    %v4859 = vunpack.c.l.b16 %v3583
    %v4860 = vunpack.c.h.b16 %v3583
    %v4861 = vunpack.c.l.b16 %v3584
    %v4862 = vunpack.c.h.b16 %v3584
    %v4863 = vpack.c.b16 %v4119, %v4095
    %v4864 = vpack.c.b16 %v4120, %v4096
    %v4865 = vpack.c.b16 %v4121, %v4097
    %v4866 = vpack.c.b16 %v4122, %v4098
    %v4867 = vpack.c.b16 %v4123, %v4099
    %v4868 = vpack.c.b16 %v4124, %v4100
    %v4869 = vpack.c.b16 %v4125, %v4101
    %v4870 = vpack.c.b16 %v4126, %v4102
    %v4871 = vpack.c.b16 %v4127, %v4103
    %v4872 = vpack.c.b16 %v4128, %v4104
    %v4873 = vpack.c.b16 %v4129, %v4105
    %v4874 = vpack.c.b16 %v4130, %v4106
    %v4875 = vpack.c.b16 %v4131, %v4107
    %v4876 = vpack.c.b16 %v4132, %v4108
    %v4877 = vpack.c.b16 %v4133, %v4109
    %v4878 = vpack.c.b16 %v4134, %v4110
    %v4879 = vpack.c.b16 %v4135, %v4111
    %v4880 = vpack.c.b16 %v4136, %v4112
    %v4881 = vpack.c.b16 %v4137, %v4113
    %v4882 = vpack.c.b16 %v4138, %v4114
    %v4883 = vpack.c.b16 %v4139, %v4115
    %v4884 = vpack.c.b16 %v4140, %v4116
    %v4885 = vpack.c.b16 %v4141, %v4117
    %v4886 = vpack.c.b16 %v4142, %v4118
    %v4887 = vpack.c.b16 %v4167, %v4143
    %v4888 = vpack.c.b16 %v4168, %v4144
    %v4889 = vpack.c.b16 %v4169, %v4145
    %v4890 = vpack.c.b16 %v4170, %v4146
    %v4891 = vpack.c.b16 %v4171, %v4147
    %v4892 = vpack.c.b16 %v4172, %v4148
    %v4893 = vpack.c.b16 %v4173, %v4149
    %v4894 = vpack.c.b16 %v4174, %v4150
    %v4895 = vpack.c.b16 %v4175, %v4151
    %v4896 = vpack.c.b16 %v4176, %v4152
    %v4897 = vpack.c.b16 %v4177, %v4153
    %v4898 = vpack.c.b16 %v4178, %v4154
    %v4899 = vpack.c.b16 %v4179, %v4155
    %v4900 = vpack.c.b16 %v4180, %v4156
    %v4901 = vpack.c.b16 %v4181, %v4157
    %v4902 = vpack.c.b16 %v4182, %v4158
    %v4903 = vpack.c.b16 %v4183, %v4159
    %v4904 = vpack.c.b16 %v4184, %v4160
    %v4905 = vpack.c.b16 %v4185, %v4161
    %v4906 = vpack.c.b16 %v4186, %v4162
    %v4907 = vpack.c.b16 %v4187, %v4163
    %v4908 = vpack.c.b16 %v4188, %v4164
    %v4909 = vpack.c.b16 %v4189, %v4165
    %v4910 = vpack.c.b16 %v4190, %v4166
    %v4911 = vpack.c.b16 %v4215, %v4191
    %v4912 = vpack.c.b16 %v4216, %v4192
    %v4913 = vpack.c.b16 %v4217, %v4193
    %v4914 = vpack.c.b16 %v4218, %v4194
    %v4915 = vpack.c.b16 %v4219, %v4195
    %v4916 = vpack.c.b16 %v4220, %v4196
    %v4917 = vpack.c.b16 %v4221, %v4197
    %v4918 = vpack.c.b16 %v4222, %v4198
    %v4919 = vpack.c.b16 %v4223, %v4199
    %v4920 = vpack.c.b16 %v4224, %v4200
    %v4921 = vpack.c.b16 %v4225, %v4201
    %v4922 = vpack.c.b16 %v4226, %v4202
    %v4923 = vpack.c.b16 %v4227, %v4203
    %v4924 = vpack.c.b16 %v4228, %v4204
    %v4925 = vpack.c.b16 %v4229, %v4205
    %v4926 = vpack.c.b16 %v4230, %v4206
    %v4927 = vpack.c.b16 %v4231, %v4207
    %v4928 = vpack.c.b16 %v4232, %v4208
    %v4929 = vpack.c.b16 %v4233, %v4209
    %v4930 = vpack.c.b16 %v4234, %v4210
    %v4931 = vpack.c.b16 %v4235, %v4211
    %v4932 = vpack.c.b16 %v4236, %v4212
    %v4933 = vpack.c.b16 %v4237, %v4213
    %v4934 = vpack.c.b16 %v4238, %v4214
    %v4935 = vpack.c.b16 %v4263, %v4239
    %v4936 = vpack.c.b16 %v4264, %v4240
    %v4937 = vpack.c.b16 %v4265, %v4241
    %v4938 = vpack.c.b16 %v4266, %v4242
    %v4939 = vpack.c.b16 %v4267, %v4243
    %v4940 = vpack.c.b16 %v4268, %v4244
    %v4941 = vpack.c.b16 %v4269, %v4245
    %v4942 = vpack.c.b16 %v4270, %v4246
    %v4943 = vpack.c.b16 %v4271, %v4247
    %v4944 = vpack.c.b16 %v4272, %v4248
    %v4945 = vpack.c.b16 %v4273, %v4249
    %v4946 = vpack.c.b16 %v4274, %v4250
    %v4947 = vpack.c.b16 %v4275, %v4251
    %v4948 = vpack.c.b16 %v4276, %v4252
    %v4949 = vpack.c.b16 %v4277, %v4253
    %v4950 = vpack.c.b16 %v4278, %v4254
    %v4951 = vpack.c.b16 %v4279, %v4255
    %v4952 = vpack.c.b16 %v4280, %v4256
    %v4953 = vpack.c.b16 %v4281, %v4257
    %v4954 = vpack.c.b16 %v4282, %v4258
    %v4955 = vpack.c.b16 %v4283, %v4259
    %v4956 = vpack.c.b16 %v4284, %v4260
    %v4957 = vpack.c.b16 %v4285, %v4261
    %v4958 = vpack.c.b16 %v4286, %v4262
    %v4959 = vpack.c.b16 %v4311, %v4287
    %v4960 = vpack.c.b16 %v4312, %v4288
    %v4961 = vpack.c.b16 %v4313, %v4289
    %v4962 = vpack.c.b16 %v4314, %v4290
    %v4963 = vpack.c.b16 %v4315, %v4291
    %v4964 = vpack.c.b16 %v4316, %v4292
    %v4965 = vpack.c.b16 %v4317, %v4293
    %v4966 = vpack.c.b16 %v4318, %v4294
    %v4967 = vpack.c.b16 %v4319, %v4295
    %v4968 = vpack.c.b16 %v4320, %v4296
    %v4969 = vpack.c.b16 %v4321, %v4297
    %v4970 = vpack.c.b16 %v4322, %v4298
    %v4971 = vpack.c.b16 %v4323, %v4299
    %v4972 = vpack.c.b16 %v4324, %v4300
    %v4973 = vpack.c.b16 %v4325, %v4301
    %v4974 = vpack.c.b16 %v4326, %v4302
    %v4975 = vpack.c.b16 %v4327, %v4303
    %v4976 = vpack.c.b16 %v4328, %v4304
    %v4977 = vpack.c.b16 %v4329, %v4305
    %v4978 = vpack.c.b16 %v4330, %v4306
    %v4979 = vpack.c.b16 %v4331, %v4307
    %v4980 = vpack.c.b16 %v4332, %v4308
    %v4981 = vpack.c.b16 %v4333, %v4309
    %v4982 = vpack.c.b16 %v4334, %v4310
    %v4983 = vpack.c.b16 %v4359, %v4335
    %v4984 = vpack.c.b16 %v4360, %v4336
    %v4985 = vpack.c.b16 %v4361, %v4337
    %v4986 = vpack.c.b16 %v4362, %v4338
    %v4987 = vpack.c.b16 %v4363, %v4339
    %v4988 = vpack.c.b16 %v4364, %v4340
    %v4989 = vpack.c.b16 %v4365, %v4341
    %v4990 = vpack.c.b16 %v4366, %v4342
    %v4991 = vpack.c.b16 %v4367, %v4343
    %v4992 = vpack.c.b16 %v4368, %v4344
    %v4993 = vpack.c.b16 %v4369, %v4345
    %v4994 = vpack.c.b16 %v4370, %v4346
    %v4995 = vpack.c.b16 %v4371, %v4347
    %v4996 = vpack.c.b16 %v4372, %v4348
    %v4997 = vpack.c.b16 %v4373, %v4349
    %v4998 = vpack.c.b16 %v4374, %v4350
    %v4999 = vpack.c.b16 %v4375, %v4351
    %v5000 = vpack.c.b16 %v4376, %v4352
    %v5001 = vpack.c.b16 %v4377, %v4353
    %v5002 = vpack.c.b16 %v4378, %v4354
    %v5003 = vpack.c.b16 %v4379, %v4355
    %v5004 = vpack.c.b16 %v4380, %v4356
    %v5005 = vpack.c.b16 %v4381, %v4357
    %v5006 = vpack.c.b16 %v4382, %v4358
    %v5007 = vpack.c.b16 %v4407, %v4383
    %v5008 = vpack.c.b16 %v4408, %v4384
    %v5009 = vpack.c.b16 %v4409, %v4385
    %v5010 = vpack.c.b16 %v4410, %v4386
    %v5011 = vpack.c.b16 %v4411, %v4387
    %v5012 = vpack.c.b16 %v4412, %v4388
    %v5013 = vpack.c.b16 %v4413, %v4389
    %v5014 = vpack.c.b16 %v4414, %v4390
    %v5015 = vpack.c.b16 %v4415, %v4391
    %v5016 = vpack.c.b16 %v4416, %v4392
    %v5017 = vpack.c.b16 %v4417, %v4393
    %v5018 = vpack.c.b16 %v4418, %v4394
    %v5019 = vpack.c.b16 %v4419, %v4395
    %v5020 = vpack.c.b16 %v4420, %v4396
    %v5021 = vpack.c.b16 %v4421, %v4397
    %v5022 = vpack.c.b16 %v4422, %v4398
    %v5023 = vpack.c.b16 %v4423, %v4399
    %v5024 = vpack.c.b16 %v4424, %v4400
    %v5025 = vpack.c.b16 %v4425, %v4401
    %v5026 = vpack.c.b16 %v4426, %v4402
    %v5027 = vpack.c.b16 %v4427, %v4403
    %v5028 = vpack.c.b16 %v4428, %v4404
    %v5029 = vpack.c.b16 %v4429, %v4405
    %v5030 = vpack.c.b16 %v4430, %v4406
    %v5031 = vpack.c.b16 %v4455, %v4431
    %v5032 = vpack.c.b16 %v4456, %v4432
    %v5033 = vpack.c.b16 %v4457, %v4433
    %v5034 = vpack.c.b16 %v4458, %v4434
    %v5035 = vpack.c.b16 %v4459, %v4435
    %v5036 = vpack.c.b16 %v4460, %v4436
    %v5037 = vpack.c.b16 %v4461, %v4437
    %v5038 = vpack.c.b16 %v4462, %v4438
    %v5039 = vpack.c.b16 %v4463, %v4439
    %v5040 = vpack.c.b16 %v4464, %v4440
    %v5041 = vpack.c.b16 %v4465, %v4441
    %v5042 = vpack.c.b16 %v4466, %v4442
    %v5043 = vpack.c.b16 %v4467, %v4443
    %v5044 = vpack.c.b16 %v4468, %v4444
    %v5045 = vpack.c.b16 %v4469, %v4445
    %v5046 = vpack.c.b16 %v4470, %v4446
    %v5047 = vpack.c.b16 %v4471, %v4447
    %v5048 = vpack.c.b16 %v4472, %v4448
    %v5049 = vpack.c.b16 %v4473, %v4449
    %v5050 = vpack.c.b16 %v4474, %v4450
    %v5051 = vpack.c.b16 %v4475, %v4451
    %v5052 = vpack.c.b16 %v4476, %v4452
    %v5053 = vpack.c.b16 %v4477, %v4453
    %v5054 = vpack.c.b16 %v4478, %v4454
    %v5055 = vpack.c.b16 %v4503, %v4479
    %v5056 = vpack.c.b16 %v4504, %v4480
    %v5057 = vpack.c.b16 %v4505, %v4481
    %v5058 = vpack.c.b16 %v4506, %v4482
    %v5059 = vpack.c.b16 %v4507, %v4483
    %v5060 = vpack.c.b16 %v4508, %v4484
    %v5061 = vpack.c.b16 %v4509, %v4485
    %v5062 = vpack.c.b16 %v4510, %v4486
    %v5063 = vpack.c.b16 %v4511, %v4487
    %v5064 = vpack.c.b16 %v4512, %v4488
    %v5065 = vpack.c.b16 %v4513, %v4489
    %v5066 = vpack.c.b16 %v4514, %v4490
    %v5067 = vpack.c.b16 %v4515, %v4491
    %v5068 = vpack.c.b16 %v4516, %v4492
    %v5069 = vpack.c.b16 %v4517, %v4493
    %v5070 = vpack.c.b16 %v4518, %v4494
    %v5071 = vpack.c.b16 %v4519, %v4495
    %v5072 = vpack.c.b16 %v4520, %v4496
    %v5073 = vpack.c.b16 %v4521, %v4497
    %v5074 = vpack.c.b16 %v4522, %v4498
    %v5075 = vpack.c.b16 %v4523, %v4499
    %v5076 = vpack.c.b16 %v4524, %v4500
    %v5077 = vpack.c.b16 %v4525, %v4501
    %v5078 = vpack.c.b16 %v4526, %v4502
    %v5079 = vpack.c.b16 %v4551, %v4527
    %v5080 = vpack.c.b16 %v4552, %v4528
    %v5081 = vpack.c.b16 %v4553, %v4529
    %v5082 = vpack.c.b16 %v4554, %v4530
    %v5083 = vpack.c.b16 %v4555, %v4531
    %v5084 = vpack.c.b16 %v4556, %v4532
    %v5085 = vpack.c.b16 %v4557, %v4533
    %v5086 = vpack.c.b16 %v4558, %v4534
    %v5087 = vpack.c.b16 %v4559, %v4535
    %v5088 = vpack.c.b16 %v4560, %v4536
    %v5089 = vpack.c.b16 %v4561, %v4537
    %v5090 = vpack.c.b16 %v4562, %v4538
    %v5091 = vpack.c.b16 %v4563, %v4539
    %v5092 = vpack.c.b16 %v4564, %v4540
    %v5093 = vpack.c.b16 %v4565, %v4541
    %v5094 = vpack.c.b16 %v4566, %v4542
    %v5095 = vpack.c.b16 %v4567, %v4543
    %v5096 = vpack.c.b16 %v4568, %v4544
    %v5097 = vpack.c.b16 %v4569, %v4545
    %v5098 = vpack.c.b16 %v4570, %v4546
    %v5099 = vpack.c.b16 %v4571, %v4547
    %v5100 = vpack.c.b16 %v4572, %v4548
    %v5101 = vpack.c.b16 %v4573, %v4549
    %v5102 = vpack.c.b16 %v4574, %v4550
    %v5103 = vpack.c.b16 %v4599, %v4575
    %v5104 = vpack.c.b16 %v4600, %v4576
    %v5105 = vpack.c.b16 %v4601, %v4577
    %v5106 = vpack.c.b16 %v4602, %v4578
    %v5107 = vpack.c.b16 %v4603, %v4579
    %v5108 = vpack.c.b16 %v4604, %v4580
    %v5109 = vpack.c.b16 %v4605, %v4581
    %v5110 = vpack.c.b16 %v4606, %v4582
    %v5111 = vpack.c.b16 %v4607, %v4583
    %v5112 = vpack.c.b16 %v4608, %v4584
    %v5113 = vpack.c.b16 %v4609, %v4585
    %v5114 = vpack.c.b16 %v4610, %v4586
    %v5115 = vpack.c.b16 %v4611, %v4587
    %v5116 = vpack.c.b16 %v4612, %v4588
    %v5117 = vpack.c.b16 %v4613, %v4589
    %v5118 = vpack.c.b16 %v4614, %v4590
    %v5119 = vpack.c.b16 %v4615, %v4591
    %v5120 = vpack.c.b16 %v4616, %v4592
    %v5121 = vpack.c.b16 %v4617, %v4593
    %v5122 = vpack.c.b16 %v4618, %v4594
    %v5123 = vpack.c.b16 %v4619, %v4595
    %v5124 = vpack.c.b16 %v4620, %v4596
    %v5125 = vpack.c.b16 %v4621, %v4597
    %v5126 = vpack.c.b16 %v4622, %v4598
    %v5127 = vpack.c.b16 %v4647, %v4623
    %v5128 = vpack.c.b16 %v4648, %v4624
    %v5129 = vpack.c.b16 %v4649, %v4625
    %v5130 = vpack.c.b16 %v4650, %v4626
    %v5131 = vpack.c.b16 %v4651, %v4627
    %v5132 = vpack.c.b16 %v4652, %v4628
    %v5133 = vpack.c.b16 %v4653, %v4629
    %v5134 = vpack.c.b16 %v4654, %v4630
    %v5135 = vpack.c.b16 %v4655, %v4631
    %v5136 = vpack.c.b16 %v4656, %v4632
    %v5137 = vpack.c.b16 %v4657, %v4633
    %v5138 = vpack.c.b16 %v4658, %v4634
    %v5139 = vpack.c.b16 %v4659, %v4635
    %v5140 = vpack.c.b16 %v4660, %v4636
    %v5141 = vpack.c.b16 %v4661, %v4637
    %v5142 = vpack.c.b16 %v4662, %v4638
    %v5143 = vpack.c.b16 %v4663, %v4639
    %v5144 = vpack.c.b16 %v4664, %v4640
    %v5145 = vpack.c.b16 %v4665, %v4641
    %v5146 = vpack.c.b16 %v4666, %v4642
    %v5147 = vpack.c.b16 %v4667, %v4643
    %v5148 = vpack.c.b16 %v4668, %v4644
    %v5149 = vpack.c.b16 %v4669, %v4645
    %v5150 = vpack.c.b16 %v4670, %v4646
    %v5151 = vpack.c.b16 %v4695, %v4671
    %v5152 = vpack.c.b16 %v4696, %v4672
    %v5153 = vpack.c.b16 %v4697, %v4673
    %v5154 = vpack.c.b16 %v4698, %v4674
    %v5155 = vpack.c.b16 %v4699, %v4675
    %v5156 = vpack.c.b16 %v4700, %v4676
    %v5157 = vpack.c.b16 %v4701, %v4677
    %v5158 = vpack.c.b16 %v4702, %v4678
    %v5159 = vpack.c.b16 %v4703, %v4679
    %v5160 = vpack.c.b16 %v4704, %v4680
    %v5161 = vpack.c.b16 %v4705, %v4681
    %v5162 = vpack.c.b16 %v4706, %v4682
    %v5163 = vpack.c.b16 %v4707, %v4683
    %v5164 = vpack.c.b16 %v4708, %v4684
    %v5165 = vpack.c.b16 %v4709, %v4685
    %v5166 = vpack.c.b16 %v4710, %v4686
    %v5167 = vpack.c.b16 %v4711, %v4687
    %v5168 = vpack.c.b16 %v4712, %v4688
    %v5169 = vpack.c.b16 %v4713, %v4689
    %v5170 = vpack.c.b16 %v4714, %v4690
    %v5171 = vpack.c.b16 %v4715, %v4691
    %v5172 = vpack.c.b16 %v4716, %v4692
    %v5173 = vpack.c.b16 %v4717, %v4693
    %v5174 = vpack.c.b16 %v4718, %v4694
    %v5175 = vpack.c.b16 %v4743, %v4719
    %v5176 = vpack.c.b16 %v4744, %v4720
    %v5177 = vpack.c.b16 %v4745, %v4721
    %v5178 = vpack.c.b16 %v4746, %v4722
    %v5179 = vpack.c.b16 %v4747, %v4723
    %v5180 = vpack.c.b16 %v4748, %v4724
    %v5181 = vpack.c.b16 %v4749, %v4725
    %v5182 = vpack.c.b16 %v4750, %v4726
    %v5183 = vpack.c.b16 %v4751, %v4727
    %v5184 = vpack.c.b16 %v4752, %v4728
    %v5185 = vpack.c.b16 %v4753, %v4729
    %v5186 = vpack.c.b16 %v4754, %v4730
    %v5187 = vpack.c.b16 %v4755, %v4731
    %v5188 = vpack.c.b16 %v4756, %v4732
    %v5189 = vpack.c.b16 %v4757, %v4733
    %v5190 = vpack.c.b16 %v4758, %v4734
    %v5191 = vpack.c.b16 %v4759, %v4735
    %v5192 = vpack.c.b16 %v4760, %v4736
    %v5193 = vpack.c.b16 %v4761, %v4737
    %v5194 = vpack.c.b16 %v4762, %v4738
    %v5195 = vpack.c.b16 %v4763, %v4739
    %v5196 = vpack.c.b16 %v4764, %v4740
    %v5197 = vpack.c.b16 %v4765, %v4741
    %v5198 = vpack.c.b16 %v4766, %v4742
    %v5199 = vpack.c.b16 %v4791, %v4767
    %v5200 = vpack.c.b16 %v4792, %v4768
    %v5201 = vpack.c.b16 %v4793, %v4769
    %v5202 = vpack.c.b16 %v4794, %v4770
    %v5203 = vpack.c.b16 %v4795, %v4771
    %v5204 = vpack.c.b16 %v4796, %v4772
    %v5205 = vpack.c.b16 %v4797, %v4773
    %v5206 = vpack.c.b16 %v4798, %v4774
    %v5207 = vpack.c.b16 %v4799, %v4775
    %v5208 = vpack.c.b16 %v4800, %v4776
    %v5209 = vpack.c.b16 %v4801, %v4777
    %v5210 = vpack.c.b16 %v4802, %v4778
    %v5211 = vpack.c.b16 %v4803, %v4779
    %v5212 = vpack.c.b16 %v4804, %v4780
    %v5213 = vpack.c.b16 %v4805, %v4781
    %v5214 = vpack.c.b16 %v4806, %v4782
    %v5215 = vpack.c.b16 %v4807, %v4783
    %v5216 = vpack.c.b16 %v4808, %v4784
    %v5217 = vpack.c.b16 %v4809, %v4785
    %v5218 = vpack.c.b16 %v4810, %v4786
    %v5219 = vpack.c.b16 %v4811, %v4787
    %v5220 = vpack.c.b16 %v4812, %v4788
    %v5221 = vpack.c.b16 %v4813, %v4789
    %v5222 = vpack.c.b16 %v4814, %v4790
    %v5223 = vpack.c.b16 %v4839, %v4815
    %v5224 = vpack.c.b16 %v4840, %v4816
    %v5225 = vpack.c.b16 %v4841, %v4817
    %v5226 = vpack.c.b16 %v4842, %v4818
    %v5227 = vpack.c.b16 %v4843, %v4819
    %v5228 = vpack.c.b16 %v4844, %v4820
    %v5229 = vpack.c.b16 %v4845, %v4821
    %v5230 = vpack.c.b16 %v4846, %v4822
    %v5231 = vpack.c.b16 %v4847, %v4823
    %v5232 = vpack.c.b16 %v4848, %v4824
    %v5233 = vpack.c.b16 %v4849, %v4825
    %v5234 = vpack.c.b16 %v4850, %v4826
    %v5235 = vpack.c.b16 %v4851, %v4827
    %v5236 = vpack.c.b16 %v4852, %v4828
    %v5237 = vpack.c.b16 %v4853, %v4829
    %v5238 = vpack.c.b16 %v4854, %v4830
    %v5239 = vpack.c.b16 %v4855, %v4831
    %v5240 = vpack.c.b16 %v4856, %v4832
    %v5241 = vpack.c.b16 %v4857, %v4833
    %v5242 = vpack.c.b16 %v4858, %v4834
    %v5243 = vpack.c.b16 %v4859, %v4835
    %v5244 = vpack.c.b16 %v4860, %v4836
    %v5245 = vpack.c.b16 %v4861, %v4837
    %v5246 = vpack.c.b16 %v4862, %v4838
    %5631 = vmatprep.subr.bf16.mxu0 %v5032
    %5632 = vmatpush1.bf16.msra.mxu0 %v5031
    %5633 = vmatprep.subr.bf16.mxu0 %v5008
    %5634 = vmatpush1.bf16.msra.mxu0 %v5007
    %5635 = vmatprep.subr.bf16.mxu0 %v4984
    %5636 = vmatpush1.bf16.msra.mxu0 %v4983
    %5637 = vmatprep.subr.bf16.mxu0 %v4960
    %5638 = vmatpush1.bf16.msra.mxu0 %v4959
    %5639 = vmatprep.subr.bf16.mxu0 %v4936
    %5640 = vmatpush1.bf16.msra.mxu0 %v4935
    %5641 = vmatprep.subr.bf16.mxu0 %v4912
    %5642 = vmatpush1.bf16.msra.mxu0 %v4911
    %5643 = vmatprep.subr.bf16.mxu0 %v4888
    %5644 = vmatpush1.bf16.msra.mxu0 %v4887
    %5645 = vmatprep.subr.bf16.mxu0 %v4864
    %5646 = vmatpush1.bf16.msra.mxu0 %v4863
    %5647 = vmatprep.subr.bf16.mxu0 %v5224
    %5648 = vmatpush2.bf16.msra.mxu0 %v5223
    %5649 = vmatprep.subr.bf16.mxu0 %v5200
    %5650 = vmatpush2.bf16.msra.mxu0 %v5199
    %5651 = vmatprep.subr.bf16.mxu0 %v5176
    %5652 = vmatpush2.bf16.msra.mxu0 %v5175
    %5653 = vmatprep.subr.bf16.mxu0 %v5152
    %5654 = vmatpush2.bf16.msra.mxu0 %v5151
    %5655 = vmatprep.subr.bf16.mxu0 %v5128
    %5656 = vmatpush2.bf16.msra.mxu0 %v5127
    %5657 = vmatprep.subr.bf16.mxu0 %v5104
    %5658 = vmatpush2.bf16.msra.mxu0 %v5103
    %5659 = vmatprep.subr.bf16.mxu0 %v5080
    %5660 = vmatpush2.bf16.msra.mxu0 %v5079
    %5661 = vmatprep.subr.bf16.mxu0 %v5056
    %5662 = vmatpush2.bf16.msra.mxu0 %v5055
    %5663 = vmatprep.mubr.bf16.mxu0 %v3200
    %5664 = vmatmul.mubr.bf16.gmra.mxu0 %v3199
    %v5665 = vpop.f32.mrf.mxu0
    %v5666 = vadd.f32 %v3594, %v5665
    %v5667 = vpop.f32.mrf.mxu0
    %v5668 = vadd.f32 %v3598, %v5667
    %v5669 = vpop.f32.mrf.mxu0
    %v5670 = vpop.f32.mrf.mxu0
    %5671 = vdwg.mxu0
    %5672 = vmatprep.subr.bf16.mxu0 %v5034
    %5673 = vmatpush1.bf16.msra.mxu0 %v5033
    %5674 = vmatprep.subr.bf16.mxu0 %v5010
    %5675 = vmatpush1.bf16.msra.mxu0 %v5009
    %5676 = vmatprep.subr.bf16.mxu0 %v4986
    %5677 = vmatpush1.bf16.msra.mxu0 %v4985
    %5678 = vmatprep.subr.bf16.mxu0 %v4962
    %5679 = vmatpush1.bf16.msra.mxu0 %v4961
    %5680 = vmatprep.subr.bf16.mxu0 %v4938
    %5681 = vmatpush1.bf16.msra.mxu0 %v4937
    %5682 = vmatprep.subr.bf16.mxu0 %v4914
    %5683 = vmatpush1.bf16.msra.mxu0 %v4913
    %5684 = vmatprep.subr.bf16.mxu0 %v4890
    %5685 = vmatpush1.bf16.msra.mxu0 %v4889
    %5686 = vmatprep.subr.bf16.mxu0 %v4866
    %5687 = vmatpush1.bf16.msra.mxu0 %v4865
    %5688 = vmatprep.subr.bf16.mxu0 %v5226
    %5689 = vmatpush2.bf16.msra.mxu0 %v5225
    %5690 = vmatprep.subr.bf16.mxu0 %v5202
    %5691 = vmatpush2.bf16.msra.mxu0 %v5201
    %5692 = vmatprep.subr.bf16.mxu0 %v5178
    %5693 = vmatpush2.bf16.msra.mxu0 %v5177
    %5694 = vmatprep.subr.bf16.mxu0 %v5154
    %5695 = vmatpush2.bf16.msra.mxu0 %v5153
    %5696 = vmatprep.subr.bf16.mxu0 %v5130
    %5697 = vmatpush2.bf16.msra.mxu0 %v5129
    %5698 = vmatprep.subr.bf16.mxu0 %v5106
    %5699 = vmatpush2.bf16.msra.mxu0 %v5105
    %5700 = vmatprep.subr.bf16.mxu0 %v5082
    %5701 = vmatpush2.bf16.msra.mxu0 %v5081
    %5702 = vmatprep.subr.bf16.mxu0 %v5058
    %5703 = vmatpush2.bf16.msra.mxu0 %v5057
    %5704 = vmatprep.mubr.bf16.mxu0 %v3200
    %5705 = vmatmul.mubr.bf16.gmra.mxu0 %v3199
    %v5706 = vpop.f32.mrf.mxu0
    %v5707 = vadd.f32 %v3602, %v5706
    %v5708 = vpop.f32.mrf.mxu0
    %v5709 = vadd.f32 %v3606, %v5708
    %v5710 = vpop.f32.mrf.mxu0
    %v5711 = vpop.f32.mrf.mxu0
    %5712 = vdwg.mxu0
    %5713 = vmatprep.subr.bf16.mxu0 %v5036
    %5714 = vmatpush1.bf16.msra.mxu0 %v5035
    %5715 = vmatprep.subr.bf16.mxu0 %v5012
    %5716 = vmatpush1.bf16.msra.mxu0 %v5011
    %5717 = vmatprep.subr.bf16.mxu0 %v4988
    %5718 = vmatpush1.bf16.msra.mxu0 %v4987
    %5719 = vmatprep.subr.bf16.mxu0 %v4964
    %5720 = vmatpush1.bf16.msra.mxu0 %v4963
    %5721 = vmatprep.subr.bf16.mxu0 %v4940
    %5722 = vmatpush1.bf16.msra.mxu0 %v4939
    %5723 = vmatprep.subr.bf16.mxu0 %v4916
    %5724 = vmatpush1.bf16.msra.mxu0 %v4915
    %5725 = vmatprep.subr.bf16.mxu0 %v4892
    %5726 = vmatpush1.bf16.msra.mxu0 %v4891
    %5727 = vmatprep.subr.bf16.mxu0 %v4868
    %5728 = vmatpush1.bf16.msra.mxu0 %v4867
    %5729 = vmatprep.subr.bf16.mxu0 %v5228
    %5730 = vmatpush2.bf16.msra.mxu0 %v5227
    %5731 = vmatprep.subr.bf16.mxu0 %v5204
    %5732 = vmatpush2.bf16.msra.mxu0 %v5203
    %5733 = vmatprep.subr.bf16.mxu0 %v5180
    %5734 = vmatpush2.bf16.msra.mxu0 %v5179
    %5735 = vmatprep.subr.bf16.mxu0 %v5156
    %5736 = vmatpush2.bf16.msra.mxu0 %v5155
    %5737 = vmatprep.subr.bf16.mxu0 %v5132
    %5738 = vmatpush2.bf16.msra.mxu0 %v5131
    %5739 = vmatprep.subr.bf16.mxu0 %v5108
    %5740 = vmatpush2.bf16.msra.mxu0 %v5107
    %5741 = vmatprep.subr.bf16.mxu0 %v5084
    %5742 = vmatpush2.bf16.msra.mxu0 %v5083
    %5743 = vmatprep.subr.bf16.mxu0 %v5060
    %5744 = vmatpush2.bf16.msra.mxu0 %v5059
    %5745 = vmatprep.mubr.bf16.mxu0 %v3200
    %5746 = vmatmul.mubr.bf16.gmra.mxu0 %v3199
    %v5747 = vpop.f32.mrf.mxu0
    %v5748 = vadd.f32 %v3610, %v5747
    %v5749 = vpop.f32.mrf.mxu0
    %v5750 = vadd.f32 %v3614, %v5749
    %v5751 = vpop.f32.mrf.mxu0
    %v5752 = vpop.f32.mrf.mxu0
    %5753 = vdwg.mxu0
    %5754 = vmatprep.subr.bf16.mxu0 %v5038
    %5755 = vmatpush1.bf16.msra.mxu0 %v5037
    %5756 = vmatprep.subr.bf16.mxu0 %v5014
    %5757 = vmatpush1.bf16.msra.mxu0 %v5013
    %5758 = vmatprep.subr.bf16.mxu0 %v4990
    %5759 = vmatpush1.bf16.msra.mxu0 %v4989
    %5760 = vmatprep.subr.bf16.mxu0 %v4966
    %5761 = vmatpush1.bf16.msra.mxu0 %v4965
    %5762 = vmatprep.subr.bf16.mxu0 %v4942
    %5763 = vmatpush1.bf16.msra.mxu0 %v4941
    %5764 = vmatprep.subr.bf16.mxu0 %v4918
    %5765 = vmatpush1.bf16.msra.mxu0 %v4917
    %5766 = vmatprep.subr.bf16.mxu0 %v4894
    %5767 = vmatpush1.bf16.msra.mxu0 %v4893
    %5768 = vmatprep.subr.bf16.mxu0 %v4870
    %5769 = vmatpush1.bf16.msra.mxu0 %v4869
    %5770 = vmatprep.subr.bf16.mxu0 %v5230
    %5771 = vmatpush2.bf16.msra.mxu0 %v5229
    %5772 = vmatprep.subr.bf16.mxu0 %v5206
    %5773 = vmatpush2.bf16.msra.mxu0 %v5205
    %5774 = vmatprep.subr.bf16.mxu0 %v5182
    %5775 = vmatpush2.bf16.msra.mxu0 %v5181
    %5776 = vmatprep.subr.bf16.mxu0 %v5158
    %5777 = vmatpush2.bf16.msra.mxu0 %v5157
    %5778 = vmatprep.subr.bf16.mxu0 %v5134
    %5779 = vmatpush2.bf16.msra.mxu0 %v5133
    %5780 = vmatprep.subr.bf16.mxu0 %v5110
    %5781 = vmatpush2.bf16.msra.mxu0 %v5109
    %5782 = vmatprep.subr.bf16.mxu0 %v5086
    %5783 = vmatpush2.bf16.msra.mxu0 %v5085
    %5784 = vmatprep.subr.bf16.mxu0 %v5062
    %5785 = vmatpush2.bf16.msra.mxu0 %v5061
    %5786 = vmatprep.mubr.bf16.mxu0 %v3200
    %5787 = vmatmul.mubr.bf16.gmra.mxu0 %v3199
    %v5788 = vpop.f32.mrf.mxu0
    %v5789 = vadd.f32 %v3618, %v5788
    %v5790 = vpop.f32.mrf.mxu0
    %v5791 = vadd.f32 %v3622, %v5790
    %v5792 = vpop.f32.mrf.mxu0
    %v5793 = vpop.f32.mrf.mxu0
    %5794 = vdwg.mxu0
    %5795 = vmatprep.subr.bf16.mxu0 %v5040
    %5796 = vmatpush1.bf16.msra.mxu0 %v5039
    %5797 = vmatprep.subr.bf16.mxu0 %v5016
    %5798 = vmatpush1.bf16.msra.mxu0 %v5015
    %5799 = vmatprep.subr.bf16.mxu0 %v4992
    %5800 = vmatpush1.bf16.msra.mxu0 %v4991
    %5801 = vmatprep.subr.bf16.mxu0 %v4968
    %5802 = vmatpush1.bf16.msra.mxu0 %v4967
    %5803 = vmatprep.subr.bf16.mxu0 %v4944
    %5804 = vmatpush1.bf16.msra.mxu0 %v4943
    %5805 = vmatprep.subr.bf16.mxu0 %v4920
    %5806 = vmatpush1.bf16.msra.mxu0 %v4919
    %5807 = vmatprep.subr.bf16.mxu0 %v4896
    %5808 = vmatpush1.bf16.msra.mxu0 %v4895
    %5809 = vmatprep.subr.bf16.mxu0 %v4872
    %5810 = vmatpush1.bf16.msra.mxu0 %v4871
    %5811 = vmatprep.subr.bf16.mxu0 %v5232
    %5812 = vmatpush2.bf16.msra.mxu0 %v5231
    %5813 = vmatprep.subr.bf16.mxu0 %v5208
    %5814 = vmatpush2.bf16.msra.mxu0 %v5207
    %5815 = vmatprep.subr.bf16.mxu0 %v5184
    %5816 = vmatpush2.bf16.msra.mxu0 %v5183
    %5817 = vmatprep.subr.bf16.mxu0 %v5160
    %5818 = vmatpush2.bf16.msra.mxu0 %v5159
    %5819 = vmatprep.subr.bf16.mxu0 %v5136
    %5820 = vmatpush2.bf16.msra.mxu0 %v5135
    %5821 = vmatprep.subr.bf16.mxu0 %v5112
    %5822 = vmatpush2.bf16.msra.mxu0 %v5111
    %5823 = vmatprep.subr.bf16.mxu0 %v5088
    %5824 = vmatpush2.bf16.msra.mxu0 %v5087
    %5825 = vmatprep.subr.bf16.mxu0 %v5064
    %5826 = vmatpush2.bf16.msra.mxu0 %v5063
    %5827 = vmatprep.mubr.bf16.mxu0 %v3200
    %5828 = vmatmul.mubr.bf16.gmra.mxu0 %v3199
    %v5829 = vpop.f32.mrf.mxu0
    %v5830 = vadd.f32 %v3626, %v5829
    %v5831 = vpop.f32.mrf.mxu0
    %v5832 = vadd.f32 %v3630, %v5831
    %v5833 = vpop.f32.mrf.mxu0
    %v5834 = vpop.f32.mrf.mxu0
    %5835 = vdwg.mxu0
    %5836 = vmatprep.subr.bf16.mxu0 %v5042
    %5837 = vmatpush1.bf16.msra.mxu0 %v5041
    %5838 = vmatprep.subr.bf16.mxu0 %v5018
    %5839 = vmatpush1.bf16.msra.mxu0 %v5017
    %5840 = vmatprep.subr.bf16.mxu0 %v4994
    %5841 = vmatpush1.bf16.msra.mxu0 %v4993
    %5842 = vmatprep.subr.bf16.mxu0 %v4970
    %5843 = vmatpush1.bf16.msra.mxu0 %v4969
    %5844 = vmatprep.subr.bf16.mxu0 %v4946
    %5845 = vmatpush1.bf16.msra.mxu0 %v4945
    %5846 = vmatprep.subr.bf16.mxu0 %v4922
    %5847 = vmatpush1.bf16.msra.mxu0 %v4921
    %5848 = vmatprep.subr.bf16.mxu0 %v4898
    %5849 = vmatpush1.bf16.msra.mxu0 %v4897
    %5850 = vmatprep.subr.bf16.mxu0 %v4874
    %5851 = vmatpush1.bf16.msra.mxu0 %v4873
    %5852 = vmatprep.subr.bf16.mxu0 %v5234
    %5853 = vmatpush2.bf16.msra.mxu0 %v5233
    %5854 = vmatprep.subr.bf16.mxu0 %v5210
    %5855 = vmatpush2.bf16.msra.mxu0 %v5209
    %5856 = vmatprep.subr.bf16.mxu0 %v5186
    %5857 = vmatpush2.bf16.msra.mxu0 %v5185
    %5858 = vmatprep.subr.bf16.mxu0 %v5162
    %5859 = vmatpush2.bf16.msra.mxu0 %v5161
    %5860 = vmatprep.subr.bf16.mxu0 %v5138
    %5861 = vmatpush2.bf16.msra.mxu0 %v5137
    %5862 = vmatprep.subr.bf16.mxu0 %v5114
    %5863 = vmatpush2.bf16.msra.mxu0 %v5113
    %5864 = vmatprep.subr.bf16.mxu0 %v5090
    %5865 = vmatpush2.bf16.msra.mxu0 %v5089
    %5866 = vmatprep.subr.bf16.mxu0 %v5066
    %5867 = vmatpush2.bf16.msra.mxu0 %v5065
    %5868 = vmatprep.mubr.bf16.mxu0 %v3200
    %5869 = vmatmul.mubr.bf16.gmra.mxu0 %v3199
    %v5870 = vpop.f32.mrf.mxu0
    %v5871 = vadd.f32 %v3634, %v5870
    %v5872 = vpop.f32.mrf.mxu0
    %v5873 = vadd.f32 %v3638, %v5872
    %v5874 = vpop.f32.mrf.mxu0
    %v5875 = vpop.f32.mrf.mxu0
    %5876 = vdwg.mxu0
    %5877 = vmatprep.subr.bf16.mxu0 %v5044
    %5878 = vmatpush1.bf16.msra.mxu0 %v5043
    %5879 = vmatprep.subr.bf16.mxu0 %v5020
    %5880 = vmatpush1.bf16.msra.mxu0 %v5019
    %5881 = vmatprep.subr.bf16.mxu0 %v4996
    %5882 = vmatpush1.bf16.msra.mxu0 %v4995
    %5883 = vmatprep.subr.bf16.mxu0 %v4972
    %5884 = vmatpush1.bf16.msra.mxu0 %v4971
    %5885 = vmatprep.subr.bf16.mxu0 %v4948
    %5886 = vmatpush1.bf16.msra.mxu0 %v4947
    %5887 = vmatprep.subr.bf16.mxu0 %v4924
    %5888 = vmatpush1.bf16.msra.mxu0 %v4923
    %5889 = vmatprep.subr.bf16.mxu0 %v4900
    %5890 = vmatpush1.bf16.msra.mxu0 %v4899
    %5891 = vmatprep.subr.bf16.mxu0 %v4876
    %5892 = vmatpush1.bf16.msra.mxu0 %v4875
    %5893 = vmatprep.subr.bf16.mxu0 %v5236
    %5894 = vmatpush2.bf16.msra.mxu0 %v5235
    %5895 = vmatprep.subr.bf16.mxu0 %v5212
    %5896 = vmatpush2.bf16.msra.mxu0 %v5211
    %5897 = vmatprep.subr.bf16.mxu0 %v5188
    %5898 = vmatpush2.bf16.msra.mxu0 %v5187
    %5899 = vmatprep.subr.bf16.mxu0 %v5164
    %5900 = vmatpush2.bf16.msra.mxu0 %v5163
    %5901 = vmatprep.subr.bf16.mxu0 %v5140
    %5902 = vmatpush2.bf16.msra.mxu0 %v5139
    %5903 = vmatprep.subr.bf16.mxu0 %v5116
    %5904 = vmatpush2.bf16.msra.mxu0 %v5115
    %5905 = vmatprep.subr.bf16.mxu0 %v5092
    %5906 = vmatpush2.bf16.msra.mxu0 %v5091
    %5907 = vmatprep.subr.bf16.mxu0 %v5068
    %5908 = vmatpush2.bf16.msra.mxu0 %v5067
    %5909 = vmatprep.mubr.bf16.mxu0 %v3200
    %5910 = vmatmul.mubr.bf16.gmra.mxu0 %v3199
    %v5911 = vpop.f32.mrf.mxu0
    %v5912 = vadd.f32 %v3642, %v5911
    %v5913 = vpop.f32.mrf.mxu0
    %v5914 = vadd.f32 %v3646, %v5913
    %v5915 = vpop.f32.mrf.mxu0
    %v5916 = vpop.f32.mrf.mxu0
    %5917 = vdwg.mxu0
    %5918 = vmatprep.subr.bf16.mxu0 %v5046
    %5919 = vmatpush1.bf16.msra.mxu0 %v5045
    %5920 = vmatprep.subr.bf16.mxu0 %v5022
    %5921 = vmatpush1.bf16.msra.mxu0 %v5021
    %5922 = vmatprep.subr.bf16.mxu0 %v4998
    %5923 = vmatpush1.bf16.msra.mxu0 %v4997
    %5924 = vmatprep.subr.bf16.mxu0 %v4974
    %5925 = vmatpush1.bf16.msra.mxu0 %v4973
    %5926 = vmatprep.subr.bf16.mxu0 %v4950
    %5927 = vmatpush1.bf16.msra.mxu0 %v4949
    %5928 = vmatprep.subr.bf16.mxu0 %v4926
    %5929 = vmatpush1.bf16.msra.mxu0 %v4925
    %5930 = vmatprep.subr.bf16.mxu0 %v4902
    %5931 = vmatpush1.bf16.msra.mxu0 %v4901
    %5932 = vmatprep.subr.bf16.mxu0 %v4878
    %5933 = vmatpush1.bf16.msra.mxu0 %v4877
    %5934 = vmatprep.subr.bf16.mxu0 %v5238
    %5935 = vmatpush2.bf16.msra.mxu0 %v5237
    %5936 = vmatprep.subr.bf16.mxu0 %v5214
    %5937 = vmatpush2.bf16.msra.mxu0 %v5213
    %5938 = vmatprep.subr.bf16.mxu0 %v5190
    %5939 = vmatpush2.bf16.msra.mxu0 %v5189
    %5940 = vmatprep.subr.bf16.mxu0 %v5166
    %5941 = vmatpush2.bf16.msra.mxu0 %v5165
    %5942 = vmatprep.subr.bf16.mxu0 %v5142
    %5943 = vmatpush2.bf16.msra.mxu0 %v5141
    %5944 = vmatprep.subr.bf16.mxu0 %v5118
    %5945 = vmatpush2.bf16.msra.mxu0 %v5117
    %5946 = vmatprep.subr.bf16.mxu0 %v5094
    %5947 = vmatpush2.bf16.msra.mxu0 %v5093
    %5948 = vmatprep.subr.bf16.mxu0 %v5070
    %5949 = vmatpush2.bf16.msra.mxu0 %v5069
    %5950 = vmatprep.mubr.bf16.mxu0 %v3200
    %5951 = vmatmul.mubr.bf16.gmra.mxu0 %v3199
    %v5952 = vpop.f32.mrf.mxu0
    %v5953 = vadd.f32 %v3650, %v5952
    %v5954 = vpop.f32.mrf.mxu0
    %v5955 = vadd.f32 %v3654, %v5954
    %v5956 = vpop.f32.mrf.mxu0
    %v5957 = vpop.f32.mrf.mxu0
    %5958 = vdwg.mxu0
    %5959 = vmatprep.subr.bf16.mxu0 %v5048
    %5960 = vmatpush1.bf16.msra.mxu0 %v5047
    %5961 = vmatprep.subr.bf16.mxu0 %v5024
    %5962 = vmatpush1.bf16.msra.mxu0 %v5023
    %5963 = vmatprep.subr.bf16.mxu0 %v5000
    %5964 = vmatpush1.bf16.msra.mxu0 %v4999
    %5965 = vmatprep.subr.bf16.mxu0 %v4976
    %5966 = vmatpush1.bf16.msra.mxu0 %v4975
    %5967 = vmatprep.subr.bf16.mxu0 %v4952
    %5968 = vmatpush1.bf16.msra.mxu0 %v4951
    %5969 = vmatprep.subr.bf16.mxu0 %v4928
    %5970 = vmatpush1.bf16.msra.mxu0 %v4927
    %5971 = vmatprep.subr.bf16.mxu0 %v4904
    %5972 = vmatpush1.bf16.msra.mxu0 %v4903
    %5973 = vmatprep.subr.bf16.mxu0 %v4880
    %5974 = vmatpush1.bf16.msra.mxu0 %v4879
    %5975 = vmatprep.subr.bf16.mxu0 %v5240
    %5976 = vmatpush2.bf16.msra.mxu0 %v5239
    %5977 = vmatprep.subr.bf16.mxu0 %v5216
    %5978 = vmatpush2.bf16.msra.mxu0 %v5215
    %5979 = vmatprep.subr.bf16.mxu0 %v5192
    %5980 = vmatpush2.bf16.msra.mxu0 %v5191
    %5981 = vmatprep.subr.bf16.mxu0 %v5168
    %5982 = vmatpush2.bf16.msra.mxu0 %v5167
    %5983 = vmatprep.subr.bf16.mxu0 %v5144
    %5984 = vmatpush2.bf16.msra.mxu0 %v5143
    %5985 = vmatprep.subr.bf16.mxu0 %v5120
    %5986 = vmatpush2.bf16.msra.mxu0 %v5119
    %5987 = vmatprep.subr.bf16.mxu0 %v5096
    %5988 = vmatpush2.bf16.msra.mxu0 %v5095
    %5989 = vmatprep.subr.bf16.mxu0 %v5072
    %5990 = vmatpush2.bf16.msra.mxu0 %v5071
    %5991 = vmatprep.mubr.bf16.mxu0 %v3200
    %5992 = vmatmul.mubr.bf16.gmra.mxu0 %v3199
    %v5993 = vpop.f32.mrf.mxu0
    %v5994 = vadd.f32 %v3658, %v5993
    %v5995 = vpop.f32.mrf.mxu0
    %v5996 = vadd.f32 %v3662, %v5995
    %v5997 = vpop.f32.mrf.mxu0
    %v5998 = vpop.f32.mrf.mxu0
    %5999 = vdwg.mxu0
    %6000 = vmatprep.subr.bf16.mxu0 %v5050
    %6001 = vmatpush1.bf16.msra.mxu0 %v5049
    %6002 = vmatprep.subr.bf16.mxu0 %v5026
    %6003 = vmatpush1.bf16.msra.mxu0 %v5025
    %6004 = vmatprep.subr.bf16.mxu0 %v5002
    %6005 = vmatpush1.bf16.msra.mxu0 %v5001
    %6006 = vmatprep.subr.bf16.mxu0 %v4978
    %6007 = vmatpush1.bf16.msra.mxu0 %v4977
    %6008 = vmatprep.subr.bf16.mxu0 %v4954
    %6009 = vmatpush1.bf16.msra.mxu0 %v4953
    %6010 = vmatprep.subr.bf16.mxu0 %v4930
    %6011 = vmatpush1.bf16.msra.mxu0 %v4929
    %6012 = vmatprep.subr.bf16.mxu0 %v4906
    %6013 = vmatpush1.bf16.msra.mxu0 %v4905
    %6014 = vmatprep.subr.bf16.mxu0 %v4882
    %6015 = vmatpush1.bf16.msra.mxu0 %v4881
    %6016 = vmatprep.subr.bf16.mxu0 %v5242
    %6017 = vmatpush2.bf16.msra.mxu0 %v5241
    %6018 = vmatprep.subr.bf16.mxu0 %v5218
    %6019 = vmatpush2.bf16.msra.mxu0 %v5217
    %6020 = vmatprep.subr.bf16.mxu0 %v5194
    %6021 = vmatpush2.bf16.msra.mxu0 %v5193
    %6022 = vmatprep.subr.bf16.mxu0 %v5170
    %6023 = vmatpush2.bf16.msra.mxu0 %v5169
    %6024 = vmatprep.subr.bf16.mxu0 %v5146
    %6025 = vmatpush2.bf16.msra.mxu0 %v5145
    %6026 = vmatprep.subr.bf16.mxu0 %v5122
    %6027 = vmatpush2.bf16.msra.mxu0 %v5121
    %6028 = vmatprep.subr.bf16.mxu0 %v5098
    %6029 = vmatpush2.bf16.msra.mxu0 %v5097
    %6030 = vmatprep.subr.bf16.mxu0 %v5074
    %6031 = vmatpush2.bf16.msra.mxu0 %v5073
    %6032 = vmatprep.mubr.bf16.mxu0 %v3200
    %6033 = vmatmul.mubr.bf16.gmra.mxu0 %v3199
    %v6034 = vpop.f32.mrf.mxu0
    %v6035 = vadd.f32 %v3666, %v6034
    %v6036 = vpop.f32.mrf.mxu0
    %v6037 = vadd.f32 %v3670, %v6036
    %v6038 = vpop.f32.mrf.mxu0
    %v6039 = vpop.f32.mrf.mxu0
    %6040 = vdwg.mxu0
    %6041 = vmatprep.subr.bf16.mxu0 %v5052
    %6042 = vmatpush1.bf16.msra.mxu0 %v5051
    %6043 = vmatprep.subr.bf16.mxu0 %v5028
    %6044 = vmatpush1.bf16.msra.mxu0 %v5027
    %6045 = vmatprep.subr.bf16.mxu0 %v5004
    %6046 = vmatpush1.bf16.msra.mxu0 %v5003
    %6047 = vmatprep.subr.bf16.mxu0 %v4980
    %6048 = vmatpush1.bf16.msra.mxu0 %v4979
    %6049 = vmatprep.subr.bf16.mxu0 %v4956
    %6050 = vmatpush1.bf16.msra.mxu0 %v4955
    %6051 = vmatprep.subr.bf16.mxu0 %v4932
    %6052 = vmatpush1.bf16.msra.mxu0 %v4931
    %6053 = vmatprep.subr.bf16.mxu0 %v4908
    %6054 = vmatpush1.bf16.msra.mxu0 %v4907
    %6055 = vmatprep.subr.bf16.mxu0 %v4884
    %6056 = vmatpush1.bf16.msra.mxu0 %v4883
    %6057 = vmatprep.subr.bf16.mxu0 %v5244
    %6058 = vmatpush2.bf16.msra.mxu0 %v5243
    %6059 = vmatprep.subr.bf16.mxu0 %v5220
    %6060 = vmatpush2.bf16.msra.mxu0 %v5219
    %6061 = vmatprep.subr.bf16.mxu0 %v5196
    %6062 = vmatpush2.bf16.msra.mxu0 %v5195
    %6063 = vmatprep.subr.bf16.mxu0 %v5172
    %6064 = vmatpush2.bf16.msra.mxu0 %v5171
    %6065 = vmatprep.subr.bf16.mxu0 %v5148
    %6066 = vmatpush2.bf16.msra.mxu0 %v5147
    %6067 = vmatprep.subr.bf16.mxu0 %v5124
    %6068 = vmatpush2.bf16.msra.mxu0 %v5123
    %6069 = vmatprep.subr.bf16.mxu0 %v5100
    %6070 = vmatpush2.bf16.msra.mxu0 %v5099
    %6071 = vmatprep.subr.bf16.mxu0 %v5076
    %6072 = vmatpush2.bf16.msra.mxu0 %v5075
    %6073 = vmatprep.mubr.bf16.mxu0 %v3200
    %6074 = vmatmul.mubr.bf16.gmra.mxu0 %v3199
    %v6075 = vpop.f32.mrf.mxu0
    %v6076 = vadd.f32 %v3674, %v6075
    %v6077 = vpop.f32.mrf.mxu0
    %v6078 = vadd.f32 %v3678, %v6077
    %v6079 = vpop.f32.mrf.mxu0
    %v6080 = vpop.f32.mrf.mxu0
    %6081 = vdwg.mxu0
    %6082 = vmatprep.subr.bf16.mxu0 %v5054
    %6083 = vmatpush1.bf16.msra.mxu0 %v5053
    %6084 = vmatprep.subr.bf16.mxu0 %v5030
    %6085 = vmatpush1.bf16.msra.mxu0 %v5029
    %6086 = vmatprep.subr.bf16.mxu0 %v5006
    %6087 = vmatpush1.bf16.msra.mxu0 %v5005
    %6088 = vmatprep.subr.bf16.mxu0 %v4982
    %6089 = vmatpush1.bf16.msra.mxu0 %v4981
    %6090 = vmatprep.subr.bf16.mxu0 %v4958
    %6091 = vmatpush1.bf16.msra.mxu0 %v4957
    %6092 = vmatprep.subr.bf16.mxu0 %v4934
    %6093 = vmatpush1.bf16.msra.mxu0 %v4933
    %6094 = vmatprep.subr.bf16.mxu0 %v4910
    %6095 = vmatpush1.bf16.msra.mxu0 %v4909
    %6096 = vmatprep.subr.bf16.mxu0 %v4886
    %6097 = vmatpush1.bf16.msra.mxu0 %v4885
    %6098 = vmatprep.subr.bf16.mxu0 %v5246
    %6099 = vmatpush2.bf16.msra.mxu0 %v5245
    %6100 = vmatprep.subr.bf16.mxu0 %v5222
    %6101 = vmatpush2.bf16.msra.mxu0 %v5221
    %6102 = vmatprep.subr.bf16.mxu0 %v5198
    %6103 = vmatpush2.bf16.msra.mxu0 %v5197
    %6104 = vmatprep.subr.bf16.mxu0 %v5174
    %6105 = vmatpush2.bf16.msra.mxu0 %v5173
    %6106 = vmatprep.subr.bf16.mxu0 %v5150
    %6107 = vmatpush2.bf16.msra.mxu0 %v5149
    %6108 = vmatprep.subr.bf16.mxu0 %v5126
    %6109 = vmatpush2.bf16.msra.mxu0 %v5125
    %6110 = vmatprep.subr.bf16.mxu0 %v5102
    %6111 = vmatpush2.bf16.msra.mxu0 %v5101
    %6112 = vmatprep.subr.bf16.mxu0 %v5078
    %6113 = vmatpush2.bf16.msra.mxu0 %v5077
    %6114 = vmatprep.mubr.bf16.mxu0 %v3200
    %6115 = vmatmul.mubr.bf16.gmra.mxu0 %v3199
    %v6116 = vpop.f32.mrf.mxu0
    %v6117 = vadd.f32 %v3682, %v6116
    %v6118 = vpop.f32.mrf.mxu0
    %v6119 = vadd.f32 %v3686, %v6118
    %v6120 = vpop.f32.mrf.mxu0
    %v6121 = vpop.f32.mrf.mxu0
    %6122 = vdwg.mxu0
    %v6123 = vmax.f32 %v5666, %v5748
    %v6124 = vmax.f32 %v5668, %v5750
    %v6125 = vmax.f32 %v5707, %v5789
    %v6126 = vmax.f32 %v5709, %v5791
    %v6127 = vmax.f32 %v6123, %v5830
    %v6128 = vmax.f32 %v6124, %v5832
    %v6129 = vmax.f32 %v6125, %v5871
    %v6130 = vmax.f32 %v6126, %v5873
    %v6131 = vmax.f32 %v6127, %v5912
    %v6132 = vmax.f32 %v6128, %v5914
    %v6133 = vmax.f32 %v6129, %v5953
    %v6134 = vmax.f32 %v6130, %v5955
    %v6135 = vmax.f32 %v6131, %v5994
    %v6136 = vmax.f32 %v6132, %v5996
    %v6137 = vmax.f32 %v6133, %v6035
    %v6138 = vmax.f32 %v6134, %v6037
    %v6139 = vmax.f32 %v6135, %v6076
    %v6140 = vmax.f32 %v6136, %v6078
    %v6141 = vmax.f32 %v6137, %v6117
    %v6142 = vmax.f32 %v6138, %v6119
    %v6143 = vmax.f32 %v6139, %v6140
    %v6144 = vmax.f32 %v6141, %v6142
    %v6145 = vmax.f32 %v6143, %v6144
    %6146 = vmax.xlane.f32.xlu0 %v6145
    %v6147 = vpop.xlane.xlu0 %6146
    %v6148 = vsub.f32 %v5666, %v6147
    %v6149 = vsub.f32 %v5668, %v6147
    %v6150 = vsub.f32 %v5707, %v6147
    %v6151 = vsub.f32 %v5709, %v6147
    %v6152 = vmul.f32 %v6148, 1.442695
    %v6153 = vpow.pop %v6152
    %v6154 = vmul.f32 %v6149, 1.442695
    %v6155 = vpow.pop %v6154
    %v6156 = vmul.f32 %v6150, 1.442695
    %v6157 = vpow.pop %v6156
    %v6158 = vmul.f32 %v6151, 1.442695
    %v6159 = vpow.pop %v6158
    %v6160 = vadd.f32 %v6153, %v6155
    %v6161 = vadd.f32 %v6160, %v6157
    %v6162 = vadd.f32 %v6161, %v6159
    %6163 = vadd.xlane.f32.xlu0 %v6162
    %v6164 = vpop.xlane.xlu0 %6163
    %v6165 = vadd.f32 %v6164, 0.0
    %v6166 = vlaneseq
    %v6167 = vand.u32 %v6166, 127
    %v6168 = vadd.s32 %v6167, 128
    %v6169 = vadd.s32 %v6167, 256
    %v6170 = vadd.s32 %v6167, 384
    %vm6171 = vcmp.eq.f32.partialorder %v5666, %v6147
    %vm6172 = vcmp.eq.f32.partialorder %v5668, %v6147
    %vm6173 = vcmp.eq.f32.partialorder %v5707, %v6147
    %vm6174 = vcmp.eq.f32.partialorder %v5709, %v6147
    %v6175 = vsel %vm6171, %v6167, 3072
    %v6176 = vsel %vm6172, %v6168, 3072
    %v6177 = vsel %vm6173, %v6169, 3072
    %v6178 = vsel %vm6174, %v6170, 3072
    %vm6179 = vcmp.lt.s32.totalorder %v6175, %v6176
    %v6180 = vsel %vm6179, %v6175, %v6176
    %vm6181 = vcmp.lt.s32.totalorder %v6177, %v6178
    %v6182 = vsel %vm6181, %v6177, %v6178
    %vm6183 = vcmp.lt.s32.totalorder %v6180, %v6182
    %v6184 = vsel %vm6183, %v6180, %v6182
    %v6185 = vand.u32 %v6184, 65535
    %v6186 = vshra.s32 %v6184, 16
    %v6187 = vcvt.s32.f32 %v6185
    %v6188 = vcvt.s32.f32 %v6186
    %6189 = vmin.xlane.f32.xlu0 %v6188
    %v6190 = vpop.xlane.xlu0 %6189
    %vm6191 = vcmp.eq.f32.partialorder %v6188, %v6190
    %v6192 = vsel %vm6191, %v6187, inf
    %6193 = vmin.xlane.f32.xlu0 %v6192
    %v6194 = vpop.xlane.xlu0 %6193
    %v6195 = vcvt.f32.s32 %v6194
    %v6196 = vcvt.f32.s32 %v6190
    %v6197 = vshll.u32 %v6196, 16
    %v6198 = vadd.s32 %v6197, %v6195
    %vm6199 = vcmp.lt.s32.totalorder %v6198, 3072
    %v6200 = vsel %vm6199, %v6198, 3072
    %v6201 = vsub.f32 %v5748, %v6147
    %v6202 = vsub.f32 %v5750, %v6147
    %v6203 = vsub.f32 %v5789, %v6147
    %v6204 = vsub.f32 %v5791, %v6147
    %v6205 = vmul.f32 %v6201, 1.442695
    %v6206 = vpow.pop %v6205
    %v6207 = vmul.f32 %v6202, 1.442695
    %v6208 = vpow.pop %v6207
    %v6209 = vmul.f32 %v6203, 1.442695
    %v6210 = vpow.pop %v6209
    %v6211 = vmul.f32 %v6204, 1.442695
    %v6212 = vpow.pop %v6211
    %v6213 = vadd.f32 %v6206, %v6208
    %v6214 = vadd.f32 %v6213, %v6210
    %v6215 = vadd.f32 %v6214, %v6212
    %6216 = vadd.xlane.f32.xlu0 %v6215
    %v6217 = vpop.xlane.xlu0 %6216
    %v6218 = vadd.f32 %v6165, %v6217
    %v6219 = vadd.s32 %v6167, 512
    %v6220 = vadd.s32 %v6168, 512
    %v6221 = vadd.s32 %v6169, 512
    %v6222 = vadd.s32 %v6170, 512
    %vm6223 = vcmp.eq.f32.partialorder %v5748, %v6147
    %vm6224 = vcmp.eq.f32.partialorder %v5750, %v6147
    %vm6225 = vcmp.eq.f32.partialorder %v5789, %v6147
    %vm6226 = vcmp.eq.f32.partialorder %v5791, %v6147
    %v6227 = vsel %vm6223, %v6219, 3072
    %v6228 = vsel %vm6224, %v6220, 3072
    %v6229 = vsel %vm6225, %v6221, 3072
    %v6230 = vsel %vm6226, %v6222, 3072
    %vm6231 = vcmp.lt.s32.totalorder %v6227, %v6228
    %v6232 = vsel %vm6231, %v6227, %v6228
    %vm6233 = vcmp.lt.s32.totalorder %v6229, %v6230
    %v6234 = vsel %vm6233, %v6229, %v6230
    %vm6235 = vcmp.lt.s32.totalorder %v6232, %v6234
    %v6236 = vsel %vm6235, %v6232, %v6234
    %v6237 = vand.u32 %v6236, 65535
    %v6238 = vshra.s32 %v6236, 16
    %v6239 = vcvt.s32.f32 %v6237
    %v6240 = vcvt.s32.f32 %v6238
    %6241 = vmin.xlane.f32.xlu0 %v6240
    %v6242 = vpop.xlane.xlu0 %6241
    %vm6243 = vcmp.eq.f32.partialorder %v6240, %v6242
    %v6244 = vsel %vm6243, %v6239, inf
    %6245 = vmin.xlane.f32.xlu0 %v6244
    %v6246 = vpop.xlane.xlu0 %6245
    %v6247 = vcvt.f32.s32 %v6246
    %v6248 = vcvt.f32.s32 %v6242
    %v6249 = vshll.u32 %v6248, 16
    %v6250 = vadd.s32 %v6249, %v6247
    %vm6251 = vcmp.lt.s32.totalorder %v6200, %v6250
    %v6252 = vsel %vm6251, %v6200, %v6250
    %v6253 = vsub.f32 %v5830, %v6147
    %v6254 = vsub.f32 %v5832, %v6147
    %v6255 = vsub.f32 %v5871, %v6147
    %v6256 = vsub.f32 %v5873, %v6147
    %v6257 = vmul.f32 %v6253, 1.442695
    %v6258 = vpow.pop %v6257
    %v6259 = vmul.f32 %v6254, 1.442695
    %v6260 = vpow.pop %v6259
    %v6261 = vmul.f32 %v6255, 1.442695
    %v6262 = vpow.pop %v6261
    %v6263 = vmul.f32 %v6256, 1.442695
    %v6264 = vpow.pop %v6263
    %v6265 = vadd.f32 %v6258, %v6260
    %v6266 = vadd.f32 %v6265, %v6262
    %v6267 = vadd.f32 %v6266, %v6264
    %6268 = vadd.xlane.f32.xlu0 %v6267
    %v6269 = vpop.xlane.xlu0 %6268
    %v6270 = vadd.f32 %v6218, %v6269
    %v6271 = vadd.s32 %v6167, 1024
    %v6272 = vadd.s32 %v6168, 1024
    %v6273 = vadd.s32 %v6169, 1024
    %v6274 = vadd.s32 %v6170, 1024
    %vm6275 = vcmp.eq.f32.partialorder %v5830, %v6147
    %vm6276 = vcmp.eq.f32.partialorder %v5832, %v6147
    %vm6277 = vcmp.eq.f32.partialorder %v5871, %v6147
    %vm6278 = vcmp.eq.f32.partialorder %v5873, %v6147
    %v6279 = vsel %vm6275, %v6271, 3072
    %v6280 = vsel %vm6276, %v6272, 3072
    %v6281 = vsel %vm6277, %v6273, 3072
    %v6282 = vsel %vm6278, %v6274, 3072
    %vm6283 = vcmp.lt.s32.totalorder %v6279, %v6280
    %v6284 = vsel %vm6283, %v6279, %v6280
    %vm6285 = vcmp.lt.s32.totalorder %v6281, %v6282
    %v6286 = vsel %vm6285, %v6281, %v6282
    %vm6287 = vcmp.lt.s32.totalorder %v6284, %v6286
    %v6288 = vsel %vm6287, %v6284, %v6286
    %v6289 = vand.u32 %v6288, 65535
    %v6290 = vshra.s32 %v6288, 16
    %v6291 = vcvt.s32.f32 %v6289
    %v6292 = vcvt.s32.f32 %v6290
    %6293 = vmin.xlane.f32.xlu0 %v6292
    %v6294 = vpop.xlane.xlu0 %6293
    %vm6295 = vcmp.eq.f32.partialorder %v6292, %v6294
    %v6296 = vsel %vm6295, %v6291, inf
    %6297 = vmin.xlane.f32.xlu0 %v6296
    %v6298 = vpop.xlane.xlu0 %6297
    %v6299 = vcvt.f32.s32 %v6298
    %v6300 = vcvt.f32.s32 %v6294
    %v6301 = vshll.u32 %v6300, 16
    %v6302 = vadd.s32 %v6301, %v6299
    %vm6303 = vcmp.lt.s32.totalorder %v6252, %v6302
    %v6304 = vsel %vm6303, %v6252, %v6302
    %v6305 = vsub.f32 %v5912, %v6147
    %v6306 = vsub.f32 %v5914, %v6147
    %v6307 = vsub.f32 %v5953, %v6147
    %v6308 = vsub.f32 %v5955, %v6147
    %v6309 = vmul.f32 %v6305, 1.442695
    %v6310 = vpow.pop %v6309
    %v6311 = vmul.f32 %v6306, 1.442695
    %v6312 = vpow.pop %v6311
    %v6313 = vmul.f32 %v6307, 1.442695
    %v6314 = vpow.pop %v6313
    %v6315 = vmul.f32 %v6308, 1.442695
    %v6316 = vpow.pop %v6315
    %v6317 = vadd.f32 %v6310, %v6312
    %v6318 = vadd.f32 %v6317, %v6314
    %v6319 = vadd.f32 %v6318, %v6316
    %6320 = vadd.xlane.f32.xlu0 %v6319
    %v6321 = vpop.xlane.xlu0 %6320
    %v6322 = vadd.f32 %v6270, %v6321
    %v6323 = vadd.s32 %v6167, 1536
    %v6324 = vadd.s32 %v6168, 1536
    %v6325 = vadd.s32 %v6169, 1536
    %v6326 = vadd.s32 %v6170, 1536
    %vm6327 = vcmp.eq.f32.partialorder %v5912, %v6147
    %vm6328 = vcmp.eq.f32.partialorder %v5914, %v6147
    %vm6329 = vcmp.eq.f32.partialorder %v5953, %v6147
    %vm6330 = vcmp.eq.f32.partialorder %v5955, %v6147
    %v6331 = vsel %vm6327, %v6323, 3072
    %v6332 = vsel %vm6328, %v6324, 3072
    %v6333 = vsel %vm6329, %v6325, 3072
    %v6334 = vsel %vm6330, %v6326, 3072
    %vm6335 = vcmp.lt.s32.totalorder %v6331, %v6332
    %v6336 = vsel %vm6335, %v6331, %v6332
    %vm6337 = vcmp.lt.s32.totalorder %v6333, %v6334
    %v6338 = vsel %vm6337, %v6333, %v6334
    %vm6339 = vcmp.lt.s32.totalorder %v6336, %v6338
    %v6340 = vsel %vm6339, %v6336, %v6338
    %v6341 = vand.u32 %v6340, 65535
    %v6342 = vshra.s32 %v6340, 16
    %v6343 = vcvt.s32.f32 %v6341
    %v6344 = vcvt.s32.f32 %v6342
    %6345 = vmin.xlane.f32.xlu0 %v6344
    %v6346 = vpop.xlane.xlu0 %6345
    %vm6347 = vcmp.eq.f32.partialorder %v6344, %v6346
    %v6348 = vsel %vm6347, %v6343, inf
    %6349 = vmin.xlane.f32.xlu0 %v6348
    %v6350 = vpop.xlane.xlu0 %6349
    %v6351 = vcvt.f32.s32 %v6350
    %v6352 = vcvt.f32.s32 %v6346
    %v6353 = vshll.u32 %v6352, 16
    %v6354 = vadd.s32 %v6353, %v6351
    %vm6355 = vcmp.lt.s32.totalorder %v6304, %v6354
    %v6356 = vsel %vm6355, %v6304, %v6354
    %v6357 = vsub.f32 %v5994, %v6147
    %v6358 = vsub.f32 %v5996, %v6147
    %v6359 = vsub.f32 %v6035, %v6147
    %v6360 = vsub.f32 %v6037, %v6147
    %v6361 = vmul.f32 %v6357, 1.442695
    %v6362 = vpow.pop %v6361
    %v6363 = vmul.f32 %v6358, 1.442695
    %v6364 = vpow.pop %v6363
    %v6365 = vmul.f32 %v6359, 1.442695
    %v6366 = vpow.pop %v6365
    %v6367 = vmul.f32 %v6360, 1.442695
    %v6368 = vpow.pop %v6367
    %v6369 = vadd.f32 %v6362, %v6364
    %v6370 = vadd.f32 %v6369, %v6366
    %v6371 = vadd.f32 %v6370, %v6368
    %6372 = vadd.xlane.f32.xlu0 %v6371
    %v6373 = vpop.xlane.xlu0 %6372
    %v6374 = vadd.f32 %v6322, %v6373
    %v6375 = vadd.s32 %v6167, 2048
    %v6376 = vadd.s32 %v6168, 2048
    %v6377 = vadd.s32 %v6169, 2048
    %v6378 = vadd.s32 %v6170, 2048
    %vm6379 = vcmp.eq.f32.partialorder %v5994, %v6147
    %vm6380 = vcmp.eq.f32.partialorder %v5996, %v6147
    %vm6381 = vcmp.eq.f32.partialorder %v6035, %v6147
    %vm6382 = vcmp.eq.f32.partialorder %v6037, %v6147
    %v6383 = vsel %vm6379, %v6375, 3072
    %v6384 = vsel %vm6380, %v6376, 3072
    %v6385 = vsel %vm6381, %v6377, 3072
    %v6386 = vsel %vm6382, %v6378, 3072
    %vm6387 = vcmp.lt.s32.totalorder %v6383, %v6384
    %v6388 = vsel %vm6387, %v6383, %v6384
    %vm6389 = vcmp.lt.s32.totalorder %v6385, %v6386
    %v6390 = vsel %vm6389, %v6385, %v6386
    %vm6391 = vcmp.lt.s32.totalorder %v6388, %v6390
    %v6392 = vsel %vm6391, %v6388, %v6390
    %v6393 = vand.u32 %v6392, 65535
    %v6394 = vshra.s32 %v6392, 16
    %v6395 = vcvt.s32.f32 %v6393
    %v6396 = vcvt.s32.f32 %v6394
    %6397 = vmin.xlane.f32.xlu0 %v6396
    %v6398 = vpop.xlane.xlu0 %6397
    %vm6399 = vcmp.eq.f32.partialorder %v6396, %v6398
    %v6400 = vsel %vm6399, %v6395, inf
    %6401 = vmin.xlane.f32.xlu0 %v6400
    %v6402 = vpop.xlane.xlu0 %6401
    %v6403 = vcvt.f32.s32 %v6402
    %v6404 = vcvt.f32.s32 %v6398
    %v6405 = vshll.u32 %v6404, 16
    %v6406 = vadd.s32 %v6405, %v6403
    %vm6407 = vcmp.lt.s32.totalorder %v6356, %v6406
    %v6408 = vsel %vm6407, %v6356, %v6406
    %v6409 = vsub.f32 %v6076, %v6147
    %v6410 = vsub.f32 %v6078, %v6147
    %v6411 = vsub.f32 %v6117, %v6147
    %v6412 = vsub.f32 %v6119, %v6147
    %v6413 = vmul.f32 %v6409, 1.442695
    %v6414 = vpow.pop %v6413
    %v6415 = vmul.f32 %v6410, 1.442695
    %v6416 = vpow.pop %v6415
    %v6417 = vmul.f32 %v6411, 1.442695
    %v6418 = vpow.pop %v6417
    %v6419 = vmul.f32 %v6412, 1.442695
    %v6420 = vpow.pop %v6419
    %v6421 = vadd.f32 %v6414, %v6416
    %v6422 = vadd.f32 %v6421, %v6418
    %v6423 = vadd.f32 %v6422, %v6420
    %6424 = vadd.xlane.f32.xlu0 %v6423
    %v6425 = vpop.xlane.xlu0 %6424
    %v6426 = vadd.f32 %v6374, %v6425
    %v6427 = vadd.s32 %v6167, 2560
    %v6428 = vadd.s32 %v6168, 2560
    %v6429 = vadd.s32 %v6169, 2560
    %v6430 = vadd.s32 %v6170, 2560
    %vm6431 = vcmp.eq.f32.partialorder %v6076, %v6147
    %vm6432 = vcmp.eq.f32.partialorder %v6078, %v6147
    %vm6433 = vcmp.eq.f32.partialorder %v6117, %v6147
    %vm6434 = vcmp.eq.f32.partialorder %v6119, %v6147
    %v6435 = vsel %vm6431, %v6427, 3072
    %v6436 = vsel %vm6432, %v6428, 3072
    %v6437 = vsel %vm6433, %v6429, 3072
    %v6438 = vsel %vm6434, %v6430, 3072
    %vm6439 = vcmp.lt.s32.totalorder %v6435, %v6436
    %v6440 = vsel %vm6439, %v6435, %v6436
    %vm6441 = vcmp.lt.s32.totalorder %v6437, %v6438
    %v6442 = vsel %vm6441, %v6437, %v6438
    %vm6443 = vcmp.lt.s32.totalorder %v6440, %v6442
    %v6444 = vsel %vm6443, %v6440, %v6442
    %v6445 = vand.u32 %v6444, 65535
    %v6446 = vshra.s32 %v6444, 16
    %v6447 = vcvt.s32.f32 %v6445
    %v6448 = vcvt.s32.f32 %v6446
    %6449 = vmin.xlane.f32.xlu0 %v6448
    %v6450 = vpop.xlane.xlu0 %6449
    %vm6451 = vcmp.eq.f32.partialorder %v6448, %v6450
    %v6452 = vsel %vm6451, %v6447, inf
    %6453 = vmin.xlane.f32.xlu0 %v6452
    %v6454 = vpop.xlane.xlu0 %6453
    %v6455 = vcvt.f32.s32 %v6454
    %v6456 = vcvt.f32.s32 %v6450
    %v6457 = vshll.u32 %v6456, 16
    %v6458 = vadd.s32 %v6457, %v6455
    %vm6459 = vcmp.lt.s32.totalorder %v6408, %v6458
    %v6460 = vsel %vm6459, %v6408, %v6458
    %v6461 = vlog2.pop %v6426
    %v6462 = vmul.f32 %v6461, 0.6931472
    %v6463 = vadd.f32 %v6147, %v6462
    %v6464 = vsub.f32 %v5666, %v6463
    %v6465 = vsub.f32 %v5668, %v6463
    %v6466 = vsub.f32 %v5707, %v6463
    %v6467 = vsub.f32 %v5709, %v6463
    %v6468 = vsub.f32 %v5748, %v6463
    %v6469 = vsub.f32 %v5750, %v6463
    %v6470 = vsub.f32 %v5789, %v6463
    %v6471 = vsub.f32 %v5791, %v6463
    %v6472 = vsub.f32 %v5830, %v6463
    %v6473 = vsub.f32 %v5832, %v6463
    %v6474 = vsub.f32 %v5871, %v6463
    %v6475 = vsub.f32 %v5873, %v6463
    %v6476 = vsub.f32 %v5912, %v6463
    %v6477 = vsub.f32 %v5914, %v6463
    %v6478 = vsub.f32 %v5953, %v6463
    %v6479 = vsub.f32 %v5955, %v6463
    %v6480 = vsub.f32 %v5994, %v6463
    %v6481 = vsub.f32 %v5996, %v6463
    %v6482 = vsub.f32 %v6035, %v6463
    %v6483 = vsub.f32 %v6037, %v6463
    %v6484 = vsub.f32 %v6076, %v6463
    %v6485 = vsub.f32 %v6078, %v6463
    %v6486 = vsub.f32 %v6117, %v6463
    %v6487 = vsub.f32 %v6119, %v6463
    %6488 = vst [vmem:[#allocation17] sm:$0xff] %v6464
    %6489 = vst [vmem:[#allocation17 + $0x8] sm:$0xff] %v6465
    %6490 = vst [vmem:[#allocation17 + $0x10] sm:$0xff] %v6466
    %6491 = vst [vmem:[#allocation17 + $0x18] sm:$0xff] %v6467
    %6492 = vst [vmem:[#allocation17 + $0x20] sm:$0xff] %v6468
    %6493 = vst [vmem:[#allocation17 + $0x28] sm:$0xff] %v6469
    %6494 = vst [vmem:[#allocation17 + $0x30] sm:$0xff] %v6470
    %6495 = vst [vmem:[#allocation17 + $0x38] sm:$0xff] %v6471
    %6496 = vst [vmem:[#allocation17 + $0x40] sm:$0xff] %v6472
    %6497 = vst [vmem:[#allocation17 + $0x48] sm:$0xff] %v6473
    %6498 = vst [vmem:[#allocation17 + $0x50] sm:$0xff] %v6474
    %6499 = vst [vmem:[#allocation17 + $0x58] sm:$0xff] %v6475
    %6500 = vst [vmem:[#allocation17 + $0x60] sm:$0xff] %v6476
    %6501 = vst [vmem:[#allocation17 + $0x68] sm:$0xff] %v6477
    %6502 = vst [vmem:[#allocation17 + $0x70] sm:$0xff] %v6478
    %6503 = vst [vmem:[#allocation17 + $0x78] sm:$0xff] %v6479
    %6504 = vst [vmem:[#allocation17 + $0x80] sm:$0xff] %v6480
    %6505 = vst [vmem:[#allocation17 + $0x88] sm:$0xff] %v6481
    %6506 = vst [vmem:[#allocation17 + $0x90] sm:$0xff] %v6482
    %6507 = vst [vmem:[#allocation17 + $0x98] sm:$0xff] %v6483
    %6508 = vst [vmem:[#allocation17 + $0xa0] sm:$0xff] %v6484
    %6509 = vst [vmem:[#allocation17 + $0xa8] sm:$0xff] %v6485
    %6510 = vst [vmem:[#allocation17 + $0xb0] sm:$0xff] %v6486
    %6511 = vst [vmem:[#allocation17 + $0xb8] sm:$0xff] %v6487
    %vm6512 = vcmask 7168
    %6513 = vst.msk [vmem:[%s9] sm:$0xff] %vm6512, %v6460
    // Predicated region
    $region62: #{decoder_forward.1} parent=1 // pred_check
      _
    $region63: #{decoder_forward.1} parent=1 // pred_check_branch
      %6515 = sbr.rel (0) target = $region65
    $region64: #{decoder_forward.1} parent=1 // pred_region
      %s6517 = ssub.s32 3072, 3072
      %6518 = vsyncadd [#allocation7], %s6517
      %s6520 = sshll.u32 [#allocation17], 4
      %s6521 = int_to_ptr.vmem [resolvable:$true] %s6520
      %6523 = dma.vmem_to_hbm [thread:$0]  %s6521, 3072, %s8, [#allocation7]
    $region65: #{decoder_forward.1} parent=1 // pred_fallthru
      _
    // Predicated region
    $region66: #{decoder_forward.1} parent=1 // pred_check
      _
    $region67: #{decoder_forward.1} parent=1 // pred_check_branch
      %6525 = sbr.rel (0) target = $region69
    $region68: #{decoder_forward.1} parent=1 // pred_region
      _
    $region69: #{decoder_forward.1} parent=1 // pred_fallthru
      _
    // Predicated region
    $region70: #{decoder_forward.1} parent=1 // pred_check
      _
    $region71: #{decoder_forward.1} parent=1 // pred_check_branch
      %6527 = sbr.rel (0) target = $region73
    $region72: #{decoder_forward.1} parent=1 // pred_region
      %s6529 = ssub.s32 64, 64
      %6530 = vsyncadd [#allocation19], %s6529
      %s6532 = sshll.u32 [#allocation18], 4
      %s6533 = int_to_ptr.vmem [resolvable:$true] %s6532
      %6535 = dma.vmem_to_hbm [thread:$0]  %s6533, 64, %s10, [#allocation19]
    $region73: #{decoder_forward.1} parent=1 // pred_fallthru
      _
    // Predicated region
    $region74: #{decoder_forward.1} parent=1 // pred_check
      _
    $region75: #{decoder_forward.1} parent=1 // pred_check_branch
      %6537 = sbr.rel (0) target = $region77
    $region76: #{decoder_forward.1} parent=1 // pred_region
      %s6539 = ssub.s32 64, 64
      %6540 = vsyncadd [#allocation19], %s6539
      %s6542 = sshll.u32 [#allocation20], 4
      %s6543 = int_to_ptr.vmem [resolvable:$true] %s6542
      %6545 = dma.vmem_to_hbm [thread:$0]  %s6543, 64, %s11, [#allocation19]
    $region77: #{decoder_forward.1} parent=1 // pred_fallthru
      _
    // Predicated region
    $region78: #{decoder_forward.1} parent=1 // pred_check
      _
    $region79: #{decoder_forward.1} parent=1 // pred_check_branch
      %6547 = sbr.rel (0) target = $region81
    $region80: #{decoder_forward.1} parent=1 // pred_region
      %6548 = dma.done [#allocation7], 3072
    $region81: #{decoder_forward.1} parent=1 // pred_fallthru
      _
    // Predicated region
    $region82: #{decoder_forward.1} parent=1 // pred_check
      _
    $region83: #{decoder_forward.1} parent=1 // pred_check_branch
      %6550 = sbr.rel (0) target = $region85
    $region84: #{decoder_forward.1} parent=1 // pred_region
      _
    $region85: #{decoder_forward.1} parent=1 // pred_fallthru
      _
    // Predicated region
    $region86: #{decoder_forward.1} parent=1 // pred_check
      _
    $region87: #{decoder_forward.1} parent=1 // pred_check_branch
      %6552 = sbr.rel (0) target = $region89
    $region88: #{decoder_forward.1} parent=1 // pred_region
      %6553 = dma.done [#allocation19], 64
    $region89: #{decoder_forward.1} parent=1 // pred_fallthru
      _
    // Predicated region
    $region90: #{decoder_forward.1} parent=1 // pred_check
      _
    $region91: #{decoder_forward.1} parent=1 // pred_check_branch
      %6555 = sbr.rel (0) target = $region93
    $region92: #{decoder_forward.1} parent=1 // pred_region
      %6556 = dma.done [#allocation19], 64
    $region93: #{decoder_forward.1} parent=1 // pred_fallthru
      _
    %6557 = vsyncpa [#allocation6], 1
    %6558 = vsyncpa [#allocation9], 1
    %6559 = vsyncpa [#allocation12], 1
    %6560 = vsyncpa [#allocation15], 1
    %6561 = vsyncpa [#allocation7], 1
    %6562 = vsyncpa [#allocation19], 1
  %6563 = vsyncmov [#allocation4]
  %s6564 = vpop.sfrf %6563
  %p6565 = scmp.eq.s32.totalorder %s6564, 0
  %p6566 = pneg %p6565
  %6568 = shalt.err (%p6566)

</llo_original>
